<compile_context>
chip_gen: v5e
topology: v5e:2x2
jax: 0.10.0
libtpu: 0.0.40
codegen_flags: <defaults>
</compile_context>

<pallas_src>
import functools
import math

import jax
import jax.numpy as jnp
from jax import lax
from jax.experimental import pallas as pl
from jax.experimental.pallas import tpu as pltpu


# stride-2 3x3 tap offset d in {0,1,2}: input coord 2*o + d - 1
#   == 2*(o + hs - 1) + ph  ->  (padded-block slice start hs, phase ph)
_SUB2 = {0: (0, 1), 1: (1, 0), 2: (1, 1)}


def _nbytes(shape, dtype):
    return math.prod(shape) * jnp.dtype(dtype).itemsize


# ----------------------------------------------------------------------------
# Fused BasicBlockEnc kernel (one grid step == one batch element)
# ----------------------------------------------------------------------------

def _make_block_kernel(H, W, Cin, Cout, stride):
    Ho, Wo = H // stride, W // stride
    M = Ho * Wo
    K1 = 9 * Cin
    K2 = 9 * Cout + (Cin if stride == 2 else 0)

    def kernel(x_ref, w1_ref, b1_ref, w2_ref, b2_ref, o_ref,
               xp_ref, h1p_ref, col_ref):
        bf16 = xp_ref.dtype

        # ---- zero only the halo strips of the padded scratches (perimeter,
        #      not area); interiors are fully overwritten below. ----
        if stride == 1:
            xp_ref[0:1, :, :] = jnp.zeros((1, W + 2, Cin), bf16)
            xp_ref[H + 1:H + 2, :, :] = jnp.zeros((1, W + 2, Cin), bf16)
            xp_ref[:, 0:1, :] = jnp.zeros((H + 2, 1, Cin), bf16)
            xp_ref[:, W + 1:W + 2, :] = jnp.zeros((H + 2, 1, Cin), bf16)
        else:
            xp_ref[:, 0:1, :, :] = jnp.zeros((4, 1, Wo + 1, Cin), bf16)
            xp_ref[:, :, 0:1, :] = jnp.zeros((4, Ho + 1, 1, Cin), bf16)
        h1p_ref[0:1, :, :] = jnp.zeros((1, Wo + 2, Cout), bf16)
        h1p_ref[Ho + 1:Ho + 2, :, :] = jnp.zeros((1, Wo + 2, Cout), bf16)
        h1p_ref[:, 0:1, :] = jnp.zeros((Ho + 2, 1, Cout), bf16)
        h1p_ref[:, Wo + 1:Wo + 2, :] = jnp.zeros((Ho + 2, 1, Cout), bf16)

        # ---- stage the (implicitly zero-padded) input interior ----
        if stride == 1:
            xp_ref[1:H + 1, 1:W + 1, :] = x_ref[0]
        else:
            # phase-major space-to-depth: every strided tap below becomes a
            # contiguous block slice.
            xp_ref[:, 1:, 1:, :] = x_ref[0]

        # ---- conv1: stage im2col taps into the shared col scratch, then one
        #      (M, 9*Cin) x (9*Cin, Cout) matmul on the MXU ----
        for dh in range(3):
            for dw in range(3):
                t = dh * 3 + dw
                if stride == 1:
                    tap = xp_ref[dh:dh + H, dw:dw + W, :]
                else:
                    hs, ph = _SUB2[dh]
                    ws, pw = _SUB2[dw]
                    tap = xp_ref[ph * 2 + pw, hs:hs + Ho, ws:ws + Wo, :]
                col_ref[:, t * Cin:(t + 1) * Cin] = tap.reshape(M, Cin)

        h1 = jnp.dot(col_ref[:, :K1], w1_ref[...],
                     preferred_element_type=jnp.float32)       # (M, Cout) f32
        a1 = jnp.maximum(h1 + b1_ref[...], 0.0)                # bn1 bias + relu

        # ---- stage relu(bn1(conv1)), padded, for conv2 ----
        h1p_ref[1:Ho + 1, 1:Wo + 1, :] = a1.reshape(Ho, Wo, Cout).astype(bf16)

        # ---- conv2 (+ fused stride-2 1x1 shortcut columns): one matmul over
        #      K = 9*Cout (+ Cin shortcut columns) ----
        for dh in range(3):
            for dw in range(3):
                t = dh * 3 + dw
                tap = h1p_ref[dh:dh + Ho, dw:dw + Wo, :]
                col_ref[:, t * Cout:(t + 1) * Cout] = tap.reshape(M, Cout)
        if stride == 2:
            # phase-(0,0) samples == the 1x1 / stride-2 shortcut conv input.
            col_ref[:, 9 * Cout:K2] = x_ref[0, 0].reshape(M, Cin)

        h2 = jnp.dot(col_ref[:, :K2], w2_ref[...],
                     preferred_element_type=jnp.float32)       # (M, Cout) f32
        out = h2 + b2_ref[...]                                 # bn2 (+ sc bn) bias

        if stride == 1:
            out = out + x_ref[0].reshape(M, Cin).astype(jnp.float32)  # identity

        o_ref[0] = jnp.maximum(out, 0.0)

    return kernel


@functools.partial(jax.jit, static_argnums=(2,))
def basic_block_enc(x_nchw, params, stride):
    """BasicBlockEnc forward: (B, Cin, H, W) f32 -> (B, Cin*stride, H/s, W/s) f32."""
    B, Cin, H, W = x_nchw.shape
    assert H % stride == 0 and W % stride == 0, "stride-2 path needs even H, W"
    Cout = Cin * stride
    Ho, Wo = H // stride, W // stride
    M = Ho * Wo

    # TODO(synk): when chaining blocks, keep activations in this NHWC bf16
    # layout between calls instead of round-tripping through NCHW f32.
    x = jnp.transpose(x_nchw, (0, 2, 3, 1)).astype(jnp.bfloat16)   # NHWC bf16
    if stride == 2:
        # batch-major, phase-major space-to-depth:
        #   x[b, 2*ph+pw, bh, bw, c] = x_nhwc[b, 2*bh+ph, 2*bw+pw, c]
        x = x.reshape(B, Ho, 2, Wo, 2, Cin).transpose(0, 2, 4, 1, 3, 5)
        x = x.reshape(B, 4, Ho, Wo, Cin)

    eps = 1e-5

    def fold(bn):
        s = bn["g"] / jnp.sqrt(bn["v"] + eps)
        return s.astype(jnp.float32), (bn["b"] - bn["m"] * s).astype(jnp.float32)

    # BN scales folded into the bf16 weight columns; biases stay f32.
    s1, b1 = fold(params["bn1"])
    s2, b2 = fold(params["bn2"])
    w1 = (params["conv1_w"].reshape(9 * Cin, Cout) * s1[None, :]).astype(jnp.bfloat16)
    w2 = (params["conv2_w"].reshape(9 * Cout, Cout) * s2[None, :]).astype(jnp.bfloat16)
    if stride == 2:
        ssc, bsc = fold(params["sc_bn"])
        wsc = (params["sc_conv_w"] * ssc[None, :]).astype(jnp.bfloat16)   # (Cin, Cout)
        w2 = jnp.concatenate([w2, wsc], axis=0)       # fuse shortcut into conv2 K
        b2 = b2 + bsc
    b1 = b1.reshape(1, Cout)
    b2 = b2.reshape(1, Cout)

    K1 = 9 * Cin
    K2 = w2.shape[0]

    if stride == 1:
        x_blk = (1, H, W, Cin)
        x_spec = pl.BlockSpec(x_blk, lambda b: (b, 0, 0, 0))
        xp_shape = (H + 2, W + 2, Cin)
    else:
        x_blk = (1, 4, Ho, Wo, Cin)
        x_spec = pl.BlockSpec(x_blk, lambda b: (b, 0, 0, 0, 0))
        xp_shape = (4, Ho + 1, Wo + 1, Cin)
    h1p_shape = (Ho + 2, Wo + 2, Cout)

    in_specs = [
        x_spec,
        pl.BlockSpec((K1, Cout), lambda b: (0, 0)),   # w1 (resident across steps)
        pl.BlockSpec((1, Cout), lambda b: (0, 0)),    # b1
        pl.BlockSpec((K2, Cout), lambda b: (0, 0)),   # w2 (+ fused shortcut rows)
        pl.BlockSpec((1, Cout), lambda b: (0, 0)),    # b2 (+ shortcut bias)
    ]
    # TODO(synk): a lane-dense (B, Ho, Wo*Cout) output store would need an
    # in-kernel sublane->lane relayout of the (M, Cout) matmul result; the
    # natural matmul layout is kept here to stay within supported reshapes.
    out_spec = pl.BlockSpec((1, M, Cout), lambda b: (b, 0, 0))

    scratch_shapes = [
        pltpu.VMEM(xp_shape, jnp.bfloat16),           # zero-padded input
        pltpu.VMEM(h1p_shape, jnp.bfloat16),          # zero-padded act1
        pltpu.VMEM((M, K2), jnp.bfloat16),            # shared im2col staging
    ]

    # Explicit VMEM budget: double-buffered x/out blocks + resident weights +
    # scratches + headroom for matmul results / temporaries.
    scratch_bytes = (_nbytes(xp_shape, jnp.bfloat16)
                     + _nbytes(h1p_shape, jnp.bfloat16)
                     + _nbytes((M, K2), jnp.bfloat16))
    io_bytes = 2 * (_nbytes(x_blk, jnp.bfloat16) + _nbytes((1, M, Cout), jnp.float32))
    w_bytes = 2 * (_nbytes((K1, Cout), jnp.bfloat16) + _nbytes((K2, Cout), jnp.bfloat16)
                   + 2 * _nbytes((1, Cout), jnp.float32))
    vmem_limit = min(scratch_bytes + io_bytes + w_bytes + (16 << 20), 64 << 20)

    out2d = pl.pallas_call(
        _make_block_kernel(H, W, Cin, Cout, stride),
        out_shape=jax.ShapeDtypeStruct((B, M, Cout), jnp.float32),
        grid_spec=pltpu.PrefetchScalarGridSpec(
            num_scalar_prefetch=0,
            grid=(B,),
            in_specs=in_specs,
            out_specs=out_spec,
            scratch_shapes=scratch_shapes),
        compiler_params=pltpu.CompilerParams(
            dimension_semantics=("parallel",),
            vmem_limit_bytes=int(vmem_limit)),
    )(x, w1, b1, w2, b2)

    out = out2d.reshape(B, Ho, Wo, Cout)
    return jnp.transpose(out, (0, 3, 1, 2))           # back to NCHW


# ----------------------------------------------------------------------------
# Pure-JAX reference (same inference-mode BN folding / bf16 conv precision)
# ----------------------------------------------------------------------------

def reference_block(x_nchw, params, stride):
    Cin = x_nchw.shape[1]
    Cout = Cin * stride
    eps = 1e-5

    def fold(bn):
        s = bn["g"] / jnp.sqrt(bn["v"] + eps)
        return s, bn["b"] - bn["m"] * s

    def conv(x, w_hwio, s, pad):
        return lax.conv_general_dilated(
            x.astype(jnp.bfloat16), w_hwio.astype(jnp.bfloat16),
            window_strides=(s, s), padding=[(pad, pad), (pad, pad)],
            dimension_numbers=("NCHW", "HWIO", "NCHW"),
            preferred_element_type=jnp.float32)

    s1, b1 = fold(params["bn1"])
    s2, b2 = fold(params["bn2"])
    w1 = params["conv1_w"] * s1[None, None, None, :]
    w2 = params["conv2_w"] * s2[None, None, None, :]
    a1 = jnp.maximum(conv(x_nchw, w1, stride, 1) + b1[None, :, None, None], 0.0)
    out = conv(a1, w2, 1, 1) + b2[None, :, None, None]
    if stride == 1:
        sc = x_nchw.astype(jnp.bfloat16).astype(jnp.float32)
    else:
        ssc, bsc = fold(params["sc_bn"])
        wsc = (params["sc_conv_w"] * ssc[None, :]).reshape(1, 1, Cin, Cout)
        sc = conv(x_nchw, wsc, stride, 0) + bsc[None, :, None, None]
    return jnp.maximum(out + sc, 0.0)


def init_params(key, in_planes, stride):
    planes = in_planes * stride
    it = iter(list(jax.random.split(key, 16)))
    nk = lambda: next(it)

    def conv_w(kh, kw, cin, cout):
        std = math.sqrt(2.0 / (kh * kw * cin))
        return std * jax.random.normal(nk(), (kh, kw, cin, cout), jnp.float32)

    def bn(c):
        return dict(
            g=1.0 + 0.1 * jax.random.normal(nk(), (c,), jnp.float32),
            b=0.05 * jax.random.normal(nk(), (c,), jnp.float32),
            m=0.05 * jax.random.normal(nk(), (c,), jnp.float32),
            v=jax.random.uniform(nk(), (c,), jnp.float32, 0.8, 1.2),
        )

    p = dict(conv1_w=conv_w(3, 3, in_planes, planes), bn1=bn(planes),
             conv2_w=conv_w(3, 3, planes, planes), bn2=bn(planes))
    if stride != 1:
        p["sc_conv_w"] = conv_w(1, 1, in_planes, planes).reshape(in_planes,
                                                                 planes)
        p["sc_bn"] = bn(planes)
    return p


# ----------------------------------------------------------------------------

if __name__ == "__main__":
    B, Cin, H, W = 2, 32, 16, 16
    root = jax.random.PRNGKey(0)

    for stride in (1, 2):                       # identity and strided shortcut
        root, kp, kx = jax.random.split(root, 3)
        params = init_params(kp, Cin, stride)
        x = jax.random.normal(kx, (B, Cin, H, W), jnp.float32)

        out = jax.block_until_ready(basic_block_enc(x, params, stride))
        assert out.shape == (B, Cin * stride, H // stride, W // stride), out.shape
        assert bool(jnp.all(jnp.isfinite(out)))
        assert bool(jnp.all(out >= 0.0))        # relu output

        ref = reference_block(x, params, stride)
        err = float(jnp.max(jnp.abs(out - ref)))
        assert err < 2e-2, (stride, err)

    print("KERNEL_OK")
</pallas_src>

<mosaic_0001>
module attributes {stable_mosaic.version = 11 : i64} {
  func.func @kernel(%arg0: i32, %arg1: memref<1x16x16x32xbf16, #tpu.memory_space<vmem>>, %arg2: memref<288x32xbf16, #tpu.memory_space<vmem>>, %arg3: memref<1x32xf32, #tpu.memory_space<vmem>>, %arg4: memref<288x32xbf16, #tpu.memory_space<vmem>>, %arg5: memref<1x32xf32, #tpu.memory_space<vmem>>, %arg6: memref<1x256x32xf32, #tpu.memory_space<vmem>>, %arg7: memref<18x18x32xbf16, #tpu.memory_space<vmem>>, %arg8: memref<18x18x32xbf16, #tpu.memory_space<vmem>>, %arg9: memref<256x288xbf16, #tpu.memory_space<vmem>>) attributes {dimension_semantics = [#tpu.dimension_semantics<parallel>], iteration_bounds = array<i64: 2>, scalar_prefetch = 0 : i64, scratch_operands = 3 : i64, tpu.core_type = #tpu.core_type<tc>, window_params = [{transform_indices = @transform_0, window_bounds = array<i64: 1, 16, 16, 32>}, {pipeline_mode = #tpu.pipeline_mode<synchronous>, transform_indices = @transform_1, window_bounds = array<i64: 288, 32>}, {pipeline_mode = #tpu.pipeline_mode<synchronous>, transform_indices = @transform_2, window_bounds = array<i64: 1, 32>}, {pipeline_mode = #tpu.pipeline_mode<synchronous>, transform_indices = @transform_3, window_bounds = array<i64: 288, 32>}, {pipeline_mode = #tpu.pipeline_mode<synchronous>, transform_indices = @transform_4, window_bounds = array<i64: 1, 32>}, {transform_indices = @transform_5, window_bounds = array<i64: 1, 256, 32>}]} {
    %cst = arith.constant 0.000000e+00 : bf16
    %0 = vector.broadcast %cst : bf16 to vector<1x18x32xbf16>
    %c0 = arith.constant 0 : index
    %c0_0 = arith.constant 0 : index
    %c0_1 = arith.constant 0 : index
    %1 = vector.load %arg7[%c0, %c0_0, %c0_1] : memref<18x18x32xbf16, #tpu.memory_space<vmem>>, vector<1x18x32xbf16>
    tpu.vector_store %arg7[%c0, %c0_0, %c0_1], %0 {strides = array<i32>} : memref<18x18x32xbf16, #tpu.memory_space<vmem>>, vector<1x18x32xbf16>,
    %cst_2 = arith.constant 0.000000e+00 : bf16
    %2 = vector.broadcast %cst_2 : bf16 to vector<1x18x32xbf16>
    %c17 = arith.constant 17 : index
    %c0_3 = arith.constant 0 : index
    %c0_4 = arith.constant 0 : index
    %3 = vector.load %arg7[%c17, %c0_3, %c0_4] : memref<18x18x32xbf16, #tpu.memory_space<vmem>>, vector<1x18x32xbf16>
    tpu.vector_store %arg7[%c17, %c0_3, %c0_4], %2 {strides = array<i32>} : memref<18x18x32xbf16, #tpu.memory_space<vmem>>, vector<1x18x32xbf16>,
    %cst_5 = arith.constant 0.000000e+00 : bf16
    %4 = vector.broadcast %cst_5 : bf16 to vector<18x1x32xbf16>
    %c0_6 = arith.constant 0 : index
    %c0_7 = arith.constant 0 : index
    %c0_8 = arith.constant 0 : index
    %5 = vector.load %arg7[%c0_6, %c0_7, %c0_8] : memref<18x18x32xbf16, #tpu.memory_space<vmem>>, vector<18x1x32xbf16>
    tpu.vector_store %arg7[%c0_6, %c0_7, %c0_8], %4 {strides = array<i32>} : memref<18x18x32xbf16, #tpu.memory_space<vmem>>, vector<18x1x32xbf16>,
    %cst_9 = arith.constant 0.000000e+00 : bf16
    %6 = vector.broadcast %cst_9 : bf16 to vector<18x1x32xbf16>
    %c0_10 = arith.constant 0 : index
    %c17_11 = arith.constant 17 : index
    %c0_12 = arith.constant 0 : index
    %7 = vector.load %arg7[%c0_10, %c17_11, %c0_12] : memref<18x18x32xbf16, #tpu.memory_space<vmem>>, vector<18x1x32xbf16>
    tpu.vector_store %arg7[%c0_10, %c17_11, %c0_12], %6 {strides = array<i32>} : memref<18x18x32xbf16, #tpu.memory_space<vmem>>, vector<18x1x32xbf16>,
    %cst_13 = arith.constant 0.000000e+00 : bf16
    %8 = vector.broadcast %cst_13 : bf16 to vector<1x18x32xbf16>
    %c0_14 = arith.constant 0 : index
    %c0_15 = arith.constant 0 : index
    %c0_16 = arith.constant 0 : index
    %9 = vector.load %arg8[%c0_14, %c0_15, %c0_16] : memref<18x18x32xbf16, #tpu.memory_space<vmem>>, vector<1x18x32xbf16>
    tpu.vector_store %arg8[%c0_14, %c0_15, %c0_16], %8 {strides = array<i32>} : memref<18x18x32xbf16, #tpu.memory_space<vmem>>, vector<1x18x32xbf16>,
    %cst_17 = arith.constant 0.000000e+00 : bf16
    %10 = vector.broadcast %cst_17 : bf16 to vector<1x18x32xbf16>
    %c17_18 = arith.constant 17 : index
    %c0_19 = arith.constant 0 : index
    %c0_20 = arith.constant 0 : index
    %11 = vector.load %arg8[%c17_18, %c0_19, %c0_20] : memref<18x18x32xbf16, #tpu.memory_space<vmem>>, vector<1x18x32xbf16>
    tpu.vector_store %arg8[%c17_18, %c0_19, %c0_20], %10 {strides = array<i32>} : memref<18x18x32xbf16, #tpu.memory_space<vmem>>, vector<1x18x32xbf16>,
    %cst_21 = arith.constant 0.000000e+00 : bf16
    %12 = vector.broadcast %cst_21 : bf16 to vector<18x1x32xbf16>
    %c0_22 = arith.constant 0 : index
    %c0_23 = arith.constant 0 : index
    %c0_24 = arith.constant 0 : index
    %13 = vector.load %arg8[%c0_22, %c0_23, %c0_24] : memref<18x18x32xbf16, #tpu.memory_space<vmem>>, vector<18x1x32xbf16>
    tpu.vector_store %arg8[%c0_22, %c0_23, %c0_24], %12 {strides = array<i32>} : memref<18x18x32xbf16, #tpu.memory_space<vmem>>, vector<18x1x32xbf16>,
    %cst_25 = arith.constant 0.000000e+00 : bf16
    %14 = vector.broadcast %cst_25 : bf16 to vector<18x1x32xbf16>
    %c0_26 = arith.constant 0 : index
    %c17_27 = arith.constant 17 : index
    %c0_28 = arith.constant 0 : index
    %15 = vector.load %arg8[%c0_26, %c17_27, %c0_28] : memref<18x18x32xbf16, #tpu.memory_space<vmem>>, vector<18x1x32xbf16>
    tpu.vector_store %arg8[%c0_26, %c17_27, %c0_28], %14 {strides = array<i32>} : memref<18x18x32xbf16, #tpu.memory_space<vmem>>, vector<18x1x32xbf16>,
    %c0_29 = arith.constant 0 : index
    %c0_30 = arith.constant 0 : index
    %c0_31 = arith.constant 0 : index
    %c0_32 = arith.constant 0 : index
    %16 = vector.load %arg1[%c0_29, %c0_30, %c0_31, %c0_32] : memref<1x16x16x32xbf16, #tpu.memory_space<vmem>>, vector<1x16x16x32xbf16>
    %17 = vector.shape_cast %16 : vector<1x16x16x32xbf16> to vector<16x16x32xbf16>
    %c1 = arith.constant 1 : index
    %c1_33 = arith.constant 1 : index
    %c0_34 = arith.constant 0 : index
    %18 = vector.load %arg7[%c1, %c1_33, %c0_34] : memref<18x18x32xbf16, #tpu.memory_space<vmem>>, vector<16x16x32xbf16>
    tpu.vector_store %arg7[%c1, %c1_33, %c0_34], %17 {strides = array<i32>} : memref<18x18x32xbf16, #tpu.memory_space<vmem>>, vector<16x16x32xbf16>,
    %c0_35 = arith.constant 0 : index
    %c0_36 = arith.constant 0 : index
    %c0_37 = arith.constant 0 : index
    %19 = vector.load %arg7[%c0_35, %c0_36, %c0_37] : memref<18x18x32xbf16, #tpu.memory_space<vmem>>, vector<16x16x32xbf16>
    %20 = vector.shape_cast %19 : vector<16x16x32xbf16> to vector<256x32xbf16>
    %c0_38 = arith.constant 0 : index
    %c0_39 = arith.constant 0 : index
    %21 = vector.load %arg9[%c0_38, %c0_39] : memref<256x288xbf16, #tpu.memory_space<vmem>>, vector<256x32xbf16>
    tpu.vector_store %arg9[%c0_38, %c0_39], %20 {strides = array<i32>} : memref<256x288xbf16, #tpu.memory_space<vmem>>, vector<256x32xbf16>,
    %c0_40 = arith.constant 0 : index
    %c1_41 = arith.constant 1 : index
    %c0_42 = arith.constant 0 : index
    %22 = vector.load %arg7[%c0_40, %c1_41, %c0_42] : memref<18x18x32xbf16, #tpu.memory_space<vmem>>, vector<16x16x32xbf16>
    %23 = vector.shape_cast %22 : vector<16x16x32xbf16> to vector<256x32xbf16>
    %c0_43 = arith.constant 0 : index
    %c32 = arith.constant 32 : index
    %24 = vector.load %arg9[%c0_43, %c32] : memref<256x288xbf16, #tpu.memory_space<vmem>>, vector<256x32xbf16>
    tpu.vector_store %arg9[%c0_43, %c32], %23 {strides = array<i32>} : memref<256x288xbf16, #tpu.memory_space<vmem>>, vector<256x32xbf16>,
    %c0_44 = arith.constant 0 : index
    %c2 = arith.constant 2 : index
    %c0_45 = arith.constant 0 : index
    %25 = vector.load %arg7[%c0_44, %c2, %c0_45] : memref<18x18x32xbf16, #tpu.memory_space<vmem>>, vector<16x16x32xbf16>
    %26 = vector.shape_cast %25 : vector<16x16x32xbf16> to vector<256x32xbf16>
    %c0_46 = arith.constant 0 : index
    %c64 = arith.constant 64 : index
    %27 = vector.load %arg9[%c0_46, %c64] : memref<256x288xbf16, #tpu.memory_space<vmem>>, vector<256x32xbf16>
    tpu.vector_store %arg9[%c0_46, %c64], %26 {strides = array<i32>} : memref<256x288xbf16, #tpu.memory_space<vmem>>, vector<256x32xbf16>,
    %c1_47 = arith.constant 1 : index
    %c0_48 = arith.constant 0 : index
    %c0_49 = arith.constant 0 : index
    %28 = vector.load %arg7[%c1_47, %c0_48, %c0_49] : memref<18x18x32xbf16, #tpu.memory_space<vmem>>, vector<16x16x32xbf16>
    %29 = vector.shape_cast %28 : vector<16x16x32xbf16> to vector<256x32xbf16>
    %c0_50 = arith.constant 0 : index
    %c96 = arith.constant 96 : index
    %30 = vector.load %arg9[%c0_50, %c96] : memref<256x288xbf16, #tpu.memory_space<vmem>>, vector<256x32xbf16>
    tpu.vector_store %arg9[%c0_50, %c96], %29 {strides = array<i32>} : memref<256x288xbf16, #tpu.memory_space<vmem>>, vector<256x32xbf16>,
    %c1_51 = arith.constant 1 : index
    %c1_52 = arith.constant 1 : index
    %c0_53 = arith.constant 0 : index
    %31 = vector.load %arg7[%c1_51, %c1_52, %c0_53] : memref<18x18x32xbf16, #tpu.memory_space<vmem>>, vector<16x16x32xbf16>
    %32 = vector.shape_cast %31 : vector<16x16x32xbf16> to vector<256x32xbf16>
    %c0_54 = arith.constant 0 : index
    %c128 = arith.constant 128 : index
    %33 = vector.load %arg9[%c0_54, %c128] : memref<256x288xbf16, #tpu.memory_space<vmem>>, vector<256x32xbf16>
    tpu.vector_store %arg9[%c0_54, %c128], %32 {strides = array<i32>} : memref<256x288xbf16, #tpu.memory_space<vmem>>, vector<256x32xbf16>,
    %c1_55 = arith.constant 1 : index
    %c2_56 = arith.constant 2 : index
    %c0_57 = arith.constant 0 : index
    %34 = vector.load %arg7[%c1_55, %c2_56, %c0_57] : memref<18x18x32xbf16, #tpu.memory_space<vmem>>, vector<16x16x32xbf16>
    %35 = vector.shape_cast %34 : vector<16x16x32xbf16> to vector<256x32xbf16>
    %c0_58 = arith.constant 0 : index
    %c160 = arith.constant 160 : index
    %36 = vector.load %arg9[%c0_58, %c160] : memref<256x288xbf16, #tpu.memory_space<vmem>>, vector<256x32xbf16>
    tpu.vector_store %arg9[%c0_58, %c160], %35 {strides = array<i32>} : memref<256x288xbf16, #tpu.memory_space<vmem>>, vector<256x32xbf16>,
    %c2_59 = arith.constant 2 : index
    %c0_60 = arith.constant 0 : index
    %c0_61 = arith.constant 0 : index
    %37 = vector.load %arg7[%c2_59, %c0_60, %c0_61] : memref<18x18x32xbf16, #tpu.memory_space<vmem>>, vector<16x16x32xbf16>
    %38 = vector.shape_cast %37 : vector<16x16x32xbf16> to vector<256x32xbf16>
    %c0_62 = arith.constant 0 : index
    %c192 = arith.constant 192 : index
    %39 = vector.load %arg9[%c0_62, %c192] : memref<256x288xbf16, #tpu.memory_space<vmem>>, vector<256x32xbf16>
    tpu.vector_store %arg9[%c0_62, %c192], %38 {strides = array<i32>} : memref<256x288xbf16, #tpu.memory_space<vmem>>, vector<256x32xbf16>,
    %c2_63 = arith.constant 2 : index
    %c1_64 = arith.constant 1 : index
    %c0_65 = arith.constant 0 : index
    %40 = vector.load %arg7[%c2_63, %c1_64, %c0_65] : memref<18x18x32xbf16, #tpu.memory_space<vmem>>, vector<16x16x32xbf16>
    %41 = vector.shape_cast %40 : vector<16x16x32xbf16> to vector<256x32xbf16>
    %c0_66 = arith.constant 0 : index
    %c224 = arith.constant 224 : index
    %42 = vector.load %arg9[%c0_66, %c224] : memref<256x288xbf16, #tpu.memory_space<vmem>>, vector<256x32xbf16>
    tpu.vector_store %arg9[%c0_66, %c224], %41 {strides = array<i32>} : memref<256x288xbf16, #tpu.memory_space<vmem>>, vector<256x32xbf16>,
    %c2_67 = arith.constant 2 : index
    %c2_68 = arith.constant 2 : index
    %c0_69 = arith.constant 0 : index
    %43 = vector.load %arg7[%c2_67, %c2_68, %c0_69] : memref<18x18x32xbf16, #tpu.memory_space<vmem>>, vector<16x16x32xbf16>
    %44 = vector.shape_cast %43 : vector<16x16x32xbf16> to vector<256x32xbf16>
    %c0_70 = arith.constant 0 : index
    %c256 = arith.constant 256 : index
    %45 = vector.load %arg9[%c0_70, %c256] : memref<256x288xbf16, #tpu.memory_space<vmem>>, vector<256x32xbf16>
    tpu.vector_store %arg9[%c0_70, %c256], %44 {strides = array<i32>} : memref<256x288xbf16, #tpu.memory_space<vmem>>, vector<256x32xbf16>,
    %c0_71 = arith.constant 0 : index
    %c0_72 = arith.constant 0 : index
    %46 = vector.load %arg9[%c0_71, %c0_72] : memref<256x288xbf16, #tpu.memory_space<vmem>>, vector<256x288xbf16>
    %c0_73 = arith.constant 0 : index
    %c0_74 = arith.constant 0 : index
    %47 = vector.load %arg2[%c0_73, %c0_74] : memref<288x32xbf16, #tpu.memory_space<vmem>>, vector<288x32xbf16>
    %cst_75 = arith.constant dense<0.000000e+00> : vector<256x32xf32>
    %48 = tpu.matmul %46, %47, %cst_75 {dimension_numbers = #tpu.dot_dimension_numbers<[1], [0], [0], [1], [0, 0, 1, 1], [], []>} : vector<256x288xbf16>, vector<288x32xbf16>, vector<256x32xf32> -> vector<256x32xf32>
    %c0_76 = arith.constant 0 : index
    %c0_77 = arith.constant 0 : index
    %49 = vector.load %arg3[%c0_76, %c0_77] : memref<1x32xf32, #tpu.memory_space<vmem>>, vector<1x32xf32>
    %50 = vector.broadcast %49 : vector<1x32xf32> to vector<256x32xf32>
    %51 = arith.addf %48, %50 : vector<256x32xf32>
    %cst_78 = arith.constant 0.000000e+00 : f32
    %52 = vector.broadcast %cst_78 : f32 to vector<256x32xf32>
    %53 = arith.maximumf %51, %52 : vector<256x32xf32>
    %54 = vector.shape_cast %53 : vector<256x32xf32> to vector<16x16x32xf32>
    %55 = arith.truncf %54 : vector<16x16x32xf32> to vector<16x16x32xbf16>
    %c1_79 = arith.constant 1 : index
    %c1_80 = arith.constant 1 : index
    %c0_81 = arith.constant 0 : index
    %56 = vector.load %arg8[%c1_79, %c1_80, %c0_81] : memref<18x18x32xbf16, #tpu.memory_space<vmem>>, vector<16x16x32xbf16>
    tpu.vector_store %arg8[%c1_79, %c1_80, %c0_81], %55 {strides = array<i32>} : memref<18x18x32xbf16, #tpu.memory_space<vmem>>, vector<16x16x32xbf16>,
    %c0_82 = arith.constant 0 : index
    %c0_83 = arith.constant 0 : index
    %c0_84 = arith.constant 0 : index
    %57 = vector.load %arg8[%c0_82, %c0_83, %c0_84] : memref<18x18x32xbf16, #tpu.memory_space<vmem>>, vector<16x16x32xbf16>
    %58 = vector.shape_cast %57 : vector<16x16x32xbf16> to vector<256x32xbf16>
    %c0_85 = arith.constant 0 : index
    %c0_86 = arith.constant 0 : index
    %59 = vector.load %arg9[%c0_85, %c0_86] : memref<256x288xbf16, #tpu.memory_space<vmem>>, vector<256x32xbf16>
    tpu.vector_store %arg9[%c0_85, %c0_86], %58 {strides = array<i32>} : memref<256x288xbf16, #tpu.memory_space<vmem>>, vector<256x32xbf16>,
    %c0_87 = arith.constant 0 : index
    %c1_88 = arith.constant 1 : index
    %c0_89 = arith.constant 0 : index
    %60 = vector.load %arg8[%c0_87, %c1_88, %c0_89] : memref<18x18x32xbf16, #tpu.memory_space<vmem>>, vector<16x16x32xbf16>
    %61 = vector.shape_cast %60 : vector<16x16x32xbf16> to vector<256x32xbf16>
    %c0_90 = arith.constant 0 : index
    %c32_91 = arith.constant 32 : index
    %62 = vector.load %arg9[%c0_90, %c32_91] : memref<256x288xbf16, #tpu.memory_space<vmem>>, vector<256x32xbf16>
    tpu.vector_store %arg9[%c0_90, %c32_91], %61 {strides = array<i32>} : memref<256x288xbf16, #tpu.memory_space<vmem>>, vector<256x32xbf16>,
    %c0_92 = arith.constant 0 : index
    %c2_93 = arith.constant 2 : index
    %c0_94 = arith.constant 0 : index
    %63 = vector.load %arg8[%c0_92, %c2_93, %c0_94] : memref<18x18x32xbf16, #tpu.memory_space<vmem>>, vector<16x16x32xbf16>
    %64 = vector.shape_cast %63 : vector<16x16x32xbf16> to vector<256x32xbf16>
    %c0_95 = arith.constant 0 : index
    %c64_96 = arith.constant 64 : index
    %65 = vector.load %arg9[%c0_95, %c64_96] : memref<256x288xbf16, #tpu.memory_space<vmem>>, vector<256x32xbf16>
    tpu.vector_store %arg9[%c0_95, %c64_96], %64 {strides = array<i32>} : memref<256x288xbf16, #tpu.memory_space<vmem>>, vector<256x32xbf16>,
    %c1_97 = arith.constant 1 : index
    %c0_98 = arith.constant 0 : index
    %c0_99 = arith.constant 0 : index
    %66 = vector.load %arg8[%c1_97, %c0_98, %c0_99] : memref<18x18x32xbf16, #tpu.memory_space<vmem>>, vector<16x16x32xbf16>
    %67 = vector.shape_cast %66 : vector<16x16x32xbf16> to vector<256x32xbf16>
    %c0_100 = arith.constant 0 : index
    %c96_101 = arith.constant 96 : index
    %68 = vector.load %arg9[%c0_100, %c96_101] : memref<256x288xbf16, #tpu.memory_space<vmem>>, vector<256x32xbf16>
    tpu.vector_store %arg9[%c0_100, %c96_101], %67 {strides = array<i32>} : memref<256x288xbf16, #tpu.memory_space<vmem>>, vector<256x32xbf16>,
    %c1_102 = arith.constant 1 : index
    %c1_103 = arith.constant 1 : index
    %c0_104 = arith.constant 0 : index
    %69 = vector.load %arg8[%c1_102, %c1_103, %c0_104] : memref<18x18x32xbf16, #tpu.memory_space<vmem>>, vector<16x16x32xbf16>
    %70 = vector.shape_cast %69 : vector<16x16x32xbf16> to vector<256x32xbf16>
    %c0_105 = arith.constant 0 : index
    %c128_106 = arith.constant 128 : index
    %71 = vector.load %arg9[%c0_105, %c128_106] : memref<256x288xbf16, #tpu.memory_space<vmem>>, vector<256x32xbf16>
    tpu.vector_store %arg9[%c0_105, %c128_106], %70 {strides = array<i32>} : memref<256x288xbf16, #tpu.memory_space<vmem>>, vector<256x32xbf16>,
    %c1_107 = arith.constant 1 : index
    %c2_108 = arith.constant 2 : index
    %c0_109 = arith.constant 0 : index
    %72 = vector.load %arg8[%c1_107, %c2_108, %c0_109] : memref<18x18x32xbf16, #tpu.memory_space<vmem>>, vector<16x16x32xbf16>
    %73 = vector.shape_cast %72 : vector<16x16x32xbf16> to vector<256x32xbf16>
    %c0_110 = arith.constant 0 : index
    %c160_111 = arith.constant 160 : index
    %74 = vector.load %arg9[%c0_110, %c160_111] : memref<256x288xbf16, #tpu.memory_space<vmem>>, vector<256x32xbf16>
    tpu.vector_store %arg9[%c0_110, %c160_111], %73 {strides = array<i32>} : memref<256x288xbf16, #tpu.memory_space<vmem>>, vector<256x32xbf16>,
    %c2_112 = arith.constant 2 : index
    %c0_113 = arith.constant 0 : index
    %c0_114 = arith.constant 0 : index
    %75 = vector.load %arg8[%c2_112, %c0_113, %c0_114] : memref<18x18x32xbf16, #tpu.memory_space<vmem>>, vector<16x16x32xbf16>
    %76 = vector.shape_cast %75 : vector<16x16x32xbf16> to vector<256x32xbf16>
    %c0_115 = arith.constant 0 : index
    %c192_116 = arith.constant 192 : index
    %77 = vector.load %arg9[%c0_115, %c192_116] : memref<256x288xbf16, #tpu.memory_space<vmem>>, vector<256x32xbf16>
    tpu.vector_store %arg9[%c0_115, %c192_116], %76 {strides = array<i32>} : memref<256x288xbf16, #tpu.memory_space<vmem>>, vector<256x32xbf16>,
    %c2_117 = arith.constant 2 : index
    %c1_118 = arith.constant 1 : index
    %c0_119 = arith.constant 0 : index
    %78 = vector.load %arg8[%c2_117, %c1_118, %c0_119] : memref<18x18x32xbf16, #tpu.memory_space<vmem>>, vector<16x16x32xbf16>
    %79 = vector.shape_cast %78 : vector<16x16x32xbf16> to vector<256x32xbf16>
    %c0_120 = arith.constant 0 : index
    %c224_121 = arith.constant 224 : index
    %80 = vector.load %arg9[%c0_120, %c224_121] : memref<256x288xbf16, #tpu.memory_space<vmem>>, vector<256x32xbf16>
    tpu.vector_store %arg9[%c0_120, %c224_121], %79 {strides = array<i32>} : memref<256x288xbf16, #tpu.memory_space<vmem>>, vector<256x32xbf16>,
    %c2_122 = arith.constant 2 : index
    %c2_123 = arith.constant 2 : index
    %c0_124 = arith.constant 0 : index
    %81 = vector.load %arg8[%c2_122, %c2_123, %c0_124] : memref<18x18x32xbf16, #tpu.memory_space<vmem>>, vector<16x16x32xbf16>
    %82 = vector.shape_cast %81 : vector<16x16x32xbf16> to vector<256x32xbf16>
    %c0_125 = arith.constant 0 : index
    %c256_126 = arith.constant 256 : index
    %83 = vector.load %arg9[%c0_125, %c256_126] : memref<256x288xbf16, #tpu.memory_space<vmem>>, vector<256x32xbf16>
    tpu.vector_store %arg9[%c0_125, %c256_126], %82 {strides = array<i32>} : memref<256x288xbf16, #tpu.memory_space<vmem>>, vector<256x32xbf16>,
    %c0_127 = arith.constant 0 : index
    %c0_128 = arith.constant 0 : index
    %84 = vector.load %arg9[%c0_127, %c0_128] : memref<256x288xbf16, #tpu.memory_space<vmem>>, vector<256x288xbf16>
    %c0_129 = arith.constant 0 : index
    %c0_130 = arith.constant 0 : index
    %85 = vector.load %arg4[%c0_129, %c0_130] : memref<288x32xbf16, #tpu.memory_space<vmem>>, vector<288x32xbf16>
    %cst_131 = arith.constant dense<0.000000e+00> : vector<256x32xf32>
    %86 = tpu.matmul %84, %85, %cst_131 {dimension_numbers = #tpu.dot_dimension_numbers<[1], [0], [0], [1], [0, 0, 1, 1], [], []>} : vector<256x288xbf16>, vector<288x32xbf16>, vector<256x32xf32> -> vector<256x32xf32>
    %c0_132 = arith.constant 0 : index
    %c0_133 = arith.constant 0 : index
    %87 = vector.load %arg5[%c0_132, %c0_133] : memref<1x32xf32, #tpu.memory_space<vmem>>, vector<1x32xf32>
    %88 = vector.broadcast %87 : vector<1x32xf32> to vector<256x32xf32>
    %89 = arith.addf %86, %88 : vector<256x32xf32>
    %c0_134 = arith.constant 0 : index
    %c0_135 = arith.constant 0 : index
    %c0_136 = arith.constant 0 : index
    %c0_137 = arith.constant 0 : index
    %90 = vector.load %arg1[%c0_134, %c0_135, %c0_136, %c0_137] : memref<1x16x16x32xbf16, #tpu.memory_space<vmem>>, vector<1x16x16x32xbf16>
    %91 = vector.shape_cast %90 : vector<1x16x16x32xbf16> to vector<16x16x32xbf16>
    %92 = vector.shape_cast %91 : vector<16x16x32xbf16> to vector<256x32xbf16>
    %93 = arith.extf %92 : vector<256x32xbf16> to vector<256x32xf32>
    %94 = arith.addf %89, %93 : vector<256x32xf32>
    %cst_138 = arith.constant 0.000000e+00 : f32
    %95 = vector.broadcast %cst_138 : f32 to vector<256x32xf32>
    %96 = arith.maximumf %94, %95 : vector<256x32xf32>
    %c0_139 = arith.constant 0 : index
    %c0_140 = arith.constant 0 : index
    %c0_141 = arith.constant 0 : index
    %97 = vector.load %arg6[%c0_139, %c0_140, %c0_141] : memref<1x256x32xf32, #tpu.memory_space<vmem>>, vector<1x256x32xf32>
    %98 = vector.shape_cast %97 : vector<1x256x32xf32> to vector<256x32xf32>
    %99 = vector.shape_cast %96 : vector<256x32xf32> to vector<1x256x32xf32>
    tpu.vector_store %arg6[%c0_139, %c0_140, %c0_141], %99 {strides = array<i32>} : memref<1x256x32xf32, #tpu.memory_space<vmem>>, vector<1x256x32xf32>,
    return
  }
  func.func @transform_0(%arg0: i32) -> (i32, i32, i32, i32) {
    %c0_i32 = arith.constant 0 : i32
    %c0_i32_0 = arith.constant 0 : i32
    %c0_i32_1 = arith.constant 0 : i32
    %c0_i32_2 = arith.constant 0 : i32
    return %arg0, %c0_i32, %c0_i32_0, %c0_i32_1 : i32, i32, i32, i32
  }
  func.func @transform_1(%arg0: i32) -> (i32, i32) {
    %c0_i32 = arith.constant 0 : i32
    %c0_i32_0 = arith.constant 0 : i32
    %c0_i32_1 = arith.constant 0 : i32
    return %c0_i32, %c0_i32_0 : i32, i32
  }
  func.func @transform_2(%arg0: i32) -> (i32, i32) {
    %c0_i32 = arith.constant 0 : i32
    %c0_i32_0 = arith.constant 0 : i32
    %c0_i32_1 = arith.constant 0 : i32
    return %c0_i32, %c0_i32_0 : i32, i32
  }
  func.func @transform_3(%arg0: i32) -> (i32, i32) {
    %c0_i32 = arith.constant 0 : i32
    %c0_i32_0 = arith.constant 0 : i32
    %c0_i32_1 = arith.constant 0 : i32
    return %c0_i32, %c0_i32_0 : i32, i32
  }
  func.func @transform_4(%arg0: i32) -> (i32, i32) {
    %c0_i32 = arith.constant 0 : i32
    %c0_i32_0 = arith.constant 0 : i32
    %c0_i32_1 = arith.constant 0 : i32
    return %c0_i32, %c0_i32_0 : i32, i32
  }
  func.func @transform_5(%arg0: i32) -> (i32, i32, i32) {
    %c0_i32 = arith.constant 0 : i32
    %c0_i32_0 = arith.constant 0 : i32
    %c0_i32_1 = arith.constant 0 : i32
    return %arg0, %c0_i32, %c0_i32_0 : i32, i32, i32
  }
}

</mosaic_0001>

<llo_original>
// kernel: basic_block_enc.1
$region0: #{basic_block_enc.1}
  #allocation0 [shape = 'u32[]', space=smem, size = 0x4, offset = 0x4, fixed_abs, tag = 'smem constant byte address 0x4 - core index']
  #allocation1 [shape = 'u32[72,128]{1,0:T(1,128)}', space=vmem, size = 0x9000, scoped, tag = 'internal scratch']
  #allocation2 [shape = 'bf16[18,18,32]{2,1,0:T(8,128)(2,1)}', space=vmem, size = 0x1b000, scoped, tag = 'scratch operand']
  #allocation3 [shape = 'bf16[18,18,32]{2,1,0:T(8,128)(2,1)}', space=vmem, size = 0x1b000, scoped, tag = 'scratch operand']
  #allocation4 [shape = 'bf16[256,288]{1,0:T(8,128)(2,1)}', space=vmem, size = 0x30000, scoped, tag = 'scratch operand']
  %s0 = inlined_call_operand.vmem [shape: bf16[2,16,16,32], index: 0, kind: input, shape index: {}]
  %s1 = inlined_call_operand.vmem [shape: bf16[288,32], index: 1, kind: input, shape index: {}]
  %s2 = inlined_call_operand.vmem [shape: f32[1,32], index: 2, kind: input, shape index: {}]
  %s3 = inlined_call_operand.vmem [shape: bf16[288,32], index: 3, kind: input, shape index: {}]
  %s4 = inlined_call_operand.vmem [shape: f32[1,32], index: 4, kind: input, shape index: {}]
  %s5 = inlined_call_operand.hbm [shape: f32[2,256,32], index: 5, kind: output, shape index: {}]
  %s6 = sld [smem:[#allocation0]]
  $region53: #{basic_block_enc.1} parent=0
    _
  %s8 = ssub.s32 1, %s6
  %s9 = scalar_select 0, %s8, %s6
  $region1: #{basic_block_enc.1} parent=0
    #allocation5 [shape = 'u8[262144]{0}', space=vmem, size = 0x40000, scoped, tag = 'output window, operand 0']
    #allocation6 [shape = 's32[2]{0}', space=sflag, size = 0x8, scoped, tag = 'scoped memory for basic_block_enc.1']
    %10 = vsyncpa [#allocation6], 0
    %s11 = scalar_lea.sflag [#allocation6], 1
    %12 = vsyncpa %s11, 0
    loop: start=0, step=1, limit=4
    $region2: #{basic_block_enc.1} parent=1 // loop_pre_header
      _
    $region3: #{basic_block_enc.1} parent=1 // loop_header
      %s14 = sphi 0, %s18
      %p15 = scmp.ge.s32.totalorder %s14, 4
      %s24 = sphi 0, %s26
      %s27 = sphi 0, %s24
      %s28 = sphi 0, %s27
      %s44 = sphi 0, %s28
      %s48 = sphi 0, %s48
      %s50 = sphi 0, %s48
      %s51 = sphi 0, %s50
      %s65 = sphi 0, %s51
      %s69 = sphi 0, %s69
      %s71 = sphi 0, %s69
      %s72 = sphi 0, %s71
      %s86 = sphi 0, %s72
      %s90 = sphi 0, %s90
      %s92 = sphi 0, %s90
      %s93 = sphi 0, %s92
      %s107 = sphi 0, %s93
      %s111 = sphi 0, %s111
      %s113 = sphi 0, %s111
      %s114 = sphi 0, %s113
      %s128 = sphi 0, %s114
      %s134 = sphi 0, %s136
      %s137 = sphi 0, %s134
      %s138 = sphi 0, %s137
      %s154 = sphi 0, %s138
    $region4: #{basic_block_enc.1} parent=1 // loop_header_branch
      %17 = sbr.rel (%p15) target = $region8
    $region5: #{basic_block_enc.1} parent=1 // loop_body
      %s19 = ssub.s32 %s14, 1
      %s20 = ssub.s32 %s14, 2
      %s21 = sadd.s32 %s14, 1
      %s22 = ssub.s32 %s14, %s21
      %p23 = scmp.eq.s32.totalorder %s22, 0
      %s25 = sadd.s32 %s24, 1
      %s26 = scalar_select %p23, %s24, %s25
      %p29 = pneg %p23
      %p30 = scmp.eq.s32.totalorder %s14, 1
      %p31 = por %p29, %p30
      %p32 = scmp.ne.s32.totalorder %s24, %s27
      %p33 = scmp.eq.s32.totalorder %s14, 0
      %p34 = por %p32, %p33
      %p35 = scmp.ne.s32.totalorder %s24, %s27
      %p36 = scmp.eq.s32.totalorder %s19, 1
      %p37 = por %p35, %p36
      %p38 = scmp.ne.s32.totalorder %s27, %s28
      %p39 = scmp.eq.s32.totalorder %s19, 0
      %p40 = por %p38, %p39
      %p41 = scmp.ne.s32.totalorder %s27, %s28
      %p42 = scmp.eq.s32.totalorder %s20, 1
      %p43 = por %p41, %p42
      %p45 = scmp.ne.s32.totalorder %s28, %s44
      %p46 = scmp.eq.s32.totalorder %s20, 0
      %p47 = por %p45, %p46
      %s49 = sadd.s32 %s48, 1
      %p52 = scmp.eq.s32.totalorder %s14, 1
      %p53 = scmp.ne.s32.totalorder %s48, %s50
      %p54 = scmp.eq.s32.totalorder %s14, 0
      %p55 = por %p53, %p54
      %p56 = scmp.ne.s32.totalorder %s48, %s50
      %p57 = scmp.eq.s32.totalorder %s19, 1
      %p58 = por %p56, %p57
      %p59 = scmp.ne.s32.totalorder %s50, %s51
      %p60 = scmp.eq.s32.totalorder %s19, 0
      %p61 = por %p59, %p60
      %p62 = scmp.ne.s32.totalorder %s50, %s51
      %p63 = scmp.eq.s32.totalorder %s20, 1
      %p64 = por %p62, %p63
      %p66 = scmp.ne.s32.totalorder %s51, %s65
      %p67 = scmp.eq.s32.totalorder %s20, 0
      %p68 = por %p66, %p67
      %s70 = sadd.s32 %s69, 1
      %p73 = scmp.eq.s32.totalorder %s14, 1
      %p74 = scmp.ne.s32.totalorder %s69, %s71
      %p75 = scmp.eq.s32.totalorder %s14, 0
      %p76 = por %p74, %p75
      %p77 = scmp.ne.s32.totalorder %s69, %s71
      %p78 = scmp.eq.s32.totalorder %s19, 1
      %p79 = por %p77, %p78
      %p80 = scmp.ne.s32.totalorder %s71, %s72
      %p81 = scmp.eq.s32.totalorder %s19, 0
      %p82 = por %p80, %p81
      %p83 = scmp.ne.s32.totalorder %s71, %s72
      %p84 = scmp.eq.s32.totalorder %s20, 1
      %p85 = por %p83, %p84
      %p87 = scmp.ne.s32.totalorder %s72, %s86
      %p88 = scmp.eq.s32.totalorder %s20, 0
      %p89 = por %p87, %p88
      %s91 = sadd.s32 %s90, 1
      %p94 = scmp.eq.s32.totalorder %s14, 1
      %p95 = scmp.ne.s32.totalorder %s90, %s92
      %p96 = scmp.eq.s32.totalorder %s14, 0
      %p97 = por %p95, %p96
      %p98 = scmp.ne.s32.totalorder %s90, %s92
      %p99 = scmp.eq.s32.totalorder %s19, 1
      %p100 = por %p98, %p99
      %p101 = scmp.ne.s32.totalorder %s92, %s93
      %p102 = scmp.eq.s32.totalorder %s19, 0
      %p103 = por %p101, %p102
      %p104 = scmp.ne.s32.totalorder %s92, %s93
      %p105 = scmp.eq.s32.totalorder %s20, 1
      %p106 = por %p104, %p105
      %p108 = scmp.ne.s32.totalorder %s93, %s107
      %p109 = scmp.eq.s32.totalorder %s20, 0
      %p110 = por %p108, %p109
      %s112 = sadd.s32 %s111, 1
      %p115 = scmp.eq.s32.totalorder %s14, 1
      %p116 = scmp.ne.s32.totalorder %s111, %s113
      %p117 = scmp.eq.s32.totalorder %s14, 0
      %p118 = por %p116, %p117
      %p119 = scmp.ne.s32.totalorder %s111, %s113
      %p120 = scmp.eq.s32.totalorder %s19, 1
      %p121 = por %p119, %p120
      %p122 = scmp.ne.s32.totalorder %s113, %s114
      %p123 = scmp.eq.s32.totalorder %s19, 0
      %p124 = por %p122, %p123
      %p125 = scmp.ne.s32.totalorder %s113, %s114
      %p126 = scmp.eq.s32.totalorder %s20, 1
      %p127 = por %p125, %p126
      %p129 = scmp.ne.s32.totalorder %s114, %s128
      %p130 = scmp.eq.s32.totalorder %s20, 0
      %p131 = por %p129, %p130
      %s132 = ssub.s32 %s14, %s21
      %p133 = scmp.eq.s32.totalorder %s132, 0
      %s135 = sadd.s32 %s134, 1
      %s136 = scalar_select %p133, %s134, %s135
      %p139 = pneg %p133
      %p140 = scmp.eq.s32.totalorder %s14, 1
      %p141 = por %p139, %p140
      %p142 = scmp.ne.s32.totalorder %s134, %s137
      %p143 = scmp.eq.s32.totalorder %s14, 0
      %p144 = por %p142, %p143
      %p145 = scmp.ne.s32.totalorder %s134, %s137
      %p146 = scmp.eq.s32.totalorder %s19, 1
      %p147 = por %p145, %p146
      %p148 = scmp.ne.s32.totalorder %s137, %s138
      %p149 = scmp.eq.s32.totalorder %s19, 0
      %p150 = por %p148, %p149
      %p151 = scmp.ne.s32.totalorder %s137, %s138
      %p152 = scmp.eq.s32.totalorder %s20, 1
      %p153 = por %p151, %p152
      %p155 = scmp.ne.s32.totalorder %s138, %s154
      %p156 = scmp.eq.s32.totalorder %s20, 0
      %p157 = por %p155, %p156
      %p158 = scmp.le.s32.totalorder 1, %s14
      %p159 = scmp.lt.s32.totalorder %s14, 3
      %p160 = pnand %p158, %p159
      %p161 = pneg %p160
      // Predicated region
      $region9: #{basic_block_enc.1} parent=5 // pred_check
        _
      $region10: #{basic_block_enc.1} parent=5 // pred_check_branch
        %163 = sbr.rel (%p160) target = $region12
      $region11: #{basic_block_enc.1} parent=5 // pred_region
        %s164 = ssub.s32 %s14, 1
        // Predicated region
        $region13: #{basic_block_enc.1} parent=11 // pred_check
          %p165 = pneg %p61
        $region14: #{basic_block_enc.1} parent=11 // pred_check_branch
          %167 = sbr.rel (%p165) target = $region16
        $region15: #{basic_block_enc.1} parent=11 // pred_region
          _
        $region16: #{basic_block_enc.1} parent=11 // pred_fallthru
          _
        // Predicated region
        $region17: #{basic_block_enc.1} parent=11 // pred_check
          %p168 = pneg %p82
        $region18: #{basic_block_enc.1} parent=11 // pred_check_branch
          %170 = sbr.rel (%p168) target = $region20
        $region19: #{basic_block_enc.1} parent=11 // pred_region
          _
        $region20: #{basic_block_enc.1} parent=11 // pred_fallthru
          _
        // Predicated region
        $region21: #{basic_block_enc.1} parent=11 // pred_check
          %p171 = pneg %p103
        $region22: #{basic_block_enc.1} parent=11 // pred_check_branch
          %173 = sbr.rel (%p171) target = $region24
        $region23: #{basic_block_enc.1} parent=11 // pred_region
          _
        $region24: #{basic_block_enc.1} parent=11 // pred_fallthru
          _
        // Predicated region
        $region25: #{basic_block_enc.1} parent=11 // pred_check
          %p174 = pneg %p124
        $region26: #{basic_block_enc.1} parent=11 // pred_check_branch
          %176 = sbr.rel (%p174) target = $region28
        $region27: #{basic_block_enc.1} parent=11 // pred_region
          _
        $region28: #{basic_block_enc.1} parent=11 // pred_fallthru
          _
      $region12: #{basic_block_enc.1} parent=5 // pred_fallthru
        _
      %p177 = scmp.lt.s32.totalorder %s14, 2
      // Predicated region
      $region29: #{basic_block_enc.1} parent=5 // pred_check
        %p178 = pneg %p177
      $region30: #{basic_block_enc.1} parent=5 // pred_check_branch
        %180 = sbr.rel (%p178) target = $region32
      $region31: #{basic_block_enc.1} parent=5 // pred_region
        // Predicated region
        $region33: #{basic_block_enc.1} parent=31 // pred_check
          %p181 = pneg %p34
        $region34: #{basic_block_enc.1} parent=31 // pred_check_branch
          %183 = sbr.rel (%p181) target = $region36
        $region35: #{basic_block_enc.1} parent=31 // pred_region
          %p184 = scmp.lt.s32.totalorder %s14, 1
          %s185 = scalar_select %p184, %s14, 1
          %s186 = smul.addr %s185, 32
          %s187 = smul.addr %s186, 4
          %s188 = scalar_lea.vmem %s0, %s187
        $region36: #{basic_block_enc.1} parent=31 // pred_fallthru
          _
      $region32: #{basic_block_enc.1} parent=5 // pred_fallthru
        _
      %p189 = scmp.le.s32.totalorder 1, %s14
      %p190 = scmp.lt.s32.totalorder %s14, 3
      %p191 = pnand %p189, %p190
      %p192 = pneg %p191
      // Predicated region
      $region37: #{basic_block_enc.1} parent=5 // pred_check
        _
      $region38: #{basic_block_enc.1} parent=5 // pred_check_branch
        %194 = sbr.rel (%p191) target = $region40
      $region39: #{basic_block_enc.1} parent=5 // pred_region
        %s195 = ssub.s32 %s14, 1
        %p196 = scmp.lt.s32.totalorder %s19, 1
        %s197 = scalar_select %p196, %s19, 1
        %s198 = smul.addr %s197, 32
        %s199 = smul.addr %s198, 4
        %s200 = scalar_lea.vmem %s0, %s199
        %p201 = pneg %p40
        %p202 = pneg %p37
        %p203 = pneg %p61
        %p204 = pneg %p58
        %p205 = pneg %p82
        %p206 = pneg %p79
        %p207 = pneg %p103
        %p208 = pneg %p100
        %p209 = pneg %p124
        %p210 = pneg %p121
        %p211 = pneg %p150
        %p212 = pneg %p147
        %s213 = sand.u32 %s137, 1
        %s214 = scalar_lea.sflag [#allocation6], %s213
        %s215 = sand.u32 %s137, 1
        %s216 = smul.addr %s215, 256
        %s217 = scalar_lea.vmem [#allocation5], %s216
        %p218 = scmp.lt.s32.totalorder %s19, 1
        %s219 = scalar_select %p218, %s19, 1
        %s220 = smul.addr %s219, 32
        %s221 = smul.addr %s220, 4
        %s222 = scalar_lea.vmem %s0, %s221
        %vm224 = vcmask 257024
        %225 = vst.msk [vmem:[#allocation2] sm:$0xf] %vm224, 0
        %226 = vst.msk [vmem:[#allocation2 + $0x4] sm:$0xf] %vm224, 0
        %vm227 = vcmask 253952
        %228 = vst.msk [vmem:[#allocation2 + $0x8] sm:$0x1] %vm227, 0
        %s229 = scalar_lea.vmem [#allocation2], 204
        %230 = vst.msk [vmem:[%s229] sm:$0xf] %vm224, 0
        %231 = vst.msk [vmem:[%s229 + $0x4] sm:$0xf] %vm224, 0
        %232 = vst.msk [vmem:[%s229 + $0x8] sm:$0x1] %vm227, 0
        %vm233 = vcmask 253952
        %vm234 = vsmask.f32 256
        %vm235 = vmand %vm233, %vm234
        %v236 = vld [vmem:[#allocation2] sm:$0x1]
        %v237 = vsel %vm235, 0, %v236
        %238 = vst [vmem:[#allocation2] sm:$0x1] %v237
        %v239 = vld [vmem:[#allocation2 + $0xc] sm:$0x1]
        %v240 = vsel %vm235, 0, %v239
        %241 = vst [vmem:[#allocation2 + $0xc] sm:$0x1] %v240
        %v242 = vld [vmem:[#allocation2 + $0x18] sm:$0x1]
        %v243 = vsel %vm235, 0, %v242
        %244 = vst [vmem:[#allocation2 + $0x18] sm:$0x1] %v243
        %v245 = vld [vmem:[#allocation2 + $0x24] sm:$0x1]
        %v246 = vsel %vm235, 0, %v245
        %247 = vst [vmem:[#allocation2 + $0x24] sm:$0x1] %v246
        %v248 = vld [vmem:[#allocation2 + $0x30] sm:$0x1]
        %v249 = vsel %vm235, 0, %v248
        %250 = vst [vmem:[#allocation2 + $0x30] sm:$0x1] %v249
        %v251 = vld [vmem:[#allocation2 + $0x3c] sm:$0x1]
        %v252 = vsel %vm235, 0, %v251
        %253 = vst [vmem:[#allocation2 + $0x3c] sm:$0x1] %v252
        %v254 = vld [vmem:[#allocation2 + $0x48] sm:$0x1]
        %v255 = vsel %vm235, 0, %v254
        %256 = vst [vmem:[#allocation2 + $0x48] sm:$0x1] %v255
        %v257 = vld [vmem:[#allocation2 + $0x54] sm:$0x1]
        %v258 = vsel %vm235, 0, %v257
        %259 = vst [vmem:[#allocation2 + $0x54] sm:$0x1] %v258
        %v260 = vld [vmem:[#allocation2 + $0x60] sm:$0x1]
        %v261 = vsel %vm235, 0, %v260
        %262 = vst [vmem:[#allocation2 + $0x60] sm:$0x1] %v261
        %v263 = vld [vmem:[#allocation2 + $0x6c] sm:$0x1]
        %v264 = vsel %vm235, 0, %v263
        %265 = vst [vmem:[#allocation2 + $0x6c] sm:$0x1] %v264
        %v266 = vld [vmem:[#allocation2 + $0x78] sm:$0x1]
        %v267 = vsel %vm235, 0, %v266
        %268 = vst [vmem:[#allocation2 + $0x78] sm:$0x1] %v267
        %v269 = vld [vmem:[#allocation2 + $0x84] sm:$0x1]
        %v270 = vsel %vm235, 0, %v269
        %271 = vst [vmem:[#allocation2 + $0x84] sm:$0x1] %v270
        %v272 = vld [vmem:[#allocation2 + $0x90] sm:$0x1]
        %v273 = vsel %vm235, 0, %v272
        %274 = vst [vmem:[#allocation2 + $0x90] sm:$0x1] %v273
        %v275 = vld [vmem:[#allocation2 + $0x9c] sm:$0x1]
        %v276 = vsel %vm235, 0, %v275
        %277 = vst [vmem:[#allocation2 + $0x9c] sm:$0x1] %v276
        %v278 = vld [vmem:[#allocation2 + $0xa8] sm:$0x1]
        %v279 = vsel %vm235, 0, %v278
        %280 = vst [vmem:[#allocation2 + $0xa8] sm:$0x1] %v279
        %v281 = vld [vmem:[#allocation2 + $0xb4] sm:$0x1]
        %v282 = vsel %vm235, 0, %v281
        %283 = vst [vmem:[#allocation2 + $0xb4] sm:$0x1] %v282
        %v284 = vld [vmem:[#allocation2 + $0xc0] sm:$0x1]
        %v285 = vsel %vm235, 0, %v284
        %286 = vst [vmem:[#allocation2 + $0xc0] sm:$0x1] %v285
        %v287 = vld [vmem:[#allocation2 + $0xcc] sm:$0x1]
        %v288 = vsel %vm235, 0, %v287
        %289 = vst [vmem:[#allocation2 + $0xcc] sm:$0x1] %v288
        %vm290 = vsmask.f32 7938
        %vm291 = vmand %vm233, %vm290
        %v292 = vld [vmem:[#allocation2 + $0x8] sm:$0x1]
        %v293 = vsel %vm291, 0, %v292
        %294 = vst [vmem:[#allocation2 + $0x8] sm:$0x1] %v293
        %v295 = vld [vmem:[#allocation2 + $0x14] sm:$0x1]
        %v296 = vsel %vm291, 0, %v295
        %297 = vst [vmem:[#allocation2 + $0x14] sm:$0x1] %v296
        %v298 = vld [vmem:[#allocation2 + $0x20] sm:$0x1]
        %v299 = vsel %vm291, 0, %v298
        %300 = vst [vmem:[#allocation2 + $0x20] sm:$0x1] %v299
        %v301 = vld [vmem:[#allocation2 + $0x2c] sm:$0x1]
        %v302 = vsel %vm291, 0, %v301
        %303 = vst [vmem:[#allocation2 + $0x2c] sm:$0x1] %v302
        %v304 = vld [vmem:[#allocation2 + $0x38] sm:$0x1]
        %v305 = vsel %vm291, 0, %v304
        %306 = vst [vmem:[#allocation2 + $0x38] sm:$0x1] %v305
        %v307 = vld [vmem:[#allocation2 + $0x44] sm:$0x1]
        %v308 = vsel %vm291, 0, %v307
        %309 = vst [vmem:[#allocation2 + $0x44] sm:$0x1] %v308
        %v310 = vld [vmem:[#allocation2 + $0x50] sm:$0x1]
        %v311 = vsel %vm291, 0, %v310
        %312 = vst [vmem:[#allocation2 + $0x50] sm:$0x1] %v311
        %v313 = vld [vmem:[#allocation2 + $0x5c] sm:$0x1]
        %v314 = vsel %vm291, 0, %v313
        %315 = vst [vmem:[#allocation2 + $0x5c] sm:$0x1] %v314
        %v316 = vld [vmem:[#allocation2 + $0x68] sm:$0x1]
        %v317 = vsel %vm291, 0, %v316
        %318 = vst [vmem:[#allocation2 + $0x68] sm:$0x1] %v317
        %v319 = vld [vmem:[#allocation2 + $0x74] sm:$0x1]
        %v320 = vsel %vm291, 0, %v319
        %321 = vst [vmem:[#allocation2 + $0x74] sm:$0x1] %v320
        %v322 = vld [vmem:[#allocation2 + $0x80] sm:$0x1]
        %v323 = vsel %vm291, 0, %v322
        %324 = vst [vmem:[#allocation2 + $0x80] sm:$0x1] %v323
        %v325 = vld [vmem:[#allocation2 + $0x8c] sm:$0x1]
        %v326 = vsel %vm291, 0, %v325
        %327 = vst [vmem:[#allocation2 + $0x8c] sm:$0x1] %v326
        %v328 = vld [vmem:[#allocation2 + $0x98] sm:$0x1]
        %v329 = vsel %vm291, 0, %v328
        %330 = vst [vmem:[#allocation2 + $0x98] sm:$0x1] %v329
        %v331 = vld [vmem:[#allocation2 + $0xa4] sm:$0x1]
        %v332 = vsel %vm291, 0, %v331
        %333 = vst [vmem:[#allocation2 + $0xa4] sm:$0x1] %v332
        %v334 = vld [vmem:[#allocation2 + $0xb0] sm:$0x1]
        %v335 = vsel %vm291, 0, %v334
        %336 = vst [vmem:[#allocation2 + $0xb0] sm:$0x1] %v335
        %v337 = vld [vmem:[#allocation2 + $0xbc] sm:$0x1]
        %v338 = vsel %vm291, 0, %v337
        %339 = vst [vmem:[#allocation2 + $0xbc] sm:$0x1] %v338
        %v340 = vld [vmem:[#allocation2 + $0xc8] sm:$0x1]
        %v341 = vsel %vm291, 0, %v340
        %342 = vst [vmem:[#allocation2 + $0xc8] sm:$0x1] %v341
        %v343 = vld [vmem:[#allocation2 + $0xd4] sm:$0x1]
        %v344 = vsel %vm291, 0, %v343
        %345 = vst [vmem:[#allocation2 + $0xd4] sm:$0x1] %v344
        %346 = vst.msk [vmem:[#allocation3] sm:$0xf] %vm224, 0
        %347 = vst.msk [vmem:[#allocation3 + $0x4] sm:$0xf] %vm224, 0
        %348 = vst.msk [vmem:[#allocation3 + $0x8] sm:$0x1] %vm227, 0
        %s349 = scalar_lea.vmem [#allocation3], 204
        %350 = vst.msk [vmem:[%s349] sm:$0xf] %vm224, 0
        %351 = vst.msk [vmem:[%s349 + $0x4] sm:$0xf] %vm224, 0
        %352 = vst.msk [vmem:[%s349 + $0x8] sm:$0x1] %vm227, 0
        %v353 = vld [vmem:[#allocation3] sm:$0x1]
        %v354 = vsel %vm235, 0, %v353
        %355 = vst [vmem:[#allocation3] sm:$0x1] %v354
        %v356 = vld [vmem:[#allocation3 + $0xc] sm:$0x1]
        %v357 = vsel %vm235, 0, %v356
        %358 = vst [vmem:[#allocation3 + $0xc] sm:$0x1] %v357
        %v359 = vld [vmem:[#allocation3 + $0x18] sm:$0x1]
        %v360 = vsel %vm235, 0, %v359
        %361 = vst [vmem:[#allocation3 + $0x18] sm:$0x1] %v360
        %v362 = vld [vmem:[#allocation3 + $0x24] sm:$0x1]
        %v363 = vsel %vm235, 0, %v362
        %364 = vst [vmem:[#allocation3 + $0x24] sm:$0x1] %v363
        %v365 = vld [vmem:[#allocation3 + $0x30] sm:$0x1]
        %v366 = vsel %vm235, 0, %v365
        %367 = vst [vmem:[#allocation3 + $0x30] sm:$0x1] %v366
        %v368 = vld [vmem:[#allocation3 + $0x3c] sm:$0x1]
        %v369 = vsel %vm235, 0, %v368
        %370 = vst [vmem:[#allocation3 + $0x3c] sm:$0x1] %v369
        %v371 = vld [vmem:[#allocation3 + $0x48] sm:$0x1]
        %v372 = vsel %vm235, 0, %v371
        %373 = vst [vmem:[#allocation3 + $0x48] sm:$0x1] %v372
        %v374 = vld [vmem:[#allocation3 + $0x54] sm:$0x1]
        %v375 = vsel %vm235, 0, %v374
        %376 = vst [vmem:[#allocation3 + $0x54] sm:$0x1] %v375
        %v377 = vld [vmem:[#allocation3 + $0x60] sm:$0x1]
        %v378 = vsel %vm235, 0, %v377
        %379 = vst [vmem:[#allocation3 + $0x60] sm:$0x1] %v378
        %v380 = vld [vmem:[#allocation3 + $0x6c] sm:$0x1]
        %v381 = vsel %vm235, 0, %v380
        %382 = vst [vmem:[#allocation3 + $0x6c] sm:$0x1] %v381
        %v383 = vld [vmem:[#allocation3 + $0x78] sm:$0x1]
        %v384 = vsel %vm235, 0, %v383
        %385 = vst [vmem:[#allocation3 + $0x78] sm:$0x1] %v384
        %v386 = vld [vmem:[#allocation3 + $0x84] sm:$0x1]
        %v387 = vsel %vm235, 0, %v386
        %388 = vst [vmem:[#allocation3 + $0x84] sm:$0x1] %v387
        %v389 = vld [vmem:[#allocation3 + $0x90] sm:$0x1]
        %v390 = vsel %vm235, 0, %v389
        %391 = vst [vmem:[#allocation3 + $0x90] sm:$0x1] %v390
        %v392 = vld [vmem:[#allocation3 + $0x9c] sm:$0x1]
        %v393 = vsel %vm235, 0, %v392
        %394 = vst [vmem:[#allocation3 + $0x9c] sm:$0x1] %v393
        %v395 = vld [vmem:[#allocation3 + $0xa8] sm:$0x1]
        %v396 = vsel %vm235, 0, %v395
        %397 = vst [vmem:[#allocation3 + $0xa8] sm:$0x1] %v396
        %v398 = vld [vmem:[#allocation3 + $0xb4] sm:$0x1]
        %v399 = vsel %vm235, 0, %v398
        %400 = vst [vmem:[#allocation3 + $0xb4] sm:$0x1] %v399
        %v401 = vld [vmem:[#allocation3 + $0xc0] sm:$0x1]
        %v402 = vsel %vm235, 0, %v401
        %403 = vst [vmem:[#allocation3 + $0xc0] sm:$0x1] %v402
        %v404 = vld [vmem:[#allocation3 + $0xcc] sm:$0x1]
        %v405 = vsel %vm235, 0, %v404
        %406 = vst [vmem:[#allocation3 + $0xcc] sm:$0x1] %v405
        %v407 = vld [vmem:[#allocation3 + $0x8] sm:$0x1]
        %v408 = vsel %vm291, 0, %v407
        %409 = vst [vmem:[#allocation3 + $0x8] sm:$0x1] %v408
        %v410 = vld [vmem:[#allocation3 + $0x14] sm:$0x1]
        %v411 = vsel %vm291, 0, %v410
        %412 = vst [vmem:[#allocation3 + $0x14] sm:$0x1] %v411
        %v413 = vld [vmem:[#allocation3 + $0x20] sm:$0x1]
        %v414 = vsel %vm291, 0, %v413
        %415 = vst [vmem:[#allocation3 + $0x20] sm:$0x1] %v414
        %v416 = vld [vmem:[#allocation3 + $0x2c] sm:$0x1]
        %v417 = vsel %vm291, 0, %v416
        %418 = vst [vmem:[#allocation3 + $0x2c] sm:$0x1] %v417
        %v419 = vld [vmem:[#allocation3 + $0x38] sm:$0x1]
        %v420 = vsel %vm291, 0, %v419
        %421 = vst [vmem:[#allocation3 + $0x38] sm:$0x1] %v420
        %v422 = vld [vmem:[#allocation3 + $0x44] sm:$0x1]
        %v423 = vsel %vm291, 0, %v422
        %424 = vst [vmem:[#allocation3 + $0x44] sm:$0x1] %v423
        %v425 = vld [vmem:[#allocation3 + $0x50] sm:$0x1]
        %v426 = vsel %vm291, 0, %v425
        %427 = vst [vmem:[#allocation3 + $0x50] sm:$0x1] %v426
        %v428 = vld [vmem:[#allocation3 + $0x5c] sm:$0x1]
        %v429 = vsel %vm291, 0, %v428
        %430 = vst [vmem:[#allocation3 + $0x5c] sm:$0x1] %v429
        %v431 = vld [vmem:[#allocation3 + $0x68] sm:$0x1]
        %v432 = vsel %vm291, 0, %v431
        %433 = vst [vmem:[#allocation3 + $0x68] sm:$0x1] %v432
        %v434 = vld [vmem:[#allocation3 + $0x74] sm:$0x1]
        %v435 = vsel %vm291, 0, %v434
        %436 = vst [vmem:[#allocation3 + $0x74] sm:$0x1] %v435
        %v437 = vld [vmem:[#allocation3 + $0x80] sm:$0x1]
        %v438 = vsel %vm291, 0, %v437
        %439 = vst [vmem:[#allocation3 + $0x80] sm:$0x1] %v438
        %v440 = vld [vmem:[#allocation3 + $0x8c] sm:$0x1]
        %v441 = vsel %vm291, 0, %v440
        %442 = vst [vmem:[#allocation3 + $0x8c] sm:$0x1] %v441
        %v443 = vld [vmem:[#allocation3 + $0x98] sm:$0x1]
        %v444 = vsel %vm291, 0, %v443
        %445 = vst [vmem:[#allocation3 + $0x98] sm:$0x1] %v444
        %v446 = vld [vmem:[#allocation3 + $0xa4] sm:$0x1]
        %v447 = vsel %vm291, 0, %v446
        %448 = vst [vmem:[#allocation3 + $0xa4] sm:$0x1] %v447
        %v449 = vld [vmem:[#allocation3 + $0xb0] sm:$0x1]
        %v450 = vsel %vm291, 0, %v449
        %451 = vst [vmem:[#allocation3 + $0xb0] sm:$0x1] %v450
        %v452 = vld [vmem:[#allocation3 + $0xbc] sm:$0x1]
        %v453 = vsel %vm291, 0, %v452
        %454 = vst [vmem:[#allocation3 + $0xbc] sm:$0x1] %v453
        %v455 = vld [vmem:[#allocation3 + $0xc8] sm:$0x1]
        %v456 = vsel %vm291, 0, %v455
        %457 = vst [vmem:[#allocation3 + $0xc8] sm:$0x1] %v456
        %v458 = vld [vmem:[#allocation3 + $0xd4] sm:$0x1]
        %v459 = vsel %vm291, 0, %v458
        %460 = vst [vmem:[#allocation3 + $0xd4] sm:$0x1] %v459
        %v461 = vld [vmem:[%s222] sm:$0xf]
        %v462 = vld [vmem:[%s222 + $0x4] sm:$0xf]
        %v463 = vld [vmem:[%s222 + $0x8] sm:$0xf]
        %v464 = vld [vmem:[%s222 + $0xc] sm:$0xf]
        %v465 = vld [vmem:[%s222 + $0x10] sm:$0xf]
        %v466 = vld [vmem:[%s222 + $0x14] sm:$0xf]
        %v467 = vld [vmem:[%s222 + $0x18] sm:$0xf]
        %v468 = vld [vmem:[%s222 + $0x1c] sm:$0xf]
        %v469 = vld [vmem:[%s222 + $0x20] sm:$0xf]
        %v470 = vld [vmem:[%s222 + $0x24] sm:$0xf]
        %v471 = vld [vmem:[%s222 + $0x28] sm:$0xf]
        %v472 = vld [vmem:[%s222 + $0x2c] sm:$0xf]
        %v473 = vld [vmem:[%s222 + $0x30] sm:$0xf]
        %v474 = vld [vmem:[%s222 + $0x34] sm:$0xf]
        %v475 = vld [vmem:[%s222 + $0x38] sm:$0xf]
        %v476 = vld [vmem:[%s222 + $0x3c] sm:$0xf]
        %v477 = vld [vmem:[%s222 + $0x40] sm:$0xf]
        %v478 = vld [vmem:[%s222 + $0x44] sm:$0xf]
        %v479 = vld [vmem:[%s222 + $0x48] sm:$0xf]
        %v480 = vld [vmem:[%s222 + $0x4c] sm:$0xf]
        %v481 = vld [vmem:[%s222 + $0x50] sm:$0xf]
        %v482 = vld [vmem:[%s222 + $0x54] sm:$0xf]
        %v483 = vld [vmem:[%s222 + $0x58] sm:$0xf]
        %v484 = vld [vmem:[%s222 + $0x5c] sm:$0xf]
        %v485 = vld [vmem:[%s222 + $0x60] sm:$0xf]
        %v486 = vld [vmem:[%s222 + $0x64] sm:$0xf]
        %v487 = vld [vmem:[%s222 + $0x68] sm:$0xf]
        %v488 = vld [vmem:[%s222 + $0x6c] sm:$0xf]
        %v489 = vld [vmem:[%s222 + $0x70] sm:$0xf]
        %v490 = vld [vmem:[%s222 + $0x74] sm:$0xf]
        %v491 = vld [vmem:[%s222 + $0x78] sm:$0xf]
        %v492 = vld [vmem:[%s222 + $0x7c] sm:$0xf]
        %vm493 = vsmask.f32 4368
        %vm494 = vmor %vm234, %vm493
        %v496 = vshrl.u32 %v461, 16
        %v498 = vrot.slane %v496, 7
        %v499 = vshll.u32 %v461, 16
        %v501 = vor.u32 %v498, %v499
        %v502 = vrot.slane %v498, 4
        %v504 = vshrl.u32 %v462, 16
        %v506 = vrot.slane %v504, 7
        %v507 = vshll.u32 %v462, 16
        %v509 = vor.u32 %v506, %v507
        %v510 = vsel %vm494, %v502, %v509
        %v511 = vrot.slane %v506, 4
        %v513 = vshrl.u32 %v463, 16
        %v515 = vrot.slane %v513, 7
        %v516 = vshll.u32 %v463, 16
        %v518 = vor.u32 %v515, %v516
        %v519 = vrot.slane %v515, 4
        %v521 = vshrl.u32 %v464, 16
        %v523 = vrot.slane %v521, 7
        %v524 = vshll.u32 %v464, 16
        %v526 = vor.u32 %v523, %v524
        %v527 = vsel %vm494, %v519, %v526
        %v528 = vrot.slane %v523, 4
        %v530 = vshrl.u32 %v465, 16
        %v532 = vrot.slane %v530, 7
        %v533 = vshll.u32 %v465, 16
        %v535 = vor.u32 %v532, %v533
        %v536 = vrot.slane %v532, 4
        %v538 = vshrl.u32 %v466, 16
        %v540 = vrot.slane %v538, 7
        %v541 = vshll.u32 %v466, 16
        %v543 = vor.u32 %v540, %v541
        %v544 = vsel %vm494, %v536, %v543
        %v545 = vrot.slane %v540, 4
        %v547 = vshrl.u32 %v467, 16
        %v549 = vrot.slane %v547, 7
        %v550 = vshll.u32 %v467, 16
        %v552 = vor.u32 %v549, %v550
        %v553 = vrot.slane %v549, 4
        %v555 = vshrl.u32 %v468, 16
        %v557 = vrot.slane %v555, 7
        %v558 = vshll.u32 %v468, 16
        %v560 = vor.u32 %v557, %v558
        %v561 = vsel %vm494, %v553, %v560
        %v562 = vrot.slane %v557, 4
        %v564 = vshrl.u32 %v469, 16
        %v566 = vrot.slane %v564, 7
        %v567 = vshll.u32 %v469, 16
        %v569 = vor.u32 %v566, %v567
        %v570 = vrot.slane %v566, 4
        %v572 = vshrl.u32 %v470, 16
        %v574 = vrot.slane %v572, 7
        %v575 = vshll.u32 %v470, 16
        %v577 = vor.u32 %v574, %v575
        %v578 = vsel %vm494, %v570, %v577
        %v579 = vrot.slane %v574, 4
        %v581 = vshrl.u32 %v471, 16
        %v583 = vrot.slane %v581, 7
        %v584 = vshll.u32 %v471, 16
        %v586 = vor.u32 %v583, %v584
        %v587 = vrot.slane %v583, 4
        %v589 = vshrl.u32 %v472, 16
        %v591 = vrot.slane %v589, 7
        %v592 = vshll.u32 %v472, 16
        %v594 = vor.u32 %v591, %v592
        %v595 = vsel %vm494, %v587, %v594
        %v596 = vrot.slane %v591, 4
        %v598 = vshrl.u32 %v473, 16
        %v600 = vrot.slane %v598, 7
        %v601 = vshll.u32 %v473, 16
        %v603 = vor.u32 %v600, %v601
        %v604 = vrot.slane %v600, 4
        %v606 = vshrl.u32 %v474, 16
        %v608 = vrot.slane %v606, 7
        %v609 = vshll.u32 %v474, 16
        %v611 = vor.u32 %v608, %v609
        %v612 = vsel %vm494, %v604, %v611
        %v613 = vrot.slane %v608, 4
        %v615 = vshrl.u32 %v475, 16
        %v617 = vrot.slane %v615, 7
        %v618 = vshll.u32 %v475, 16
        %v620 = vor.u32 %v617, %v618
        %v621 = vrot.slane %v617, 4
        %v623 = vshrl.u32 %v476, 16
        %v625 = vrot.slane %v623, 7
        %v626 = vshll.u32 %v476, 16
        %v628 = vor.u32 %v625, %v626
        %v629 = vsel %vm494, %v621, %v628
        %v630 = vrot.slane %v625, 4
        %v632 = vshrl.u32 %v477, 16
        %v634 = vrot.slane %v632, 7
        %v635 = vshll.u32 %v477, 16
        %v637 = vor.u32 %v634, %v635
        %v638 = vrot.slane %v634, 4
        %v640 = vshrl.u32 %v478, 16
        %v642 = vrot.slane %v640, 7
        %v643 = vshll.u32 %v478, 16
        %v645 = vor.u32 %v642, %v643
        %v646 = vsel %vm494, %v638, %v645
        %v647 = vrot.slane %v642, 4
        %v649 = vshrl.u32 %v479, 16
        %v651 = vrot.slane %v649, 7
        %v652 = vshll.u32 %v479, 16
        %v654 = vor.u32 %v651, %v652
        %v655 = vrot.slane %v651, 4
        %v657 = vshrl.u32 %v480, 16
        %v659 = vrot.slane %v657, 7
        %v660 = vshll.u32 %v480, 16
        %v662 = vor.u32 %v659, %v660
        %v663 = vsel %vm494, %v655, %v662
        %v664 = vrot.slane %v659, 4
        %v666 = vshrl.u32 %v481, 16
        %v668 = vrot.slane %v666, 7
        %v669 = vshll.u32 %v481, 16
        %v671 = vor.u32 %v668, %v669
        %v672 = vrot.slane %v668, 4
        %v674 = vshrl.u32 %v482, 16
        %v676 = vrot.slane %v674, 7
        %v677 = vshll.u32 %v482, 16
        %v679 = vor.u32 %v676, %v677
        %v680 = vsel %vm494, %v672, %v679
        %v681 = vrot.slane %v676, 4
        %v683 = vshrl.u32 %v483, 16
        %v685 = vrot.slane %v683, 7
        %v686 = vshll.u32 %v483, 16
        %v688 = vor.u32 %v685, %v686
        %v689 = vrot.slane %v685, 4
        %v691 = vshrl.u32 %v484, 16
        %v693 = vrot.slane %v691, 7
        %v694 = vshll.u32 %v484, 16
        %v696 = vor.u32 %v693, %v694
        %v697 = vsel %vm494, %v689, %v696
        %v698 = vrot.slane %v693, 4
        %v700 = vshrl.u32 %v485, 16
        %v702 = vrot.slane %v700, 7
        %v703 = vshll.u32 %v485, 16
        %v705 = vor.u32 %v702, %v703
        %v706 = vrot.slane %v702, 4
        %v708 = vshrl.u32 %v486, 16
        %v710 = vrot.slane %v708, 7
        %v711 = vshll.u32 %v486, 16
        %v713 = vor.u32 %v710, %v711
        %v714 = vsel %vm494, %v706, %v713
        %v715 = vrot.slane %v710, 4
        %v717 = vshrl.u32 %v487, 16
        %v719 = vrot.slane %v717, 7
        %v720 = vshll.u32 %v487, 16
        %v722 = vor.u32 %v719, %v720
        %v723 = vrot.slane %v719, 4
        %v725 = vshrl.u32 %v488, 16
        %v727 = vrot.slane %v725, 7
        %v728 = vshll.u32 %v488, 16
        %v730 = vor.u32 %v727, %v728
        %v731 = vsel %vm494, %v723, %v730
        %v732 = vrot.slane %v727, 4
        %v734 = vshrl.u32 %v489, 16
        %v736 = vrot.slane %v734, 7
        %v737 = vshll.u32 %v489, 16
        %v739 = vor.u32 %v736, %v737
        %v740 = vrot.slane %v736, 4
        %v742 = vshrl.u32 %v490, 16
        %v744 = vrot.slane %v742, 7
        %v745 = vshll.u32 %v490, 16
        %v747 = vor.u32 %v744, %v745
        %v748 = vsel %vm494, %v740, %v747
        %v749 = vrot.slane %v744, 4
        %v751 = vshrl.u32 %v491, 16
        %v753 = vrot.slane %v751, 7
        %v754 = vshll.u32 %v491, 16
        %v756 = vor.u32 %v753, %v754
        %v757 = vrot.slane %v753, 4
        %v759 = vshrl.u32 %v492, 16
        %v761 = vrot.slane %v759, 7
        %v762 = vshll.u32 %v492, 16
        %v764 = vor.u32 %v761, %v762
        %v765 = vsel %vm494, %v757, %v764
        %v766 = vrot.slane %v761, 4
        %s815 = scalar_lea.vmem [#allocation2], 12
        %vm816 = vcmask 257024
        %vm817 = vmand %vm816, %vm290
        %v818 = vld [vmem:[%s815] sm:$0xf]
        %v819 = vsel %vm817, %v501, %v818
        %820 = vst [vmem:[%s815] sm:$0xf] %v819
        %821 = vst.msk [vmem:[%s815 + $0x4] sm:$0xf] %vm224, %v510
        %v822 = vld [vmem:[%s815 + $0x8] sm:$0x1]
        %v823 = vsel %vm235, %v511, %v822
        %824 = vst [vmem:[%s815 + $0x8] sm:$0x1] %v823
        %v825 = vld [vmem:[%s815 + $0xc] sm:$0xf]
        %v826 = vsel %vm817, %v518, %v825
        %827 = vst [vmem:[%s815 + $0xc] sm:$0xf] %v826
        %828 = vst.msk [vmem:[%s815 + $0x10] sm:$0xf] %vm224, %v527
        %v829 = vld [vmem:[%s815 + $0x14] sm:$0x1]
        %v830 = vsel %vm235, %v528, %v829
        %831 = vst [vmem:[%s815 + $0x14] sm:$0x1] %v830
        %v832 = vld [vmem:[%s815 + $0x18] sm:$0xf]
        %v833 = vsel %vm817, %v535, %v832
        %834 = vst [vmem:[%s815 + $0x18] sm:$0xf] %v833
        %835 = vst.msk [vmem:[%s815 + $0x1c] sm:$0xf] %vm224, %v544
        %v836 = vld [vmem:[%s815 + $0x20] sm:$0x1]
        %v837 = vsel %vm235, %v545, %v836
        %838 = vst [vmem:[%s815 + $0x20] sm:$0x1] %v837
        %v839 = vld [vmem:[%s815 + $0x24] sm:$0xf]
        %v840 = vsel %vm817, %v552, %v839
        %841 = vst [vmem:[%s815 + $0x24] sm:$0xf] %v840
        %842 = vst.msk [vmem:[%s815 + $0x28] sm:$0xf] %vm224, %v561
        %v843 = vld [vmem:[%s815 + $0x2c] sm:$0x1]
        %v844 = vsel %vm235, %v562, %v843
        %845 = vst [vmem:[%s815 + $0x2c] sm:$0x1] %v844
        %v846 = vld [vmem:[%s815 + $0x30] sm:$0xf]
        %v847 = vsel %vm817, %v569, %v846
        %848 = vst [vmem:[%s815 + $0x30] sm:$0xf] %v847
        %849 = vst.msk [vmem:[%s815 + $0x34] sm:$0xf] %vm224, %v578
        %v850 = vld [vmem:[%s815 + $0x38] sm:$0x1]
        %v851 = vsel %vm235, %v579, %v850
        %852 = vst [vmem:[%s815 + $0x38] sm:$0x1] %v851
        %v853 = vld [vmem:[%s815 + $0x3c] sm:$0xf]
        %v854 = vsel %vm817, %v586, %v853
        %855 = vst [vmem:[%s815 + $0x3c] sm:$0xf] %v854
        %856 = vst.msk [vmem:[%s815 + $0x40] sm:$0xf] %vm224, %v595
        %v857 = vld [vmem:[%s815 + $0x44] sm:$0x1]
        %v858 = vsel %vm235, %v596, %v857
        %859 = vst [vmem:[%s815 + $0x44] sm:$0x1] %v858
        %v860 = vld [vmem:[%s815 + $0x48] sm:$0xf]
        %v861 = vsel %vm817, %v603, %v860
        %862 = vst [vmem:[%s815 + $0x48] sm:$0xf] %v861
        %863 = vst.msk [vmem:[%s815 + $0x4c] sm:$0xf] %vm224, %v612
        %v864 = vld [vmem:[%s815 + $0x50] sm:$0x1]
        %v865 = vsel %vm235, %v613, %v864
        %866 = vst [vmem:[%s815 + $0x50] sm:$0x1] %v865
        %v867 = vld [vmem:[%s815 + $0x54] sm:$0xf]
        %v868 = vsel %vm817, %v620, %v867
        %869 = vst [vmem:[%s815 + $0x54] sm:$0xf] %v868
        %870 = vst.msk [vmem:[%s815 + $0x58] sm:$0xf] %vm224, %v629
        %v871 = vld [vmem:[%s815 + $0x5c] sm:$0x1]
        %v872 = vsel %vm235, %v630, %v871
        %873 = vst [vmem:[%s815 + $0x5c] sm:$0x1] %v872
        %v874 = vld [vmem:[%s815 + $0x60] sm:$0xf]
        %v875 = vsel %vm817, %v637, %v874
        %876 = vst [vmem:[%s815 + $0x60] sm:$0xf] %v875
        %877 = vst.msk [vmem:[%s815 + $0x64] sm:$0xf] %vm224, %v646
        %v878 = vld [vmem:[%s815 + $0x68] sm:$0x1]
        %v879 = vsel %vm235, %v647, %v878
        %880 = vst [vmem:[%s815 + $0x68] sm:$0x1] %v879
        %v881 = vld [vmem:[%s815 + $0x6c] sm:$0xf]
        %v882 = vsel %vm817, %v654, %v881
        %883 = vst [vmem:[%s815 + $0x6c] sm:$0xf] %v882
        %884 = vst.msk [vmem:[%s815 + $0x70] sm:$0xf] %vm224, %v663
        %v885 = vld [vmem:[%s815 + $0x74] sm:$0x1]
        %v886 = vsel %vm235, %v664, %v885
        %887 = vst [vmem:[%s815 + $0x74] sm:$0x1] %v886
        %v888 = vld [vmem:[%s815 + $0x78] sm:$0xf]
        %v889 = vsel %vm817, %v671, %v888
        %890 = vst [vmem:[%s815 + $0x78] sm:$0xf] %v889
        %891 = vst.msk [vmem:[%s815 + $0x7c] sm:$0xf] %vm224, %v680
        %v892 = vld [vmem:[%s815 + $0x80] sm:$0x1]
        %v893 = vsel %vm235, %v681, %v892
        %894 = vst [vmem:[%s815 + $0x80] sm:$0x1] %v893
        %v895 = vld [vmem:[%s815 + $0x84] sm:$0xf]
        %v896 = vsel %vm817, %v688, %v895
        %897 = vst [vmem:[%s815 + $0x84] sm:$0xf] %v896
        %898 = vst.msk [vmem:[%s815 + $0x88] sm:$0xf] %vm224, %v697
        %v899 = vld [vmem:[%s815 + $0x8c] sm:$0x1]
        %v900 = vsel %vm235, %v698, %v899
        %901 = vst [vmem:[%s815 + $0x8c] sm:$0x1] %v900
        %v902 = vld [vmem:[%s815 + $0x90] sm:$0xf]
        %v903 = vsel %vm817, %v705, %v902
        %904 = vst [vmem:[%s815 + $0x90] sm:$0xf] %v903
        %905 = vst.msk [vmem:[%s815 + $0x94] sm:$0xf] %vm224, %v714
        %v906 = vld [vmem:[%s815 + $0x98] sm:$0x1]
        %v907 = vsel %vm235, %v715, %v906
        %908 = vst [vmem:[%s815 + $0x98] sm:$0x1] %v907
        %v909 = vld [vmem:[%s815 + $0x9c] sm:$0xf]
        %v910 = vsel %vm817, %v722, %v909
        %911 = vst [vmem:[%s815 + $0x9c] sm:$0xf] %v910
        %912 = vst.msk [vmem:[%s815 + $0xa0] sm:$0xf] %vm224, %v731
        %v913 = vld [vmem:[%s815 + $0xa4] sm:$0x1]
        %v914 = vsel %vm235, %v732, %v913
        %915 = vst [vmem:[%s815 + $0xa4] sm:$0x1] %v914
        %v916 = vld [vmem:[%s815 + $0xa8] sm:$0xf]
        %v917 = vsel %vm817, %v739, %v916
        %918 = vst [vmem:[%s815 + $0xa8] sm:$0xf] %v917
        %919 = vst.msk [vmem:[%s815 + $0xac] sm:$0xf] %vm224, %v748
        %v920 = vld [vmem:[%s815 + $0xb0] sm:$0x1]
        %v921 = vsel %vm235, %v749, %v920
        %922 = vst [vmem:[%s815 + $0xb0] sm:$0x1] %v921
        %v923 = vld [vmem:[%s815 + $0xb4] sm:$0xf]
        %v924 = vsel %vm817, %v756, %v923
        %925 = vst [vmem:[%s815 + $0xb4] sm:$0xf] %v924
        %926 = vst.msk [vmem:[%s815 + $0xb8] sm:$0xf] %vm224, %v765
        %v927 = vld [vmem:[%s815 + $0xbc] sm:$0x1]
        %v928 = vsel %vm235, %v766, %v927
        %929 = vst [vmem:[%s815 + $0xbc] sm:$0x1] %v928
        %v930 = vld [vmem:[#allocation2] sm:$0xf]
        %v931 = vld [vmem:[#allocation2 + $0x4] sm:$0xf]
        %v932 = vld [vmem:[#allocation2 + $0xc] sm:$0xf]
        %v933 = vld [vmem:[#allocation2 + $0x10] sm:$0xf]
        %v934 = vld [vmem:[#allocation2 + $0x18] sm:$0xf]
        %v935 = vld [vmem:[#allocation2 + $0x1c] sm:$0xf]
        %v936 = vld [vmem:[#allocation2 + $0x24] sm:$0xf]
        %v937 = vld [vmem:[#allocation2 + $0x28] sm:$0xf]
        %v938 = vld [vmem:[#allocation2 + $0x30] sm:$0xf]
        %v939 = vld [vmem:[#allocation2 + $0x34] sm:$0xf]
        %v940 = vld [vmem:[#allocation2 + $0x3c] sm:$0xf]
        %v941 = vld [vmem:[#allocation2 + $0x40] sm:$0xf]
        %v942 = vld [vmem:[#allocation2 + $0x48] sm:$0xf]
        %v943 = vld [vmem:[#allocation2 + $0x4c] sm:$0xf]
        %v944 = vld [vmem:[#allocation2 + $0x54] sm:$0xf]
        %v945 = vld [vmem:[#allocation2 + $0x58] sm:$0xf]
        %v946 = vld [vmem:[#allocation2 + $0x60] sm:$0xf]
        %v947 = vld [vmem:[#allocation2 + $0x64] sm:$0xf]
        %v948 = vld [vmem:[#allocation2 + $0x6c] sm:$0xf]
        %v949 = vld [vmem:[#allocation2 + $0x70] sm:$0xf]
        %v950 = vld [vmem:[#allocation2 + $0x78] sm:$0xf]
        %v951 = vld [vmem:[#allocation2 + $0x7c] sm:$0xf]
        %v952 = vld [vmem:[#allocation2 + $0x84] sm:$0xf]
        %v953 = vld [vmem:[#allocation2 + $0x88] sm:$0xf]
        %v954 = vld [vmem:[#allocation2 + $0x90] sm:$0xf]
        %v955 = vld [vmem:[#allocation2 + $0x94] sm:$0xf]
        %v956 = vld [vmem:[#allocation2 + $0x9c] sm:$0xf]
        %v957 = vld [vmem:[#allocation2 + $0xa0] sm:$0xf]
        %v958 = vld [vmem:[#allocation2 + $0xa8] sm:$0xf]
        %v959 = vld [vmem:[#allocation2 + $0xac] sm:$0xf]
        %v960 = vld [vmem:[#allocation2 + $0xb4] sm:$0xf]
        %v961 = vld [vmem:[#allocation2 + $0xb8] sm:$0xf]
        %962 = vst.msk [vmem:[#allocation4] sm:$0xf] %vm224, %v930
        %963 = vst.msk [vmem:[#allocation4 + $0xc] sm:$0xf] %vm224, %v931
        %964 = vst.msk [vmem:[#allocation4 + $0x18] sm:$0xf] %vm224, %v932
        %965 = vst.msk [vmem:[#allocation4 + $0x24] sm:$0xf] %vm224, %v933
        %966 = vst.msk [vmem:[#allocation4 + $0x30] sm:$0xf] %vm224, %v934
        %967 = vst.msk [vmem:[#allocation4 + $0x3c] sm:$0xf] %vm224, %v935
        %968 = vst.msk [vmem:[#allocation4 + $0x48] sm:$0xf] %vm224, %v936
        %969 = vst.msk [vmem:[#allocation4 + $0x54] sm:$0xf] %vm224, %v937
        %970 = vst.msk [vmem:[#allocation4 + $0x60] sm:$0xf] %vm224, %v938
        %971 = vst.msk [vmem:[#allocation4 + $0x6c] sm:$0xf] %vm224, %v939
        %972 = vst.msk [vmem:[#allocation4 + $0x78] sm:$0xf] %vm224, %v940
        %973 = vst.msk [vmem:[#allocation4 + $0x84] sm:$0xf] %vm224, %v941
        %974 = vst.msk [vmem:[#allocation4 + $0x90] sm:$0xf] %vm224, %v942
        %975 = vst.msk [vmem:[#allocation4 + $0x9c] sm:$0xf] %vm224, %v943
        %976 = vst.msk [vmem:[#allocation4 + $0xa8] sm:$0xf] %vm224, %v944
        %977 = vst.msk [vmem:[#allocation4 + $0xb4] sm:$0xf] %vm224, %v945
        %978 = vst.msk [vmem:[#allocation4 + $0xc0] sm:$0xf] %vm224, %v946
        %979 = vst.msk [vmem:[#allocation4 + $0xcc] sm:$0xf] %vm224, %v947
        %980 = vst.msk [vmem:[#allocation4 + $0xd8] sm:$0xf] %vm224, %v948
        %981 = vst.msk [vmem:[#allocation4 + $0xe4] sm:$0xf] %vm224, %v949
        %982 = vst.msk [vmem:[#allocation4 + $0xf0] sm:$0xf] %vm224, %v950
        %983 = vst.msk [vmem:[#allocation4 + $0xfc] sm:$0xf] %vm224, %v951
        %984 = vst.msk [vmem:[#allocation4 + $0x108] sm:$0xf] %vm224, %v952
        %985 = vst.msk [vmem:[#allocation4 + $0x114] sm:$0xf] %vm224, %v953
        %986 = vst.msk [vmem:[#allocation4 + $0x120] sm:$0xf] %vm224, %v954
        %987 = vst.msk [vmem:[#allocation4 + $0x12c] sm:$0xf] %vm224, %v955
        %988 = vst.msk [vmem:[#allocation4 + $0x138] sm:$0xf] %vm224, %v956
        %989 = vst.msk [vmem:[#allocation4 + $0x144] sm:$0xf] %vm224, %v957
        %990 = vst.msk [vmem:[#allocation4 + $0x150] sm:$0xf] %vm224, %v958
        %991 = vst.msk [vmem:[#allocation4 + $0x15c] sm:$0xf] %vm224, %v959
        %992 = vst.msk [vmem:[#allocation4 + $0x168] sm:$0xf] %vm224, %v960
        %993 = vst.msk [vmem:[#allocation4 + $0x174] sm:$0xf] %vm224, %v961
        %v994 = vld [vmem:[#allocation2] sm:$0xf]
        %v995 = vld [vmem:[#allocation2 + $0x4] sm:$0xf]
        %v996 = vld [vmem:[#allocation2 + $0x8] sm:$0x1]
        %v997 = vld [vmem:[#allocation2 + $0xc] sm:$0xf]
        %v998 = vld [vmem:[#allocation2 + $0x10] sm:$0xf]
        %v999 = vld [vmem:[#allocation2 + $0x14] sm:$0x1]
        %v1000 = vld [vmem:[#allocation2 + $0x18] sm:$0xf]
        %v1001 = vld [vmem:[#allocation2 + $0x1c] sm:$0xf]
        %v1002 = vld [vmem:[#allocation2 + $0x20] sm:$0x1]
        %v1003 = vld [vmem:[#allocation2 + $0x24] sm:$0xf]
        %v1004 = vld [vmem:[#allocation2 + $0x28] sm:$0xf]
        %v1005 = vld [vmem:[#allocation2 + $0x2c] sm:$0x1]
        %v1006 = vld [vmem:[#allocation2 + $0x30] sm:$0xf]
        %v1007 = vld [vmem:[#allocation2 + $0x34] sm:$0xf]
        %v1008 = vld [vmem:[#allocation2 + $0x38] sm:$0x1]
        %v1009 = vld [vmem:[#allocation2 + $0x3c] sm:$0xf]
        %v1010 = vld [vmem:[#allocation2 + $0x40] sm:$0xf]
        %v1011 = vld [vmem:[#allocation2 + $0x44] sm:$0x1]
        %v1012 = vld [vmem:[#allocation2 + $0x48] sm:$0xf]
        %v1013 = vld [vmem:[#allocation2 + $0x4c] sm:$0xf]
        %v1014 = vld [vmem:[#allocation2 + $0x50] sm:$0x1]
        %v1015 = vld [vmem:[#allocation2 + $0x54] sm:$0xf]
        %v1016 = vld [vmem:[#allocation2 + $0x58] sm:$0xf]
        %v1017 = vld [vmem:[#allocation2 + $0x5c] sm:$0x1]
        %v1018 = vld [vmem:[#allocation2 + $0x60] sm:$0xf]
        %v1019 = vld [vmem:[#allocation2 + $0x64] sm:$0xf]
        %v1020 = vld [vmem:[#allocation2 + $0x68] sm:$0x1]
        %v1021 = vld [vmem:[#allocation2 + $0x6c] sm:$0xf]
        %v1022 = vld [vmem:[#allocation2 + $0x70] sm:$0xf]
        %v1023 = vld [vmem:[#allocation2 + $0x74] sm:$0x1]
        %v1024 = vld [vmem:[#allocation2 + $0x78] sm:$0xf]
        %v1025 = vld [vmem:[#allocation2 + $0x7c] sm:$0xf]
        %v1026 = vld [vmem:[#allocation2 + $0x80] sm:$0x1]
        %v1027 = vld [vmem:[#allocation2 + $0x84] sm:$0xf]
        %v1028 = vld [vmem:[#allocation2 + $0x88] sm:$0xf]
        %v1029 = vld [vmem:[#allocation2 + $0x8c] sm:$0x1]
        %v1030 = vld [vmem:[#allocation2 + $0x90] sm:$0xf]
        %v1031 = vld [vmem:[#allocation2 + $0x94] sm:$0xf]
        %v1032 = vld [vmem:[#allocation2 + $0x98] sm:$0x1]
        %v1033 = vld [vmem:[#allocation2 + $0x9c] sm:$0xf]
        %v1034 = vld [vmem:[#allocation2 + $0xa0] sm:$0xf]
        %v1035 = vld [vmem:[#allocation2 + $0xa4] sm:$0x1]
        %v1036 = vld [vmem:[#allocation2 + $0xa8] sm:$0xf]
        %v1037 = vld [vmem:[#allocation2 + $0xac] sm:$0xf]
        %v1038 = vld [vmem:[#allocation2 + $0xb0] sm:$0x1]
        %v1039 = vld [vmem:[#allocation2 + $0xb4] sm:$0xf]
        %v1040 = vld [vmem:[#allocation2 + $0xb8] sm:$0xf]
        %v1041 = vld [vmem:[#allocation2 + $0xbc] sm:$0x1]
        %vm1042 = vsmask.f32 3328
        %vm1043 = vsmask.f32 7440
        %vm1044 = vmor %vm1042, %vm1043
        %v1046 = vshrl.u32 %v994, 16
        %v1048 = vrot.slane %v1046, 4
        %v1049 = vshll.u32 %v994, 16
        %v1051 = vrot.slane %v1049, 5
        %v1052 = vor.u32 %v1048, %v1051
        %v1053 = vrot.slane %v1052, 4
        %v1055 = vshll.u32 %v995, 16
        %v1057 = vrot.slane %v1055, 5
        %v1058 = vsel %vm1044, %v1053, %v1057
        %v1059 = vshrl.u32 %v995, 16
        %v1061 = vrot.slane %v1059, 4
        %v1062 = vor.u32 %v1061, %v1057
        %v1063 = vrot.slane %v1062, 4
        %v1065 = vshll.u32 %v996, 16
        %v1067 = vrot.slane %v1065, 5
        %v1068 = vsel %vm1044, %v1063, %v1067
        %v1070 = vshrl.u32 %v997, 16
        %v1072 = vrot.slane %v1070, 4
        %v1073 = vshll.u32 %v997, 16
        %v1075 = vrot.slane %v1073, 5
        %v1076 = vor.u32 %v1072, %v1075
        %v1077 = vrot.slane %v1076, 4
        %v1079 = vshll.u32 %v998, 16
        %v1081 = vrot.slane %v1079, 5
        %v1082 = vsel %vm1044, %v1077, %v1081
        %v1083 = vshrl.u32 %v998, 16
        %v1085 = vrot.slane %v1083, 4
        %v1086 = vor.u32 %v1085, %v1081
        %v1087 = vrot.slane %v1086, 4
        %v1089 = vshll.u32 %v999, 16
        %v1091 = vrot.slane %v1089, 5
        %v1092 = vsel %vm1044, %v1087, %v1091
        %v1094 = vshrl.u32 %v1000, 16
        %v1096 = vrot.slane %v1094, 4
        %v1097 = vshll.u32 %v1000, 16
        %v1099 = vrot.slane %v1097, 5
        %v1100 = vor.u32 %v1096, %v1099
        %v1101 = vrot.slane %v1100, 4
        %v1103 = vshll.u32 %v1001, 16
        %v1105 = vrot.slane %v1103, 5
        %v1106 = vsel %vm1044, %v1101, %v1105
        %v1107 = vshrl.u32 %v1001, 16
        %v1109 = vrot.slane %v1107, 4
        %v1110 = vor.u32 %v1109, %v1105
        %v1111 = vrot.slane %v1110, 4
        %v1113 = vshll.u32 %v1002, 16
        %v1115 = vrot.slane %v1113, 5
        %v1116 = vsel %vm1044, %v1111, %v1115
        %v1118 = vshrl.u32 %v1003, 16
        %v1120 = vrot.slane %v1118, 4
        %v1121 = vshll.u32 %v1003, 16
        %v1123 = vrot.slane %v1121, 5
        %v1124 = vor.u32 %v1120, %v1123
        %v1125 = vrot.slane %v1124, 4
        %v1127 = vshll.u32 %v1004, 16
        %v1129 = vrot.slane %v1127, 5
        %v1130 = vsel %vm1044, %v1125, %v1129
        %v1131 = vshrl.u32 %v1004, 16
        %v1133 = vrot.slane %v1131, 4
        %v1134 = vor.u32 %v1133, %v1129
        %v1135 = vrot.slane %v1134, 4
        %v1137 = vshll.u32 %v1005, 16
        %v1139 = vrot.slane %v1137, 5
        %v1140 = vsel %vm1044, %v1135, %v1139
        %v1142 = vshrl.u32 %v1006, 16
        %v1144 = vrot.slane %v1142, 4
        %v1145 = vshll.u32 %v1006, 16
        %v1147 = vrot.slane %v1145, 5
        %v1148 = vor.u32 %v1144, %v1147
        %v1149 = vrot.slane %v1148, 4
        %v1151 = vshll.u32 %v1007, 16
        %v1153 = vrot.slane %v1151, 5
        %v1154 = vsel %vm1044, %v1149, %v1153
        %v1155 = vshrl.u32 %v1007, 16
        %v1157 = vrot.slane %v1155, 4
        %v1158 = vor.u32 %v1157, %v1153
        %v1159 = vrot.slane %v1158, 4
        %v1161 = vshll.u32 %v1008, 16
        %v1163 = vrot.slane %v1161, 5
        %v1164 = vsel %vm1044, %v1159, %v1163
        %v1166 = vshrl.u32 %v1009, 16
        %v1168 = vrot.slane %v1166, 4
        %v1169 = vshll.u32 %v1009, 16
        %v1171 = vrot.slane %v1169, 5
        %v1172 = vor.u32 %v1168, %v1171
        %v1173 = vrot.slane %v1172, 4
        %v1175 = vshll.u32 %v1010, 16
        %v1177 = vrot.slane %v1175, 5
        %v1178 = vsel %vm1044, %v1173, %v1177
        %v1179 = vshrl.u32 %v1010, 16
        %v1181 = vrot.slane %v1179, 4
        %v1182 = vor.u32 %v1181, %v1177
        %v1183 = vrot.slane %v1182, 4
        %v1185 = vshll.u32 %v1011, 16
        %v1187 = vrot.slane %v1185, 5
        %v1188 = vsel %vm1044, %v1183, %v1187
        %v1190 = vshrl.u32 %v1012, 16
        %v1192 = vrot.slane %v1190, 4
        %v1193 = vshll.u32 %v1012, 16
        %v1195 = vrot.slane %v1193, 5
        %v1196 = vor.u32 %v1192, %v1195
        %v1197 = vrot.slane %v1196, 4
        %v1199 = vshll.u32 %v1013, 16
        %v1201 = vrot.slane %v1199, 5
        %v1202 = vsel %vm1044, %v1197, %v1201
        %v1203 = vshrl.u32 %v1013, 16
        %v1205 = vrot.slane %v1203, 4
        %v1206 = vor.u32 %v1205, %v1201
        %v1207 = vrot.slane %v1206, 4
        %v1209 = vshll.u32 %v1014, 16
        %v1211 = vrot.slane %v1209, 5
        %v1212 = vsel %vm1044, %v1207, %v1211
        %v1214 = vshrl.u32 %v1015, 16
        %v1216 = vrot.slane %v1214, 4
        %v1217 = vshll.u32 %v1015, 16
        %v1219 = vrot.slane %v1217, 5
        %v1220 = vor.u32 %v1216, %v1219
        %v1221 = vrot.slane %v1220, 4
        %v1223 = vshll.u32 %v1016, 16
        %v1225 = vrot.slane %v1223, 5
        %v1226 = vsel %vm1044, %v1221, %v1225
        %v1227 = vshrl.u32 %v1016, 16
        %v1229 = vrot.slane %v1227, 4
        %v1230 = vor.u32 %v1229, %v1225
        %v1231 = vrot.slane %v1230, 4
        %v1233 = vshll.u32 %v1017, 16
        %v1235 = vrot.slane %v1233, 5
        %v1236 = vsel %vm1044, %v1231, %v1235
        %v1238 = vshrl.u32 %v1018, 16
        %v1240 = vrot.slane %v1238, 4
        %v1241 = vshll.u32 %v1018, 16
        %v1243 = vrot.slane %v1241, 5
        %v1244 = vor.u32 %v1240, %v1243
        %v1245 = vrot.slane %v1244, 4
        %v1247 = vshll.u32 %v1019, 16
        %v1249 = vrot.slane %v1247, 5
        %v1250 = vsel %vm1044, %v1245, %v1249
        %v1251 = vshrl.u32 %v1019, 16
        %v1253 = vrot.slane %v1251, 4
        %v1254 = vor.u32 %v1253, %v1249
        %v1255 = vrot.slane %v1254, 4
        %v1257 = vshll.u32 %v1020, 16
        %v1259 = vrot.slane %v1257, 5
        %v1260 = vsel %vm1044, %v1255, %v1259
        %v1262 = vshrl.u32 %v1021, 16
        %v1264 = vrot.slane %v1262, 4
        %v1265 = vshll.u32 %v1021, 16
        %v1267 = vrot.slane %v1265, 5
        %v1268 = vor.u32 %v1264, %v1267
        %v1269 = vrot.slane %v1268, 4
        %v1271 = vshll.u32 %v1022, 16
        %v1273 = vrot.slane %v1271, 5
        %v1274 = vsel %vm1044, %v1269, %v1273
        %v1275 = vshrl.u32 %v1022, 16
        %v1277 = vrot.slane %v1275, 4
        %v1278 = vor.u32 %v1277, %v1273
        %v1279 = vrot.slane %v1278, 4
        %v1281 = vshll.u32 %v1023, 16
        %v1283 = vrot.slane %v1281, 5
        %v1284 = vsel %vm1044, %v1279, %v1283
        %v1286 = vshrl.u32 %v1024, 16
        %v1288 = vrot.slane %v1286, 4
        %v1289 = vshll.u32 %v1024, 16
        %v1291 = vrot.slane %v1289, 5
        %v1292 = vor.u32 %v1288, %v1291
        %v1293 = vrot.slane %v1292, 4
        %v1295 = vshll.u32 %v1025, 16
        %v1297 = vrot.slane %v1295, 5
        %v1298 = vsel %vm1044, %v1293, %v1297
        %v1299 = vshrl.u32 %v1025, 16
        %v1301 = vrot.slane %v1299, 4
        %v1302 = vor.u32 %v1301, %v1297
        %v1303 = vrot.slane %v1302, 4
        %v1305 = vshll.u32 %v1026, 16
        %v1307 = vrot.slane %v1305, 5
        %v1308 = vsel %vm1044, %v1303, %v1307
        %v1310 = vshrl.u32 %v1027, 16
        %v1312 = vrot.slane %v1310, 4
        %v1313 = vshll.u32 %v1027, 16
        %v1315 = vrot.slane %v1313, 5
        %v1316 = vor.u32 %v1312, %v1315
        %v1317 = vrot.slane %v1316, 4
        %v1319 = vshll.u32 %v1028, 16
        %v1321 = vrot.slane %v1319, 5
        %v1322 = vsel %vm1044, %v1317, %v1321
        %v1323 = vshrl.u32 %v1028, 16
        %v1325 = vrot.slane %v1323, 4
        %v1326 = vor.u32 %v1325, %v1321
        %v1327 = vrot.slane %v1326, 4
        %v1329 = vshll.u32 %v1029, 16
        %v1331 = vrot.slane %v1329, 5
        %v1332 = vsel %vm1044, %v1327, %v1331
        %v1334 = vshrl.u32 %v1030, 16
        %v1336 = vrot.slane %v1334, 4
        %v1337 = vshll.u32 %v1030, 16
        %v1339 = vrot.slane %v1337, 5
        %v1340 = vor.u32 %v1336, %v1339
        %v1341 = vrot.slane %v1340, 4
        %v1343 = vshll.u32 %v1031, 16
        %v1345 = vrot.slane %v1343, 5
        %v1346 = vsel %vm1044, %v1341, %v1345
        %v1347 = vshrl.u32 %v1031, 16
        %v1349 = vrot.slane %v1347, 4
        %v1350 = vor.u32 %v1349, %v1345
        %v1351 = vrot.slane %v1350, 4
        %v1353 = vshll.u32 %v1032, 16
        %v1355 = vrot.slane %v1353, 5
        %v1356 = vsel %vm1044, %v1351, %v1355
        %v1358 = vshrl.u32 %v1033, 16
        %v1360 = vrot.slane %v1358, 4
        %v1361 = vshll.u32 %v1033, 16
        %v1363 = vrot.slane %v1361, 5
        %v1364 = vor.u32 %v1360, %v1363
        %v1365 = vrot.slane %v1364, 4
        %v1367 = vshll.u32 %v1034, 16
        %v1369 = vrot.slane %v1367, 5
        %v1370 = vsel %vm1044, %v1365, %v1369
        %v1371 = vshrl.u32 %v1034, 16
        %v1373 = vrot.slane %v1371, 4
        %v1374 = vor.u32 %v1373, %v1369
        %v1375 = vrot.slane %v1374, 4
        %v1377 = vshll.u32 %v1035, 16
        %v1379 = vrot.slane %v1377, 5
        %v1380 = vsel %vm1044, %v1375, %v1379
        %v1382 = vshrl.u32 %v1036, 16
        %v1384 = vrot.slane %v1382, 4
        %v1385 = vshll.u32 %v1036, 16
        %v1387 = vrot.slane %v1385, 5
        %v1388 = vor.u32 %v1384, %v1387
        %v1389 = vrot.slane %v1388, 4
        %v1391 = vshll.u32 %v1037, 16
        %v1393 = vrot.slane %v1391, 5
        %v1394 = vsel %vm1044, %v1389, %v1393
        %v1395 = vshrl.u32 %v1037, 16
        %v1397 = vrot.slane %v1395, 4
        %v1398 = vor.u32 %v1397, %v1393
        %v1399 = vrot.slane %v1398, 4
        %v1401 = vshll.u32 %v1038, 16
        %v1403 = vrot.slane %v1401, 5
        %v1404 = vsel %vm1044, %v1399, %v1403
        %v1406 = vshrl.u32 %v1039, 16
        %v1408 = vrot.slane %v1406, 4
        %v1409 = vshll.u32 %v1039, 16
        %v1411 = vrot.slane %v1409, 5
        %v1412 = vor.u32 %v1408, %v1411
        %v1413 = vrot.slane %v1412, 4
        %v1415 = vshll.u32 %v1040, 16
        %v1417 = vrot.slane %v1415, 5
        %v1418 = vsel %vm1044, %v1413, %v1417
        %v1419 = vshrl.u32 %v1040, 16
        %v1421 = vrot.slane %v1419, 4
        %v1422 = vor.u32 %v1421, %v1417
        %v1423 = vrot.slane %v1422, 4
        %v1425 = vshll.u32 %v1041, 16
        %v1427 = vrot.slane %v1425, 5
        %v1428 = vsel %vm1044, %v1423, %v1427
        %1429 = vrot.lane.b32.xlu0 %v1058, 32
        %v1430 = vpop.permute.xlu0 %1429
        %1431 = vrot.lane.b32.xlu0 %v1068, 32
        %v1432 = vpop.permute.xlu0 %1431
        %1433 = vrot.lane.b32.xlu0 %v1082, 32
        %v1434 = vpop.permute.xlu0 %1433
        %1435 = vrot.lane.b32.xlu0 %v1092, 32
        %v1436 = vpop.permute.xlu0 %1435
        %1437 = vrot.lane.b32.xlu0 %v1106, 32
        %v1438 = vpop.permute.xlu0 %1437
        %1439 = vrot.lane.b32.xlu0 %v1116, 32
        %v1440 = vpop.permute.xlu0 %1439
        %1441 = vrot.lane.b32.xlu0 %v1130, 32
        %v1442 = vpop.permute.xlu0 %1441
        %1443 = vrot.lane.b32.xlu0 %v1140, 32
        %v1444 = vpop.permute.xlu0 %1443
        %1445 = vrot.lane.b32.xlu0 %v1154, 32
        %v1446 = vpop.permute.xlu0 %1445
        %1447 = vrot.lane.b32.xlu0 %v1164, 32
        %v1448 = vpop.permute.xlu0 %1447
        %1449 = vrot.lane.b32.xlu0 %v1178, 32
        %v1450 = vpop.permute.xlu0 %1449
        %1451 = vrot.lane.b32.xlu0 %v1188, 32
        %v1452 = vpop.permute.xlu0 %1451
        %1453 = vrot.lane.b32.xlu0 %v1202, 32
        %v1454 = vpop.permute.xlu0 %1453
        %1455 = vrot.lane.b32.xlu0 %v1212, 32
        %v1456 = vpop.permute.xlu0 %1455
        %1457 = vrot.lane.b32.xlu0 %v1226, 32
        %v1458 = vpop.permute.xlu0 %1457
        %1459 = vrot.lane.b32.xlu0 %v1236, 32
        %v1460 = vpop.permute.xlu0 %1459
        %1461 = vrot.lane.b32.xlu0 %v1250, 32
        %v1462 = vpop.permute.xlu0 %1461
        %1463 = vrot.lane.b32.xlu0 %v1260, 32
        %v1464 = vpop.permute.xlu0 %1463
        %1465 = vrot.lane.b32.xlu0 %v1274, 32
        %v1466 = vpop.permute.xlu0 %1465
        %1467 = vrot.lane.b32.xlu0 %v1284, 32
        %v1468 = vpop.permute.xlu0 %1467
        %1469 = vrot.lane.b32.xlu0 %v1298, 32
        %v1470 = vpop.permute.xlu0 %1469
        %1471 = vrot.lane.b32.xlu0 %v1308, 32
        %v1472 = vpop.permute.xlu0 %1471
        %1473 = vrot.lane.b32.xlu0 %v1322, 32
        %v1474 = vpop.permute.xlu0 %1473
        %1475 = vrot.lane.b32.xlu0 %v1332, 32
        %v1476 = vpop.permute.xlu0 %1475
        %1477 = vrot.lane.b32.xlu0 %v1346, 32
        %v1478 = vpop.permute.xlu0 %1477
        %1479 = vrot.lane.b32.xlu0 %v1356, 32
        %v1480 = vpop.permute.xlu0 %1479
        %1481 = vrot.lane.b32.xlu0 %v1370, 32
        %v1482 = vpop.permute.xlu0 %1481
        %1483 = vrot.lane.b32.xlu0 %v1380, 32
        %v1484 = vpop.permute.xlu0 %1483
        %1485 = vrot.lane.b32.xlu0 %v1394, 32
        %v1486 = vpop.permute.xlu0 %1485
        %1487 = vrot.lane.b32.xlu0 %v1404, 32
        %v1488 = vpop.permute.xlu0 %1487
        %1489 = vrot.lane.b32.xlu0 %v1418, 32
        %v1490 = vpop.permute.xlu0 %1489
        %1491 = vrot.lane.b32.xlu0 %v1428, 32
        %v1492 = vpop.permute.xlu0 %1491
        %vm1525 = vcmask 519424
        %1526 = vst.msk [vmem:[#allocation4] sm:$0xf] %vm1525, %v1430
        %1527 = vst.msk [vmem:[#allocation4 + $0xc] sm:$0xf] %vm1525, %v1432
        %1528 = vst.msk [vmem:[#allocation4 + $0x18] sm:$0xf] %vm1525, %v1434
        %1529 = vst.msk [vmem:[#allocation4 + $0x24] sm:$0xf] %vm1525, %v1436
        %1530 = vst.msk [vmem:[#allocation4 + $0x30] sm:$0xf] %vm1525, %v1438
        %1531 = vst.msk [vmem:[#allocation4 + $0x3c] sm:$0xf] %vm1525, %v1440
        %1532 = vst.msk [vmem:[#allocation4 + $0x48] sm:$0xf] %vm1525, %v1442
        %1533 = vst.msk [vmem:[#allocation4 + $0x54] sm:$0xf] %vm1525, %v1444
        %1534 = vst.msk [vmem:[#allocation4 + $0x60] sm:$0xf] %vm1525, %v1446
        %1535 = vst.msk [vmem:[#allocation4 + $0x6c] sm:$0xf] %vm1525, %v1448
        %1536 = vst.msk [vmem:[#allocation4 + $0x78] sm:$0xf] %vm1525, %v1450
        %1537 = vst.msk [vmem:[#allocation4 + $0x84] sm:$0xf] %vm1525, %v1452
        %1538 = vst.msk [vmem:[#allocation4 + $0x90] sm:$0xf] %vm1525, %v1454
        %1539 = vst.msk [vmem:[#allocation4 + $0x9c] sm:$0xf] %vm1525, %v1456
        %1540 = vst.msk [vmem:[#allocation4 + $0xa8] sm:$0xf] %vm1525, %v1458
        %1541 = vst.msk [vmem:[#allocation4 + $0xb4] sm:$0xf] %vm1525, %v1460
        %1542 = vst.msk [vmem:[#allocation4 + $0xc0] sm:$0xf] %vm1525, %v1462
        %1543 = vst.msk [vmem:[#allocation4 + $0xcc] sm:$0xf] %vm1525, %v1464
        %1544 = vst.msk [vmem:[#allocation4 + $0xd8] sm:$0xf] %vm1525, %v1466
        %1545 = vst.msk [vmem:[#allocation4 + $0xe4] sm:$0xf] %vm1525, %v1468
        %1546 = vst.msk [vmem:[#allocation4 + $0xf0] sm:$0xf] %vm1525, %v1470
        %1547 = vst.msk [vmem:[#allocation4 + $0xfc] sm:$0xf] %vm1525, %v1472
        %1548 = vst.msk [vmem:[#allocation4 + $0x108] sm:$0xf] %vm1525, %v1474
        %1549 = vst.msk [vmem:[#allocation4 + $0x114] sm:$0xf] %vm1525, %v1476
        %1550 = vst.msk [vmem:[#allocation4 + $0x120] sm:$0xf] %vm1525, %v1478
        %1551 = vst.msk [vmem:[#allocation4 + $0x12c] sm:$0xf] %vm1525, %v1480
        %1552 = vst.msk [vmem:[#allocation4 + $0x138] sm:$0xf] %vm1525, %v1482
        %1553 = vst.msk [vmem:[#allocation4 + $0x144] sm:$0xf] %vm1525, %v1484
        %1554 = vst.msk [vmem:[#allocation4 + $0x150] sm:$0xf] %vm1525, %v1486
        %1555 = vst.msk [vmem:[#allocation4 + $0x15c] sm:$0xf] %vm1525, %v1488
        %1556 = vst.msk [vmem:[#allocation4 + $0x168] sm:$0xf] %vm1525, %v1490
        %1557 = vst.msk [vmem:[#allocation4 + $0x174] sm:$0xf] %vm1525, %v1492
        %v1558 = vld [vmem:[#allocation2] sm:$0xe]
        %v1559 = vld [vmem:[#allocation2 + $0x4] sm:$0xf]
        %v1560 = vld [vmem:[#allocation2 + $0x8] sm:$0x1]
        %v1561 = vld [vmem:[#allocation2 + $0xc] sm:$0xe]
        %v1562 = vld [vmem:[#allocation2 + $0x10] sm:$0xf]
        %v1563 = vld [vmem:[#allocation2 + $0x14] sm:$0x1]
        %v1564 = vld [vmem:[#allocation2 + $0x18] sm:$0xe]
        %v1565 = vld [vmem:[#allocation2 + $0x1c] sm:$0xf]
        %v1566 = vld [vmem:[#allocation2 + $0x20] sm:$0x1]
        %v1567 = vld [vmem:[#allocation2 + $0x24] sm:$0xe]
        %v1568 = vld [vmem:[#allocation2 + $0x28] sm:$0xf]
        %v1569 = vld [vmem:[#allocation2 + $0x2c] sm:$0x1]
        %v1570 = vld [vmem:[#allocation2 + $0x30] sm:$0xe]
        %v1571 = vld [vmem:[#allocation2 + $0x34] sm:$0xf]
        %v1572 = vld [vmem:[#allocation2 + $0x38] sm:$0x1]
        %v1573 = vld [vmem:[#allocation2 + $0x3c] sm:$0xe]
        %v1574 = vld [vmem:[#allocation2 + $0x40] sm:$0xf]
        %v1575 = vld [vmem:[#allocation2 + $0x44] sm:$0x1]
        %v1576 = vld [vmem:[#allocation2 + $0x48] sm:$0xe]
        %v1577 = vld [vmem:[#allocation2 + $0x4c] sm:$0xf]
        %v1578 = vld [vmem:[#allocation2 + $0x50] sm:$0x1]
        %v1579 = vld [vmem:[#allocation2 + $0x54] sm:$0xe]
        %v1580 = vld [vmem:[#allocation2 + $0x58] sm:$0xf]
        %v1581 = vld [vmem:[#allocation2 + $0x5c] sm:$0x1]
        %v1582 = vld [vmem:[#allocation2 + $0x60] sm:$0xe]
        %v1583 = vld [vmem:[#allocation2 + $0x64] sm:$0xf]
        %v1584 = vld [vmem:[#allocation2 + $0x68] sm:$0x1]
        %v1585 = vld [vmem:[#allocation2 + $0x6c] sm:$0xe]
        %v1586 = vld [vmem:[#allocation2 + $0x70] sm:$0xf]
        %v1587 = vld [vmem:[#allocation2 + $0x74] sm:$0x1]
        %v1588 = vld [vmem:[#allocation2 + $0x78] sm:$0xe]
        %v1589 = vld [vmem:[#allocation2 + $0x7c] sm:$0xf]
        %v1590 = vld [vmem:[#allocation2 + $0x80] sm:$0x1]
        %v1591 = vld [vmem:[#allocation2 + $0x84] sm:$0xe]
        %v1592 = vld [vmem:[#allocation2 + $0x88] sm:$0xf]
        %v1593 = vld [vmem:[#allocation2 + $0x8c] sm:$0x1]
        %v1594 = vld [vmem:[#allocation2 + $0x90] sm:$0xe]
        %v1595 = vld [vmem:[#allocation2 + $0x94] sm:$0xf]
        %v1596 = vld [vmem:[#allocation2 + $0x98] sm:$0x1]
        %v1597 = vld [vmem:[#allocation2 + $0x9c] sm:$0xe]
        %v1598 = vld [vmem:[#allocation2 + $0xa0] sm:$0xf]
        %v1599 = vld [vmem:[#allocation2 + $0xa4] sm:$0x1]
        %v1600 = vld [vmem:[#allocation2 + $0xa8] sm:$0xe]
        %v1601 = vld [vmem:[#allocation2 + $0xac] sm:$0xf]
        %v1602 = vld [vmem:[#allocation2 + $0xb0] sm:$0x1]
        %v1603 = vld [vmem:[#allocation2 + $0xb4] sm:$0xe]
        %v1604 = vld [vmem:[#allocation2 + $0xb8] sm:$0xf]
        %v1605 = vld [vmem:[#allocation2 + $0xbc] sm:$0x1]
        %vm1654 = vcmask 1042432
        %vm1655 = vcmask 1046532
        %vm1656 = vmor %vm1654, %vm1655
        %v1657 = vrot.slane %v1558, 5
        %v1658 = vrot.slane %v1657, 4
        %v1659 = vrot.slane %v1559, 5
        %v1660 = vsel %vm1656, %v1658, %v1659
        %v1661 = vrot.slane %v1659, 4
        %v1662 = vrot.slane %v1560, 5
        %v1663 = vsel %vm1656, %v1661, %v1662
        %v1664 = vrot.slane %v1561, 5
        %v1665 = vrot.slane %v1664, 4
        %v1666 = vrot.slane %v1562, 5
        %v1667 = vsel %vm1656, %v1665, %v1666
        %v1668 = vrot.slane %v1666, 4
        %v1669 = vrot.slane %v1563, 5
        %v1670 = vsel %vm1656, %v1668, %v1669
        %v1671 = vrot.slane %v1564, 5
        %v1672 = vrot.slane %v1671, 4
        %v1673 = vrot.slane %v1565, 5
        %v1674 = vsel %vm1656, %v1672, %v1673
        %v1675 = vrot.slane %v1673, 4
        %v1676 = vrot.slane %v1566, 5
        %v1677 = vsel %vm1656, %v1675, %v1676
        %v1678 = vrot.slane %v1567, 5
        %v1679 = vrot.slane %v1678, 4
        %v1680 = vrot.slane %v1568, 5
        %v1681 = vsel %vm1656, %v1679, %v1680
        %v1682 = vrot.slane %v1680, 4
        %v1683 = vrot.slane %v1569, 5
        %v1684 = vsel %vm1656, %v1682, %v1683
        %v1685 = vrot.slane %v1570, 5
        %v1686 = vrot.slane %v1685, 4
        %v1687 = vrot.slane %v1571, 5
        %v1688 = vsel %vm1656, %v1686, %v1687
        %v1689 = vrot.slane %v1687, 4
        %v1690 = vrot.slane %v1572, 5
        %v1691 = vsel %vm1656, %v1689, %v1690
        %v1692 = vrot.slane %v1573, 5
        %v1693 = vrot.slane %v1692, 4
        %v1694 = vrot.slane %v1574, 5
        %v1695 = vsel %vm1656, %v1693, %v1694
        %v1696 = vrot.slane %v1694, 4
        %v1697 = vrot.slane %v1575, 5
        %v1698 = vsel %vm1656, %v1696, %v1697
        %v1699 = vrot.slane %v1576, 5
        %v1700 = vrot.slane %v1699, 4
        %v1701 = vrot.slane %v1577, 5
        %v1702 = vsel %vm1656, %v1700, %v1701
        %v1703 = vrot.slane %v1701, 4
        %v1704 = vrot.slane %v1578, 5
        %v1705 = vsel %vm1656, %v1703, %v1704
        %v1706 = vrot.slane %v1579, 5
        %v1707 = vrot.slane %v1706, 4
        %v1708 = vrot.slane %v1580, 5
        %v1709 = vsel %vm1656, %v1707, %v1708
        %v1710 = vrot.slane %v1708, 4
        %v1711 = vrot.slane %v1581, 5
        %v1712 = vsel %vm1656, %v1710, %v1711
        %v1713 = vrot.slane %v1582, 5
        %v1714 = vrot.slane %v1713, 4
        %v1715 = vrot.slane %v1583, 5
        %v1716 = vsel %vm1656, %v1714, %v1715
        %v1717 = vrot.slane %v1715, 4
        %v1718 = vrot.slane %v1584, 5
        %v1719 = vsel %vm1656, %v1717, %v1718
        %v1720 = vrot.slane %v1585, 5
        %v1721 = vrot.slane %v1720, 4
        %v1722 = vrot.slane %v1586, 5
        %v1723 = vsel %vm1656, %v1721, %v1722
        %v1724 = vrot.slane %v1722, 4
        %v1725 = vrot.slane %v1587, 5
        %v1726 = vsel %vm1656, %v1724, %v1725
        %v1727 = vrot.slane %v1588, 5
        %v1728 = vrot.slane %v1727, 4
        %v1729 = vrot.slane %v1589, 5
        %v1730 = vsel %vm1656, %v1728, %v1729
        %v1731 = vrot.slane %v1729, 4
        %v1732 = vrot.slane %v1590, 5
        %v1733 = vsel %vm1656, %v1731, %v1732
        %v1734 = vrot.slane %v1591, 5
        %v1735 = vrot.slane %v1734, 4
        %v1736 = vrot.slane %v1592, 5
        %v1737 = vsel %vm1656, %v1735, %v1736
        %v1738 = vrot.slane %v1736, 4
        %v1739 = vrot.slane %v1593, 5
        %v1740 = vsel %vm1656, %v1738, %v1739
        %v1741 = vrot.slane %v1594, 5
        %v1742 = vrot.slane %v1741, 4
        %v1743 = vrot.slane %v1595, 5
        %v1744 = vsel %vm1656, %v1742, %v1743
        %v1745 = vrot.slane %v1743, 4
        %v1746 = vrot.slane %v1596, 5
        %v1747 = vsel %vm1656, %v1745, %v1746
        %v1748 = vrot.slane %v1597, 5
        %v1749 = vrot.slane %v1748, 4
        %v1750 = vrot.slane %v1598, 5
        %v1751 = vsel %vm1656, %v1749, %v1750
        %v1752 = vrot.slane %v1750, 4
        %v1753 = vrot.slane %v1599, 5
        %v1754 = vsel %vm1656, %v1752, %v1753
        %v1755 = vrot.slane %v1600, 5
        %v1756 = vrot.slane %v1755, 4
        %v1757 = vrot.slane %v1601, 5
        %v1758 = vsel %vm1656, %v1756, %v1757
        %v1759 = vrot.slane %v1757, 4
        %v1760 = vrot.slane %v1602, 5
        %v1761 = vsel %vm1656, %v1759, %v1760
        %v1762 = vrot.slane %v1603, 5
        %v1763 = vrot.slane %v1762, 4
        %v1764 = vrot.slane %v1604, 5
        %v1765 = vsel %vm1656, %v1763, %v1764
        %v1766 = vrot.slane %v1764, 4
        %v1767 = vrot.slane %v1605, 5
        %v1768 = vsel %vm1656, %v1766, %v1767
        %1769 = vrot.lane.b32.xlu0 %v1660, 64
        %v1770 = vpop.permute.xlu0 %1769
        %1771 = vrot.lane.b32.xlu0 %v1663, 64
        %v1772 = vpop.permute.xlu0 %1771
        %1773 = vrot.lane.b32.xlu0 %v1667, 64
        %v1774 = vpop.permute.xlu0 %1773
        %1775 = vrot.lane.b32.xlu0 %v1670, 64
        %v1776 = vpop.permute.xlu0 %1775
        %1777 = vrot.lane.b32.xlu0 %v1674, 64
        %v1778 = vpop.permute.xlu0 %1777
        %1779 = vrot.lane.b32.xlu0 %v1677, 64
        %v1780 = vpop.permute.xlu0 %1779
        %1781 = vrot.lane.b32.xlu0 %v1681, 64
        %v1782 = vpop.permute.xlu0 %1781
        %1783 = vrot.lane.b32.xlu0 %v1684, 64
        %v1784 = vpop.permute.xlu0 %1783
        %1785 = vrot.lane.b32.xlu0 %v1688, 64
        %v1786 = vpop.permute.xlu0 %1785
        %1787 = vrot.lane.b32.xlu0 %v1691, 64
        %v1788 = vpop.permute.xlu0 %1787
        %1789 = vrot.lane.b32.xlu0 %v1695, 64
        %v1790 = vpop.permute.xlu0 %1789
        %1791 = vrot.lane.b32.xlu0 %v1698, 64
        %v1792 = vpop.permute.xlu0 %1791
        %1793 = vrot.lane.b32.xlu0 %v1702, 64
        %v1794 = vpop.permute.xlu0 %1793
        %1795 = vrot.lane.b32.xlu0 %v1705, 64
        %v1796 = vpop.permute.xlu0 %1795
        %1797 = vrot.lane.b32.xlu0 %v1709, 64
        %v1798 = vpop.permute.xlu0 %1797
        %1799 = vrot.lane.b32.xlu0 %v1712, 64
        %v1800 = vpop.permute.xlu0 %1799
        %1801 = vrot.lane.b32.xlu0 %v1716, 64
        %v1802 = vpop.permute.xlu0 %1801
        %1803 = vrot.lane.b32.xlu0 %v1719, 64
        %v1804 = vpop.permute.xlu0 %1803
        %1805 = vrot.lane.b32.xlu0 %v1723, 64
        %v1806 = vpop.permute.xlu0 %1805
        %1807 = vrot.lane.b32.xlu0 %v1726, 64
        %v1808 = vpop.permute.xlu0 %1807
        %1809 = vrot.lane.b32.xlu0 %v1730, 64
        %v1810 = vpop.permute.xlu0 %1809
        %1811 = vrot.lane.b32.xlu0 %v1733, 64
        %v1812 = vpop.permute.xlu0 %1811
        %1813 = vrot.lane.b32.xlu0 %v1737, 64
        %v1814 = vpop.permute.xlu0 %1813
        %1815 = vrot.lane.b32.xlu0 %v1740, 64
        %v1816 = vpop.permute.xlu0 %1815
        %1817 = vrot.lane.b32.xlu0 %v1744, 64
        %v1818 = vpop.permute.xlu0 %1817
        %1819 = vrot.lane.b32.xlu0 %v1747, 64
        %v1820 = vpop.permute.xlu0 %1819
        %1821 = vrot.lane.b32.xlu0 %v1751, 64
        %v1822 = vpop.permute.xlu0 %1821
        %1823 = vrot.lane.b32.xlu0 %v1754, 64
        %v1824 = vpop.permute.xlu0 %1823
        %1825 = vrot.lane.b32.xlu0 %v1758, 64
        %v1826 = vpop.permute.xlu0 %1825
        %1827 = vrot.lane.b32.xlu0 %v1761, 64
        %v1828 = vpop.permute.xlu0 %1827
        %1829 = vrot.lane.b32.xlu0 %v1765, 64
        %v1830 = vpop.permute.xlu0 %1829
        %1831 = vrot.lane.b32.xlu0 %v1768, 64
        %v1832 = vpop.permute.xlu0 %1831
        %vm1865 = vcmask 781824
        %1866 = vst.msk [vmem:[#allocation4] sm:$0xf] %vm1865, %v1770
        %1867 = vst.msk [vmem:[#allocation4 + $0xc] sm:$0xf] %vm1865, %v1772
        %1868 = vst.msk [vmem:[#allocation4 + $0x18] sm:$0xf] %vm1865, %v1774
        %1869 = vst.msk [vmem:[#allocation4 + $0x24] sm:$0xf] %vm1865, %v1776
        %1870 = vst.msk [vmem:[#allocation4 + $0x30] sm:$0xf] %vm1865, %v1778
        %1871 = vst.msk [vmem:[#allocation4 + $0x3c] sm:$0xf] %vm1865, %v1780
        %1872 = vst.msk [vmem:[#allocation4 + $0x48] sm:$0xf] %vm1865, %v1782
        %1873 = vst.msk [vmem:[#allocation4 + $0x54] sm:$0xf] %vm1865, %v1784
        %1874 = vst.msk [vmem:[#allocation4 + $0x60] sm:$0xf] %vm1865, %v1786
        %1875 = vst.msk [vmem:[#allocation4 + $0x6c] sm:$0xf] %vm1865, %v1788
        %1876 = vst.msk [vmem:[#allocation4 + $0x78] sm:$0xf] %vm1865, %v1790
        %1877 = vst.msk [vmem:[#allocation4 + $0x84] sm:$0xf] %vm1865, %v1792
        %1878 = vst.msk [vmem:[#allocation4 + $0x90] sm:$0xf] %vm1865, %v1794
        %1879 = vst.msk [vmem:[#allocation4 + $0x9c] sm:$0xf] %vm1865, %v1796
        %1880 = vst.msk [vmem:[#allocation4 + $0xa8] sm:$0xf] %vm1865, %v1798
        %1881 = vst.msk [vmem:[#allocation4 + $0xb4] sm:$0xf] %vm1865, %v1800
        %1882 = vst.msk [vmem:[#allocation4 + $0xc0] sm:$0xf] %vm1865, %v1802
        %1883 = vst.msk [vmem:[#allocation4 + $0xcc] sm:$0xf] %vm1865, %v1804
        %1884 = vst.msk [vmem:[#allocation4 + $0xd8] sm:$0xf] %vm1865, %v1806
        %1885 = vst.msk [vmem:[#allocation4 + $0xe4] sm:$0xf] %vm1865, %v1808
        %1886 = vst.msk [vmem:[#allocation4 + $0xf0] sm:$0xf] %vm1865, %v1810
        %1887 = vst.msk [vmem:[#allocation4 + $0xfc] sm:$0xf] %vm1865, %v1812
        %1888 = vst.msk [vmem:[#allocation4 + $0x108] sm:$0xf] %vm1865, %v1814
        %1889 = vst.msk [vmem:[#allocation4 + $0x114] sm:$0xf] %vm1865, %v1816
        %1890 = vst.msk [vmem:[#allocation4 + $0x120] sm:$0xf] %vm1865, %v1818
        %1891 = vst.msk [vmem:[#allocation4 + $0x12c] sm:$0xf] %vm1865, %v1820
        %1892 = vst.msk [vmem:[#allocation4 + $0x138] sm:$0xf] %vm1865, %v1822
        %1893 = vst.msk [vmem:[#allocation4 + $0x144] sm:$0xf] %vm1865, %v1824
        %1894 = vst.msk [vmem:[#allocation4 + $0x150] sm:$0xf] %vm1865, %v1826
        %1895 = vst.msk [vmem:[#allocation4 + $0x15c] sm:$0xf] %vm1865, %v1828
        %1896 = vst.msk [vmem:[#allocation4 + $0x168] sm:$0xf] %vm1865, %v1830
        %1897 = vst.msk [vmem:[#allocation4 + $0x174] sm:$0xf] %vm1865, %v1832
        %v1898 = vld [vmem:[%s815] sm:$0xf]
        %v1899 = vld [vmem:[%s815 + $0x4] sm:$0xf]
        %v1900 = vld [vmem:[%s815 + $0xc] sm:$0xf]
        %v1901 = vld [vmem:[%s815 + $0x10] sm:$0xf]
        %v1902 = vld [vmem:[%s815 + $0x18] sm:$0xf]
        %v1903 = vld [vmem:[%s815 + $0x1c] sm:$0xf]
        %v1904 = vld [vmem:[%s815 + $0x24] sm:$0xf]
        %v1905 = vld [vmem:[%s815 + $0x28] sm:$0xf]
        %v1906 = vld [vmem:[%s815 + $0x30] sm:$0xf]
        %v1907 = vld [vmem:[%s815 + $0x34] sm:$0xf]
        %v1908 = vld [vmem:[%s815 + $0x3c] sm:$0xf]
        %v1909 = vld [vmem:[%s815 + $0x40] sm:$0xf]
        %v1910 = vld [vmem:[%s815 + $0x48] sm:$0xf]
        %v1911 = vld [vmem:[%s815 + $0x4c] sm:$0xf]
        %v1912 = vld [vmem:[%s815 + $0x54] sm:$0xf]
        %v1913 = vld [vmem:[%s815 + $0x58] sm:$0xf]
        %v1914 = vld [vmem:[%s815 + $0x60] sm:$0xf]
        %v1915 = vld [vmem:[%s815 + $0x64] sm:$0xf]
        %v1916 = vld [vmem:[%s815 + $0x6c] sm:$0xf]
        %v1917 = vld [vmem:[%s815 + $0x70] sm:$0xf]
        %v1918 = vld [vmem:[%s815 + $0x78] sm:$0xf]
        %v1919 = vld [vmem:[%s815 + $0x7c] sm:$0xf]
        %v1920 = vld [vmem:[%s815 + $0x84] sm:$0xf]
        %v1921 = vld [vmem:[%s815 + $0x88] sm:$0xf]
        %v1922 = vld [vmem:[%s815 + $0x90] sm:$0xf]
        %v1923 = vld [vmem:[%s815 + $0x94] sm:$0xf]
        %v1924 = vld [vmem:[%s815 + $0x9c] sm:$0xf]
        %v1925 = vld [vmem:[%s815 + $0xa0] sm:$0xf]
        %v1926 = vld [vmem:[%s815 + $0xa8] sm:$0xf]
        %v1927 = vld [vmem:[%s815 + $0xac] sm:$0xf]
        %v1928 = vld [vmem:[%s815 + $0xb4] sm:$0xf]
        %v1929 = vld [vmem:[%s815 + $0xb8] sm:$0xf]
        %1962 = vrot.lane.b32.xlu0 %v1898, 96
        %v1963 = vpop.permute.xlu0 %1962
        %1964 = vrot.lane.b32.xlu0 %v1899, 96
        %v1965 = vpop.permute.xlu0 %1964
        %1966 = vrot.lane.b32.xlu0 %v1900, 96
        %v1967 = vpop.permute.xlu0 %1966
        %1968 = vrot.lane.b32.xlu0 %v1901, 96
        %v1969 = vpop.permute.xlu0 %1968
        %1970 = vrot.lane.b32.xlu0 %v1902, 96
        %v1971 = vpop.permute.xlu0 %1970
        %1972 = vrot.lane.b32.xlu0 %v1903, 96
        %v1973 = vpop.permute.xlu0 %1972
        %1974 = vrot.lane.b32.xlu0 %v1904, 96
        %v1975 = vpop.permute.xlu0 %1974
        %1976 = vrot.lane.b32.xlu0 %v1905, 96
        %v1977 = vpop.permute.xlu0 %1976
        %1978 = vrot.lane.b32.xlu0 %v1906, 96
        %v1979 = vpop.permute.xlu0 %1978
        %1980 = vrot.lane.b32.xlu0 %v1907, 96
        %v1981 = vpop.permute.xlu0 %1980
        %1982 = vrot.lane.b32.xlu0 %v1908, 96
        %v1983 = vpop.permute.xlu0 %1982
        %1984 = vrot.lane.b32.xlu0 %v1909, 96
        %v1985 = vpop.permute.xlu0 %1984
        %1986 = vrot.lane.b32.xlu0 %v1910, 96
        %v1987 = vpop.permute.xlu0 %1986
        %1988 = vrot.lane.b32.xlu0 %v1911, 96
        %v1989 = vpop.permute.xlu0 %1988
        %1990 = vrot.lane.b32.xlu0 %v1912, 96
        %v1991 = vpop.permute.xlu0 %1990
        %1992 = vrot.lane.b32.xlu0 %v1913, 96
        %v1993 = vpop.permute.xlu0 %1992
        %1994 = vrot.lane.b32.xlu0 %v1914, 96
        %v1995 = vpop.permute.xlu0 %1994
        %1996 = vrot.lane.b32.xlu0 %v1915, 96
        %v1997 = vpop.permute.xlu0 %1996
        %1998 = vrot.lane.b32.xlu0 %v1916, 96
        %v1999 = vpop.permute.xlu0 %1998
        %2000 = vrot.lane.b32.xlu0 %v1917, 96
        %v2001 = vpop.permute.xlu0 %2000
        %2002 = vrot.lane.b32.xlu0 %v1918, 96
        %v2003 = vpop.permute.xlu0 %2002
        %2004 = vrot.lane.b32.xlu0 %v1919, 96
        %v2005 = vpop.permute.xlu0 %2004
        %2006 = vrot.lane.b32.xlu0 %v1920, 96
        %v2007 = vpop.permute.xlu0 %2006
        %2008 = vrot.lane.b32.xlu0 %v1921, 96
        %v2009 = vpop.permute.xlu0 %2008
        %2010 = vrot.lane.b32.xlu0 %v1922, 96
        %v2011 = vpop.permute.xlu0 %2010
        %2012 = vrot.lane.b32.xlu0 %v1923, 96
        %v2013 = vpop.permute.xlu0 %2012
        %2014 = vrot.lane.b32.xlu0 %v1924, 96
        %v2015 = vpop.permute.xlu0 %2014
        %2016 = vrot.lane.b32.xlu0 %v1925, 96
        %v2017 = vpop.permute.xlu0 %2016
        %2018 = vrot.lane.b32.xlu0 %v1926, 96
        %v2019 = vpop.permute.xlu0 %2018
        %2020 = vrot.lane.b32.xlu0 %v1927, 96
        %v2021 = vpop.permute.xlu0 %2020
        %2022 = vrot.lane.b32.xlu0 %v1928, 96
        %v2023 = vpop.permute.xlu0 %2022
        %2024 = vrot.lane.b32.xlu0 %v1929, 96
        %v2025 = vpop.permute.xlu0 %2024
        %vm2058 = vcmask 1044224
        %2059 = vst.msk [vmem:[#allocation4] sm:$0xf] %vm2058, %v1963
        %2060 = vst.msk [vmem:[#allocation4 + $0xc] sm:$0xf] %vm2058, %v1965
        %2061 = vst.msk [vmem:[#allocation4 + $0x18] sm:$0xf] %vm2058, %v1967
        %2062 = vst.msk [vmem:[#allocation4 + $0x24] sm:$0xf] %vm2058, %v1969
        %2063 = vst.msk [vmem:[#allocation4 + $0x30] sm:$0xf] %vm2058, %v1971
        %2064 = vst.msk [vmem:[#allocation4 + $0x3c] sm:$0xf] %vm2058, %v1973
        %2065 = vst.msk [vmem:[#allocation4 + $0x48] sm:$0xf] %vm2058, %v1975
        %2066 = vst.msk [vmem:[#allocation4 + $0x54] sm:$0xf] %vm2058, %v1977
        %2067 = vst.msk [vmem:[#allocation4 + $0x60] sm:$0xf] %vm2058, %v1979
        %2068 = vst.msk [vmem:[#allocation4 + $0x6c] sm:$0xf] %vm2058, %v1981
        %2069 = vst.msk [vmem:[#allocation4 + $0x78] sm:$0xf] %vm2058, %v1983
        %2070 = vst.msk [vmem:[#allocation4 + $0x84] sm:$0xf] %vm2058, %v1985
        %2071 = vst.msk [vmem:[#allocation4 + $0x90] sm:$0xf] %vm2058, %v1987
        %2072 = vst.msk [vmem:[#allocation4 + $0x9c] sm:$0xf] %vm2058, %v1989
        %2073 = vst.msk [vmem:[#allocation4 + $0xa8] sm:$0xf] %vm2058, %v1991
        %2074 = vst.msk [vmem:[#allocation4 + $0xb4] sm:$0xf] %vm2058, %v1993
        %2075 = vst.msk [vmem:[#allocation4 + $0xc0] sm:$0xf] %vm2058, %v1995
        %2076 = vst.msk [vmem:[#allocation4 + $0xcc] sm:$0xf] %vm2058, %v1997
        %2077 = vst.msk [vmem:[#allocation4 + $0xd8] sm:$0xf] %vm2058, %v1999
        %2078 = vst.msk [vmem:[#allocation4 + $0xe4] sm:$0xf] %vm2058, %v2001
        %2079 = vst.msk [vmem:[#allocation4 + $0xf0] sm:$0xf] %vm2058, %v2003
        %2080 = vst.msk [vmem:[#allocation4 + $0xfc] sm:$0xf] %vm2058, %v2005
        %2081 = vst.msk [vmem:[#allocation4 + $0x108] sm:$0xf] %vm2058, %v2007
        %2082 = vst.msk [vmem:[#allocation4 + $0x114] sm:$0xf] %vm2058, %v2009
        %2083 = vst.msk [vmem:[#allocation4 + $0x120] sm:$0xf] %vm2058, %v2011
        %2084 = vst.msk [vmem:[#allocation4 + $0x12c] sm:$0xf] %vm2058, %v2013
        %2085 = vst.msk [vmem:[#allocation4 + $0x138] sm:$0xf] %vm2058, %v2015
        %2086 = vst.msk [vmem:[#allocation4 + $0x144] sm:$0xf] %vm2058, %v2017
        %2087 = vst.msk [vmem:[#allocation4 + $0x150] sm:$0xf] %vm2058, %v2019
        %2088 = vst.msk [vmem:[#allocation4 + $0x15c] sm:$0xf] %vm2058, %v2021
        %2089 = vst.msk [vmem:[#allocation4 + $0x168] sm:$0xf] %vm2058, %v2023
        %2090 = vst.msk [vmem:[#allocation4 + $0x174] sm:$0xf] %vm2058, %v2025
        %v2091 = vld [vmem:[%s815] sm:$0xf]
        %v2092 = vld [vmem:[%s815 + $0x4] sm:$0xf]
        %v2093 = vld [vmem:[%s815 + $0x8] sm:$0x1]
        %v2094 = vld [vmem:[%s815 + $0xc] sm:$0xf]
        %v2095 = vld [vmem:[%s815 + $0x10] sm:$0xf]
        %v2096 = vld [vmem:[%s815 + $0x14] sm:$0x1]
        %v2097 = vld [vmem:[%s815 + $0x18] sm:$0xf]
        %v2098 = vld [vmem:[%s815 + $0x1c] sm:$0xf]
        %v2099 = vld [vmem:[%s815 + $0x20] sm:$0x1]
        %v2100 = vld [vmem:[%s815 + $0x24] sm:$0xf]
        %v2101 = vld [vmem:[%s815 + $0x28] sm:$0xf]
        %v2102 = vld [vmem:[%s815 + $0x2c] sm:$0x1]
        %v2103 = vld [vmem:[%s815 + $0x30] sm:$0xf]
        %v2104 = vld [vmem:[%s815 + $0x34] sm:$0xf]
        %v2105 = vld [vmem:[%s815 + $0x38] sm:$0x1]
        %v2106 = vld [vmem:[%s815 + $0x3c] sm:$0xf]
        %v2107 = vld [vmem:[%s815 + $0x40] sm:$0xf]
        %v2108 = vld [vmem:[%s815 + $0x44] sm:$0x1]
        %v2109 = vld [vmem:[%s815 + $0x48] sm:$0xf]
        %v2110 = vld [vmem:[%s815 + $0x4c] sm:$0xf]
        %v2111 = vld [vmem:[%s815 + $0x50] sm:$0x1]
        %v2112 = vld [vmem:[%s815 + $0x54] sm:$0xf]
        %v2113 = vld [vmem:[%s815 + $0x58] sm:$0xf]
        %v2114 = vld [vmem:[%s815 + $0x5c] sm:$0x1]
        %v2115 = vld [vmem:[%s815 + $0x60] sm:$0xf]
        %v2116 = vld [vmem:[%s815 + $0x64] sm:$0xf]
        %v2117 = vld [vmem:[%s815 + $0x68] sm:$0x1]
        %v2118 = vld [vmem:[%s815 + $0x6c] sm:$0xf]
        %v2119 = vld [vmem:[%s815 + $0x70] sm:$0xf]
        %v2120 = vld [vmem:[%s815 + $0x74] sm:$0x1]
        %v2121 = vld [vmem:[%s815 + $0x78] sm:$0xf]
        %v2122 = vld [vmem:[%s815 + $0x7c] sm:$0xf]
        %v2123 = vld [vmem:[%s815 + $0x80] sm:$0x1]
        %v2124 = vld [vmem:[%s815 + $0x84] sm:$0xf]
        %v2125 = vld [vmem:[%s815 + $0x88] sm:$0xf]
        %v2126 = vld [vmem:[%s815 + $0x8c] sm:$0x1]
        %v2127 = vld [vmem:[%s815 + $0x90] sm:$0xf]
        %v2128 = vld [vmem:[%s815 + $0x94] sm:$0xf]
        %v2129 = vld [vmem:[%s815 + $0x98] sm:$0x1]
        %v2130 = vld [vmem:[%s815 + $0x9c] sm:$0xf]
        %v2131 = vld [vmem:[%s815 + $0xa0] sm:$0xf]
        %v2132 = vld [vmem:[%s815 + $0xa4] sm:$0x1]
        %v2133 = vld [vmem:[%s815 + $0xa8] sm:$0xf]
        %v2134 = vld [vmem:[%s815 + $0xac] sm:$0xf]
        %v2135 = vld [vmem:[%s815 + $0xb0] sm:$0x1]
        %v2136 = vld [vmem:[%s815 + $0xb4] sm:$0xf]
        %v2137 = vld [vmem:[%s815 + $0xb8] sm:$0xf]
        %v2138 = vld [vmem:[%s815 + $0xbc] sm:$0x1]
        %v2140 = vshrl.u32 %v2091, 16
        %v2142 = vrot.slane %v2140, 4
        %v2143 = vshll.u32 %v2091, 16
        %v2145 = vrot.slane %v2143, 5
        %v2146 = vor.u32 %v2142, %v2145
        %v2147 = vrot.slane %v2146, 4
        %v2149 = vshll.u32 %v2092, 16
        %v2151 = vrot.slane %v2149, 5
        %v2152 = vsel %vm1044, %v2147, %v2151
        %v2153 = vshrl.u32 %v2092, 16
        %v2155 = vrot.slane %v2153, 4
        %v2156 = vor.u32 %v2155, %v2151
        %v2157 = vrot.slane %v2156, 4
        %v2159 = vshll.u32 %v2093, 16
        %v2161 = vrot.slane %v2159, 5
        %v2162 = vsel %vm1044, %v2157, %v2161
        %v2164 = vshrl.u32 %v2094, 16
        %v2166 = vrot.slane %v2164, 4
        %v2167 = vshll.u32 %v2094, 16
        %v2169 = vrot.slane %v2167, 5
        %v2170 = vor.u32 %v2166, %v2169
        %v2171 = vrot.slane %v2170, 4
        %v2173 = vshll.u32 %v2095, 16
        %v2175 = vrot.slane %v2173, 5
        %v2176 = vsel %vm1044, %v2171, %v2175
        %v2177 = vshrl.u32 %v2095, 16
        %v2179 = vrot.slane %v2177, 4
        %v2180 = vor.u32 %v2179, %v2175
        %v2181 = vrot.slane %v2180, 4
        %v2183 = vshll.u32 %v2096, 16
        %v2185 = vrot.slane %v2183, 5
        %v2186 = vsel %vm1044, %v2181, %v2185
        %v2188 = vshrl.u32 %v2097, 16
        %v2190 = vrot.slane %v2188, 4
        %v2191 = vshll.u32 %v2097, 16
        %v2193 = vrot.slane %v2191, 5
        %v2194 = vor.u32 %v2190, %v2193
        %v2195 = vrot.slane %v2194, 4
        %v2197 = vshll.u32 %v2098, 16
        %v2199 = vrot.slane %v2197, 5
        %v2200 = vsel %vm1044, %v2195, %v2199
        %v2201 = vshrl.u32 %v2098, 16
        %v2203 = vrot.slane %v2201, 4
        %v2204 = vor.u32 %v2203, %v2199
        %v2205 = vrot.slane %v2204, 4
        %v2207 = vshll.u32 %v2099, 16
        %v2209 = vrot.slane %v2207, 5
        %v2210 = vsel %vm1044, %v2205, %v2209
        %v2212 = vshrl.u32 %v2100, 16
        %v2214 = vrot.slane %v2212, 4
        %v2215 = vshll.u32 %v2100, 16
        %v2217 = vrot.slane %v2215, 5
        %v2218 = vor.u32 %v2214, %v2217
        %v2219 = vrot.slane %v2218, 4
        %v2221 = vshll.u32 %v2101, 16
        %v2223 = vrot.slane %v2221, 5
        %v2224 = vsel %vm1044, %v2219, %v2223
        %v2225 = vshrl.u32 %v2101, 16
        %v2227 = vrot.slane %v2225, 4
        %v2228 = vor.u32 %v2227, %v2223
        %v2229 = vrot.slane %v2228, 4
        %v2231 = vshll.u32 %v2102, 16
        %v2233 = vrot.slane %v2231, 5
        %v2234 = vsel %vm1044, %v2229, %v2233
        %v2236 = vshrl.u32 %v2103, 16
        %v2238 = vrot.slane %v2236, 4
        %v2239 = vshll.u32 %v2103, 16
        %v2241 = vrot.slane %v2239, 5
        %v2242 = vor.u32 %v2238, %v2241
        %v2243 = vrot.slane %v2242, 4
        %v2245 = vshll.u32 %v2104, 16
        %v2247 = vrot.slane %v2245, 5
        %v2248 = vsel %vm1044, %v2243, %v2247
        %v2249 = vshrl.u32 %v2104, 16
        %v2251 = vrot.slane %v2249, 4
        %v2252 = vor.u32 %v2251, %v2247
        %v2253 = vrot.slane %v2252, 4
        %v2255 = vshll.u32 %v2105, 16
        %v2257 = vrot.slane %v2255, 5
        %v2258 = vsel %vm1044, %v2253, %v2257
        %v2260 = vshrl.u32 %v2106, 16
        %v2262 = vrot.slane %v2260, 4
        %v2263 = vshll.u32 %v2106, 16
        %v2265 = vrot.slane %v2263, 5
        %v2266 = vor.u32 %v2262, %v2265
        %v2267 = vrot.slane %v2266, 4
        %v2269 = vshll.u32 %v2107, 16
        %v2271 = vrot.slane %v2269, 5
        %v2272 = vsel %vm1044, %v2267, %v2271
        %v2273 = vshrl.u32 %v2107, 16
        %v2275 = vrot.slane %v2273, 4
        %v2276 = vor.u32 %v2275, %v2271
        %v2277 = vrot.slane %v2276, 4
        %v2279 = vshll.u32 %v2108, 16
        %v2281 = vrot.slane %v2279, 5
        %v2282 = vsel %vm1044, %v2277, %v2281
        %v2284 = vshrl.u32 %v2109, 16
        %v2286 = vrot.slane %v2284, 4
        %v2287 = vshll.u32 %v2109, 16
        %v2289 = vrot.slane %v2287, 5
        %v2290 = vor.u32 %v2286, %v2289
        %v2291 = vrot.slane %v2290, 4
        %v2293 = vshll.u32 %v2110, 16
        %v2295 = vrot.slane %v2293, 5
        %v2296 = vsel %vm1044, %v2291, %v2295
        %v2297 = vshrl.u32 %v2110, 16
        %v2299 = vrot.slane %v2297, 4
        %v2300 = vor.u32 %v2299, %v2295
        %v2301 = vrot.slane %v2300, 4
        %v2303 = vshll.u32 %v2111, 16
        %v2305 = vrot.slane %v2303, 5
        %v2306 = vsel %vm1044, %v2301, %v2305
        %v2308 = vshrl.u32 %v2112, 16
        %v2310 = vrot.slane %v2308, 4
        %v2311 = vshll.u32 %v2112, 16
        %v2313 = vrot.slane %v2311, 5
        %v2314 = vor.u32 %v2310, %v2313
        %v2315 = vrot.slane %v2314, 4
        %v2317 = vshll.u32 %v2113, 16
        %v2319 = vrot.slane %v2317, 5
        %v2320 = vsel %vm1044, %v2315, %v2319
        %v2321 = vshrl.u32 %v2113, 16
        %v2323 = vrot.slane %v2321, 4
        %v2324 = vor.u32 %v2323, %v2319
        %v2325 = vrot.slane %v2324, 4
        %v2327 = vshll.u32 %v2114, 16
        %v2329 = vrot.slane %v2327, 5
        %v2330 = vsel %vm1044, %v2325, %v2329
        %v2332 = vshrl.u32 %v2115, 16
        %v2334 = vrot.slane %v2332, 4
        %v2335 = vshll.u32 %v2115, 16
        %v2337 = vrot.slane %v2335, 5
        %v2338 = vor.u32 %v2334, %v2337
        %v2339 = vrot.slane %v2338, 4
        %v2341 = vshll.u32 %v2116, 16
        %v2343 = vrot.slane %v2341, 5
        %v2344 = vsel %vm1044, %v2339, %v2343
        %v2345 = vshrl.u32 %v2116, 16
        %v2347 = vrot.slane %v2345, 4
        %v2348 = vor.u32 %v2347, %v2343
        %v2349 = vrot.slane %v2348, 4
        %v2351 = vshll.u32 %v2117, 16
        %v2353 = vrot.slane %v2351, 5
        %v2354 = vsel %vm1044, %v2349, %v2353
        %v2356 = vshrl.u32 %v2118, 16
        %v2358 = vrot.slane %v2356, 4
        %v2359 = vshll.u32 %v2118, 16
        %v2361 = vrot.slane %v2359, 5
        %v2362 = vor.u32 %v2358, %v2361
        %v2363 = vrot.slane %v2362, 4
        %v2365 = vshll.u32 %v2119, 16
        %v2367 = vrot.slane %v2365, 5
        %v2368 = vsel %vm1044, %v2363, %v2367
        %v2369 = vshrl.u32 %v2119, 16
        %v2371 = vrot.slane %v2369, 4
        %v2372 = vor.u32 %v2371, %v2367
        %v2373 = vrot.slane %v2372, 4
        %v2375 = vshll.u32 %v2120, 16
        %v2377 = vrot.slane %v2375, 5
        %v2378 = vsel %vm1044, %v2373, %v2377
        %v2380 = vshrl.u32 %v2121, 16
        %v2382 = vrot.slane %v2380, 4
        %v2383 = vshll.u32 %v2121, 16
        %v2385 = vrot.slane %v2383, 5
        %v2386 = vor.u32 %v2382, %v2385
        %v2387 = vrot.slane %v2386, 4
        %v2389 = vshll.u32 %v2122, 16
        %v2391 = vrot.slane %v2389, 5
        %v2392 = vsel %vm1044, %v2387, %v2391
        %v2393 = vshrl.u32 %v2122, 16
        %v2395 = vrot.slane %v2393, 4
        %v2396 = vor.u32 %v2395, %v2391
        %v2397 = vrot.slane %v2396, 4
        %v2399 = vshll.u32 %v2123, 16
        %v2401 = vrot.slane %v2399, 5
        %v2402 = vsel %vm1044, %v2397, %v2401
        %v2404 = vshrl.u32 %v2124, 16
        %v2406 = vrot.slane %v2404, 4
        %v2407 = vshll.u32 %v2124, 16
        %v2409 = vrot.slane %v2407, 5
        %v2410 = vor.u32 %v2406, %v2409
        %v2411 = vrot.slane %v2410, 4
        %v2413 = vshll.u32 %v2125, 16
        %v2415 = vrot.slane %v2413, 5
        %v2416 = vsel %vm1044, %v2411, %v2415
        %v2417 = vshrl.u32 %v2125, 16
        %v2419 = vrot.slane %v2417, 4
        %v2420 = vor.u32 %v2419, %v2415
        %v2421 = vrot.slane %v2420, 4
        %v2423 = vshll.u32 %v2126, 16
        %v2425 = vrot.slane %v2423, 5
        %v2426 = vsel %vm1044, %v2421, %v2425
        %v2428 = vshrl.u32 %v2127, 16
        %v2430 = vrot.slane %v2428, 4
        %v2431 = vshll.u32 %v2127, 16
        %v2433 = vrot.slane %v2431, 5
        %v2434 = vor.u32 %v2430, %v2433
        %v2435 = vrot.slane %v2434, 4
        %v2437 = vshll.u32 %v2128, 16
        %v2439 = vrot.slane %v2437, 5
        %v2440 = vsel %vm1044, %v2435, %v2439
        %v2441 = vshrl.u32 %v2128, 16
        %v2443 = vrot.slane %v2441, 4
        %v2444 = vor.u32 %v2443, %v2439
        %v2445 = vrot.slane %v2444, 4
        %v2447 = vshll.u32 %v2129, 16
        %v2449 = vrot.slane %v2447, 5
        %v2450 = vsel %vm1044, %v2445, %v2449
        %v2452 = vshrl.u32 %v2130, 16
        %v2454 = vrot.slane %v2452, 4
        %v2455 = vshll.u32 %v2130, 16
        %v2457 = vrot.slane %v2455, 5
        %v2458 = vor.u32 %v2454, %v2457
        %v2459 = vrot.slane %v2458, 4
        %v2461 = vshll.u32 %v2131, 16
        %v2463 = vrot.slane %v2461, 5
        %v2464 = vsel %vm1044, %v2459, %v2463
        %v2465 = vshrl.u32 %v2131, 16
        %v2467 = vrot.slane %v2465, 4
        %v2468 = vor.u32 %v2467, %v2463
        %v2469 = vrot.slane %v2468, 4
        %v2471 = vshll.u32 %v2132, 16
        %v2473 = vrot.slane %v2471, 5
        %v2474 = vsel %vm1044, %v2469, %v2473
        %v2476 = vshrl.u32 %v2133, 16
        %v2478 = vrot.slane %v2476, 4
        %v2479 = vshll.u32 %v2133, 16
        %v2481 = vrot.slane %v2479, 5
        %v2482 = vor.u32 %v2478, %v2481
        %v2483 = vrot.slane %v2482, 4
        %v2485 = vshll.u32 %v2134, 16
        %v2487 = vrot.slane %v2485, 5
        %v2488 = vsel %vm1044, %v2483, %v2487
        %v2489 = vshrl.u32 %v2134, 16
        %v2491 = vrot.slane %v2489, 4
        %v2492 = vor.u32 %v2491, %v2487
        %v2493 = vrot.slane %v2492, 4
        %v2495 = vshll.u32 %v2135, 16
        %v2497 = vrot.slane %v2495, 5
        %v2498 = vsel %vm1044, %v2493, %v2497
        %v2500 = vshrl.u32 %v2136, 16
        %v2502 = vrot.slane %v2500, 4
        %v2503 = vshll.u32 %v2136, 16
        %v2505 = vrot.slane %v2503, 5
        %v2506 = vor.u32 %v2502, %v2505
        %v2507 = vrot.slane %v2506, 4
        %v2509 = vshll.u32 %v2137, 16
        %v2511 = vrot.slane %v2509, 5
        %v2512 = vsel %vm1044, %v2507, %v2511
        %v2513 = vshrl.u32 %v2137, 16
        %v2515 = vrot.slane %v2513, 4
        %v2516 = vor.u32 %v2515, %v2511
        %v2517 = vrot.slane %v2516, 4
        %v2519 = vshll.u32 %v2138, 16
        %v2521 = vrot.slane %v2519, 5
        %v2522 = vsel %vm1044, %v2517, %v2521
        %2555 = vst.msk [vmem:[#allocation4 + $0x4] sm:$0xf] %vm224, %v2152
        %2556 = vst.msk [vmem:[#allocation4 + $0x10] sm:$0xf] %vm224, %v2162
        %2557 = vst.msk [vmem:[#allocation4 + $0x1c] sm:$0xf] %vm224, %v2176
        %2558 = vst.msk [vmem:[#allocation4 + $0x28] sm:$0xf] %vm224, %v2186
        %2559 = vst.msk [vmem:[#allocation4 + $0x34] sm:$0xf] %vm224, %v2200
        %2560 = vst.msk [vmem:[#allocation4 + $0x40] sm:$0xf] %vm224, %v2210
        %2561 = vst.msk [vmem:[#allocation4 + $0x4c] sm:$0xf] %vm224, %v2224
        %2562 = vst.msk [vmem:[#allocation4 + $0x58] sm:$0xf] %vm224, %v2234
        %2563 = vst.msk [vmem:[#allocation4 + $0x64] sm:$0xf] %vm224, %v2248
        %2564 = vst.msk [vmem:[#allocation4 + $0x70] sm:$0xf] %vm224, %v2258
        %2565 = vst.msk [vmem:[#allocation4 + $0x7c] sm:$0xf] %vm224, %v2272
        %2566 = vst.msk [vmem:[#allocation4 + $0x88] sm:$0xf] %vm224, %v2282
        %2567 = vst.msk [vmem:[#allocation4 + $0x94] sm:$0xf] %vm224, %v2296
        %2568 = vst.msk [vmem:[#allocation4 + $0xa0] sm:$0xf] %vm224, %v2306
        %2569 = vst.msk [vmem:[#allocation4 + $0xac] sm:$0xf] %vm224, %v2320
        %2570 = vst.msk [vmem:[#allocation4 + $0xb8] sm:$0xf] %vm224, %v2330
        %2571 = vst.msk [vmem:[#allocation4 + $0xc4] sm:$0xf] %vm224, %v2344
        %2572 = vst.msk [vmem:[#allocation4 + $0xd0] sm:$0xf] %vm224, %v2354
        %2573 = vst.msk [vmem:[#allocation4 + $0xdc] sm:$0xf] %vm224, %v2368
        %2574 = vst.msk [vmem:[#allocation4 + $0xe8] sm:$0xf] %vm224, %v2378
        %2575 = vst.msk [vmem:[#allocation4 + $0xf4] sm:$0xf] %vm224, %v2392
        %2576 = vst.msk [vmem:[#allocation4 + $0x100] sm:$0xf] %vm224, %v2402
        %2577 = vst.msk [vmem:[#allocation4 + $0x10c] sm:$0xf] %vm224, %v2416
        %2578 = vst.msk [vmem:[#allocation4 + $0x118] sm:$0xf] %vm224, %v2426
        %2579 = vst.msk [vmem:[#allocation4 + $0x124] sm:$0xf] %vm224, %v2440
        %2580 = vst.msk [vmem:[#allocation4 + $0x130] sm:$0xf] %vm224, %v2450
        %2581 = vst.msk [vmem:[#allocation4 + $0x13c] sm:$0xf] %vm224, %v2464
        %2582 = vst.msk [vmem:[#allocation4 + $0x148] sm:$0xf] %vm224, %v2474
        %2583 = vst.msk [vmem:[#allocation4 + $0x154] sm:$0xf] %vm224, %v2488
        %2584 = vst.msk [vmem:[#allocation4 + $0x160] sm:$0xf] %vm224, %v2498
        %2585 = vst.msk [vmem:[#allocation4 + $0x16c] sm:$0xf] %vm224, %v2512
        %2586 = vst.msk [vmem:[#allocation4 + $0x178] sm:$0xf] %vm224, %v2522
        %v2587 = vld [vmem:[%s815] sm:$0xe]
        %v2588 = vld [vmem:[%s815 + $0x4] sm:$0xf]
        %v2589 = vld [vmem:[%s815 + $0x8] sm:$0x1]
        %v2590 = vld [vmem:[%s815 + $0xc] sm:$0xe]
        %v2591 = vld [vmem:[%s815 + $0x10] sm:$0xf]
        %v2592 = vld [vmem:[%s815 + $0x14] sm:$0x1]
        %v2593 = vld [vmem:[%s815 + $0x18] sm:$0xe]
        %v2594 = vld [vmem:[%s815 + $0x1c] sm:$0xf]
        %v2595 = vld [vmem:[%s815 + $0x20] sm:$0x1]
        %v2596 = vld [vmem:[%s815 + $0x24] sm:$0xe]
        %v2597 = vld [vmem:[%s815 + $0x28] sm:$0xf]
        %v2598 = vld [vmem:[%s815 + $0x2c] sm:$0x1]
        %v2599 = vld [vmem:[%s815 + $0x30] sm:$0xe]
        %v2600 = vld [vmem:[%s815 + $0x34] sm:$0xf]
        %v2601 = vld [vmem:[%s815 + $0x38] sm:$0x1]
        %v2602 = vld [vmem:[%s815 + $0x3c] sm:$0xe]
        %v2603 = vld [vmem:[%s815 + $0x40] sm:$0xf]
        %v2604 = vld [vmem:[%s815 + $0x44] sm:$0x1]
        %v2605 = vld [vmem:[%s815 + $0x48] sm:$0xe]
        %v2606 = vld [vmem:[%s815 + $0x4c] sm:$0xf]
        %v2607 = vld [vmem:[%s815 + $0x50] sm:$0x1]
        %v2608 = vld [vmem:[%s815 + $0x54] sm:$0xe]
        %v2609 = vld [vmem:[%s815 + $0x58] sm:$0xf]
        %v2610 = vld [vmem:[%s815 + $0x5c] sm:$0x1]
        %v2611 = vld [vmem:[%s815 + $0x60] sm:$0xe]
        %v2612 = vld [vmem:[%s815 + $0x64] sm:$0xf]
        %v2613 = vld [vmem:[%s815 + $0x68] sm:$0x1]
        %v2614 = vld [vmem:[%s815 + $0x6c] sm:$0xe]
        %v2615 = vld [vmem:[%s815 + $0x70] sm:$0xf]
        %v2616 = vld [vmem:[%s815 + $0x74] sm:$0x1]
        %v2617 = vld [vmem:[%s815 + $0x78] sm:$0xe]
        %v2618 = vld [vmem:[%s815 + $0x7c] sm:$0xf]
        %v2619 = vld [vmem:[%s815 + $0x80] sm:$0x1]
        %v2620 = vld [vmem:[%s815 + $0x84] sm:$0xe]
        %v2621 = vld [vmem:[%s815 + $0x88] sm:$0xf]
        %v2622 = vld [vmem:[%s815 + $0x8c] sm:$0x1]
        %v2623 = vld [vmem:[%s815 + $0x90] sm:$0xe]
        %v2624 = vld [vmem:[%s815 + $0x94] sm:$0xf]
        %v2625 = vld [vmem:[%s815 + $0x98] sm:$0x1]
        %v2626 = vld [vmem:[%s815 + $0x9c] sm:$0xe]
        %v2627 = vld [vmem:[%s815 + $0xa0] sm:$0xf]
        %v2628 = vld [vmem:[%s815 + $0xa4] sm:$0x1]
        %v2629 = vld [vmem:[%s815 + $0xa8] sm:$0xe]
        %v2630 = vld [vmem:[%s815 + $0xac] sm:$0xf]
        %v2631 = vld [vmem:[%s815 + $0xb0] sm:$0x1]
        %v2632 = vld [vmem:[%s815 + $0xb4] sm:$0xe]
        %v2633 = vld [vmem:[%s815 + $0xb8] sm:$0xf]
        %v2634 = vld [vmem:[%s815 + $0xbc] sm:$0x1]
        %v2683 = vrot.slane %v2587, 5
        %v2684 = vrot.slane %v2683, 4
        %v2685 = vrot.slane %v2588, 5
        %v2686 = vsel %vm1656, %v2684, %v2685
        %v2687 = vrot.slane %v2685, 4
        %v2688 = vrot.slane %v2589, 5
        %v2689 = vsel %vm1656, %v2687, %v2688
        %v2690 = vrot.slane %v2590, 5
        %v2691 = vrot.slane %v2690, 4
        %v2692 = vrot.slane %v2591, 5
        %v2693 = vsel %vm1656, %v2691, %v2692
        %v2694 = vrot.slane %v2692, 4
        %v2695 = vrot.slane %v2592, 5
        %v2696 = vsel %vm1656, %v2694, %v2695
        %v2697 = vrot.slane %v2593, 5
        %v2698 = vrot.slane %v2697, 4
        %v2699 = vrot.slane %v2594, 5
        %v2700 = vsel %vm1656, %v2698, %v2699
        %v2701 = vrot.slane %v2699, 4
        %v2702 = vrot.slane %v2595, 5
        %v2703 = vsel %vm1656, %v2701, %v2702
        %v2704 = vrot.slane %v2596, 5
        %v2705 = vrot.slane %v2704, 4
        %v2706 = vrot.slane %v2597, 5
        %v2707 = vsel %vm1656, %v2705, %v2706
        %v2708 = vrot.slane %v2706, 4
        %v2709 = vrot.slane %v2598, 5
        %v2710 = vsel %vm1656, %v2708, %v2709
        %v2711 = vrot.slane %v2599, 5
        %v2712 = vrot.slane %v2711, 4
        %v2713 = vrot.slane %v2600, 5
        %v2714 = vsel %vm1656, %v2712, %v2713
        %v2715 = vrot.slane %v2713, 4
        %v2716 = vrot.slane %v2601, 5
        %v2717 = vsel %vm1656, %v2715, %v2716
        %v2718 = vrot.slane %v2602, 5
        %v2719 = vrot.slane %v2718, 4
        %v2720 = vrot.slane %v2603, 5
        %v2721 = vsel %vm1656, %v2719, %v2720
        %v2722 = vrot.slane %v2720, 4
        %v2723 = vrot.slane %v2604, 5
        %v2724 = vsel %vm1656, %v2722, %v2723
        %v2725 = vrot.slane %v2605, 5
        %v2726 = vrot.slane %v2725, 4
        %v2727 = vrot.slane %v2606, 5
        %v2728 = vsel %vm1656, %v2726, %v2727
        %v2729 = vrot.slane %v2727, 4
        %v2730 = vrot.slane %v2607, 5
        %v2731 = vsel %vm1656, %v2729, %v2730
        %v2732 = vrot.slane %v2608, 5
        %v2733 = vrot.slane %v2732, 4
        %v2734 = vrot.slane %v2609, 5
        %v2735 = vsel %vm1656, %v2733, %v2734
        %v2736 = vrot.slane %v2734, 4
        %v2737 = vrot.slane %v2610, 5
        %v2738 = vsel %vm1656, %v2736, %v2737
        %v2739 = vrot.slane %v2611, 5
        %v2740 = vrot.slane %v2739, 4
        %v2741 = vrot.slane %v2612, 5
        %v2742 = vsel %vm1656, %v2740, %v2741
        %v2743 = vrot.slane %v2741, 4
        %v2744 = vrot.slane %v2613, 5
        %v2745 = vsel %vm1656, %v2743, %v2744
        %v2746 = vrot.slane %v2614, 5
        %v2747 = vrot.slane %v2746, 4
        %v2748 = vrot.slane %v2615, 5
        %v2749 = vsel %vm1656, %v2747, %v2748
        %v2750 = vrot.slane %v2748, 4
        %v2751 = vrot.slane %v2616, 5
        %v2752 = vsel %vm1656, %v2750, %v2751
        %v2753 = vrot.slane %v2617, 5
        %v2754 = vrot.slane %v2753, 4
        %v2755 = vrot.slane %v2618, 5
        %v2756 = vsel %vm1656, %v2754, %v2755
        %v2757 = vrot.slane %v2755, 4
        %v2758 = vrot.slane %v2619, 5
        %v2759 = vsel %vm1656, %v2757, %v2758
        %v2760 = vrot.slane %v2620, 5
        %v2761 = vrot.slane %v2760, 4
        %v2762 = vrot.slane %v2621, 5
        %v2763 = vsel %vm1656, %v2761, %v2762
        %v2764 = vrot.slane %v2762, 4
        %v2765 = vrot.slane %v2622, 5
        %v2766 = vsel %vm1656, %v2764, %v2765
        %v2767 = vrot.slane %v2623, 5
        %v2768 = vrot.slane %v2767, 4
        %v2769 = vrot.slane %v2624, 5
        %v2770 = vsel %vm1656, %v2768, %v2769
        %v2771 = vrot.slane %v2769, 4
        %v2772 = vrot.slane %v2625, 5
        %v2773 = vsel %vm1656, %v2771, %v2772
        %v2774 = vrot.slane %v2626, 5
        %v2775 = vrot.slane %v2774, 4
        %v2776 = vrot.slane %v2627, 5
        %v2777 = vsel %vm1656, %v2775, %v2776
        %v2778 = vrot.slane %v2776, 4
        %v2779 = vrot.slane %v2628, 5
        %v2780 = vsel %vm1656, %v2778, %v2779
        %v2781 = vrot.slane %v2629, 5
        %v2782 = vrot.slane %v2781, 4
        %v2783 = vrot.slane %v2630, 5
        %v2784 = vsel %vm1656, %v2782, %v2783
        %v2785 = vrot.slane %v2783, 4
        %v2786 = vrot.slane %v2631, 5
        %v2787 = vsel %vm1656, %v2785, %v2786
        %v2788 = vrot.slane %v2632, 5
        %v2789 = vrot.slane %v2788, 4
        %v2790 = vrot.slane %v2633, 5
        %v2791 = vsel %vm1656, %v2789, %v2790
        %v2792 = vrot.slane %v2790, 4
        %v2793 = vrot.slane %v2634, 5
        %v2794 = vsel %vm1656, %v2792, %v2793
        %2795 = vrot.lane.b32.xlu0 %v2686, 32
        %v2796 = vpop.permute.xlu0 %2795
        %2797 = vrot.lane.b32.xlu0 %v2689, 32
        %v2798 = vpop.permute.xlu0 %2797
        %2799 = vrot.lane.b32.xlu0 %v2693, 32
        %v2800 = vpop.permute.xlu0 %2799
        %2801 = vrot.lane.b32.xlu0 %v2696, 32
        %v2802 = vpop.permute.xlu0 %2801
        %2803 = vrot.lane.b32.xlu0 %v2700, 32
        %v2804 = vpop.permute.xlu0 %2803
        %2805 = vrot.lane.b32.xlu0 %v2703, 32
        %v2806 = vpop.permute.xlu0 %2805
        %2807 = vrot.lane.b32.xlu0 %v2707, 32
        %v2808 = vpop.permute.xlu0 %2807
        %2809 = vrot.lane.b32.xlu0 %v2710, 32
        %v2810 = vpop.permute.xlu0 %2809
        %2811 = vrot.lane.b32.xlu0 %v2714, 32
        %v2812 = vpop.permute.xlu0 %2811
        %2813 = vrot.lane.b32.xlu0 %v2717, 32
        %v2814 = vpop.permute.xlu0 %2813
        %2815 = vrot.lane.b32.xlu0 %v2721, 32
        %v2816 = vpop.permute.xlu0 %2815
        %2817 = vrot.lane.b32.xlu0 %v2724, 32
        %v2818 = vpop.permute.xlu0 %2817
        %2819 = vrot.lane.b32.xlu0 %v2728, 32
        %v2820 = vpop.permute.xlu0 %2819
        %2821 = vrot.lane.b32.xlu0 %v2731, 32
        %v2822 = vpop.permute.xlu0 %2821
        %2823 = vrot.lane.b32.xlu0 %v2735, 32
        %v2824 = vpop.permute.xlu0 %2823
        %2825 = vrot.lane.b32.xlu0 %v2738, 32
        %v2826 = vpop.permute.xlu0 %2825
        %2827 = vrot.lane.b32.xlu0 %v2742, 32
        %v2828 = vpop.permute.xlu0 %2827
        %2829 = vrot.lane.b32.xlu0 %v2745, 32
        %v2830 = vpop.permute.xlu0 %2829
        %2831 = vrot.lane.b32.xlu0 %v2749, 32
        %v2832 = vpop.permute.xlu0 %2831
        %2833 = vrot.lane.b32.xlu0 %v2752, 32
        %v2834 = vpop.permute.xlu0 %2833
        %2835 = vrot.lane.b32.xlu0 %v2756, 32
        %v2836 = vpop.permute.xlu0 %2835
        %2837 = vrot.lane.b32.xlu0 %v2759, 32
        %v2838 = vpop.permute.xlu0 %2837
        %2839 = vrot.lane.b32.xlu0 %v2763, 32
        %v2840 = vpop.permute.xlu0 %2839
        %2841 = vrot.lane.b32.xlu0 %v2766, 32
        %v2842 = vpop.permute.xlu0 %2841
        %2843 = vrot.lane.b32.xlu0 %v2770, 32
        %v2844 = vpop.permute.xlu0 %2843
        %2845 = vrot.lane.b32.xlu0 %v2773, 32
        %v2846 = vpop.permute.xlu0 %2845
        %2847 = vrot.lane.b32.xlu0 %v2777, 32
        %v2848 = vpop.permute.xlu0 %2847
        %2849 = vrot.lane.b32.xlu0 %v2780, 32
        %v2850 = vpop.permute.xlu0 %2849
        %2851 = vrot.lane.b32.xlu0 %v2784, 32
        %v2852 = vpop.permute.xlu0 %2851
        %2853 = vrot.lane.b32.xlu0 %v2787, 32
        %v2854 = vpop.permute.xlu0 %2853
        %2855 = vrot.lane.b32.xlu0 %v2791, 32
        %v2856 = vpop.permute.xlu0 %2855
        %2857 = vrot.lane.b32.xlu0 %v2794, 32
        %v2858 = vpop.permute.xlu0 %2857
        %2891 = vst.msk [vmem:[#allocation4 + $0x4] sm:$0xf] %vm1525, %v2796
        %2892 = vst.msk [vmem:[#allocation4 + $0x10] sm:$0xf] %vm1525, %v2798
        %2893 = vst.msk [vmem:[#allocation4 + $0x1c] sm:$0xf] %vm1525, %v2800
        %2894 = vst.msk [vmem:[#allocation4 + $0x28] sm:$0xf] %vm1525, %v2802
        %2895 = vst.msk [vmem:[#allocation4 + $0x34] sm:$0xf] %vm1525, %v2804
        %2896 = vst.msk [vmem:[#allocation4 + $0x40] sm:$0xf] %vm1525, %v2806
        %2897 = vst.msk [vmem:[#allocation4 + $0x4c] sm:$0xf] %vm1525, %v2808
        %2898 = vst.msk [vmem:[#allocation4 + $0x58] sm:$0xf] %vm1525, %v2810
        %2899 = vst.msk [vmem:[#allocation4 + $0x64] sm:$0xf] %vm1525, %v2812
        %2900 = vst.msk [vmem:[#allocation4 + $0x70] sm:$0xf] %vm1525, %v2814
        %2901 = vst.msk [vmem:[#allocation4 + $0x7c] sm:$0xf] %vm1525, %v2816
        %2902 = vst.msk [vmem:[#allocation4 + $0x88] sm:$0xf] %vm1525, %v2818
        %2903 = vst.msk [vmem:[#allocation4 + $0x94] sm:$0xf] %vm1525, %v2820
        %2904 = vst.msk [vmem:[#allocation4 + $0xa0] sm:$0xf] %vm1525, %v2822
        %2905 = vst.msk [vmem:[#allocation4 + $0xac] sm:$0xf] %vm1525, %v2824
        %2906 = vst.msk [vmem:[#allocation4 + $0xb8] sm:$0xf] %vm1525, %v2826
        %2907 = vst.msk [vmem:[#allocation4 + $0xc4] sm:$0xf] %vm1525, %v2828
        %2908 = vst.msk [vmem:[#allocation4 + $0xd0] sm:$0xf] %vm1525, %v2830
        %2909 = vst.msk [vmem:[#allocation4 + $0xdc] sm:$0xf] %vm1525, %v2832
        %2910 = vst.msk [vmem:[#allocation4 + $0xe8] sm:$0xf] %vm1525, %v2834
        %2911 = vst.msk [vmem:[#allocation4 + $0xf4] sm:$0xf] %vm1525, %v2836
        %2912 = vst.msk [vmem:[#allocation4 + $0x100] sm:$0xf] %vm1525, %v2838
        %2913 = vst.msk [vmem:[#allocation4 + $0x10c] sm:$0xf] %vm1525, %v2840
        %2914 = vst.msk [vmem:[#allocation4 + $0x118] sm:$0xf] %vm1525, %v2842
        %2915 = vst.msk [vmem:[#allocation4 + $0x124] sm:$0xf] %vm1525, %v2844
        %2916 = vst.msk [vmem:[#allocation4 + $0x130] sm:$0xf] %vm1525, %v2846
        %2917 = vst.msk [vmem:[#allocation4 + $0x13c] sm:$0xf] %vm1525, %v2848
        %2918 = vst.msk [vmem:[#allocation4 + $0x148] sm:$0xf] %vm1525, %v2850
        %2919 = vst.msk [vmem:[#allocation4 + $0x154] sm:$0xf] %vm1525, %v2852
        %2920 = vst.msk [vmem:[#allocation4 + $0x160] sm:$0xf] %vm1525, %v2854
        %2921 = vst.msk [vmem:[#allocation4 + $0x16c] sm:$0xf] %vm1525, %v2856
        %2922 = vst.msk [vmem:[#allocation4 + $0x178] sm:$0xf] %vm1525, %v2858
        %s2923 = scalar_lea.vmem [#allocation2], 24
        %v2924 = vld [vmem:[%s2923] sm:$0xf]
        %v2925 = vld [vmem:[%s2923 + $0x4] sm:$0xf]
        %v2926 = vld [vmem:[%s2923 + $0xc] sm:$0xf]
        %v2927 = vld [vmem:[%s2923 + $0x10] sm:$0xf]
        %v2928 = vld [vmem:[%s2923 + $0x18] sm:$0xf]
        %v2929 = vld [vmem:[%s2923 + $0x1c] sm:$0xf]
        %v2930 = vld [vmem:[%s2923 + $0x24] sm:$0xf]
        %v2931 = vld [vmem:[%s2923 + $0x28] sm:$0xf]
        %v2932 = vld [vmem:[%s2923 + $0x30] sm:$0xf]
        %v2933 = vld [vmem:[%s2923 + $0x34] sm:$0xf]
        %v2934 = vld [vmem:[%s2923 + $0x3c] sm:$0xf]
        %v2935 = vld [vmem:[%s2923 + $0x40] sm:$0xf]
        %v2936 = vld [vmem:[%s2923 + $0x48] sm:$0xf]
        %v2937 = vld [vmem:[%s2923 + $0x4c] sm:$0xf]
        %v2938 = vld [vmem:[%s2923 + $0x54] sm:$0xf]
        %v2939 = vld [vmem:[%s2923 + $0x58] sm:$0xf]
        %v2940 = vld [vmem:[%s2923 + $0x60] sm:$0xf]
        %v2941 = vld [vmem:[%s2923 + $0x64] sm:$0xf]
        %v2942 = vld [vmem:[%s2923 + $0x6c] sm:$0xf]
        %v2943 = vld [vmem:[%s2923 + $0x70] sm:$0xf]
        %v2944 = vld [vmem:[%s2923 + $0x78] sm:$0xf]
        %v2945 = vld [vmem:[%s2923 + $0x7c] sm:$0xf]
        %v2946 = vld [vmem:[%s2923 + $0x84] sm:$0xf]
        %v2947 = vld [vmem:[%s2923 + $0x88] sm:$0xf]
        %v2948 = vld [vmem:[%s2923 + $0x90] sm:$0xf]
        %v2949 = vld [vmem:[%s2923 + $0x94] sm:$0xf]
        %v2950 = vld [vmem:[%s2923 + $0x9c] sm:$0xf]
        %v2951 = vld [vmem:[%s2923 + $0xa0] sm:$0xf]
        %v2952 = vld [vmem:[%s2923 + $0xa8] sm:$0xf]
        %v2953 = vld [vmem:[%s2923 + $0xac] sm:$0xf]
        %v2954 = vld [vmem:[%s2923 + $0xb4] sm:$0xf]
        %v2955 = vld [vmem:[%s2923 + $0xb8] sm:$0xf]
        %2988 = vrot.lane.b32.xlu0 %v2924, 64
        %v2989 = vpop.permute.xlu0 %2988
        %2990 = vrot.lane.b32.xlu0 %v2925, 64
        %v2991 = vpop.permute.xlu0 %2990
        %2992 = vrot.lane.b32.xlu0 %v2926, 64
        %v2993 = vpop.permute.xlu0 %2992
        %2994 = vrot.lane.b32.xlu0 %v2927, 64
        %v2995 = vpop.permute.xlu0 %2994
        %2996 = vrot.lane.b32.xlu0 %v2928, 64
        %v2997 = vpop.permute.xlu0 %2996
        %2998 = vrot.lane.b32.xlu0 %v2929, 64
        %v2999 = vpop.permute.xlu0 %2998
        %3000 = vrot.lane.b32.xlu0 %v2930, 64
        %v3001 = vpop.permute.xlu0 %3000
        %3002 = vrot.lane.b32.xlu0 %v2931, 64
        %v3003 = vpop.permute.xlu0 %3002
        %3004 = vrot.lane.b32.xlu0 %v2932, 64
        %v3005 = vpop.permute.xlu0 %3004
        %3006 = vrot.lane.b32.xlu0 %v2933, 64
        %v3007 = vpop.permute.xlu0 %3006
        %3008 = vrot.lane.b32.xlu0 %v2934, 64
        %v3009 = vpop.permute.xlu0 %3008
        %3010 = vrot.lane.b32.xlu0 %v2935, 64
        %v3011 = vpop.permute.xlu0 %3010
        %3012 = vrot.lane.b32.xlu0 %v2936, 64
        %v3013 = vpop.permute.xlu0 %3012
        %3014 = vrot.lane.b32.xlu0 %v2937, 64
        %v3015 = vpop.permute.xlu0 %3014
        %3016 = vrot.lane.b32.xlu0 %v2938, 64
        %v3017 = vpop.permute.xlu0 %3016
        %3018 = vrot.lane.b32.xlu0 %v2939, 64
        %v3019 = vpop.permute.xlu0 %3018
        %3020 = vrot.lane.b32.xlu0 %v2940, 64
        %v3021 = vpop.permute.xlu0 %3020
        %3022 = vrot.lane.b32.xlu0 %v2941, 64
        %v3023 = vpop.permute.xlu0 %3022
        %3024 = vrot.lane.b32.xlu0 %v2942, 64
        %v3025 = vpop.permute.xlu0 %3024
        %3026 = vrot.lane.b32.xlu0 %v2943, 64
        %v3027 = vpop.permute.xlu0 %3026
        %3028 = vrot.lane.b32.xlu0 %v2944, 64
        %v3029 = vpop.permute.xlu0 %3028
        %3030 = vrot.lane.b32.xlu0 %v2945, 64
        %v3031 = vpop.permute.xlu0 %3030
        %3032 = vrot.lane.b32.xlu0 %v2946, 64
        %v3033 = vpop.permute.xlu0 %3032
        %3034 = vrot.lane.b32.xlu0 %v2947, 64
        %v3035 = vpop.permute.xlu0 %3034
        %3036 = vrot.lane.b32.xlu0 %v2948, 64
        %v3037 = vpop.permute.xlu0 %3036
        %3038 = vrot.lane.b32.xlu0 %v2949, 64
        %v3039 = vpop.permute.xlu0 %3038
        %3040 = vrot.lane.b32.xlu0 %v2950, 64
        %v3041 = vpop.permute.xlu0 %3040
        %3042 = vrot.lane.b32.xlu0 %v2951, 64
        %v3043 = vpop.permute.xlu0 %3042
        %3044 = vrot.lane.b32.xlu0 %v2952, 64
        %v3045 = vpop.permute.xlu0 %3044
        %3046 = vrot.lane.b32.xlu0 %v2953, 64
        %v3047 = vpop.permute.xlu0 %3046
        %3048 = vrot.lane.b32.xlu0 %v2954, 64
        %v3049 = vpop.permute.xlu0 %3048
        %3050 = vrot.lane.b32.xlu0 %v2955, 64
        %v3051 = vpop.permute.xlu0 %3050
        %3084 = vst.msk [vmem:[#allocation4 + $0x4] sm:$0xf] %vm1865, %v2989
        %3085 = vst.msk [vmem:[#allocation4 + $0x10] sm:$0xf] %vm1865, %v2991
        %3086 = vst.msk [vmem:[#allocation4 + $0x1c] sm:$0xf] %vm1865, %v2993
        %3087 = vst.msk [vmem:[#allocation4 + $0x28] sm:$0xf] %vm1865, %v2995
        %3088 = vst.msk [vmem:[#allocation4 + $0x34] sm:$0xf] %vm1865, %v2997
        %3089 = vst.msk [vmem:[#allocation4 + $0x40] sm:$0xf] %vm1865, %v2999
        %3090 = vst.msk [vmem:[#allocation4 + $0x4c] sm:$0xf] %vm1865, %v3001
        %3091 = vst.msk [vmem:[#allocation4 + $0x58] sm:$0xf] %vm1865, %v3003
        %3092 = vst.msk [vmem:[#allocation4 + $0x64] sm:$0xf] %vm1865, %v3005
        %3093 = vst.msk [vmem:[#allocation4 + $0x70] sm:$0xf] %vm1865, %v3007
        %3094 = vst.msk [vmem:[#allocation4 + $0x7c] sm:$0xf] %vm1865, %v3009
        %3095 = vst.msk [vmem:[#allocation4 + $0x88] sm:$0xf] %vm1865, %v3011
        %3096 = vst.msk [vmem:[#allocation4 + $0x94] sm:$0xf] %vm1865, %v3013
        %3097 = vst.msk [vmem:[#allocation4 + $0xa0] sm:$0xf] %vm1865, %v3015
        %3098 = vst.msk [vmem:[#allocation4 + $0xac] sm:$0xf] %vm1865, %v3017
        %3099 = vst.msk [vmem:[#allocation4 + $0xb8] sm:$0xf] %vm1865, %v3019
        %3100 = vst.msk [vmem:[#allocation4 + $0xc4] sm:$0xf] %vm1865, %v3021
        %3101 = vst.msk [vmem:[#allocation4 + $0xd0] sm:$0xf] %vm1865, %v3023
        %3102 = vst.msk [vmem:[#allocation4 + $0xdc] sm:$0xf] %vm1865, %v3025
        %3103 = vst.msk [vmem:[#allocation4 + $0xe8] sm:$0xf] %vm1865, %v3027
        %3104 = vst.msk [vmem:[#allocation4 + $0xf4] sm:$0xf] %vm1865, %v3029
        %3105 = vst.msk [vmem:[#allocation4 + $0x100] sm:$0xf] %vm1865, %v3031
        %3106 = vst.msk [vmem:[#allocation4 + $0x10c] sm:$0xf] %vm1865, %v3033
        %3107 = vst.msk [vmem:[#allocation4 + $0x118] sm:$0xf] %vm1865, %v3035
        %3108 = vst.msk [vmem:[#allocation4 + $0x124] sm:$0xf] %vm1865, %v3037
        %3109 = vst.msk [vmem:[#allocation4 + $0x130] sm:$0xf] %vm1865, %v3039
        %3110 = vst.msk [vmem:[#allocation4 + $0x13c] sm:$0xf] %vm1865, %v3041
        %3111 = vst.msk [vmem:[#allocation4 + $0x148] sm:$0xf] %vm1865, %v3043
        %3112 = vst.msk [vmem:[#allocation4 + $0x154] sm:$0xf] %vm1865, %v3045
        %3113 = vst.msk [vmem:[#allocation4 + $0x160] sm:$0xf] %vm1865, %v3047
        %3114 = vst.msk [vmem:[#allocation4 + $0x16c] sm:$0xf] %vm1865, %v3049
        %3115 = vst.msk [vmem:[#allocation4 + $0x178] sm:$0xf] %vm1865, %v3051
        %v3116 = vld [vmem:[%s2923] sm:$0xf]
        %v3117 = vld [vmem:[%s2923 + $0x4] sm:$0xf]
        %v3118 = vld [vmem:[%s2923 + $0x8] sm:$0x1]
        %v3119 = vld [vmem:[%s2923 + $0xc] sm:$0xf]
        %v3120 = vld [vmem:[%s2923 + $0x10] sm:$0xf]
        %v3121 = vld [vmem:[%s2923 + $0x14] sm:$0x1]
        %v3122 = vld [vmem:[%s2923 + $0x18] sm:$0xf]
        %v3123 = vld [vmem:[%s2923 + $0x1c] sm:$0xf]
        %v3124 = vld [vmem:[%s2923 + $0x20] sm:$0x1]
        %v3125 = vld [vmem:[%s2923 + $0x24] sm:$0xf]
        %v3126 = vld [vmem:[%s2923 + $0x28] sm:$0xf]
        %v3127 = vld [vmem:[%s2923 + $0x2c] sm:$0x1]
        %v3128 = vld [vmem:[%s2923 + $0x30] sm:$0xf]
        %v3129 = vld [vmem:[%s2923 + $0x34] sm:$0xf]
        %v3130 = vld [vmem:[%s2923 + $0x38] sm:$0x1]
        %v3131 = vld [vmem:[%s2923 + $0x3c] sm:$0xf]
        %v3132 = vld [vmem:[%s2923 + $0x40] sm:$0xf]
        %v3133 = vld [vmem:[%s2923 + $0x44] sm:$0x1]
        %v3134 = vld [vmem:[%s2923 + $0x48] sm:$0xf]
        %v3135 = vld [vmem:[%s2923 + $0x4c] sm:$0xf]
        %v3136 = vld [vmem:[%s2923 + $0x50] sm:$0x1]
        %v3137 = vld [vmem:[%s2923 + $0x54] sm:$0xf]
        %v3138 = vld [vmem:[%s2923 + $0x58] sm:$0xf]
        %v3139 = vld [vmem:[%s2923 + $0x5c] sm:$0x1]
        %v3140 = vld [vmem:[%s2923 + $0x60] sm:$0xf]
        %v3141 = vld [vmem:[%s2923 + $0x64] sm:$0xf]
        %v3142 = vld [vmem:[%s2923 + $0x68] sm:$0x1]
        %v3143 = vld [vmem:[%s2923 + $0x6c] sm:$0xf]
        %v3144 = vld [vmem:[%s2923 + $0x70] sm:$0xf]
        %v3145 = vld [vmem:[%s2923 + $0x74] sm:$0x1]
        %v3146 = vld [vmem:[%s2923 + $0x78] sm:$0xf]
        %v3147 = vld [vmem:[%s2923 + $0x7c] sm:$0xf]
        %v3148 = vld [vmem:[%s2923 + $0x80] sm:$0x1]
        %v3149 = vld [vmem:[%s2923 + $0x84] sm:$0xf]
        %v3150 = vld [vmem:[%s2923 + $0x88] sm:$0xf]
        %v3151 = vld [vmem:[%s2923 + $0x8c] sm:$0x1]
        %v3152 = vld [vmem:[%s2923 + $0x90] sm:$0xf]
        %v3153 = vld [vmem:[%s2923 + $0x94] sm:$0xf]
        %v3154 = vld [vmem:[%s2923 + $0x98] sm:$0x1]
        %v3155 = vld [vmem:[%s2923 + $0x9c] sm:$0xf]
        %v3156 = vld [vmem:[%s2923 + $0xa0] sm:$0xf]
        %v3157 = vld [vmem:[%s2923 + $0xa4] sm:$0x1]
        %v3158 = vld [vmem:[%s2923 + $0xa8] sm:$0xf]
        %v3159 = vld [vmem:[%s2923 + $0xac] sm:$0xf]
        %v3160 = vld [vmem:[%s2923 + $0xb0] sm:$0x1]
        %v3161 = vld [vmem:[%s2923 + $0xb4] sm:$0xf]
        %v3162 = vld [vmem:[%s2923 + $0xb8] sm:$0xf]
        %v3163 = vld [vmem:[%s2923 + $0xbc] sm:$0x1]
        %v3165 = vshrl.u32 %v3116, 16
        %v3167 = vrot.slane %v3165, 4
        %v3168 = vshll.u32 %v3116, 16
        %v3170 = vrot.slane %v3168, 5
        %v3171 = vor.u32 %v3167, %v3170
        %v3172 = vrot.slane %v3171, 4
        %v3174 = vshll.u32 %v3117, 16
        %v3176 = vrot.slane %v3174, 5
        %v3177 = vsel %vm1044, %v3172, %v3176
        %v3178 = vshrl.u32 %v3117, 16
        %v3180 = vrot.slane %v3178, 4
        %v3181 = vor.u32 %v3180, %v3176
        %v3182 = vrot.slane %v3181, 4
        %v3184 = vshll.u32 %v3118, 16
        %v3186 = vrot.slane %v3184, 5
        %v3187 = vsel %vm1044, %v3182, %v3186
        %v3189 = vshrl.u32 %v3119, 16
        %v3191 = vrot.slane %v3189, 4
        %v3192 = vshll.u32 %v3119, 16
        %v3194 = vrot.slane %v3192, 5
        %v3195 = vor.u32 %v3191, %v3194
        %v3196 = vrot.slane %v3195, 4
        %v3198 = vshll.u32 %v3120, 16
        %v3200 = vrot.slane %v3198, 5
        %v3201 = vsel %vm1044, %v3196, %v3200
        %v3202 = vshrl.u32 %v3120, 16
        %v3204 = vrot.slane %v3202, 4
        %v3205 = vor.u32 %v3204, %v3200
        %v3206 = vrot.slane %v3205, 4
        %v3208 = vshll.u32 %v3121, 16
        %v3210 = vrot.slane %v3208, 5
        %v3211 = vsel %vm1044, %v3206, %v3210
        %v3213 = vshrl.u32 %v3122, 16
        %v3215 = vrot.slane %v3213, 4
        %v3216 = vshll.u32 %v3122, 16
        %v3218 = vrot.slane %v3216, 5
        %v3219 = vor.u32 %v3215, %v3218
        %v3220 = vrot.slane %v3219, 4
        %v3222 = vshll.u32 %v3123, 16
        %v3224 = vrot.slane %v3222, 5
        %v3225 = vsel %vm1044, %v3220, %v3224
        %v3226 = vshrl.u32 %v3123, 16
        %v3228 = vrot.slane %v3226, 4
        %v3229 = vor.u32 %v3228, %v3224
        %v3230 = vrot.slane %v3229, 4
        %v3232 = vshll.u32 %v3124, 16
        %v3234 = vrot.slane %v3232, 5
        %v3235 = vsel %vm1044, %v3230, %v3234
        %v3237 = vshrl.u32 %v3125, 16
        %v3239 = vrot.slane %v3237, 4
        %v3240 = vshll.u32 %v3125, 16
        %v3242 = vrot.slane %v3240, 5
        %v3243 = vor.u32 %v3239, %v3242
        %v3244 = vrot.slane %v3243, 4
        %v3246 = vshll.u32 %v3126, 16
        %v3248 = vrot.slane %v3246, 5
        %v3249 = vsel %vm1044, %v3244, %v3248
        %v3250 = vshrl.u32 %v3126, 16
        %v3252 = vrot.slane %v3250, 4
        %v3253 = vor.u32 %v3252, %v3248
        %v3254 = vrot.slane %v3253, 4
        %v3256 = vshll.u32 %v3127, 16
        %v3258 = vrot.slane %v3256, 5
        %v3259 = vsel %vm1044, %v3254, %v3258
        %v3261 = vshrl.u32 %v3128, 16
        %v3263 = vrot.slane %v3261, 4
        %v3264 = vshll.u32 %v3128, 16
        %v3266 = vrot.slane %v3264, 5
        %v3267 = vor.u32 %v3263, %v3266
        %v3268 = vrot.slane %v3267, 4
        %v3270 = vshll.u32 %v3129, 16
        %v3272 = vrot.slane %v3270, 5
        %v3273 = vsel %vm1044, %v3268, %v3272
        %v3274 = vshrl.u32 %v3129, 16
        %v3276 = vrot.slane %v3274, 4
        %v3277 = vor.u32 %v3276, %v3272
        %v3278 = vrot.slane %v3277, 4
        %v3280 = vshll.u32 %v3130, 16
        %v3282 = vrot.slane %v3280, 5
        %v3283 = vsel %vm1044, %v3278, %v3282
        %v3285 = vshrl.u32 %v3131, 16
        %v3287 = vrot.slane %v3285, 4
        %v3288 = vshll.u32 %v3131, 16
        %v3290 = vrot.slane %v3288, 5
        %v3291 = vor.u32 %v3287, %v3290
        %v3292 = vrot.slane %v3291, 4
        %v3294 = vshll.u32 %v3132, 16
        %v3296 = vrot.slane %v3294, 5
        %v3297 = vsel %vm1044, %v3292, %v3296
        %v3298 = vshrl.u32 %v3132, 16
        %v3300 = vrot.slane %v3298, 4
        %v3301 = vor.u32 %v3300, %v3296
        %v3302 = vrot.slane %v3301, 4
        %v3304 = vshll.u32 %v3133, 16
        %v3306 = vrot.slane %v3304, 5
        %v3307 = vsel %vm1044, %v3302, %v3306
        %v3309 = vshrl.u32 %v3134, 16
        %v3311 = vrot.slane %v3309, 4
        %v3312 = vshll.u32 %v3134, 16
        %v3314 = vrot.slane %v3312, 5
        %v3315 = vor.u32 %v3311, %v3314
        %v3316 = vrot.slane %v3315, 4
        %v3318 = vshll.u32 %v3135, 16
        %v3320 = vrot.slane %v3318, 5
        %v3321 = vsel %vm1044, %v3316, %v3320
        %v3322 = vshrl.u32 %v3135, 16
        %v3324 = vrot.slane %v3322, 4
        %v3325 = vor.u32 %v3324, %v3320
        %v3326 = vrot.slane %v3325, 4
        %v3328 = vshll.u32 %v3136, 16
        %v3330 = vrot.slane %v3328, 5
        %v3331 = vsel %vm1044, %v3326, %v3330
        %v3333 = vshrl.u32 %v3137, 16
        %v3335 = vrot.slane %v3333, 4
        %v3336 = vshll.u32 %v3137, 16
        %v3338 = vrot.slane %v3336, 5
        %v3339 = vor.u32 %v3335, %v3338
        %v3340 = vrot.slane %v3339, 4
        %v3342 = vshll.u32 %v3138, 16
        %v3344 = vrot.slane %v3342, 5
        %v3345 = vsel %vm1044, %v3340, %v3344
        %v3346 = vshrl.u32 %v3138, 16
        %v3348 = vrot.slane %v3346, 4
        %v3349 = vor.u32 %v3348, %v3344
        %v3350 = vrot.slane %v3349, 4
        %v3352 = vshll.u32 %v3139, 16
        %v3354 = vrot.slane %v3352, 5
        %v3355 = vsel %vm1044, %v3350, %v3354
        %v3357 = vshrl.u32 %v3140, 16
        %v3359 = vrot.slane %v3357, 4
        %v3360 = vshll.u32 %v3140, 16
        %v3362 = vrot.slane %v3360, 5
        %v3363 = vor.u32 %v3359, %v3362
        %v3364 = vrot.slane %v3363, 4
        %v3366 = vshll.u32 %v3141, 16
        %v3368 = vrot.slane %v3366, 5
        %v3369 = vsel %vm1044, %v3364, %v3368
        %v3370 = vshrl.u32 %v3141, 16
        %v3372 = vrot.slane %v3370, 4
        %v3373 = vor.u32 %v3372, %v3368
        %v3374 = vrot.slane %v3373, 4
        %v3376 = vshll.u32 %v3142, 16
        %v3378 = vrot.slane %v3376, 5
        %v3379 = vsel %vm1044, %v3374, %v3378
        %v3381 = vshrl.u32 %v3143, 16
        %v3383 = vrot.slane %v3381, 4
        %v3384 = vshll.u32 %v3143, 16
        %v3386 = vrot.slane %v3384, 5
        %v3387 = vor.u32 %v3383, %v3386
        %v3388 = vrot.slane %v3387, 4
        %v3390 = vshll.u32 %v3144, 16
        %v3392 = vrot.slane %v3390, 5
        %v3393 = vsel %vm1044, %v3388, %v3392
        %v3394 = vshrl.u32 %v3144, 16
        %v3396 = vrot.slane %v3394, 4
        %v3397 = vor.u32 %v3396, %v3392
        %v3398 = vrot.slane %v3397, 4
        %v3400 = vshll.u32 %v3145, 16
        %v3402 = vrot.slane %v3400, 5
        %v3403 = vsel %vm1044, %v3398, %v3402
        %v3405 = vshrl.u32 %v3146, 16
        %v3407 = vrot.slane %v3405, 4
        %v3408 = vshll.u32 %v3146, 16
        %v3410 = vrot.slane %v3408, 5
        %v3411 = vor.u32 %v3407, %v3410
        %v3412 = vrot.slane %v3411, 4
        %v3414 = vshll.u32 %v3147, 16
        %v3416 = vrot.slane %v3414, 5
        %v3417 = vsel %vm1044, %v3412, %v3416
        %v3418 = vshrl.u32 %v3147, 16
        %v3420 = vrot.slane %v3418, 4
        %v3421 = vor.u32 %v3420, %v3416
        %v3422 = vrot.slane %v3421, 4
        %v3424 = vshll.u32 %v3148, 16
        %v3426 = vrot.slane %v3424, 5
        %v3427 = vsel %vm1044, %v3422, %v3426
        %v3429 = vshrl.u32 %v3149, 16
        %v3431 = vrot.slane %v3429, 4
        %v3432 = vshll.u32 %v3149, 16
        %v3434 = vrot.slane %v3432, 5
        %v3435 = vor.u32 %v3431, %v3434
        %v3436 = vrot.slane %v3435, 4
        %v3438 = vshll.u32 %v3150, 16
        %v3440 = vrot.slane %v3438, 5
        %v3441 = vsel %vm1044, %v3436, %v3440
        %v3442 = vshrl.u32 %v3150, 16
        %v3444 = vrot.slane %v3442, 4
        %v3445 = vor.u32 %v3444, %v3440
        %v3446 = vrot.slane %v3445, 4
        %v3448 = vshll.u32 %v3151, 16
        %v3450 = vrot.slane %v3448, 5
        %v3451 = vsel %vm1044, %v3446, %v3450
        %v3453 = vshrl.u32 %v3152, 16
        %v3455 = vrot.slane %v3453, 4
        %v3456 = vshll.u32 %v3152, 16
        %v3458 = vrot.slane %v3456, 5
        %v3459 = vor.u32 %v3455, %v3458
        %v3460 = vrot.slane %v3459, 4
        %v3462 = vshll.u32 %v3153, 16
        %v3464 = vrot.slane %v3462, 5
        %v3465 = vsel %vm1044, %v3460, %v3464
        %v3466 = vshrl.u32 %v3153, 16
        %v3468 = vrot.slane %v3466, 4
        %v3469 = vor.u32 %v3468, %v3464
        %v3470 = vrot.slane %v3469, 4
        %v3472 = vshll.u32 %v3154, 16
        %v3474 = vrot.slane %v3472, 5
        %v3475 = vsel %vm1044, %v3470, %v3474
        %v3477 = vshrl.u32 %v3155, 16
        %v3479 = vrot.slane %v3477, 4
        %v3480 = vshll.u32 %v3155, 16
        %v3482 = vrot.slane %v3480, 5
        %v3483 = vor.u32 %v3479, %v3482
        %v3484 = vrot.slane %v3483, 4
        %v3486 = vshll.u32 %v3156, 16
        %v3488 = vrot.slane %v3486, 5
        %v3489 = vsel %vm1044, %v3484, %v3488
        %v3490 = vshrl.u32 %v3156, 16
        %v3492 = vrot.slane %v3490, 4
        %v3493 = vor.u32 %v3492, %v3488
        %v3494 = vrot.slane %v3493, 4
        %v3496 = vshll.u32 %v3157, 16
        %v3498 = vrot.slane %v3496, 5
        %v3499 = vsel %vm1044, %v3494, %v3498
        %v3501 = vshrl.u32 %v3158, 16
        %v3503 = vrot.slane %v3501, 4
        %v3504 = vshll.u32 %v3158, 16
        %v3506 = vrot.slane %v3504, 5
        %v3507 = vor.u32 %v3503, %v3506
        %v3508 = vrot.slane %v3507, 4
        %v3510 = vshll.u32 %v3159, 16
        %v3512 = vrot.slane %v3510, 5
        %v3513 = vsel %vm1044, %v3508, %v3512
        %v3514 = vshrl.u32 %v3159, 16
        %v3516 = vrot.slane %v3514, 4
        %v3517 = vor.u32 %v3516, %v3512
        %v3518 = vrot.slane %v3517, 4
        %v3520 = vshll.u32 %v3160, 16
        %v3522 = vrot.slane %v3520, 5
        %v3523 = vsel %vm1044, %v3518, %v3522
        %v3525 = vshrl.u32 %v3161, 16
        %v3527 = vrot.slane %v3525, 4
        %v3528 = vshll.u32 %v3161, 16
        %v3530 = vrot.slane %v3528, 5
        %v3531 = vor.u32 %v3527, %v3530
        %v3532 = vrot.slane %v3531, 4
        %v3534 = vshll.u32 %v3162, 16
        %v3536 = vrot.slane %v3534, 5
        %v3537 = vsel %vm1044, %v3532, %v3536
        %v3538 = vshrl.u32 %v3162, 16
        %v3540 = vrot.slane %v3538, 4
        %v3541 = vor.u32 %v3540, %v3536
        %v3542 = vrot.slane %v3541, 4
        %v3544 = vshll.u32 %v3163, 16
        %v3546 = vrot.slane %v3544, 5
        %v3547 = vsel %vm1044, %v3542, %v3546
        %3548 = vrot.lane.b32.xlu0 %v3177, 96
        %v3549 = vpop.permute.xlu0 %3548
        %3550 = vrot.lane.b32.xlu0 %v3187, 96
        %v3551 = vpop.permute.xlu0 %3550
        %3552 = vrot.lane.b32.xlu0 %v3201, 96
        %v3553 = vpop.permute.xlu0 %3552
        %3554 = vrot.lane.b32.xlu0 %v3211, 96
        %v3555 = vpop.permute.xlu0 %3554
        %3556 = vrot.lane.b32.xlu0 %v3225, 96
        %v3557 = vpop.permute.xlu0 %3556
        %3558 = vrot.lane.b32.xlu0 %v3235, 96
        %v3559 = vpop.permute.xlu0 %3558
        %3560 = vrot.lane.b32.xlu0 %v3249, 96
        %v3561 = vpop.permute.xlu0 %3560
        %3562 = vrot.lane.b32.xlu0 %v3259, 96
        %v3563 = vpop.permute.xlu0 %3562
        %3564 = vrot.lane.b32.xlu0 %v3273, 96
        %v3565 = vpop.permute.xlu0 %3564
        %3566 = vrot.lane.b32.xlu0 %v3283, 96
        %v3567 = vpop.permute.xlu0 %3566
        %3568 = vrot.lane.b32.xlu0 %v3297, 96
        %v3569 = vpop.permute.xlu0 %3568
        %3570 = vrot.lane.b32.xlu0 %v3307, 96
        %v3571 = vpop.permute.xlu0 %3570
        %3572 = vrot.lane.b32.xlu0 %v3321, 96
        %v3573 = vpop.permute.xlu0 %3572
        %3574 = vrot.lane.b32.xlu0 %v3331, 96
        %v3575 = vpop.permute.xlu0 %3574
        %3576 = vrot.lane.b32.xlu0 %v3345, 96
        %v3577 = vpop.permute.xlu0 %3576
        %3578 = vrot.lane.b32.xlu0 %v3355, 96
        %v3579 = vpop.permute.xlu0 %3578
        %3580 = vrot.lane.b32.xlu0 %v3369, 96
        %v3581 = vpop.permute.xlu0 %3580
        %3582 = vrot.lane.b32.xlu0 %v3379, 96
        %v3583 = vpop.permute.xlu0 %3582
        %3584 = vrot.lane.b32.xlu0 %v3393, 96
        %v3585 = vpop.permute.xlu0 %3584
        %3586 = vrot.lane.b32.xlu0 %v3403, 96
        %v3587 = vpop.permute.xlu0 %3586
        %3588 = vrot.lane.b32.xlu0 %v3417, 96
        %v3589 = vpop.permute.xlu0 %3588
        %3590 = vrot.lane.b32.xlu0 %v3427, 96
        %v3591 = vpop.permute.xlu0 %3590
        %3592 = vrot.lane.b32.xlu0 %v3441, 96
        %v3593 = vpop.permute.xlu0 %3592
        %3594 = vrot.lane.b32.xlu0 %v3451, 96
        %v3595 = vpop.permute.xlu0 %3594
        %3596 = vrot.lane.b32.xlu0 %v3465, 96
        %v3597 = vpop.permute.xlu0 %3596
        %3598 = vrot.lane.b32.xlu0 %v3475, 96
        %v3599 = vpop.permute.xlu0 %3598
        %3600 = vrot.lane.b32.xlu0 %v3489, 96
        %v3601 = vpop.permute.xlu0 %3600
        %3602 = vrot.lane.b32.xlu0 %v3499, 96
        %v3603 = vpop.permute.xlu0 %3602
        %3604 = vrot.lane.b32.xlu0 %v3513, 96
        %v3605 = vpop.permute.xlu0 %3604
        %3606 = vrot.lane.b32.xlu0 %v3523, 96
        %v3607 = vpop.permute.xlu0 %3606
        %3608 = vrot.lane.b32.xlu0 %v3537, 96
        %v3609 = vpop.permute.xlu0 %3608
        %3610 = vrot.lane.b32.xlu0 %v3547, 96
        %v3611 = vpop.permute.xlu0 %3610
        %3644 = vst.msk [vmem:[#allocation4 + $0x4] sm:$0xf] %vm2058, %v3549
        %3645 = vst.msk [vmem:[#allocation4 + $0x10] sm:$0xf] %vm2058, %v3551
        %3646 = vst.msk [vmem:[#allocation4 + $0x1c] sm:$0xf] %vm2058, %v3553
        %3647 = vst.msk [vmem:[#allocation4 + $0x28] sm:$0xf] %vm2058, %v3555
        %3648 = vst.msk [vmem:[#allocation4 + $0x34] sm:$0xf] %vm2058, %v3557
        %3649 = vst.msk [vmem:[#allocation4 + $0x40] sm:$0xf] %vm2058, %v3559
        %3650 = vst.msk [vmem:[#allocation4 + $0x4c] sm:$0xf] %vm2058, %v3561
        %3651 = vst.msk [vmem:[#allocation4 + $0x58] sm:$0xf] %vm2058, %v3563
        %3652 = vst.msk [vmem:[#allocation4 + $0x64] sm:$0xf] %vm2058, %v3565
        %3653 = vst.msk [vmem:[#allocation4 + $0x70] sm:$0xf] %vm2058, %v3567
        %3654 = vst.msk [vmem:[#allocation4 + $0x7c] sm:$0xf] %vm2058, %v3569
        %3655 = vst.msk [vmem:[#allocation4 + $0x88] sm:$0xf] %vm2058, %v3571
        %3656 = vst.msk [vmem:[#allocation4 + $0x94] sm:$0xf] %vm2058, %v3573
        %3657 = vst.msk [vmem:[#allocation4 + $0xa0] sm:$0xf] %vm2058, %v3575
        %3658 = vst.msk [vmem:[#allocation4 + $0xac] sm:$0xf] %vm2058, %v3577
        %3659 = vst.msk [vmem:[#allocation4 + $0xb8] sm:$0xf] %vm2058, %v3579
        %3660 = vst.msk [vmem:[#allocation4 + $0xc4] sm:$0xf] %vm2058, %v3581
        %3661 = vst.msk [vmem:[#allocation4 + $0xd0] sm:$0xf] %vm2058, %v3583
        %3662 = vst.msk [vmem:[#allocation4 + $0xdc] sm:$0xf] %vm2058, %v3585
        %3663 = vst.msk [vmem:[#allocation4 + $0xe8] sm:$0xf] %vm2058, %v3587
        %3664 = vst.msk [vmem:[#allocation4 + $0xf4] sm:$0xf] %vm2058, %v3589
        %3665 = vst.msk [vmem:[#allocation4 + $0x100] sm:$0xf] %vm2058, %v3591
        %3666 = vst.msk [vmem:[#allocation4 + $0x10c] sm:$0xf] %vm2058, %v3593
        %3667 = vst.msk [vmem:[#allocation4 + $0x118] sm:$0xf] %vm2058, %v3595
        %3668 = vst.msk [vmem:[#allocation4 + $0x124] sm:$0xf] %vm2058, %v3597
        %3669 = vst.msk [vmem:[#allocation4 + $0x130] sm:$0xf] %vm2058, %v3599
        %3670 = vst.msk [vmem:[#allocation4 + $0x13c] sm:$0xf] %vm2058, %v3601
        %3671 = vst.msk [vmem:[#allocation4 + $0x148] sm:$0xf] %vm2058, %v3603
        %3672 = vst.msk [vmem:[#allocation4 + $0x154] sm:$0xf] %vm2058, %v3605
        %3673 = vst.msk [vmem:[#allocation4 + $0x160] sm:$0xf] %vm2058, %v3607
        %3674 = vst.msk [vmem:[#allocation4 + $0x16c] sm:$0xf] %vm2058, %v3609
        %3675 = vst.msk [vmem:[#allocation4 + $0x178] sm:$0xf] %vm2058, %v3611
        %v3676 = vld [vmem:[%s2923] sm:$0xe]
        %v3677 = vld [vmem:[%s2923 + $0x4] sm:$0xf]
        %v3678 = vld [vmem:[%s2923 + $0x8] sm:$0x1]
        %v3679 = vld [vmem:[%s2923 + $0xc] sm:$0xe]
        %v3680 = vld [vmem:[%s2923 + $0x10] sm:$0xf]
        %v3681 = vld [vmem:[%s2923 + $0x14] sm:$0x1]
        %v3682 = vld [vmem:[%s2923 + $0x18] sm:$0xe]
        %v3683 = vld [vmem:[%s2923 + $0x1c] sm:$0xf]
        %v3684 = vld [vmem:[%s2923 + $0x20] sm:$0x1]
        %v3685 = vld [vmem:[%s2923 + $0x24] sm:$0xe]
        %v3686 = vld [vmem:[%s2923 + $0x28] sm:$0xf]
        %v3687 = vld [vmem:[%s2923 + $0x2c] sm:$0x1]
        %v3688 = vld [vmem:[%s2923 + $0x30] sm:$0xe]
        %v3689 = vld [vmem:[%s2923 + $0x34] sm:$0xf]
        %v3690 = vld [vmem:[%s2923 + $0x38] sm:$0x1]
        %v3691 = vld [vmem:[%s2923 + $0x3c] sm:$0xe]
        %v3692 = vld [vmem:[%s2923 + $0x40] sm:$0xf]
        %v3693 = vld [vmem:[%s2923 + $0x44] sm:$0x1]
        %v3694 = vld [vmem:[%s2923 + $0x48] sm:$0xe]
        %v3695 = vld [vmem:[%s2923 + $0x4c] sm:$0xf]
        %v3696 = vld [vmem:[%s2923 + $0x50] sm:$0x1]
        %v3697 = vld [vmem:[%s2923 + $0x54] sm:$0xe]
        %v3698 = vld [vmem:[%s2923 + $0x58] sm:$0xf]
        %v3699 = vld [vmem:[%s2923 + $0x5c] sm:$0x1]
        %v3700 = vld [vmem:[%s2923 + $0x60] sm:$0xe]
        %v3701 = vld [vmem:[%s2923 + $0x64] sm:$0xf]
        %v3702 = vld [vmem:[%s2923 + $0x68] sm:$0x1]
        %v3703 = vld [vmem:[%s2923 + $0x6c] sm:$0xe]
        %v3704 = vld [vmem:[%s2923 + $0x70] sm:$0xf]
        %v3705 = vld [vmem:[%s2923 + $0x74] sm:$0x1]
        %v3706 = vld [vmem:[%s2923 + $0x78] sm:$0xe]
        %v3707 = vld [vmem:[%s2923 + $0x7c] sm:$0xf]
        %v3708 = vld [vmem:[%s2923 + $0x80] sm:$0x1]
        %v3709 = vld [vmem:[%s2923 + $0x84] sm:$0xe]
        %v3710 = vld [vmem:[%s2923 + $0x88] sm:$0xf]
        %v3711 = vld [vmem:[%s2923 + $0x8c] sm:$0x1]
        %v3712 = vld [vmem:[%s2923 + $0x90] sm:$0xe]
        %v3713 = vld [vmem:[%s2923 + $0x94] sm:$0xf]
        %v3714 = vld [vmem:[%s2923 + $0x98] sm:$0x1]
        %v3715 = vld [vmem:[%s2923 + $0x9c] sm:$0xe]
        %v3716 = vld [vmem:[%s2923 + $0xa0] sm:$0xf]
        %v3717 = vld [vmem:[%s2923 + $0xa4] sm:$0x1]
        %v3718 = vld [vmem:[%s2923 + $0xa8] sm:$0xe]
        %v3719 = vld [vmem:[%s2923 + $0xac] sm:$0xf]
        %v3720 = vld [vmem:[%s2923 + $0xb0] sm:$0x1]
        %v3721 = vld [vmem:[%s2923 + $0xb4] sm:$0xe]
        %v3722 = vld [vmem:[%s2923 + $0xb8] sm:$0xf]
        %v3723 = vld [vmem:[%s2923 + $0xbc] sm:$0x1]
        %v3772 = vrot.slane %v3676, 5
        %v3773 = vrot.slane %v3772, 4
        %v3774 = vrot.slane %v3677, 5
        %v3775 = vsel %vm1656, %v3773, %v3774
        %v3776 = vrot.slane %v3774, 4
        %v3777 = vrot.slane %v3678, 5
        %v3778 = vsel %vm1656, %v3776, %v3777
        %v3779 = vrot.slane %v3679, 5
        %v3780 = vrot.slane %v3779, 4
        %v3781 = vrot.slane %v3680, 5
        %v3782 = vsel %vm1656, %v3780, %v3781
        %v3783 = vrot.slane %v3781, 4
        %v3784 = vrot.slane %v3681, 5
        %v3785 = vsel %vm1656, %v3783, %v3784
        %v3786 = vrot.slane %v3682, 5
        %v3787 = vrot.slane %v3786, 4
        %v3788 = vrot.slane %v3683, 5
        %v3789 = vsel %vm1656, %v3787, %v3788
        %v3790 = vrot.slane %v3788, 4
        %v3791 = vrot.slane %v3684, 5
        %v3792 = vsel %vm1656, %v3790, %v3791
        %v3793 = vrot.slane %v3685, 5
        %v3794 = vrot.slane %v3793, 4
        %v3795 = vrot.slane %v3686, 5
        %v3796 = vsel %vm1656, %v3794, %v3795
        %v3797 = vrot.slane %v3795, 4
        %v3798 = vrot.slane %v3687, 5
        %v3799 = vsel %vm1656, %v3797, %v3798
        %v3800 = vrot.slane %v3688, 5
        %v3801 = vrot.slane %v3800, 4
        %v3802 = vrot.slane %v3689, 5
        %v3803 = vsel %vm1656, %v3801, %v3802
        %v3804 = vrot.slane %v3802, 4
        %v3805 = vrot.slane %v3690, 5
        %v3806 = vsel %vm1656, %v3804, %v3805
        %v3807 = vrot.slane %v3691, 5
        %v3808 = vrot.slane %v3807, 4
        %v3809 = vrot.slane %v3692, 5
        %v3810 = vsel %vm1656, %v3808, %v3809
        %v3811 = vrot.slane %v3809, 4
        %v3812 = vrot.slane %v3693, 5
        %v3813 = vsel %vm1656, %v3811, %v3812
        %v3814 = vrot.slane %v3694, 5
        %v3815 = vrot.slane %v3814, 4
        %v3816 = vrot.slane %v3695, 5
        %v3817 = vsel %vm1656, %v3815, %v3816
        %v3818 = vrot.slane %v3816, 4
        %v3819 = vrot.slane %v3696, 5
        %v3820 = vsel %vm1656, %v3818, %v3819
        %v3821 = vrot.slane %v3697, 5
        %v3822 = vrot.slane %v3821, 4
        %v3823 = vrot.slane %v3698, 5
        %v3824 = vsel %vm1656, %v3822, %v3823
        %v3825 = vrot.slane %v3823, 4
        %v3826 = vrot.slane %v3699, 5
        %v3827 = vsel %vm1656, %v3825, %v3826
        %v3828 = vrot.slane %v3700, 5
        %v3829 = vrot.slane %v3828, 4
        %v3830 = vrot.slane %v3701, 5
        %v3831 = vsel %vm1656, %v3829, %v3830
        %v3832 = vrot.slane %v3830, 4
        %v3833 = vrot.slane %v3702, 5
        %v3834 = vsel %vm1656, %v3832, %v3833
        %v3835 = vrot.slane %v3703, 5
        %v3836 = vrot.slane %v3835, 4
        %v3837 = vrot.slane %v3704, 5
        %v3838 = vsel %vm1656, %v3836, %v3837
        %v3839 = vrot.slane %v3837, 4
        %v3840 = vrot.slane %v3705, 5
        %v3841 = vsel %vm1656, %v3839, %v3840
        %v3842 = vrot.slane %v3706, 5
        %v3843 = vrot.slane %v3842, 4
        %v3844 = vrot.slane %v3707, 5
        %v3845 = vsel %vm1656, %v3843, %v3844
        %v3846 = vrot.slane %v3844, 4
        %v3847 = vrot.slane %v3708, 5
        %v3848 = vsel %vm1656, %v3846, %v3847
        %v3849 = vrot.slane %v3709, 5
        %v3850 = vrot.slane %v3849, 4
        %v3851 = vrot.slane %v3710, 5
        %v3852 = vsel %vm1656, %v3850, %v3851
        %v3853 = vrot.slane %v3851, 4
        %v3854 = vrot.slane %v3711, 5
        %v3855 = vsel %vm1656, %v3853, %v3854
        %v3856 = vrot.slane %v3712, 5
        %v3857 = vrot.slane %v3856, 4
        %v3858 = vrot.slane %v3713, 5
        %v3859 = vsel %vm1656, %v3857, %v3858
        %v3860 = vrot.slane %v3858, 4
        %v3861 = vrot.slane %v3714, 5
        %v3862 = vsel %vm1656, %v3860, %v3861
        %v3863 = vrot.slane %v3715, 5
        %v3864 = vrot.slane %v3863, 4
        %v3865 = vrot.slane %v3716, 5
        %v3866 = vsel %vm1656, %v3864, %v3865
        %v3867 = vrot.slane %v3865, 4
        %v3868 = vrot.slane %v3717, 5
        %v3869 = vsel %vm1656, %v3867, %v3868
        %v3870 = vrot.slane %v3718, 5
        %v3871 = vrot.slane %v3870, 4
        %v3872 = vrot.slane %v3719, 5
        %v3873 = vsel %vm1656, %v3871, %v3872
        %v3874 = vrot.slane %v3872, 4
        %v3875 = vrot.slane %v3720, 5
        %v3876 = vsel %vm1656, %v3874, %v3875
        %v3877 = vrot.slane %v3721, 5
        %v3878 = vrot.slane %v3877, 4
        %v3879 = vrot.slane %v3722, 5
        %v3880 = vsel %vm1656, %v3878, %v3879
        %v3881 = vrot.slane %v3879, 4
        %v3882 = vrot.slane %v3723, 5
        %v3883 = vsel %vm1656, %v3881, %v3882
        %3916 = vst.msk [vmem:[#allocation4 + $0x8] sm:$0xf] %vm224, %v3775
        %3917 = vst.msk [vmem:[#allocation4 + $0x14] sm:$0xf] %vm224, %v3778
        %3918 = vst.msk [vmem:[#allocation4 + $0x20] sm:$0xf] %vm224, %v3782
        %3919 = vst.msk [vmem:[#allocation4 + $0x2c] sm:$0xf] %vm224, %v3785
        %3920 = vst.msk [vmem:[#allocation4 + $0x38] sm:$0xf] %vm224, %v3789
        %3921 = vst.msk [vmem:[#allocation4 + $0x44] sm:$0xf] %vm224, %v3792
        %3922 = vst.msk [vmem:[#allocation4 + $0x50] sm:$0xf] %vm224, %v3796
        %3923 = vst.msk [vmem:[#allocation4 + $0x5c] sm:$0xf] %vm224, %v3799
        %3924 = vst.msk [vmem:[#allocation4 + $0x68] sm:$0xf] %vm224, %v3803
        %3925 = vst.msk [vmem:[#allocation4 + $0x74] sm:$0xf] %vm224, %v3806
        %3926 = vst.msk [vmem:[#allocation4 + $0x80] sm:$0xf] %vm224, %v3810
        %3927 = vst.msk [vmem:[#allocation4 + $0x8c] sm:$0xf] %vm224, %v3813
        %3928 = vst.msk [vmem:[#allocation4 + $0x98] sm:$0xf] %vm224, %v3817
        %3929 = vst.msk [vmem:[#allocation4 + $0xa4] sm:$0xf] %vm224, %v3820
        %3930 = vst.msk [vmem:[#allocation4 + $0xb0] sm:$0xf] %vm224, %v3824
        %3931 = vst.msk [vmem:[#allocation4 + $0xbc] sm:$0xf] %vm224, %v3827
        %3932 = vst.msk [vmem:[#allocation4 + $0xc8] sm:$0xf] %vm224, %v3831
        %3933 = vst.msk [vmem:[#allocation4 + $0xd4] sm:$0xf] %vm224, %v3834
        %3934 = vst.msk [vmem:[#allocation4 + $0xe0] sm:$0xf] %vm224, %v3838
        %3935 = vst.msk [vmem:[#allocation4 + $0xec] sm:$0xf] %vm224, %v3841
        %3936 = vst.msk [vmem:[#allocation4 + $0xf8] sm:$0xf] %vm224, %v3845
        %3937 = vst.msk [vmem:[#allocation4 + $0x104] sm:$0xf] %vm224, %v3848
        %3938 = vst.msk [vmem:[#allocation4 + $0x110] sm:$0xf] %vm224, %v3852
        %3939 = vst.msk [vmem:[#allocation4 + $0x11c] sm:$0xf] %vm224, %v3855
        %3940 = vst.msk [vmem:[#allocation4 + $0x128] sm:$0xf] %vm224, %v3859
        %3941 = vst.msk [vmem:[#allocation4 + $0x134] sm:$0xf] %vm224, %v3862
        %3942 = vst.msk [vmem:[#allocation4 + $0x140] sm:$0xf] %vm224, %v3866
        %3943 = vst.msk [vmem:[#allocation4 + $0x14c] sm:$0xf] %vm224, %v3869
        %3944 = vst.msk [vmem:[#allocation4 + $0x158] sm:$0xf] %vm224, %v3873
        %3945 = vst.msk [vmem:[#allocation4 + $0x164] sm:$0xf] %vm224, %v3876
        %3946 = vst.msk [vmem:[#allocation4 + $0x170] sm:$0xf] %vm224, %v3880
        %3947 = vst.msk [vmem:[#allocation4 + $0x17c] sm:$0xf] %vm224, %v3883
        %v3948 = vld [vmem:[#allocation4] sm:$0xff]
        %v3949 = vld [vmem:[#allocation4 + $0x8] sm:$0xf]
        %v3950 = vld [vmem:[#allocation4 + $0xc] sm:$0xff]
        %v3951 = vld [vmem:[#allocation4 + $0x14] sm:$0xf]
        %v3952 = vld [vmem:[#allocation4 + $0x18] sm:$0xff]
        %v3953 = vld [vmem:[#allocation4 + $0x20] sm:$0xf]
        %v3954 = vld [vmem:[#allocation4 + $0x24] sm:$0xff]
        %v3955 = vld [vmem:[#allocation4 + $0x2c] sm:$0xf]
        %v3956 = vld [vmem:[#allocation4 + $0x30] sm:$0xff]
        %v3957 = vld [vmem:[#allocation4 + $0x38] sm:$0xf]
        %v3958 = vld [vmem:[#allocation4 + $0x3c] sm:$0xff]
        %v3959 = vld [vmem:[#allocation4 + $0x44] sm:$0xf]
        %v3960 = vld [vmem:[#allocation4 + $0x48] sm:$0xff]
        %v3961 = vld [vmem:[#allocation4 + $0x50] sm:$0xf]
        %v3962 = vld [vmem:[#allocation4 + $0x54] sm:$0xff]
        %v3963 = vld [vmem:[#allocation4 + $0x5c] sm:$0xf]
        %v3964 = vld [vmem:[#allocation4 + $0x60] sm:$0xff]
        %v3965 = vld [vmem:[#allocation4 + $0x68] sm:$0xf]
        %v3966 = vld [vmem:[#allocation4 + $0x6c] sm:$0xff]
        %v3967 = vld [vmem:[#allocation4 + $0x74] sm:$0xf]
        %v3968 = vld [vmem:[#allocation4 + $0x78] sm:$0xff]
        %v3969 = vld [vmem:[#allocation4 + $0x80] sm:$0xf]
        %v3970 = vld [vmem:[#allocation4 + $0x84] sm:$0xff]
        %v3971 = vld [vmem:[#allocation4 + $0x8c] sm:$0xf]
        %v3972 = vld [vmem:[#allocation4 + $0x90] sm:$0xff]
        %v3973 = vld [vmem:[#allocation4 + $0x98] sm:$0xf]
        %v3974 = vld [vmem:[#allocation4 + $0x9c] sm:$0xff]
        %v3975 = vld [vmem:[#allocation4 + $0xa4] sm:$0xf]
        %v3976 = vld [vmem:[#allocation4 + $0xa8] sm:$0xff]
        %v3977 = vld [vmem:[#allocation4 + $0xb0] sm:$0xf]
        %v3978 = vld [vmem:[#allocation4 + $0xb4] sm:$0xff]
        %v3979 = vld [vmem:[#allocation4 + $0xbc] sm:$0xf]
        %v3980 = vld [vmem:[#allocation4 + $0xc0] sm:$0xff]
        %v3981 = vld [vmem:[#allocation4 + $0xc8] sm:$0xf]
        %v3982 = vld [vmem:[#allocation4 + $0xcc] sm:$0xff]
        %v3983 = vld [vmem:[#allocation4 + $0xd4] sm:$0xf]
        %v3984 = vld [vmem:[#allocation4 + $0xd8] sm:$0xff]
        %v3985 = vld [vmem:[#allocation4 + $0xe0] sm:$0xf]
        %v3986 = vld [vmem:[#allocation4 + $0xe4] sm:$0xff]
        %v3987 = vld [vmem:[#allocation4 + $0xec] sm:$0xf]
        %v3988 = vld [vmem:[#allocation4 + $0xf0] sm:$0xff]
        %v3989 = vld [vmem:[#allocation4 + $0xf8] sm:$0xf]
        %v3990 = vld [vmem:[#allocation4 + $0xfc] sm:$0xff]
        %v3991 = vld [vmem:[#allocation4 + $0x104] sm:$0xf]
        %v3992 = vld [vmem:[#allocation4 + $0x108] sm:$0xff]
        %v3993 = vld [vmem:[#allocation4 + $0x110] sm:$0xf]
        %v3994 = vld [vmem:[#allocation4 + $0x114] sm:$0xff]
        %v3995 = vld [vmem:[#allocation4 + $0x11c] sm:$0xf]
        %v3996 = vld [vmem:[#allocation4 + $0x120] sm:$0xff]
        %v3997 = vld [vmem:[#allocation4 + $0x128] sm:$0xf]
        %v3998 = vld [vmem:[#allocation4 + $0x12c] sm:$0xff]
        %v3999 = vld [vmem:[#allocation4 + $0x134] sm:$0xf]
        %v4000 = vld [vmem:[#allocation4 + $0x138] sm:$0xff]
        %v4001 = vld [vmem:[#allocation4 + $0x140] sm:$0xf]
        %v4002 = vld [vmem:[#allocation4 + $0x144] sm:$0xff]
        %v4003 = vld [vmem:[#allocation4 + $0x14c] sm:$0xf]
        %v4004 = vld [vmem:[#allocation4 + $0x150] sm:$0xff]
        %v4005 = vld [vmem:[#allocation4 + $0x158] sm:$0xf]
        %v4006 = vld [vmem:[#allocation4 + $0x15c] sm:$0xff]
        %v4007 = vld [vmem:[#allocation4 + $0x164] sm:$0xf]
        %v4008 = vld [vmem:[#allocation4 + $0x168] sm:$0xff]
        %v4009 = vld [vmem:[#allocation4 + $0x170] sm:$0xf]
        %v4010 = vld [vmem:[#allocation4 + $0x174] sm:$0xff]
        %v4011 = vld [vmem:[#allocation4 + $0x17c] sm:$0xf]
        %v4012 = vld [vmem:[%s1] sm:$0xf]
        %v4013 = vld [vmem:[%s1 + $0x4] sm:$0xf]
        %v4014 = vld [vmem:[%s1 + $0x8] sm:$0xf]
        %v4015 = vld [vmem:[%s1 + $0xc] sm:$0xf]
        %v4016 = vld [vmem:[%s1 + $0x10] sm:$0xf]
        %v4017 = vld [vmem:[%s1 + $0x14] sm:$0xf]
        %v4018 = vld [vmem:[%s1 + $0x18] sm:$0xf]
        %v4019 = vld [vmem:[%s1 + $0x1c] sm:$0xf]
        %v4020 = vld [vmem:[%s1 + $0x20] sm:$0xf]
        %v4021 = vld [vmem:[%s1 + $0x24] sm:$0xf]
        %v4022 = vld [vmem:[%s1 + $0x28] sm:$0xf]
        %v4023 = vld [vmem:[%s1 + $0x2c] sm:$0xf]
        %v4024 = vld [vmem:[%s1 + $0x30] sm:$0xf]
        %v4025 = vld [vmem:[%s1 + $0x34] sm:$0xf]
        %v4026 = vld [vmem:[%s1 + $0x38] sm:$0xf]
        %v4027 = vld [vmem:[%s1 + $0x3c] sm:$0xf]
        %v4028 = vld [vmem:[%s1 + $0x40] sm:$0xf]
        %v4029 = vld [vmem:[%s1 + $0x44] sm:$0xf]
        %v4030 = vld [vmem:[%s1 + $0x48] sm:$0xf]
        %v4031 = vld [vmem:[%s1 + $0x4c] sm:$0xf]
        %v4032 = vld [vmem:[%s1 + $0x50] sm:$0xf]
        %v4033 = vld [vmem:[%s1 + $0x54] sm:$0xf]
        %v4034 = vld [vmem:[%s1 + $0x58] sm:$0xf]
        %v4035 = vld [vmem:[%s1 + $0x5c] sm:$0xf]
        %v4036 = vld [vmem:[%s1 + $0x60] sm:$0xf]
        %v4037 = vld [vmem:[%s1 + $0x64] sm:$0xf]
        %v4038 = vld [vmem:[%s1 + $0x68] sm:$0xf]
        %v4039 = vld [vmem:[%s1 + $0x6c] sm:$0xf]
        %v4040 = vld [vmem:[%s1 + $0x70] sm:$0xf]
        %v4041 = vld [vmem:[%s1 + $0x74] sm:$0xf]
        %v4042 = vld [vmem:[%s1 + $0x78] sm:$0xf]
        %v4043 = vld [vmem:[%s1 + $0x7c] sm:$0xf]
        %v4044 = vld [vmem:[%s1 + $0x80] sm:$0xf]
        %v4045 = vld [vmem:[%s1 + $0x84] sm:$0xf]
        %v4046 = vld [vmem:[%s1 + $0x88] sm:$0xf]
        %v4047 = vld [vmem:[%s1 + $0x8c] sm:$0xf]
        %v4048 = vld [vmem:[%s2] sm:$0x1]
        %v4050 = vperm.slane %v4048, 0
        %v4116 = vunpack.c.l.b16 %v3948
        %v4117 = vunpack.c.h.b16 %v3948
        %v4118 = vunpack.c.l.b16 %v3949
        %v4119 = vunpack.c.l.b16 %v3950
        %v4120 = vunpack.c.h.b16 %v3950
        %v4121 = vunpack.c.l.b16 %v3951
        %v4122 = vunpack.c.l.b16 %v3952
        %v4123 = vunpack.c.h.b16 %v3952
        %v4124 = vunpack.c.l.b16 %v3953
        %v4125 = vunpack.c.l.b16 %v3954
        %v4126 = vunpack.c.h.b16 %v3954
        %v4127 = vunpack.c.l.b16 %v3955
        %v4128 = vunpack.c.l.b16 %v3956
        %v4129 = vunpack.c.h.b16 %v3956
        %v4130 = vunpack.c.l.b16 %v3957
        %v4131 = vunpack.c.l.b16 %v3958
        %v4132 = vunpack.c.h.b16 %v3958
        %v4133 = vunpack.c.l.b16 %v3959
        %v4134 = vunpack.c.l.b16 %v3960
        %v4135 = vunpack.c.h.b16 %v3960
        %v4136 = vunpack.c.l.b16 %v3961
        %v4137 = vunpack.c.l.b16 %v3962
        %v4138 = vunpack.c.h.b16 %v3962
        %v4139 = vunpack.c.l.b16 %v3963
        %v4140 = vunpack.c.l.b16 %v3964
        %v4141 = vunpack.c.h.b16 %v3964
        %v4142 = vunpack.c.l.b16 %v3965
        %v4143 = vunpack.c.l.b16 %v3966
        %v4144 = vunpack.c.h.b16 %v3966
        %v4145 = vunpack.c.l.b16 %v3967
        %v4146 = vunpack.c.l.b16 %v3968
        %v4147 = vunpack.c.h.b16 %v3968
        %v4148 = vunpack.c.l.b16 %v3969
        %v4149 = vunpack.c.l.b16 %v3970
        %v4150 = vunpack.c.h.b16 %v3970
        %v4151 = vunpack.c.l.b16 %v3971
        %v4152 = vunpack.c.l.b16 %v3972
        %v4153 = vunpack.c.h.b16 %v3972
        %v4154 = vunpack.c.l.b16 %v3973
        %v4155 = vunpack.c.l.b16 %v3974
        %v4156 = vunpack.c.h.b16 %v3974
        %v4157 = vunpack.c.l.b16 %v3975
        %v4158 = vunpack.c.l.b16 %v3976
        %v4159 = vunpack.c.h.b16 %v3976
        %v4160 = vunpack.c.l.b16 %v3977
        %v4161 = vunpack.c.l.b16 %v3978
        %v4162 = vunpack.c.h.b16 %v3978
        %v4163 = vunpack.c.l.b16 %v3979
        %v4164 = vunpack.c.l.b16 %v3980
        %v4165 = vunpack.c.h.b16 %v3980
        %v4166 = vunpack.c.l.b16 %v3981
        %v4167 = vunpack.c.l.b16 %v3982
        %v4168 = vunpack.c.h.b16 %v3982
        %v4169 = vunpack.c.l.b16 %v3983
        %v4170 = vunpack.c.l.b16 %v3984
        %v4171 = vunpack.c.h.b16 %v3984
        %v4172 = vunpack.c.l.b16 %v3985
        %v4173 = vunpack.c.l.b16 %v3986
        %v4174 = vunpack.c.h.b16 %v3986
        %v4175 = vunpack.c.l.b16 %v3987
        %v4176 = vunpack.c.l.b16 %v3988
        %v4177 = vunpack.c.h.b16 %v3988
        %v4178 = vunpack.c.l.b16 %v3989
        %v4179 = vunpack.c.l.b16 %v3990
        %v4180 = vunpack.c.h.b16 %v3990
        %v4181 = vunpack.c.l.b16 %v3991
        %v4182 = vunpack.c.l.b16 %v3992
        %v4183 = vunpack.c.h.b16 %v3992
        %v4184 = vunpack.c.l.b16 %v3993
        %v4185 = vunpack.c.l.b16 %v3994
        %v4186 = vunpack.c.h.b16 %v3994
        %v4187 = vunpack.c.l.b16 %v3995
        %v4188 = vunpack.c.l.b16 %v3996
        %v4189 = vunpack.c.h.b16 %v3996
        %v4190 = vunpack.c.l.b16 %v3997
        %v4191 = vunpack.c.l.b16 %v3998
        %v4192 = vunpack.c.h.b16 %v3998
        %v4193 = vunpack.c.l.b16 %v3999
        %v4194 = vunpack.c.l.b16 %v4000
        %v4195 = vunpack.c.h.b16 %v4000
        %v4196 = vunpack.c.l.b16 %v4001
        %v4197 = vunpack.c.l.b16 %v4002
        %v4198 = vunpack.c.h.b16 %v4002
        %v4199 = vunpack.c.l.b16 %v4003
        %v4200 = vunpack.c.l.b16 %v4004
        %v4201 = vunpack.c.h.b16 %v4004
        %v4202 = vunpack.c.l.b16 %v4005
        %v4203 = vunpack.c.l.b16 %v4006
        %v4204 = vunpack.c.h.b16 %v4006
        %v4205 = vunpack.c.l.b16 %v4007
        %v4206 = vunpack.c.l.b16 %v4008
        %v4207 = vunpack.c.h.b16 %v4008
        %v4208 = vunpack.c.l.b16 %v4009
        %v4209 = vunpack.c.l.b16 %v4010
        %v4210 = vunpack.c.h.b16 %v4010
        %v4211 = vunpack.c.l.b16 %v4011
        %v4212 = vpack.c.b16 %v4119, %v4116
        %v4213 = vpack.c.b16 %v4120, %v4117
        %v4214 = vpack.c.b16 %v4121, %v4118
        %v4215 = vpack.c.b16 %v4125, %v4122
        %v4216 = vpack.c.b16 %v4126, %v4123
        %v4217 = vpack.c.b16 %v4127, %v4124
        %v4218 = vpack.c.b16 %v4131, %v4128
        %v4219 = vpack.c.b16 %v4132, %v4129
        %v4220 = vpack.c.b16 %v4133, %v4130
        %v4221 = vpack.c.b16 %v4137, %v4134
        %v4222 = vpack.c.b16 %v4138, %v4135
        %v4223 = vpack.c.b16 %v4139, %v4136
        %v4224 = vpack.c.b16 %v4143, %v4140
        %v4225 = vpack.c.b16 %v4144, %v4141
        %v4226 = vpack.c.b16 %v4145, %v4142
        %v4227 = vpack.c.b16 %v4149, %v4146
        %v4228 = vpack.c.b16 %v4150, %v4147
        %v4229 = vpack.c.b16 %v4151, %v4148
        %v4230 = vpack.c.b16 %v4155, %v4152
        %v4231 = vpack.c.b16 %v4156, %v4153
        %v4232 = vpack.c.b16 %v4157, %v4154
        %v4233 = vpack.c.b16 %v4161, %v4158
        %v4234 = vpack.c.b16 %v4162, %v4159
        %v4235 = vpack.c.b16 %v4163, %v4160
        %v4236 = vpack.c.b16 %v4167, %v4164
        %v4237 = vpack.c.b16 %v4168, %v4165
        %v4238 = vpack.c.b16 %v4169, %v4166
        %v4239 = vpack.c.b16 %v4173, %v4170
        %v4240 = vpack.c.b16 %v4174, %v4171
        %v4241 = vpack.c.b16 %v4175, %v4172
        %v4242 = vpack.c.b16 %v4179, %v4176
        %v4243 = vpack.c.b16 %v4180, %v4177
        %v4244 = vpack.c.b16 %v4181, %v4178
        %v4245 = vpack.c.b16 %v4185, %v4182
        %v4246 = vpack.c.b16 %v4186, %v4183
        %v4247 = vpack.c.b16 %v4187, %v4184
        %v4248 = vpack.c.b16 %v4191, %v4188
        %v4249 = vpack.c.b16 %v4192, %v4189
        %v4250 = vpack.c.b16 %v4193, %v4190
        %v4251 = vpack.c.b16 %v4197, %v4194
        %v4252 = vpack.c.b16 %v4198, %v4195
        %v4253 = vpack.c.b16 %v4199, %v4196
        %v4254 = vpack.c.b16 %v4203, %v4200
        %v4255 = vpack.c.b16 %v4204, %v4201
        %v4256 = vpack.c.b16 %v4205, %v4202
        %v4257 = vpack.c.b16 %v4209, %v4206
        %v4258 = vpack.c.b16 %v4210, %v4207
        %v4259 = vpack.c.b16 %v4211, %v4208
        %v4328 = vunpack.c.l.b16 %v4012
        %v4329 = vunpack.c.l.b16 %v4013
        %v4330 = vunpack.c.l.b16 %v4014
        %v4331 = vunpack.c.l.b16 %v4015
        %v4332 = vunpack.c.l.b16 %v4016
        %v4333 = vunpack.c.l.b16 %v4017
        %v4334 = vunpack.c.l.b16 %v4018
        %v4335 = vunpack.c.l.b16 %v4019
        %v4336 = vunpack.c.l.b16 %v4020
        %v4337 = vunpack.c.l.b16 %v4021
        %v4338 = vunpack.c.l.b16 %v4022
        %v4339 = vunpack.c.l.b16 %v4023
        %v4340 = vunpack.c.l.b16 %v4024
        %v4341 = vunpack.c.l.b16 %v4025
        %v4342 = vunpack.c.l.b16 %v4026
        %v4343 = vunpack.c.l.b16 %v4027
        %v4344 = vunpack.c.l.b16 %v4028
        %v4345 = vunpack.c.l.b16 %v4029
        %v4346 = vunpack.c.l.b16 %v4030
        %v4347 = vunpack.c.l.b16 %v4031
        %v4348 = vunpack.c.l.b16 %v4032
        %v4349 = vunpack.c.l.b16 %v4033
        %v4350 = vunpack.c.l.b16 %v4034
        %v4351 = vunpack.c.l.b16 %v4035
        %v4352 = vunpack.c.l.b16 %v4036
        %v4353 = vunpack.c.l.b16 %v4037
        %v4354 = vunpack.c.l.b16 %v4038
        %v4355 = vunpack.c.l.b16 %v4039
        %v4356 = vunpack.c.l.b16 %v4040
        %v4357 = vunpack.c.l.b16 %v4041
        %v4358 = vunpack.c.l.b16 %v4042
        %v4359 = vunpack.c.l.b16 %v4043
        %v4360 = vunpack.c.l.b16 %v4044
        %v4361 = vunpack.c.l.b16 %v4045
        %v4362 = vunpack.c.l.b16 %v4046
        %v4363 = vunpack.c.l.b16 %v4047
        %v4364 = vpack.c.b16 %v4329, %v4328
        %v4365 = vpack.c.b16 %v4331, %v4330
        %v4366 = vpack.c.b16 %v4333, %v4332
        %v4367 = vpack.c.b16 %v4335, %v4334
        %v4368 = vpack.c.b16 %v4337, %v4336
        %v4369 = vpack.c.b16 %v4339, %v4338
        %v4370 = vpack.c.b16 %v4341, %v4340
        %v4371 = vpack.c.b16 %v4343, %v4342
        %v4372 = vpack.c.b16 %v4345, %v4344
        %v4373 = vpack.c.b16 %v4347, %v4346
        %v4374 = vpack.c.b16 %v4349, %v4348
        %v4375 = vpack.c.b16 %v4351, %v4350
        %v4376 = vpack.c.b16 %v4353, %v4352
        %v4377 = vpack.c.b16 %v4355, %v4354
        %v4378 = vpack.c.b16 %v4357, %v4356
        %v4379 = vpack.c.b16 %v4359, %v4358
        %v4380 = vpack.c.b16 %v4361, %v4360
        %v4381 = vpack.c.b16 %v4363, %v4362
        %vm4400 = vcmask 261120
        %v4402 = vsel %vm4400, %v4214, 0
        %v4405 = vsel %vm4400, %v4217, 0
        %v4408 = vsel %vm4400, %v4220, 0
        %v4411 = vsel %vm4400, %v4223, 0
        %v4414 = vsel %vm4400, %v4226, 0
        %v4417 = vsel %vm4400, %v4229, 0
        %v4420 = vsel %vm4400, %v4232, 0
        %v4423 = vsel %vm4400, %v4235, 0
        %v4426 = vsel %vm4400, %v4238, 0
        %v4429 = vsel %vm4400, %v4241, 0
        %v4432 = vsel %vm4400, %v4244, 0
        %v4435 = vsel %vm4400, %v4247, 0
        %v4438 = vsel %vm4400, %v4250, 0
        %v4441 = vsel %vm4400, %v4253, 0
        %v4444 = vsel %vm4400, %v4256, 0
        %v4447 = vsel %vm4400, %v4259, 0
        %4449 = vmatpush.bf16.msra.mxu0 %v4371
        %4450 = vmatpush.bf16.msra.mxu0 %v4370
        %4451 = vmatpush.bf16.msra.mxu0 %v4369
        %4452 = vmatpush.bf16.msra.mxu0 %v4368
        %4453 = vmatpush.bf16.msra.mxu0 %v4367
        %4454 = vmatpush.bf16.msra.mxu0 %v4366
        %4455 = vmatpush.bf16.msra.mxu0 %v4365
        %4456 = vmatpush.bf16.msra.mxu0 %v4364
        %4457 = vmatmul.bf16.gmra.mxu0 %v4212
        %v4458 = vpop.f32.mrf.mxu0
        %v4459 = vadd.f32 %v4050, %v4458
        %v4460 = vpop.f32.mrf.mxu0
        %v4461 = vadd.f32 %v4050, %v4460
        %4462 = vmatmul.bf16.gmra.mxu0 %v4215
        %v4463 = vpop.f32.mrf.mxu0
        %v4464 = vadd.f32 %v4050, %v4463
        %v4465 = vpop.f32.mrf.mxu0
        %v4466 = vadd.f32 %v4050, %v4465
        %4467 = vmatmul.bf16.gmra.mxu0 %v4218
        %v4468 = vpop.f32.mrf.mxu0
        %v4469 = vadd.f32 %v4050, %v4468
        %v4470 = vpop.f32.mrf.mxu0
        %v4471 = vadd.f32 %v4050, %v4470
        %4472 = vmatmul.bf16.gmra.mxu0 %v4221
        %v4473 = vpop.f32.mrf.mxu0
        %v4474 = vadd.f32 %v4050, %v4473
        %v4475 = vpop.f32.mrf.mxu0
        %v4476 = vadd.f32 %v4050, %v4475
        %4477 = vmatmul.bf16.gmra.mxu0 %v4224
        %v4478 = vpop.f32.mrf.mxu0
        %v4479 = vadd.f32 %v4050, %v4478
        %v4480 = vpop.f32.mrf.mxu0
        %v4481 = vadd.f32 %v4050, %v4480
        %4482 = vmatmul.bf16.gmra.mxu0 %v4227
        %v4483 = vpop.f32.mrf.mxu0
        %v4484 = vadd.f32 %v4050, %v4483
        %v4485 = vpop.f32.mrf.mxu0
        %v4486 = vadd.f32 %v4050, %v4485
        %4487 = vmatmul.bf16.gmra.mxu0 %v4230
        %v4488 = vpop.f32.mrf.mxu0
        %v4489 = vadd.f32 %v4050, %v4488
        %v4490 = vpop.f32.mrf.mxu0
        %v4491 = vadd.f32 %v4050, %v4490
        %4492 = vmatmul.bf16.gmra.mxu0 %v4233
        %v4493 = vpop.f32.mrf.mxu0
        %v4494 = vadd.f32 %v4050, %v4493
        %v4495 = vpop.f32.mrf.mxu0
        %v4496 = vadd.f32 %v4050, %v4495
        %4497 = vmatmul.bf16.gmra.mxu0 %v4236
        %v4498 = vpop.f32.mrf.mxu0
        %v4499 = vadd.f32 %v4050, %v4498
        %v4500 = vpop.f32.mrf.mxu0
        %v4501 = vadd.f32 %v4050, %v4500
        %4502 = vmatmul.bf16.gmra.mxu0 %v4239
        %v4503 = vpop.f32.mrf.mxu0
        %v4504 = vadd.f32 %v4050, %v4503
        %v4505 = vpop.f32.mrf.mxu0
        %v4506 = vadd.f32 %v4050, %v4505
        %4507 = vmatmul.bf16.gmra.mxu0 %v4242
        %v4508 = vpop.f32.mrf.mxu0
        %v4509 = vadd.f32 %v4050, %v4508
        %v4510 = vpop.f32.mrf.mxu0
        %v4511 = vadd.f32 %v4050, %v4510
        %4512 = vmatmul.bf16.gmra.mxu0 %v4245
        %v4513 = vpop.f32.mrf.mxu0
        %v4514 = vadd.f32 %v4050, %v4513
        %v4515 = vpop.f32.mrf.mxu0
        %v4516 = vadd.f32 %v4050, %v4515
        %4517 = vmatmul.bf16.gmra.mxu0 %v4248
        %v4518 = vpop.f32.mrf.mxu0
        %v4519 = vadd.f32 %v4050, %v4518
        %v4520 = vpop.f32.mrf.mxu0
        %v4521 = vadd.f32 %v4050, %v4520
        %4522 = vmatmul.bf16.gmra.mxu0 %v4251
        %v4523 = vpop.f32.mrf.mxu0
        %v4524 = vadd.f32 %v4050, %v4523
        %v4525 = vpop.f32.mrf.mxu0
        %v4526 = vadd.f32 %v4050, %v4525
        %4527 = vmatmul.bf16.gmra.mxu0 %v4254
        %v4528 = vpop.f32.mrf.mxu0
        %v4529 = vadd.f32 %v4050, %v4528
        %v4530 = vpop.f32.mrf.mxu0
        %v4531 = vadd.f32 %v4050, %v4530
        %4532 = vmatmul.bf16.gmra.mxu0 %v4257
        %v4533 = vpop.f32.mrf.mxu0
        %v4534 = vadd.f32 %v4050, %v4533
        %v4535 = vpop.f32.mrf.mxu0
        %v4536 = vadd.f32 %v4050, %v4535
        %4537 = vdwg.mxu0
        %4538 = vmatpush.bf16.msra.mxu0 %v4379
        %4539 = vmatpush.bf16.msra.mxu0 %v4378
        %4540 = vmatpush.bf16.msra.mxu0 %v4377
        %4541 = vmatpush.bf16.msra.mxu0 %v4376
        %4542 = vmatpush.bf16.msra.mxu0 %v4375
        %4543 = vmatpush.bf16.msra.mxu0 %v4374
        %4544 = vmatpush.bf16.msra.mxu0 %v4373
        %4545 = vmatpush.bf16.msra.mxu0 %v4372
        %4546 = vmatmul.bf16.gmra.mxu0 %v4213
        %v4547 = vpop.f32.mrf.mxu0
        %v4548 = vadd.f32 %v4459, %v4547
        %v4549 = vpop.f32.mrf.mxu0
        %v4550 = vadd.f32 %v4461, %v4549
        %4551 = vmatmul.bf16.gmra.mxu0 %v4216
        %v4552 = vpop.f32.mrf.mxu0
        %v4553 = vadd.f32 %v4464, %v4552
        %v4554 = vpop.f32.mrf.mxu0
        %v4555 = vadd.f32 %v4466, %v4554
        %4556 = vmatmul.bf16.gmra.mxu0 %v4219
        %v4557 = vpop.f32.mrf.mxu0
        %v4558 = vadd.f32 %v4469, %v4557
        %v4559 = vpop.f32.mrf.mxu0
        %v4560 = vadd.f32 %v4471, %v4559
        %4561 = vmatmul.bf16.gmra.mxu0 %v4222
        %v4562 = vpop.f32.mrf.mxu0
        %v4563 = vadd.f32 %v4474, %v4562
        %v4564 = vpop.f32.mrf.mxu0
        %v4565 = vadd.f32 %v4476, %v4564
        %4566 = vmatmul.bf16.gmra.mxu0 %v4225
        %v4567 = vpop.f32.mrf.mxu0
        %v4568 = vadd.f32 %v4479, %v4567
        %v4569 = vpop.f32.mrf.mxu0
        %v4570 = vadd.f32 %v4481, %v4569
        %4571 = vmatmul.bf16.gmra.mxu0 %v4228
        %v4572 = vpop.f32.mrf.mxu0
        %v4573 = vadd.f32 %v4484, %v4572
        %v4574 = vpop.f32.mrf.mxu0
        %v4575 = vadd.f32 %v4486, %v4574
        %4576 = vmatmul.bf16.gmra.mxu0 %v4231
        %v4577 = vpop.f32.mrf.mxu0
        %v4578 = vadd.f32 %v4489, %v4577
        %v4579 = vpop.f32.mrf.mxu0
        %v4580 = vadd.f32 %v4491, %v4579
        %4581 = vmatmul.bf16.gmra.mxu0 %v4234
        %v4582 = vpop.f32.mrf.mxu0
        %v4583 = vadd.f32 %v4494, %v4582
        %v4584 = vpop.f32.mrf.mxu0
        %v4585 = vadd.f32 %v4496, %v4584
        %4586 = vmatmul.bf16.gmra.mxu0 %v4237
        %v4587 = vpop.f32.mrf.mxu0
        %v4588 = vadd.f32 %v4499, %v4587
        %v4589 = vpop.f32.mrf.mxu0
        %v4590 = vadd.f32 %v4501, %v4589
        %4591 = vmatmul.bf16.gmra.mxu0 %v4240
        %v4592 = vpop.f32.mrf.mxu0
        %v4593 = vadd.f32 %v4504, %v4592
        %v4594 = vpop.f32.mrf.mxu0
        %v4595 = vadd.f32 %v4506, %v4594
        %4596 = vmatmul.bf16.gmra.mxu0 %v4243
        %v4597 = vpop.f32.mrf.mxu0
        %v4598 = vadd.f32 %v4509, %v4597
        %v4599 = vpop.f32.mrf.mxu0
        %v4600 = vadd.f32 %v4511, %v4599
        %4601 = vmatmul.bf16.gmra.mxu0 %v4246
        %v4602 = vpop.f32.mrf.mxu0
        %v4603 = vadd.f32 %v4514, %v4602
        %v4604 = vpop.f32.mrf.mxu0
        %v4605 = vadd.f32 %v4516, %v4604
        %4606 = vmatmul.bf16.gmra.mxu0 %v4249
        %v4607 = vpop.f32.mrf.mxu0
        %v4608 = vadd.f32 %v4519, %v4607
        %v4609 = vpop.f32.mrf.mxu0
        %v4610 = vadd.f32 %v4521, %v4609
        %4611 = vmatmul.bf16.gmra.mxu0 %v4252
        %v4612 = vpop.f32.mrf.mxu0
        %v4613 = vadd.f32 %v4524, %v4612
        %v4614 = vpop.f32.mrf.mxu0
        %v4615 = vadd.f32 %v4526, %v4614
        %4616 = vmatmul.bf16.gmra.mxu0 %v4255
        %v4617 = vpop.f32.mrf.mxu0
        %v4618 = vadd.f32 %v4529, %v4617
        %v4619 = vpop.f32.mrf.mxu0
        %v4620 = vadd.f32 %v4531, %v4619
        %4621 = vmatmul.bf16.gmra.mxu0 %v4258
        %v4622 = vpop.f32.mrf.mxu0
        %v4623 = vadd.f32 %v4534, %v4622
        %v4624 = vpop.f32.mrf.mxu0
        %v4625 = vadd.f32 %v4536, %v4624
        %4626 = vdwg.mxu0
        %4627 = vmatpush.bf16.msra.mxu0 0
        %4628 = vmatpush.bf16.msra.mxu0 0
        %4629 = vmatpush.bf16.msra.mxu0 0
        %4630 = vmatpush.bf16.msra.mxu0 0
        %4631 = vmatpush.bf16.msra.mxu0 0
        %4632 = vmatpush.bf16.msra.mxu0 0
        %4633 = vmatpush.bf16.msra.mxu0 %v4381
        %4634 = vmatpush.bf16.msra.mxu0 %v4380
        %4635 = vmatmul.bf16.gmra.mxu0 %v4402
        %v4636 = vpop.f32.mrf.mxu0
        %v4637 = vadd.f32 %v4548, %v4636
        %v4638 = vpop.f32.mrf.mxu0
        %v4639 = vadd.f32 %v4550, %v4638
        %4640 = vmatmul.bf16.gmra.mxu0 %v4405
        %v4641 = vpop.f32.mrf.mxu0
        %v4642 = vadd.f32 %v4553, %v4641
        %v4643 = vpop.f32.mrf.mxu0
        %v4644 = vadd.f32 %v4555, %v4643
        %4645 = vmatmul.bf16.gmra.mxu0 %v4408
        %v4646 = vpop.f32.mrf.mxu0
        %v4647 = vadd.f32 %v4558, %v4646
        %v4648 = vpop.f32.mrf.mxu0
        %v4649 = vadd.f32 %v4560, %v4648
        %4650 = vmatmul.bf16.gmra.mxu0 %v4411
        %v4651 = vpop.f32.mrf.mxu0
        %v4652 = vadd.f32 %v4563, %v4651
        %v4653 = vpop.f32.mrf.mxu0
        %v4654 = vadd.f32 %v4565, %v4653
        %4655 = vmatmul.bf16.gmra.mxu0 %v4414
        %v4656 = vpop.f32.mrf.mxu0
        %v4657 = vadd.f32 %v4568, %v4656
        %v4658 = vpop.f32.mrf.mxu0
        %v4659 = vadd.f32 %v4570, %v4658
        %4660 = vmatmul.bf16.gmra.mxu0 %v4417
        %v4661 = vpop.f32.mrf.mxu0
        %v4662 = vadd.f32 %v4573, %v4661
        %v4663 = vpop.f32.mrf.mxu0
        %v4664 = vadd.f32 %v4575, %v4663
        %4665 = vmatmul.bf16.gmra.mxu0 %v4420
        %v4666 = vpop.f32.mrf.mxu0
        %v4667 = vadd.f32 %v4578, %v4666
        %v4668 = vpop.f32.mrf.mxu0
        %v4669 = vadd.f32 %v4580, %v4668
        %4670 = vmatmul.bf16.gmra.mxu0 %v4423
        %v4671 = vpop.f32.mrf.mxu0
        %v4672 = vadd.f32 %v4583, %v4671
        %v4673 = vpop.f32.mrf.mxu0
        %v4674 = vadd.f32 %v4585, %v4673
        %4675 = vmatmul.bf16.gmra.mxu0 %v4426
        %v4676 = vpop.f32.mrf.mxu0
        %v4677 = vadd.f32 %v4588, %v4676
        %v4678 = vpop.f32.mrf.mxu0
        %v4679 = vadd.f32 %v4590, %v4678
        %4680 = vmatmul.bf16.gmra.mxu0 %v4429
        %v4681 = vpop.f32.mrf.mxu0
        %v4682 = vadd.f32 %v4593, %v4681
        %v4683 = vpop.f32.mrf.mxu0
        %v4684 = vadd.f32 %v4595, %v4683
        %4685 = vmatmul.bf16.gmra.mxu0 %v4432
        %v4686 = vpop.f32.mrf.mxu0
        %v4687 = vadd.f32 %v4598, %v4686
        %v4688 = vpop.f32.mrf.mxu0
        %v4689 = vadd.f32 %v4600, %v4688
        %4690 = vmatmul.bf16.gmra.mxu0 %v4435
        %v4691 = vpop.f32.mrf.mxu0
        %v4692 = vadd.f32 %v4603, %v4691
        %v4693 = vpop.f32.mrf.mxu0
        %v4694 = vadd.f32 %v4605, %v4693
        %4695 = vmatmul.bf16.gmra.mxu0 %v4438
        %v4696 = vpop.f32.mrf.mxu0
        %v4697 = vadd.f32 %v4608, %v4696
        %v4698 = vpop.f32.mrf.mxu0
        %v4699 = vadd.f32 %v4610, %v4698
        %4700 = vmatmul.bf16.gmra.mxu0 %v4441
        %v4701 = vpop.f32.mrf.mxu0
        %v4702 = vadd.f32 %v4613, %v4701
        %v4703 = vpop.f32.mrf.mxu0
        %v4704 = vadd.f32 %v4615, %v4703
        %4705 = vmatmul.bf16.gmra.mxu0 %v4444
        %v4706 = vpop.f32.mrf.mxu0
        %v4707 = vadd.f32 %v4618, %v4706
        %v4708 = vpop.f32.mrf.mxu0
        %v4709 = vadd.f32 %v4620, %v4708
        %4710 = vmatmul.bf16.gmra.mxu0 %v4447
        %v4711 = vpop.f32.mrf.mxu0
        %v4712 = vadd.f32 %v4623, %v4711
        %v4713 = vpop.f32.mrf.mxu0
        %v4714 = vadd.f32 %v4625, %v4713
        %4715 = vdwg.mxu0
        %v4716 = vmax.f32 %v4637, 0.0
        %v4717 = vmax.f32 %v4639, 0.0
        %v4718 = vmax.f32 %v4642, 0.0
        %v4719 = vmax.f32 %v4644, 0.0
        %v4720 = vmax.f32 %v4647, 0.0
        %v4721 = vmax.f32 %v4649, 0.0
        %v4722 = vmax.f32 %v4652, 0.0
        %v4723 = vmax.f32 %v4654, 0.0
        %v4724 = vmax.f32 %v4657, 0.0
        %v4725 = vmax.f32 %v4659, 0.0
        %v4726 = vmax.f32 %v4662, 0.0
        %v4727 = vmax.f32 %v4664, 0.0
        %v4728 = vmax.f32 %v4667, 0.0
        %v4729 = vmax.f32 %v4669, 0.0
        %v4730 = vmax.f32 %v4672, 0.0
        %v4731 = vmax.f32 %v4674, 0.0
        %v4732 = vmax.f32 %v4677, 0.0
        %v4733 = vmax.f32 %v4679, 0.0
        %v4734 = vmax.f32 %v4682, 0.0
        %v4735 = vmax.f32 %v4684, 0.0
        %v4736 = vmax.f32 %v4687, 0.0
        %v4737 = vmax.f32 %v4689, 0.0
        %v4738 = vmax.f32 %v4692, 0.0
        %v4739 = vmax.f32 %v4694, 0.0
        %v4740 = vmax.f32 %v4697, 0.0
        %v4741 = vmax.f32 %v4699, 0.0
        %v4742 = vmax.f32 %v4702, 0.0
        %v4743 = vmax.f32 %v4704, 0.0
        %v4744 = vmax.f32 %v4707, 0.0
        %v4745 = vmax.f32 %v4709, 0.0
        %v4746 = vmax.f32 %v4712, 0.0
        %v4747 = vmax.f32 %v4714, 0.0
        %v4748 = vpack.c.bf16 %v4716, %v4716
        %v4749 = vpack.c.bf16 %v4717, %v4717
        %v4750 = vpack.c.bf16 %v4718, %v4718
        %v4751 = vpack.c.bf16 %v4719, %v4719
        %v4752 = vpack.c.bf16 %v4720, %v4720
        %v4753 = vpack.c.bf16 %v4721, %v4721
        %v4754 = vpack.c.bf16 %v4722, %v4722
        %v4755 = vpack.c.bf16 %v4723, %v4723
        %v4756 = vpack.c.bf16 %v4724, %v4724
        %v4757 = vpack.c.bf16 %v4725, %v4725
        %v4758 = vpack.c.bf16 %v4726, %v4726
        %v4759 = vpack.c.bf16 %v4727, %v4727
        %v4760 = vpack.c.bf16 %v4728, %v4728
        %v4761 = vpack.c.bf16 %v4729, %v4729
        %v4762 = vpack.c.bf16 %v4730, %v4730
        %v4763 = vpack.c.bf16 %v4731, %v4731
        %v4764 = vpack.c.bf16 %v4732, %v4732
        %v4765 = vpack.c.bf16 %v4733, %v4733
        %v4766 = vpack.c.bf16 %v4734, %v4734
        %v4767 = vpack.c.bf16 %v4735, %v4735
        %v4768 = vpack.c.bf16 %v4736, %v4736
        %v4769 = vpack.c.bf16 %v4737, %v4737
        %v4770 = vpack.c.bf16 %v4738, %v4738
        %v4771 = vpack.c.bf16 %v4739, %v4739
        %v4772 = vpack.c.bf16 %v4740, %v4740
        %v4773 = vpack.c.bf16 %v4741, %v4741
        %v4774 = vpack.c.bf16 %v4742, %v4742
        %v4775 = vpack.c.bf16 %v4743, %v4743
        %v4776 = vpack.c.bf16 %v4744, %v4744
        %v4777 = vpack.c.bf16 %v4745, %v4745
        %v4778 = vpack.c.bf16 %v4746, %v4746
        %v4779 = vpack.c.bf16 %v4747, %v4747
        %v4781 = vshrl.u32 %v4748, 16
        %v4783 = vrot.slane %v4781, 7
        %v4784 = vshll.u32 %v4748, 16
        %v4786 = vor.u32 %v4783, %v4784
        %v4787 = vrot.slane %v4783, 4
        %v4789 = vshrl.u32 %v4749, 16
        %v4791 = vrot.slane %v4789, 7
        %v4792 = vshll.u32 %v4749, 16
        %v4794 = vor.u32 %v4791, %v4792
        %v4795 = vsel %vm494, %v4787, %v4794
        %v4796 = vrot.slane %v4791, 4
        %v4798 = vshrl.u32 %v4750, 16
        %v4800 = vrot.slane %v4798, 7
        %v4801 = vshll.u32 %v4750, 16
        %v4803 = vor.u32 %v4800, %v4801
        %v4804 = vrot.slane %v4800, 4
        %v4806 = vshrl.u32 %v4751, 16
        %v4808 = vrot.slane %v4806, 7
        %v4809 = vshll.u32 %v4751, 16
        %v4811 = vor.u32 %v4808, %v4809
        %v4812 = vsel %vm494, %v4804, %v4811
        %v4813 = vrot.slane %v4808, 4
        %v4815 = vshrl.u32 %v4752, 16
        %v4817 = vrot.slane %v4815, 7
        %v4818 = vshll.u32 %v4752, 16
        %v4820 = vor.u32 %v4817, %v4818
        %v4821 = vrot.slane %v4817, 4
        %v4823 = vshrl.u32 %v4753, 16
        %v4825 = vrot.slane %v4823, 7
        %v4826 = vshll.u32 %v4753, 16
        %v4828 = vor.u32 %v4825, %v4826
        %v4829 = vsel %vm494, %v4821, %v4828
        %v4830 = vrot.slane %v4825, 4
        %v4832 = vshrl.u32 %v4754, 16
        %v4834 = vrot.slane %v4832, 7
        %v4835 = vshll.u32 %v4754, 16
        %v4837 = vor.u32 %v4834, %v4835
        %v4838 = vrot.slane %v4834, 4
        %v4840 = vshrl.u32 %v4755, 16
        %v4842 = vrot.slane %v4840, 7
        %v4843 = vshll.u32 %v4755, 16
        %v4845 = vor.u32 %v4842, %v4843
        %v4846 = vsel %vm494, %v4838, %v4845
        %v4847 = vrot.slane %v4842, 4
        %v4849 = vshrl.u32 %v4756, 16
        %v4851 = vrot.slane %v4849, 7
        %v4852 = vshll.u32 %v4756, 16
        %v4854 = vor.u32 %v4851, %v4852
        %v4855 = vrot.slane %v4851, 4
        %v4857 = vshrl.u32 %v4757, 16
        %v4859 = vrot.slane %v4857, 7
        %v4860 = vshll.u32 %v4757, 16
        %v4862 = vor.u32 %v4859, %v4860
        %v4863 = vsel %vm494, %v4855, %v4862
        %v4864 = vrot.slane %v4859, 4
        %v4866 = vshrl.u32 %v4758, 16
        %v4868 = vrot.slane %v4866, 7
        %v4869 = vshll.u32 %v4758, 16
        %v4871 = vor.u32 %v4868, %v4869
        %v4872 = vrot.slane %v4868, 4
        %v4874 = vshrl.u32 %v4759, 16
        %v4876 = vrot.slane %v4874, 7
        %v4877 = vshll.u32 %v4759, 16
        %v4879 = vor.u32 %v4876, %v4877
        %v4880 = vsel %vm494, %v4872, %v4879
        %v4881 = vrot.slane %v4876, 4
        %v4883 = vshrl.u32 %v4760, 16
        %v4885 = vrot.slane %v4883, 7
        %v4886 = vshll.u32 %v4760, 16
        %v4888 = vor.u32 %v4885, %v4886
        %v4889 = vrot.slane %v4885, 4
        %v4891 = vshrl.u32 %v4761, 16
        %v4893 = vrot.slane %v4891, 7
        %v4894 = vshll.u32 %v4761, 16
        %v4896 = vor.u32 %v4893, %v4894
        %v4897 = vsel %vm494, %v4889, %v4896
        %v4898 = vrot.slane %v4893, 4
        %v4900 = vshrl.u32 %v4762, 16
        %v4902 = vrot.slane %v4900, 7
        %v4903 = vshll.u32 %v4762, 16
        %v4905 = vor.u32 %v4902, %v4903
        %v4906 = vrot.slane %v4902, 4
        %v4908 = vshrl.u32 %v4763, 16
        %v4910 = vrot.slane %v4908, 7
        %v4911 = vshll.u32 %v4763, 16
        %v4913 = vor.u32 %v4910, %v4911
        %v4914 = vsel %vm494, %v4906, %v4913
        %v4915 = vrot.slane %v4910, 4
        %v4917 = vshrl.u32 %v4764, 16
        %v4919 = vrot.slane %v4917, 7
        %v4920 = vshll.u32 %v4764, 16
        %v4922 = vor.u32 %v4919, %v4920
        %v4923 = vrot.slane %v4919, 4
        %v4925 = vshrl.u32 %v4765, 16
        %v4927 = vrot.slane %v4925, 7
        %v4928 = vshll.u32 %v4765, 16
        %v4930 = vor.u32 %v4927, %v4928
        %v4931 = vsel %vm494, %v4923, %v4930
        %v4932 = vrot.slane %v4927, 4
        %v4934 = vshrl.u32 %v4766, 16
        %v4936 = vrot.slane %v4934, 7
        %v4937 = vshll.u32 %v4766, 16
        %v4939 = vor.u32 %v4936, %v4937
        %v4940 = vrot.slane %v4936, 4
        %v4942 = vshrl.u32 %v4767, 16
        %v4944 = vrot.slane %v4942, 7
        %v4945 = vshll.u32 %v4767, 16
        %v4947 = vor.u32 %v4944, %v4945
        %v4948 = vsel %vm494, %v4940, %v4947
        %v4949 = vrot.slane %v4944, 4
        %v4951 = vshrl.u32 %v4768, 16
        %v4953 = vrot.slane %v4951, 7
        %v4954 = vshll.u32 %v4768, 16
        %v4956 = vor.u32 %v4953, %v4954
        %v4957 = vrot.slane %v4953, 4
        %v4959 = vshrl.u32 %v4769, 16
        %v4961 = vrot.slane %v4959, 7
        %v4962 = vshll.u32 %v4769, 16
        %v4964 = vor.u32 %v4961, %v4962
        %v4965 = vsel %vm494, %v4957, %v4964
        %v4966 = vrot.slane %v4961, 4
        %v4968 = vshrl.u32 %v4770, 16
        %v4970 = vrot.slane %v4968, 7
        %v4971 = vshll.u32 %v4770, 16
        %v4973 = vor.u32 %v4970, %v4971
        %v4974 = vrot.slane %v4970, 4
        %v4976 = vshrl.u32 %v4771, 16
        %v4978 = vrot.slane %v4976, 7
        %v4979 = vshll.u32 %v4771, 16
        %v4981 = vor.u32 %v4978, %v4979
        %v4982 = vsel %vm494, %v4974, %v4981
        %v4983 = vrot.slane %v4978, 4
        %v4985 = vshrl.u32 %v4772, 16
        %v4987 = vrot.slane %v4985, 7
        %v4988 = vshll.u32 %v4772, 16
        %v4990 = vor.u32 %v4987, %v4988
        %v4991 = vrot.slane %v4987, 4
        %v4993 = vshrl.u32 %v4773, 16
        %v4995 = vrot.slane %v4993, 7
        %v4996 = vshll.u32 %v4773, 16
        %v4998 = vor.u32 %v4995, %v4996
        %v4999 = vsel %vm494, %v4991, %v4998
        %v5000 = vrot.slane %v4995, 4
        %v5002 = vshrl.u32 %v4774, 16
        %v5004 = vrot.slane %v5002, 7
        %v5005 = vshll.u32 %v4774, 16
        %v5007 = vor.u32 %v5004, %v5005
        %v5008 = vrot.slane %v5004, 4
        %v5010 = vshrl.u32 %v4775, 16
        %v5012 = vrot.slane %v5010, 7
        %v5013 = vshll.u32 %v4775, 16
        %v5015 = vor.u32 %v5012, %v5013
        %v5016 = vsel %vm494, %v5008, %v5015
        %v5017 = vrot.slane %v5012, 4
        %v5019 = vshrl.u32 %v4776, 16
        %v5021 = vrot.slane %v5019, 7
        %v5022 = vshll.u32 %v4776, 16
        %v5024 = vor.u32 %v5021, %v5022
        %v5025 = vrot.slane %v5021, 4
        %v5027 = vshrl.u32 %v4777, 16
        %v5029 = vrot.slane %v5027, 7
        %v5030 = vshll.u32 %v4777, 16
        %v5032 = vor.u32 %v5029, %v5030
        %v5033 = vsel %vm494, %v5025, %v5032
        %v5034 = vrot.slane %v5029, 4
        %v5036 = vshrl.u32 %v4778, 16
        %v5038 = vrot.slane %v5036, 7
        %v5039 = vshll.u32 %v4778, 16
        %v5041 = vor.u32 %v5038, %v5039
        %v5042 = vrot.slane %v5038, 4
        %v5044 = vshrl.u32 %v4779, 16
        %v5046 = vrot.slane %v5044, 7
        %v5047 = vshll.u32 %v4779, 16
        %v5049 = vor.u32 %v5046, %v5047
        %v5050 = vsel %vm494, %v5042, %v5049
        %v5051 = vrot.slane %v5046, 4
        %s5100 = scalar_lea.vmem [#allocation3], 12
        %v5101 = vld [vmem:[%s5100] sm:$0xf]
        %v5102 = vsel %vm817, %v4786, %v5101
        %5103 = vst [vmem:[%s5100] sm:$0xf] %v5102
        %5104 = vst.msk [vmem:[%s5100 + $0x4] sm:$0xf] %vm224, %v4795
        %v5105 = vld [vmem:[%s5100 + $0x8] sm:$0x1]
        %v5106 = vsel %vm235, %v4796, %v5105
        %5107 = vst [vmem:[%s5100 + $0x8] sm:$0x1] %v5106
        %v5108 = vld [vmem:[%s5100 + $0xc] sm:$0xf]
        %v5109 = vsel %vm817, %v4803, %v5108
        %5110 = vst [vmem:[%s5100 + $0xc] sm:$0xf] %v5109
        %5111 = vst.msk [vmem:[%s5100 + $0x10] sm:$0xf] %vm224, %v4812
        %v5112 = vld [vmem:[%s5100 + $0x14] sm:$0x1]
        %v5113 = vsel %vm235, %v4813, %v5112
        %5114 = vst [vmem:[%s5100 + $0x14] sm:$0x1] %v5113
        %v5115 = vld [vmem:[%s5100 + $0x18] sm:$0xf]
        %v5116 = vsel %vm817, %v4820, %v5115
        %5117 = vst [vmem:[%s5100 + $0x18] sm:$0xf] %v5116
        %5118 = vst.msk [vmem:[%s5100 + $0x1c] sm:$0xf] %vm224, %v4829
        %v5119 = vld [vmem:[%s5100 + $0x20] sm:$0x1]
        %v5120 = vsel %vm235, %v4830, %v5119
        %5121 = vst [vmem:[%s5100 + $0x20] sm:$0x1] %v5120
        %v5122 = vld [vmem:[%s5100 + $0x24] sm:$0xf]
        %v5123 = vsel %vm817, %v4837, %v5122
        %5124 = vst [vmem:[%s5100 + $0x24] sm:$0xf] %v5123
        %5125 = vst.msk [vmem:[%s5100 + $0x28] sm:$0xf] %vm224, %v4846
        %v5126 = vld [vmem:[%s5100 + $0x2c] sm:$0x1]
        %v5127 = vsel %vm235, %v4847, %v5126
        %5128 = vst [vmem:[%s5100 + $0x2c] sm:$0x1] %v5127
        %v5129 = vld [vmem:[%s5100 + $0x30] sm:$0xf]
        %v5130 = vsel %vm817, %v4854, %v5129
        %5131 = vst [vmem:[%s5100 + $0x30] sm:$0xf] %v5130
        %5132 = vst.msk [vmem:[%s5100 + $0x34] sm:$0xf] %vm224, %v4863
        %v5133 = vld [vmem:[%s5100 + $0x38] sm:$0x1]
        %v5134 = vsel %vm235, %v4864, %v5133
        %5135 = vst [vmem:[%s5100 + $0x38] sm:$0x1] %v5134
        %v5136 = vld [vmem:[%s5100 + $0x3c] sm:$0xf]
        %v5137 = vsel %vm817, %v4871, %v5136
        %5138 = vst [vmem:[%s5100 + $0x3c] sm:$0xf] %v5137
        %5139 = vst.msk [vmem:[%s5100 + $0x40] sm:$0xf] %vm224, %v4880
        %v5140 = vld [vmem:[%s5100 + $0x44] sm:$0x1]
        %v5141 = vsel %vm235, %v4881, %v5140
        %5142 = vst [vmem:[%s5100 + $0x44] sm:$0x1] %v5141
        %v5143 = vld [vmem:[%s5100 + $0x48] sm:$0xf]
        %v5144 = vsel %vm817, %v4888, %v5143
        %5145 = vst [vmem:[%s5100 + $0x48] sm:$0xf] %v5144
        %5146 = vst.msk [vmem:[%s5100 + $0x4c] sm:$0xf] %vm224, %v4897
        %v5147 = vld [vmem:[%s5100 + $0x50] sm:$0x1]
        %v5148 = vsel %vm235, %v4898, %v5147
        %5149 = vst [vmem:[%s5100 + $0x50] sm:$0x1] %v5148
        %v5150 = vld [vmem:[%s5100 + $0x54] sm:$0xf]
        %v5151 = vsel %vm817, %v4905, %v5150
        %5152 = vst [vmem:[%s5100 + $0x54] sm:$0xf] %v5151
        %5153 = vst.msk [vmem:[%s5100 + $0x58] sm:$0xf] %vm224, %v4914
        %v5154 = vld [vmem:[%s5100 + $0x5c] sm:$0x1]
        %v5155 = vsel %vm235, %v4915, %v5154
        %5156 = vst [vmem:[%s5100 + $0x5c] sm:$0x1] %v5155
        %v5157 = vld [vmem:[%s5100 + $0x60] sm:$0xf]
        %v5158 = vsel %vm817, %v4922, %v5157
        %5159 = vst [vmem:[%s5100 + $0x60] sm:$0xf] %v5158
        %5160 = vst.msk [vmem:[%s5100 + $0x64] sm:$0xf] %vm224, %v4931
        %v5161 = vld [vmem:[%s5100 + $0x68] sm:$0x1]
        %v5162 = vsel %vm235, %v4932, %v5161
        %5163 = vst [vmem:[%s5100 + $0x68] sm:$0x1] %v5162
        %v5164 = vld [vmem:[%s5100 + $0x6c] sm:$0xf]
        %v5165 = vsel %vm817, %v4939, %v5164
        %5166 = vst [vmem:[%s5100 + $0x6c] sm:$0xf] %v5165
        %5167 = vst.msk [vmem:[%s5100 + $0x70] sm:$0xf] %vm224, %v4948
        %v5168 = vld [vmem:[%s5100 + $0x74] sm:$0x1]
        %v5169 = vsel %vm235, %v4949, %v5168
        %5170 = vst [vmem:[%s5100 + $0x74] sm:$0x1] %v5169
        %v5171 = vld [vmem:[%s5100 + $0x78] sm:$0xf]
        %v5172 = vsel %vm817, %v4956, %v5171
        %5173 = vst [vmem:[%s5100 + $0x78] sm:$0xf] %v5172
        %5174 = vst.msk [vmem:[%s5100 + $0x7c] sm:$0xf] %vm224, %v4965
        %v5175 = vld [vmem:[%s5100 + $0x80] sm:$0x1]
        %v5176 = vsel %vm235, %v4966, %v5175
        %5177 = vst [vmem:[%s5100 + $0x80] sm:$0x1] %v5176
        %v5178 = vld [vmem:[%s5100 + $0x84] sm:$0xf]
        %v5179 = vsel %vm817, %v4973, %v5178
        %5180 = vst [vmem:[%s5100 + $0x84] sm:$0xf] %v5179
        %5181 = vst.msk [vmem:[%s5100 + $0x88] sm:$0xf] %vm224, %v4982
        %v5182 = vld [vmem:[%s5100 + $0x8c] sm:$0x1]
        %v5183 = vsel %vm235, %v4983, %v5182
        %5184 = vst [vmem:[%s5100 + $0x8c] sm:$0x1] %v5183
        %v5185 = vld [vmem:[%s5100 + $0x90] sm:$0xf]
        %v5186 = vsel %vm817, %v4990, %v5185
        %5187 = vst [vmem:[%s5100 + $0x90] sm:$0xf] %v5186
        %5188 = vst.msk [vmem:[%s5100 + $0x94] sm:$0xf] %vm224, %v4999
        %v5189 = vld [vmem:[%s5100 + $0x98] sm:$0x1]
        %v5190 = vsel %vm235, %v5000, %v5189
        %5191 = vst [vmem:[%s5100 + $0x98] sm:$0x1] %v5190
        %v5192 = vld [vmem:[%s5100 + $0x9c] sm:$0xf]
        %v5193 = vsel %vm817, %v5007, %v5192
        %5194 = vst [vmem:[%s5100 + $0x9c] sm:$0xf] %v5193
        %5195 = vst.msk [vmem:[%s5100 + $0xa0] sm:$0xf] %vm224, %v5016
        %v5196 = vld [vmem:[%s5100 + $0xa4] sm:$0x1]
        %v5197 = vsel %vm235, %v5017, %v5196
        %5198 = vst [vmem:[%s5100 + $0xa4] sm:$0x1] %v5197
        %v5199 = vld [vmem:[%s5100 + $0xa8] sm:$0xf]
        %v5200 = vsel %vm817, %v5024, %v5199
        %5201 = vst [vmem:[%s5100 + $0xa8] sm:$0xf] %v5200
        %5202 = vst.msk [vmem:[%s5100 + $0xac] sm:$0xf] %vm224, %v5033
        %v5203 = vld [vmem:[%s5100 + $0xb0] sm:$0x1]
        %v5204 = vsel %vm235, %v5034, %v5203
        %5205 = vst [vmem:[%s5100 + $0xb0] sm:$0x1] %v5204
        %v5206 = vld [vmem:[%s5100 + $0xb4] sm:$0xf]
        %v5207 = vsel %vm817, %v5041, %v5206
        %5208 = vst [vmem:[%s5100 + $0xb4] sm:$0xf] %v5207
        %5209 = vst.msk [vmem:[%s5100 + $0xb8] sm:$0xf] %vm224, %v5050
        %v5210 = vld [vmem:[%s5100 + $0xbc] sm:$0x1]
        %v5211 = vsel %vm235, %v5051, %v5210
        %5212 = vst [vmem:[%s5100 + $0xbc] sm:$0x1] %v5211
        %v5213 = vld [vmem:[#allocation3] sm:$0xf]
        %v5214 = vld [vmem:[#allocation3 + $0x4] sm:$0xf]
        %v5215 = vld [vmem:[#allocation3 + $0xc] sm:$0xf]
        %v5216 = vld [vmem:[#allocation3 + $0x10] sm:$0xf]
        %v5217 = vld [vmem:[#allocation3 + $0x18] sm:$0xf]
        %v5218 = vld [vmem:[#allocation3 + $0x1c] sm:$0xf]
        %v5219 = vld [vmem:[#allocation3 + $0x24] sm:$0xf]
        %v5220 = vld [vmem:[#allocation3 + $0x28] sm:$0xf]
        %v5221 = vld [vmem:[#allocation3 + $0x30] sm:$0xf]
        %v5222 = vld [vmem:[#allocation3 + $0x34] sm:$0xf]
        %v5223 = vld [vmem:[#allocation3 + $0x3c] sm:$0xf]
        %v5224 = vld [vmem:[#allocation3 + $0x40] sm:$0xf]
        %v5225 = vld [vmem:[#allocation3 + $0x48] sm:$0xf]
        %v5226 = vld [vmem:[#allocation3 + $0x4c] sm:$0xf]
        %v5227 = vld [vmem:[#allocation3 + $0x54] sm:$0xf]
        %v5228 = vld [vmem:[#allocation3 + $0x58] sm:$0xf]
        %v5229 = vld [vmem:[#allocation3 + $0x60] sm:$0xf]
        %v5230 = vld [vmem:[#allocation3 + $0x64] sm:$0xf]
        %v5231 = vld [vmem:[#allocation3 + $0x6c] sm:$0xf]
        %v5232 = vld [vmem:[#allocation3 + $0x70] sm:$0xf]
        %v5233 = vld [vmem:[#allocation3 + $0x78] sm:$0xf]
        %v5234 = vld [vmem:[#allocation3 + $0x7c] sm:$0xf]
        %v5235 = vld [vmem:[#allocation3 + $0x84] sm:$0xf]
        %v5236 = vld [vmem:[#allocation3 + $0x88] sm:$0xf]
        %v5237 = vld [vmem:[#allocation3 + $0x90] sm:$0xf]
        %v5238 = vld [vmem:[#allocation3 + $0x94] sm:$0xf]
        %v5239 = vld [vmem:[#allocation3 + $0x9c] sm:$0xf]
        %v5240 = vld [vmem:[#allocation3 + $0xa0] sm:$0xf]
        %v5241 = vld [vmem:[#allocation3 + $0xa8] sm:$0xf]
        %v5242 = vld [vmem:[#allocation3 + $0xac] sm:$0xf]
        %v5243 = vld [vmem:[#allocation3 + $0xb4] sm:$0xf]
        %v5244 = vld [vmem:[#allocation3 + $0xb8] sm:$0xf]
        %5245 = vst.msk [vmem:[#allocation4] sm:$0xf] %vm224, %v5213
        %5246 = vst.msk [vmem:[#allocation4 + $0xc] sm:$0xf] %vm224, %v5214
        %5247 = vst.msk [vmem:[#allocation4 + $0x18] sm:$0xf] %vm224, %v5215
        %5248 = vst.msk [vmem:[#allocation4 + $0x24] sm:$0xf] %vm224, %v5216
        %5249 = vst.msk [vmem:[#allocation4 + $0x30] sm:$0xf] %vm224, %v5217
        %5250 = vst.msk [vmem:[#allocation4 + $0x3c] sm:$0xf] %vm224, %v5218
        %5251 = vst.msk [vmem:[#allocation4 + $0x48] sm:$0xf] %vm224, %v5219
        %5252 = vst.msk [vmem:[#allocation4 + $0x54] sm:$0xf] %vm224, %v5220
        %5253 = vst.msk [vmem:[#allocation4 + $0x60] sm:$0xf] %vm224, %v5221
        %5254 = vst.msk [vmem:[#allocation4 + $0x6c] sm:$0xf] %vm224, %v5222
        %5255 = vst.msk [vmem:[#allocation4 + $0x78] sm:$0xf] %vm224, %v5223
        %5256 = vst.msk [vmem:[#allocation4 + $0x84] sm:$0xf] %vm224, %v5224
        %5257 = vst.msk [vmem:[#allocation4 + $0x90] sm:$0xf] %vm224, %v5225
        %5258 = vst.msk [vmem:[#allocation4 + $0x9c] sm:$0xf] %vm224, %v5226
        %5259 = vst.msk [vmem:[#allocation4 + $0xa8] sm:$0xf] %vm224, %v5227
        %5260 = vst.msk [vmem:[#allocation4 + $0xb4] sm:$0xf] %vm224, %v5228
        %5261 = vst.msk [vmem:[#allocation4 + $0xc0] sm:$0xf] %vm224, %v5229
        %5262 = vst.msk [vmem:[#allocation4 + $0xcc] sm:$0xf] %vm224, %v5230
        %5263 = vst.msk [vmem:[#allocation4 + $0xd8] sm:$0xf] %vm224, %v5231
        %5264 = vst.msk [vmem:[#allocation4 + $0xe4] sm:$0xf] %vm224, %v5232
        %5265 = vst.msk [vmem:[#allocation4 + $0xf0] sm:$0xf] %vm224, %v5233
        %5266 = vst.msk [vmem:[#allocation4 + $0xfc] sm:$0xf] %vm224, %v5234
        %5267 = vst.msk [vmem:[#allocation4 + $0x108] sm:$0xf] %vm224, %v5235
        %5268 = vst.msk [vmem:[#allocation4 + $0x114] sm:$0xf] %vm224, %v5236
        %5269 = vst.msk [vmem:[#allocation4 + $0x120] sm:$0xf] %vm224, %v5237
        %5270 = vst.msk [vmem:[#allocation4 + $0x12c] sm:$0xf] %vm224, %v5238
        %5271 = vst.msk [vmem:[#allocation4 + $0x138] sm:$0xf] %vm224, %v5239
        %5272 = vst.msk [vmem:[#allocation4 + $0x144] sm:$0xf] %vm224, %v5240
        %5273 = vst.msk [vmem:[#allocation4 + $0x150] sm:$0xf] %vm224, %v5241
        %5274 = vst.msk [vmem:[#allocation4 + $0x15c] sm:$0xf] %vm224, %v5242
        %5275 = vst.msk [vmem:[#allocation4 + $0x168] sm:$0xf] %vm224, %v5243
        %5276 = vst.msk [vmem:[#allocation4 + $0x174] sm:$0xf] %vm224, %v5244
        %v5277 = vld [vmem:[#allocation3] sm:$0xf]
        %v5278 = vld [vmem:[#allocation3 + $0x4] sm:$0xf]
        %v5279 = vld [vmem:[#allocation3 + $0x8] sm:$0x1]
        %v5280 = vld [vmem:[#allocation3 + $0xc] sm:$0xf]
        %v5281 = vld [vmem:[#allocation3 + $0x10] sm:$0xf]
        %v5282 = vld [vmem:[#allocation3 + $0x14] sm:$0x1]
        %v5283 = vld [vmem:[#allocation3 + $0x18] sm:$0xf]
        %v5284 = vld [vmem:[#allocation3 + $0x1c] sm:$0xf]
        %v5285 = vld [vmem:[#allocation3 + $0x20] sm:$0x1]
        %v5286 = vld [vmem:[#allocation3 + $0x24] sm:$0xf]
        %v5287 = vld [vmem:[#allocation3 + $0x28] sm:$0xf]
        %v5288 = vld [vmem:[#allocation3 + $0x2c] sm:$0x1]
        %v5289 = vld [vmem:[#allocation3 + $0x30] sm:$0xf]
        %v5290 = vld [vmem:[#allocation3 + $0x34] sm:$0xf]
        %v5291 = vld [vmem:[#allocation3 + $0x38] sm:$0x1]
        %v5292 = vld [vmem:[#allocation3 + $0x3c] sm:$0xf]
        %v5293 = vld [vmem:[#allocation3 + $0x40] sm:$0xf]
        %v5294 = vld [vmem:[#allocation3 + $0x44] sm:$0x1]
        %v5295 = vld [vmem:[#allocation3 + $0x48] sm:$0xf]
        %v5296 = vld [vmem:[#allocation3 + $0x4c] sm:$0xf]
        %v5297 = vld [vmem:[#allocation3 + $0x50] sm:$0x1]
        %v5298 = vld [vmem:[#allocation3 + $0x54] sm:$0xf]
        %v5299 = vld [vmem:[#allocation3 + $0x58] sm:$0xf]
        %v5300 = vld [vmem:[#allocation3 + $0x5c] sm:$0x1]
        %v5301 = vld [vmem:[#allocation3 + $0x60] sm:$0xf]
        %v5302 = vld [vmem:[#allocation3 + $0x64] sm:$0xf]
        %v5303 = vld [vmem:[#allocation3 + $0x68] sm:$0x1]
        %v5304 = vld [vmem:[#allocation3 + $0x6c] sm:$0xf]
        %v5305 = vld [vmem:[#allocation3 + $0x70] sm:$0xf]
        %v5306 = vld [vmem:[#allocation3 + $0x74] sm:$0x1]
        %v5307 = vld [vmem:[#allocation3 + $0x78] sm:$0xf]
        %v5308 = vld [vmem:[#allocation3 + $0x7c] sm:$0xf]
        %v5309 = vld [vmem:[#allocation3 + $0x80] sm:$0x1]
        %v5310 = vld [vmem:[#allocation3 + $0x84] sm:$0xf]
        %v5311 = vld [vmem:[#allocation3 + $0x88] sm:$0xf]
        %v5312 = vld [vmem:[#allocation3 + $0x8c] sm:$0x1]
        %v5313 = vld [vmem:[#allocation3 + $0x90] sm:$0xf]
        %v5314 = vld [vmem:[#allocation3 + $0x94] sm:$0xf]
        %v5315 = vld [vmem:[#allocation3 + $0x98] sm:$0x1]
        %v5316 = vld [vmem:[#allocation3 + $0x9c] sm:$0xf]
        %v5317 = vld [vmem:[#allocation3 + $0xa0] sm:$0xf]
        %v5318 = vld [vmem:[#allocation3 + $0xa4] sm:$0x1]
        %v5319 = vld [vmem:[#allocation3 + $0xa8] sm:$0xf]
        %v5320 = vld [vmem:[#allocation3 + $0xac] sm:$0xf]
        %v5321 = vld [vmem:[#allocation3 + $0xb0] sm:$0x1]
        %v5322 = vld [vmem:[#allocation3 + $0xb4] sm:$0xf]
        %v5323 = vld [vmem:[#allocation3 + $0xb8] sm:$0xf]
        %v5324 = vld [vmem:[#allocation3 + $0xbc] sm:$0x1]
        %v5326 = vshrl.u32 %v5277, 16
        %v5328 = vrot.slane %v5326, 4
        %v5329 = vshll.u32 %v5277, 16
        %v5331 = vrot.slane %v5329, 5
        %v5332 = vor.u32 %v5328, %v5331
        %v5333 = vrot.slane %v5332, 4
        %v5335 = vshll.u32 %v5278, 16
        %v5337 = vrot.slane %v5335, 5
        %v5338 = vsel %vm1044, %v5333, %v5337
        %v5339 = vshrl.u32 %v5278, 16
        %v5341 = vrot.slane %v5339, 4
        %v5342 = vor.u32 %v5341, %v5337
        %v5343 = vrot.slane %v5342, 4
        %v5345 = vshll.u32 %v5279, 16
        %v5347 = vrot.slane %v5345, 5
        %v5348 = vsel %vm1044, %v5343, %v5347
        %v5350 = vshrl.u32 %v5280, 16
        %v5352 = vrot.slane %v5350, 4
        %v5353 = vshll.u32 %v5280, 16
        %v5355 = vrot.slane %v5353, 5
        %v5356 = vor.u32 %v5352, %v5355
        %v5357 = vrot.slane %v5356, 4
        %v5359 = vshll.u32 %v5281, 16
        %v5361 = vrot.slane %v5359, 5
        %v5362 = vsel %vm1044, %v5357, %v5361
        %v5363 = vshrl.u32 %v5281, 16
        %v5365 = vrot.slane %v5363, 4
        %v5366 = vor.u32 %v5365, %v5361
        %v5367 = vrot.slane %v5366, 4
        %v5369 = vshll.u32 %v5282, 16
        %v5371 = vrot.slane %v5369, 5
        %v5372 = vsel %vm1044, %v5367, %v5371
        %v5374 = vshrl.u32 %v5283, 16
        %v5376 = vrot.slane %v5374, 4
        %v5377 = vshll.u32 %v5283, 16
        %v5379 = vrot.slane %v5377, 5
        %v5380 = vor.u32 %v5376, %v5379
        %v5381 = vrot.slane %v5380, 4
        %v5383 = vshll.u32 %v5284, 16
        %v5385 = vrot.slane %v5383, 5
        %v5386 = vsel %vm1044, %v5381, %v5385
        %v5387 = vshrl.u32 %v5284, 16
        %v5389 = vrot.slane %v5387, 4
        %v5390 = vor.u32 %v5389, %v5385
        %v5391 = vrot.slane %v5390, 4
        %v5393 = vshll.u32 %v5285, 16
        %v5395 = vrot.slane %v5393, 5
        %v5396 = vsel %vm1044, %v5391, %v5395
        %v5398 = vshrl.u32 %v5286, 16
        %v5400 = vrot.slane %v5398, 4
        %v5401 = vshll.u32 %v5286, 16
        %v5403 = vrot.slane %v5401, 5
        %v5404 = vor.u32 %v5400, %v5403
        %v5405 = vrot.slane %v5404, 4
        %v5407 = vshll.u32 %v5287, 16
        %v5409 = vrot.slane %v5407, 5
        %v5410 = vsel %vm1044, %v5405, %v5409
        %v5411 = vshrl.u32 %v5287, 16
        %v5413 = vrot.slane %v5411, 4
        %v5414 = vor.u32 %v5413, %v5409
        %v5415 = vrot.slane %v5414, 4
        %v5417 = vshll.u32 %v5288, 16
        %v5419 = vrot.slane %v5417, 5
        %v5420 = vsel %vm1044, %v5415, %v5419
        %v5422 = vshrl.u32 %v5289, 16
        %v5424 = vrot.slane %v5422, 4
        %v5425 = vshll.u32 %v5289, 16
        %v5427 = vrot.slane %v5425, 5
        %v5428 = vor.u32 %v5424, %v5427
        %v5429 = vrot.slane %v5428, 4
        %v5431 = vshll.u32 %v5290, 16
        %v5433 = vrot.slane %v5431, 5
        %v5434 = vsel %vm1044, %v5429, %v5433
        %v5435 = vshrl.u32 %v5290, 16
        %v5437 = vrot.slane %v5435, 4
        %v5438 = vor.u32 %v5437, %v5433
        %v5439 = vrot.slane %v5438, 4
        %v5441 = vshll.u32 %v5291, 16
        %v5443 = vrot.slane %v5441, 5
        %v5444 = vsel %vm1044, %v5439, %v5443
        %v5446 = vshrl.u32 %v5292, 16
        %v5448 = vrot.slane %v5446, 4
        %v5449 = vshll.u32 %v5292, 16
        %v5451 = vrot.slane %v5449, 5
        %v5452 = vor.u32 %v5448, %v5451
        %v5453 = vrot.slane %v5452, 4
        %v5455 = vshll.u32 %v5293, 16
        %v5457 = vrot.slane %v5455, 5
        %v5458 = vsel %vm1044, %v5453, %v5457
        %v5459 = vshrl.u32 %v5293, 16
        %v5461 = vrot.slane %v5459, 4
        %v5462 = vor.u32 %v5461, %v5457
        %v5463 = vrot.slane %v5462, 4
        %v5465 = vshll.u32 %v5294, 16
        %v5467 = vrot.slane %v5465, 5
        %v5468 = vsel %vm1044, %v5463, %v5467
        %v5470 = vshrl.u32 %v5295, 16
        %v5472 = vrot.slane %v5470, 4
        %v5473 = vshll.u32 %v5295, 16
        %v5475 = vrot.slane %v5473, 5
        %v5476 = vor.u32 %v5472, %v5475
        %v5477 = vrot.slane %v5476, 4
        %v5479 = vshll.u32 %v5296, 16
        %v5481 = vrot.slane %v5479, 5
        %v5482 = vsel %vm1044, %v5477, %v5481
        %v5483 = vshrl.u32 %v5296, 16
        %v5485 = vrot.slane %v5483, 4
        %v5486 = vor.u32 %v5485, %v5481
        %v5487 = vrot.slane %v5486, 4
        %v5489 = vshll.u32 %v5297, 16
        %v5491 = vrot.slane %v5489, 5
        %v5492 = vsel %vm1044, %v5487, %v5491
        %v5494 = vshrl.u32 %v5298, 16
        %v5496 = vrot.slane %v5494, 4
        %v5497 = vshll.u32 %v5298, 16
        %v5499 = vrot.slane %v5497, 5
        %v5500 = vor.u32 %v5496, %v5499
        %v5501 = vrot.slane %v5500, 4
        %v5503 = vshll.u32 %v5299, 16
        %v5505 = vrot.slane %v5503, 5
        %v5506 = vsel %vm1044, %v5501, %v5505
        %v5507 = vshrl.u32 %v5299, 16
        %v5509 = vrot.slane %v5507, 4
        %v5510 = vor.u32 %v5509, %v5505
        %v5511 = vrot.slane %v5510, 4
        %v5513 = vshll.u32 %v5300, 16
        %v5515 = vrot.slane %v5513, 5
        %v5516 = vsel %vm1044, %v5511, %v5515
        %v5518 = vshrl.u32 %v5301, 16
        %v5520 = vrot.slane %v5518, 4
        %v5521 = vshll.u32 %v5301, 16
        %v5523 = vrot.slane %v5521, 5
        %v5524 = vor.u32 %v5520, %v5523
        %v5525 = vrot.slane %v5524, 4
        %v5527 = vshll.u32 %v5302, 16
        %v5529 = vrot.slane %v5527, 5
        %v5530 = vsel %vm1044, %v5525, %v5529
        %v5531 = vshrl.u32 %v5302, 16
        %v5533 = vrot.slane %v5531, 4
        %v5534 = vor.u32 %v5533, %v5529
        %v5535 = vrot.slane %v5534, 4
        %v5537 = vshll.u32 %v5303, 16
        %v5539 = vrot.slane %v5537, 5
        %v5540 = vsel %vm1044, %v5535, %v5539
        %v5542 = vshrl.u32 %v5304, 16
        %v5544 = vrot.slane %v5542, 4
        %v5545 = vshll.u32 %v5304, 16
        %v5547 = vrot.slane %v5545, 5
        %v5548 = vor.u32 %v5544, %v5547
        %v5549 = vrot.slane %v5548, 4
        %v5551 = vshll.u32 %v5305, 16
        %v5553 = vrot.slane %v5551, 5
        %v5554 = vsel %vm1044, %v5549, %v5553
        %v5555 = vshrl.u32 %v5305, 16
        %v5557 = vrot.slane %v5555, 4
        %v5558 = vor.u32 %v5557, %v5553
        %v5559 = vrot.slane %v5558, 4
        %v5561 = vshll.u32 %v5306, 16
        %v5563 = vrot.slane %v5561, 5
        %v5564 = vsel %vm1044, %v5559, %v5563
        %v5566 = vshrl.u32 %v5307, 16
        %v5568 = vrot.slane %v5566, 4
        %v5569 = vshll.u32 %v5307, 16
        %v5571 = vrot.slane %v5569, 5
        %v5572 = vor.u32 %v5568, %v5571
        %v5573 = vrot.slane %v5572, 4
        %v5575 = vshll.u32 %v5308, 16
        %v5577 = vrot.slane %v5575, 5
        %v5578 = vsel %vm1044, %v5573, %v5577
        %v5579 = vshrl.u32 %v5308, 16
        %v5581 = vrot.slane %v5579, 4
        %v5582 = vor.u32 %v5581, %v5577
        %v5583 = vrot.slane %v5582, 4
        %v5585 = vshll.u32 %v5309, 16
        %v5587 = vrot.slane %v5585, 5
        %v5588 = vsel %vm1044, %v5583, %v5587
        %v5590 = vshrl.u32 %v5310, 16
        %v5592 = vrot.slane %v5590, 4
        %v5593 = vshll.u32 %v5310, 16
        %v5595 = vrot.slane %v5593, 5
        %v5596 = vor.u32 %v5592, %v5595
        %v5597 = vrot.slane %v5596, 4
        %v5599 = vshll.u32 %v5311, 16
        %v5601 = vrot.slane %v5599, 5
        %v5602 = vsel %vm1044, %v5597, %v5601
        %v5603 = vshrl.u32 %v5311, 16
        %v5605 = vrot.slane %v5603, 4
        %v5606 = vor.u32 %v5605, %v5601
        %v5607 = vrot.slane %v5606, 4
        %v5609 = vshll.u32 %v5312, 16
        %v5611 = vrot.slane %v5609, 5
        %v5612 = vsel %vm1044, %v5607, %v5611
        %v5614 = vshrl.u32 %v5313, 16
        %v5616 = vrot.slane %v5614, 4
        %v5617 = vshll.u32 %v5313, 16
        %v5619 = vrot.slane %v5617, 5
        %v5620 = vor.u32 %v5616, %v5619
        %v5621 = vrot.slane %v5620, 4
        %v5623 = vshll.u32 %v5314, 16
        %v5625 = vrot.slane %v5623, 5
        %v5626 = vsel %vm1044, %v5621, %v5625
        %v5627 = vshrl.u32 %v5314, 16
        %v5629 = vrot.slane %v5627, 4
        %v5630 = vor.u32 %v5629, %v5625
        %v5631 = vrot.slane %v5630, 4
        %v5633 = vshll.u32 %v5315, 16
        %v5635 = vrot.slane %v5633, 5
        %v5636 = vsel %vm1044, %v5631, %v5635
        %v5638 = vshrl.u32 %v5316, 16
        %v5640 = vrot.slane %v5638, 4
        %v5641 = vshll.u32 %v5316, 16
        %v5643 = vrot.slane %v5641, 5
        %v5644 = vor.u32 %v5640, %v5643
        %v5645 = vrot.slane %v5644, 4
        %v5647 = vshll.u32 %v5317, 16
        %v5649 = vrot.slane %v5647, 5
        %v5650 = vsel %vm1044, %v5645, %v5649
        %v5651 = vshrl.u32 %v5317, 16
        %v5653 = vrot.slane %v5651, 4
        %v5654 = vor.u32 %v5653, %v5649
        %v5655 = vrot.slane %v5654, 4
        %v5657 = vshll.u32 %v5318, 16
        %v5659 = vrot.slane %v5657, 5
        %v5660 = vsel %vm1044, %v5655, %v5659
        %v5662 = vshrl.u32 %v5319, 16
        %v5664 = vrot.slane %v5662, 4
        %v5665 = vshll.u32 %v5319, 16
        %v5667 = vrot.slane %v5665, 5
        %v5668 = vor.u32 %v5664, %v5667
        %v5669 = vrot.slane %v5668, 4
        %v5671 = vshll.u32 %v5320, 16
        %v5673 = vrot.slane %v5671, 5
        %v5674 = vsel %vm1044, %v5669, %v5673
        %v5675 = vshrl.u32 %v5320, 16
        %v5677 = vrot.slane %v5675, 4
        %v5678 = vor.u32 %v5677, %v5673
        %v5679 = vrot.slane %v5678, 4
        %v5681 = vshll.u32 %v5321, 16
        %v5683 = vrot.slane %v5681, 5
        %v5684 = vsel %vm1044, %v5679, %v5683
        %v5686 = vshrl.u32 %v5322, 16
        %v5688 = vrot.slane %v5686, 4
        %v5689 = vshll.u32 %v5322, 16
        %v5691 = vrot.slane %v5689, 5
        %v5692 = vor.u32 %v5688, %v5691
        %v5693 = vrot.slane %v5692, 4
        %v5695 = vshll.u32 %v5323, 16
        %v5697 = vrot.slane %v5695, 5
        %v5698 = vsel %vm1044, %v5693, %v5697
        %v5699 = vshrl.u32 %v5323, 16
        %v5701 = vrot.slane %v5699, 4
        %v5702 = vor.u32 %v5701, %v5697
        %v5703 = vrot.slane %v5702, 4
        %v5705 = vshll.u32 %v5324, 16
        %v5707 = vrot.slane %v5705, 5
        %v5708 = vsel %vm1044, %v5703, %v5707
        %5709 = vrot.lane.b32.xlu0 %v5338, 32
        %v5710 = vpop.permute.xlu0 %5709
        %5711 = vrot.lane.b32.xlu0 %v5348, 32
        %v5712 = vpop.permute.xlu0 %5711
        %5713 = vrot.lane.b32.xlu0 %v5362, 32
        %v5714 = vpop.permute.xlu0 %5713
        %5715 = vrot.lane.b32.xlu0 %v5372, 32
        %v5716 = vpop.permute.xlu0 %5715
        %5717 = vrot.lane.b32.xlu0 %v5386, 32
        %v5718 = vpop.permute.xlu0 %5717
        %5719 = vrot.lane.b32.xlu0 %v5396, 32
        %v5720 = vpop.permute.xlu0 %5719
        %5721 = vrot.lane.b32.xlu0 %v5410, 32
        %v5722 = vpop.permute.xlu0 %5721
        %5723 = vrot.lane.b32.xlu0 %v5420, 32
        %v5724 = vpop.permute.xlu0 %5723
        %5725 = vrot.lane.b32.xlu0 %v5434, 32
        %v5726 = vpop.permute.xlu0 %5725
        %5727 = vrot.lane.b32.xlu0 %v5444, 32
        %v5728 = vpop.permute.xlu0 %5727
        %5729 = vrot.lane.b32.xlu0 %v5458, 32
        %v5730 = vpop.permute.xlu0 %5729
        %5731 = vrot.lane.b32.xlu0 %v5468, 32
        %v5732 = vpop.permute.xlu0 %5731
        %5733 = vrot.lane.b32.xlu0 %v5482, 32
        %v5734 = vpop.permute.xlu0 %5733
        %5735 = vrot.lane.b32.xlu0 %v5492, 32
        %v5736 = vpop.permute.xlu0 %5735
        %5737 = vrot.lane.b32.xlu0 %v5506, 32
        %v5738 = vpop.permute.xlu0 %5737
        %5739 = vrot.lane.b32.xlu0 %v5516, 32
        %v5740 = vpop.permute.xlu0 %5739
        %5741 = vrot.lane.b32.xlu0 %v5530, 32
        %v5742 = vpop.permute.xlu0 %5741
        %5743 = vrot.lane.b32.xlu0 %v5540, 32
        %v5744 = vpop.permute.xlu0 %5743
        %5745 = vrot.lane.b32.xlu0 %v5554, 32
        %v5746 = vpop.permute.xlu0 %5745
        %5747 = vrot.lane.b32.xlu0 %v5564, 32
        %v5748 = vpop.permute.xlu0 %5747
        %5749 = vrot.lane.b32.xlu0 %v5578, 32
        %v5750 = vpop.permute.xlu0 %5749
        %5751 = vrot.lane.b32.xlu0 %v5588, 32
        %v5752 = vpop.permute.xlu0 %5751
        %5753 = vrot.lane.b32.xlu0 %v5602, 32
        %v5754 = vpop.permute.xlu0 %5753
        %5755 = vrot.lane.b32.xlu0 %v5612, 32
        %v5756 = vpop.permute.xlu0 %5755
        %5757 = vrot.lane.b32.xlu0 %v5626, 32
        %v5758 = vpop.permute.xlu0 %5757
        %5759 = vrot.lane.b32.xlu0 %v5636, 32
        %v5760 = vpop.permute.xlu0 %5759
        %5761 = vrot.lane.b32.xlu0 %v5650, 32
        %v5762 = vpop.permute.xlu0 %5761
        %5763 = vrot.lane.b32.xlu0 %v5660, 32
        %v5764 = vpop.permute.xlu0 %5763
        %5765 = vrot.lane.b32.xlu0 %v5674, 32
        %v5766 = vpop.permute.xlu0 %5765
        %5767 = vrot.lane.b32.xlu0 %v5684, 32
        %v5768 = vpop.permute.xlu0 %5767
        %5769 = vrot.lane.b32.xlu0 %v5698, 32
        %v5770 = vpop.permute.xlu0 %5769
        %5771 = vrot.lane.b32.xlu0 %v5708, 32
        %v5772 = vpop.permute.xlu0 %5771
        %5805 = vst.msk [vmem:[#allocation4] sm:$0xf] %vm1525, %v5710
        %5806 = vst.msk [vmem:[#allocation4 + $0xc] sm:$0xf] %vm1525, %v5712
        %5807 = vst.msk [vmem:[#allocation4 + $0x18] sm:$0xf] %vm1525, %v5714
        %5808 = vst.msk [vmem:[#allocation4 + $0x24] sm:$0xf] %vm1525, %v5716
        %5809 = vst.msk [vmem:[#allocation4 + $0x30] sm:$0xf] %vm1525, %v5718
        %5810 = vst.msk [vmem:[#allocation4 + $0x3c] sm:$0xf] %vm1525, %v5720
        %5811 = vst.msk [vmem:[#allocation4 + $0x48] sm:$0xf] %vm1525, %v5722
        %5812 = vst.msk [vmem:[#allocation4 + $0x54] sm:$0xf] %vm1525, %v5724
        %5813 = vst.msk [vmem:[#allocation4 + $0x60] sm:$0xf] %vm1525, %v5726
        %5814 = vst.msk [vmem:[#allocation4 + $0x6c] sm:$0xf] %vm1525, %v5728
        %5815 = vst.msk [vmem:[#allocation4 + $0x78] sm:$0xf] %vm1525, %v5730
        %5816 = vst.msk [vmem:[#allocation4 + $0x84] sm:$0xf] %vm1525, %v5732
        %5817 = vst.msk [vmem:[#allocation4 + $0x90] sm:$0xf] %vm1525, %v5734
        %5818 = vst.msk [vmem:[#allocation4 + $0x9c] sm:$0xf] %vm1525, %v5736
        %5819 = vst.msk [vmem:[#allocation4 + $0xa8] sm:$0xf] %vm1525, %v5738
        %5820 = vst.msk [vmem:[#allocation4 + $0xb4] sm:$0xf] %vm1525, %v5740
        %5821 = vst.msk [vmem:[#allocation4 + $0xc0] sm:$0xf] %vm1525, %v5742
        %5822 = vst.msk [vmem:[#allocation4 + $0xcc] sm:$0xf] %vm1525, %v5744
        %5823 = vst.msk [vmem:[#allocation4 + $0xd8] sm:$0xf] %vm1525, %v5746
        %5824 = vst.msk [vmem:[#allocation4 + $0xe4] sm:$0xf] %vm1525, %v5748
        %5825 = vst.msk [vmem:[#allocation4 + $0xf0] sm:$0xf] %vm1525, %v5750
        %5826 = vst.msk [vmem:[#allocation4 + $0xfc] sm:$0xf] %vm1525, %v5752
        %5827 = vst.msk [vmem:[#allocation4 + $0x108] sm:$0xf] %vm1525, %v5754
        %5828 = vst.msk [vmem:[#allocation4 + $0x114] sm:$0xf] %vm1525, %v5756
        %5829 = vst.msk [vmem:[#allocation4 + $0x120] sm:$0xf] %vm1525, %v5758
        %5830 = vst.msk [vmem:[#allocation4 + $0x12c] sm:$0xf] %vm1525, %v5760
        %5831 = vst.msk [vmem:[#allocation4 + $0x138] sm:$0xf] %vm1525, %v5762
        %5832 = vst.msk [vmem:[#allocation4 + $0x144] sm:$0xf] %vm1525, %v5764
        %5833 = vst.msk [vmem:[#allocation4 + $0x150] sm:$0xf] %vm1525, %v5766
        %5834 = vst.msk [vmem:[#allocation4 + $0x15c] sm:$0xf] %vm1525, %v5768
        %5835 = vst.msk [vmem:[#allocation4 + $0x168] sm:$0xf] %vm1525, %v5770
        %5836 = vst.msk [vmem:[#allocation4 + $0x174] sm:$0xf] %vm1525, %v5772
        %v5837 = vld [vmem:[#allocation3] sm:$0xe]
        %v5838 = vld [vmem:[#allocation3 + $0x4] sm:$0xf]
        %v5839 = vld [vmem:[#allocation3 + $0x8] sm:$0x1]
        %v5840 = vld [vmem:[#allocation3 + $0xc] sm:$0xe]
        %v5841 = vld [vmem:[#allocation3 + $0x10] sm:$0xf]
        %v5842 = vld [vmem:[#allocation3 + $0x14] sm:$0x1]
        %v5843 = vld [vmem:[#allocation3 + $0x18] sm:$0xe]
        %v5844 = vld [vmem:[#allocation3 + $0x1c] sm:$0xf]
        %v5845 = vld [vmem:[#allocation3 + $0x20] sm:$0x1]
        %v5846 = vld [vmem:[#allocation3 + $0x24] sm:$0xe]
        %v5847 = vld [vmem:[#allocation3 + $0x28] sm:$0xf]
        %v5848 = vld [vmem:[#allocation3 + $0x2c] sm:$0x1]
        %v5849 = vld [vmem:[#allocation3 + $0x30] sm:$0xe]
        %v5850 = vld [vmem:[#allocation3 + $0x34] sm:$0xf]
        %v5851 = vld [vmem:[#allocation3 + $0x38] sm:$0x1]
        %v5852 = vld [vmem:[#allocation3 + $0x3c] sm:$0xe]
        %v5853 = vld [vmem:[#allocation3 + $0x40] sm:$0xf]
        %v5854 = vld [vmem:[#allocation3 + $0x44] sm:$0x1]
        %v5855 = vld [vmem:[#allocation3 + $0x48] sm:$0xe]
        %v5856 = vld [vmem:[#allocation3 + $0x4c] sm:$0xf]
        %v5857 = vld [vmem:[#allocation3 + $0x50] sm:$0x1]
        %v5858 = vld [vmem:[#allocation3 + $0x54] sm:$0xe]
        %v5859 = vld [vmem:[#allocation3 + $0x58] sm:$0xf]
        %v5860 = vld [vmem:[#allocation3 + $0x5c] sm:$0x1]
        %v5861 = vld [vmem:[#allocation3 + $0x60] sm:$0xe]
        %v5862 = vld [vmem:[#allocation3 + $0x64] sm:$0xf]
        %v5863 = vld [vmem:[#allocation3 + $0x68] sm:$0x1]
        %v5864 = vld [vmem:[#allocation3 + $0x6c] sm:$0xe]
        %v5865 = vld [vmem:[#allocation3 + $0x70] sm:$0xf]
        %v5866 = vld [vmem:[#allocation3 + $0x74] sm:$0x1]
        %v5867 = vld [vmem:[#allocation3 + $0x78] sm:$0xe]
        %v5868 = vld [vmem:[#allocation3 + $0x7c] sm:$0xf]
        %v5869 = vld [vmem:[#allocation3 + $0x80] sm:$0x1]
        %v5870 = vld [vmem:[#allocation3 + $0x84] sm:$0xe]
        %v5871 = vld [vmem:[#allocation3 + $0x88] sm:$0xf]
        %v5872 = vld [vmem:[#allocation3 + $0x8c] sm:$0x1]
        %v5873 = vld [vmem:[#allocation3 + $0x90] sm:$0xe]
        %v5874 = vld [vmem:[#allocation3 + $0x94] sm:$0xf]
        %v5875 = vld [vmem:[#allocation3 + $0x98] sm:$0x1]
        %v5876 = vld [vmem:[#allocation3 + $0x9c] sm:$0xe]
        %v5877 = vld [vmem:[#allocation3 + $0xa0] sm:$0xf]
        %v5878 = vld [vmem:[#allocation3 + $0xa4] sm:$0x1]
        %v5879 = vld [vmem:[#allocation3 + $0xa8] sm:$0xe]
        %v5880 = vld [vmem:[#allocation3 + $0xac] sm:$0xf]
        %v5881 = vld [vmem:[#allocation3 + $0xb0] sm:$0x1]
        %v5882 = vld [vmem:[#allocation3 + $0xb4] sm:$0xe]
        %v5883 = vld [vmem:[#allocation3 + $0xb8] sm:$0xf]
        %v5884 = vld [vmem:[#allocation3 + $0xbc] sm:$0x1]
        %v5933 = vrot.slane %v5837, 5
        %v5934 = vrot.slane %v5933, 4
        %v5935 = vrot.slane %v5838, 5
        %v5936 = vsel %vm1656, %v5934, %v5935
        %v5937 = vrot.slane %v5935, 4
        %v5938 = vrot.slane %v5839, 5
        %v5939 = vsel %vm1656, %v5937, %v5938
        %v5940 = vrot.slane %v5840, 5
        %v5941 = vrot.slane %v5940, 4
        %v5942 = vrot.slane %v5841, 5
        %v5943 = vsel %vm1656, %v5941, %v5942
        %v5944 = vrot.slane %v5942, 4
        %v5945 = vrot.slane %v5842, 5
        %v5946 = vsel %vm1656, %v5944, %v5945
        %v5947 = vrot.slane %v5843, 5
        %v5948 = vrot.slane %v5947, 4
        %v5949 = vrot.slane %v5844, 5
        %v5950 = vsel %vm1656, %v5948, %v5949
        %v5951 = vrot.slane %v5949, 4
        %v5952 = vrot.slane %v5845, 5
        %v5953 = vsel %vm1656, %v5951, %v5952
        %v5954 = vrot.slane %v5846, 5
        %v5955 = vrot.slane %v5954, 4
        %v5956 = vrot.slane %v5847, 5
        %v5957 = vsel %vm1656, %v5955, %v5956
        %v5958 = vrot.slane %v5956, 4
        %v5959 = vrot.slane %v5848, 5
        %v5960 = vsel %vm1656, %v5958, %v5959
        %v5961 = vrot.slane %v5849, 5
        %v5962 = vrot.slane %v5961, 4
        %v5963 = vrot.slane %v5850, 5
        %v5964 = vsel %vm1656, %v5962, %v5963
        %v5965 = vrot.slane %v5963, 4
        %v5966 = vrot.slane %v5851, 5
        %v5967 = vsel %vm1656, %v5965, %v5966
        %v5968 = vrot.slane %v5852, 5
        %v5969 = vrot.slane %v5968, 4
        %v5970 = vrot.slane %v5853, 5
        %v5971 = vsel %vm1656, %v5969, %v5970
        %v5972 = vrot.slane %v5970, 4
        %v5973 = vrot.slane %v5854, 5
        %v5974 = vsel %vm1656, %v5972, %v5973
        %v5975 = vrot.slane %v5855, 5
        %v5976 = vrot.slane %v5975, 4
        %v5977 = vrot.slane %v5856, 5
        %v5978 = vsel %vm1656, %v5976, %v5977
        %v5979 = vrot.slane %v5977, 4
        %v5980 = vrot.slane %v5857, 5
        %v5981 = vsel %vm1656, %v5979, %v5980
        %v5982 = vrot.slane %v5858, 5
        %v5983 = vrot.slane %v5982, 4
        %v5984 = vrot.slane %v5859, 5
        %v5985 = vsel %vm1656, %v5983, %v5984
        %v5986 = vrot.slane %v5984, 4
        %v5987 = vrot.slane %v5860, 5
        %v5988 = vsel %vm1656, %v5986, %v5987
        %v5989 = vrot.slane %v5861, 5
        %v5990 = vrot.slane %v5989, 4
        %v5991 = vrot.slane %v5862, 5
        %v5992 = vsel %vm1656, %v5990, %v5991
        %v5993 = vrot.slane %v5991, 4
        %v5994 = vrot.slane %v5863, 5
        %v5995 = vsel %vm1656, %v5993, %v5994
        %v5996 = vrot.slane %v5864, 5
        %v5997 = vrot.slane %v5996, 4
        %v5998 = vrot.slane %v5865, 5
        %v5999 = vsel %vm1656, %v5997, %v5998
        %v6000 = vrot.slane %v5998, 4
        %v6001 = vrot.slane %v5866, 5
        %v6002 = vsel %vm1656, %v6000, %v6001
        %v6003 = vrot.slane %v5867, 5
        %v6004 = vrot.slane %v6003, 4
        %v6005 = vrot.slane %v5868, 5
        %v6006 = vsel %vm1656, %v6004, %v6005
        %v6007 = vrot.slane %v6005, 4
        %v6008 = vrot.slane %v5869, 5
        %v6009 = vsel %vm1656, %v6007, %v6008
        %v6010 = vrot.slane %v5870, 5
        %v6011 = vrot.slane %v6010, 4
        %v6012 = vrot.slane %v5871, 5
        %v6013 = vsel %vm1656, %v6011, %v6012
        %v6014 = vrot.slane %v6012, 4
        %v6015 = vrot.slane %v5872, 5
        %v6016 = vsel %vm1656, %v6014, %v6015
        %v6017 = vrot.slane %v5873, 5
        %v6018 = vrot.slane %v6017, 4
        %v6019 = vrot.slane %v5874, 5
        %v6020 = vsel %vm1656, %v6018, %v6019
        %v6021 = vrot.slane %v6019, 4
        %v6022 = vrot.slane %v5875, 5
        %v6023 = vsel %vm1656, %v6021, %v6022
        %v6024 = vrot.slane %v5876, 5
        %v6025 = vrot.slane %v6024, 4
        %v6026 = vrot.slane %v5877, 5
        %v6027 = vsel %vm1656, %v6025, %v6026
        %v6028 = vrot.slane %v6026, 4
        %v6029 = vrot.slane %v5878, 5
        %v6030 = vsel %vm1656, %v6028, %v6029
        %v6031 = vrot.slane %v5879, 5
        %v6032 = vrot.slane %v6031, 4
        %v6033 = vrot.slane %v5880, 5
        %v6034 = vsel %vm1656, %v6032, %v6033
        %v6035 = vrot.slane %v6033, 4
        %v6036 = vrot.slane %v5881, 5
        %v6037 = vsel %vm1656, %v6035, %v6036
        %v6038 = vrot.slane %v5882, 5
        %v6039 = vrot.slane %v6038, 4
        %v6040 = vrot.slane %v5883, 5
        %v6041 = vsel %vm1656, %v6039, %v6040
        %v6042 = vrot.slane %v6040, 4
        %v6043 = vrot.slane %v5884, 5
        %v6044 = vsel %vm1656, %v6042, %v6043
        %6045 = vrot.lane.b32.xlu0 %v5936, 64
        %v6046 = vpop.permute.xlu0 %6045
        %6047 = vrot.lane.b32.xlu0 %v5939, 64
        %v6048 = vpop.permute.xlu0 %6047
        %6049 = vrot.lane.b32.xlu0 %v5943, 64
        %v6050 = vpop.permute.xlu0 %6049
        %6051 = vrot.lane.b32.xlu0 %v5946, 64
        %v6052 = vpop.permute.xlu0 %6051
        %6053 = vrot.lane.b32.xlu0 %v5950, 64
        %v6054 = vpop.permute.xlu0 %6053
        %6055 = vrot.lane.b32.xlu0 %v5953, 64
        %v6056 = vpop.permute.xlu0 %6055
        %6057 = vrot.lane.b32.xlu0 %v5957, 64
        %v6058 = vpop.permute.xlu0 %6057
        %6059 = vrot.lane.b32.xlu0 %v5960, 64
        %v6060 = vpop.permute.xlu0 %6059
        %6061 = vrot.lane.b32.xlu0 %v5964, 64
        %v6062 = vpop.permute.xlu0 %6061
        %6063 = vrot.lane.b32.xlu0 %v5967, 64
        %v6064 = vpop.permute.xlu0 %6063
        %6065 = vrot.lane.b32.xlu0 %v5971, 64
        %v6066 = vpop.permute.xlu0 %6065
        %6067 = vrot.lane.b32.xlu0 %v5974, 64
        %v6068 = vpop.permute.xlu0 %6067
        %6069 = vrot.lane.b32.xlu0 %v5978, 64
        %v6070 = vpop.permute.xlu0 %6069
        %6071 = vrot.lane.b32.xlu0 %v5981, 64
        %v6072 = vpop.permute.xlu0 %6071
        %6073 = vrot.lane.b32.xlu0 %v5985, 64
        %v6074 = vpop.permute.xlu0 %6073
        %6075 = vrot.lane.b32.xlu0 %v5988, 64
        %v6076 = vpop.permute.xlu0 %6075
        %6077 = vrot.lane.b32.xlu0 %v5992, 64
        %v6078 = vpop.permute.xlu0 %6077
        %6079 = vrot.lane.b32.xlu0 %v5995, 64
        %v6080 = vpop.permute.xlu0 %6079
        %6081 = vrot.lane.b32.xlu0 %v5999, 64
        %v6082 = vpop.permute.xlu0 %6081
        %6083 = vrot.lane.b32.xlu0 %v6002, 64
        %v6084 = vpop.permute.xlu0 %6083
        %6085 = vrot.lane.b32.xlu0 %v6006, 64
        %v6086 = vpop.permute.xlu0 %6085
        %6087 = vrot.lane.b32.xlu0 %v6009, 64
        %v6088 = vpop.permute.xlu0 %6087
        %6089 = vrot.lane.b32.xlu0 %v6013, 64
        %v6090 = vpop.permute.xlu0 %6089
        %6091 = vrot.lane.b32.xlu0 %v6016, 64
        %v6092 = vpop.permute.xlu0 %6091
        %6093 = vrot.lane.b32.xlu0 %v6020, 64
        %v6094 = vpop.permute.xlu0 %6093
        %6095 = vrot.lane.b32.xlu0 %v6023, 64
        %v6096 = vpop.permute.xlu0 %6095
        %6097 = vrot.lane.b32.xlu0 %v6027, 64
        %v6098 = vpop.permute.xlu0 %6097
        %6099 = vrot.lane.b32.xlu0 %v6030, 64
        %v6100 = vpop.permute.xlu0 %6099
        %6101 = vrot.lane.b32.xlu0 %v6034, 64
        %v6102 = vpop.permute.xlu0 %6101
        %6103 = vrot.lane.b32.xlu0 %v6037, 64
        %v6104 = vpop.permute.xlu0 %6103
        %6105 = vrot.lane.b32.xlu0 %v6041, 64
        %v6106 = vpop.permute.xlu0 %6105
        %6107 = vrot.lane.b32.xlu0 %v6044, 64
        %v6108 = vpop.permute.xlu0 %6107
        %6141 = vst.msk [vmem:[#allocation4] sm:$0xf] %vm1865, %v6046
        %6142 = vst.msk [vmem:[#allocation4 + $0xc] sm:$0xf] %vm1865, %v6048
        %6143 = vst.msk [vmem:[#allocation4 + $0x18] sm:$0xf] %vm1865, %v6050
        %6144 = vst.msk [vmem:[#allocation4 + $0x24] sm:$0xf] %vm1865, %v6052
        %6145 = vst.msk [vmem:[#allocation4 + $0x30] sm:$0xf] %vm1865, %v6054
        %6146 = vst.msk [vmem:[#allocation4 + $0x3c] sm:$0xf] %vm1865, %v6056
        %6147 = vst.msk [vmem:[#allocation4 + $0x48] sm:$0xf] %vm1865, %v6058
        %6148 = vst.msk [vmem:[#allocation4 + $0x54] sm:$0xf] %vm1865, %v6060
        %6149 = vst.msk [vmem:[#allocation4 + $0x60] sm:$0xf] %vm1865, %v6062
        %6150 = vst.msk [vmem:[#allocation4 + $0x6c] sm:$0xf] %vm1865, %v6064
        %6151 = vst.msk [vmem:[#allocation4 + $0x78] sm:$0xf] %vm1865, %v6066
        %6152 = vst.msk [vmem:[#allocation4 + $0x84] sm:$0xf] %vm1865, %v6068
        %6153 = vst.msk [vmem:[#allocation4 + $0x90] sm:$0xf] %vm1865, %v6070
        %6154 = vst.msk [vmem:[#allocation4 + $0x9c] sm:$0xf] %vm1865, %v6072
        %6155 = vst.msk [vmem:[#allocation4 + $0xa8] sm:$0xf] %vm1865, %v6074
        %6156 = vst.msk [vmem:[#allocation4 + $0xb4] sm:$0xf] %vm1865, %v6076
        %6157 = vst.msk [vmem:[#allocation4 + $0xc0] sm:$0xf] %vm1865, %v6078
        %6158 = vst.msk [vmem:[#allocation4 + $0xcc] sm:$0xf] %vm1865, %v6080
        %6159 = vst.msk [vmem:[#allocation4 + $0xd8] sm:$0xf] %vm1865, %v6082
        %6160 = vst.msk [vmem:[#allocation4 + $0xe4] sm:$0xf] %vm1865, %v6084
        %6161 = vst.msk [vmem:[#allocation4 + $0xf0] sm:$0xf] %vm1865, %v6086
        %6162 = vst.msk [vmem:[#allocation4 + $0xfc] sm:$0xf] %vm1865, %v6088
        %6163 = vst.msk [vmem:[#allocation4 + $0x108] sm:$0xf] %vm1865, %v6090
        %6164 = vst.msk [vmem:[#allocation4 + $0x114] sm:$0xf] %vm1865, %v6092
        %6165 = vst.msk [vmem:[#allocation4 + $0x120] sm:$0xf] %vm1865, %v6094
        %6166 = vst.msk [vmem:[#allocation4 + $0x12c] sm:$0xf] %vm1865, %v6096
        %6167 = vst.msk [vmem:[#allocation4 + $0x138] sm:$0xf] %vm1865, %v6098
        %6168 = vst.msk [vmem:[#allocation4 + $0x144] sm:$0xf] %vm1865, %v6100
        %6169 = vst.msk [vmem:[#allocation4 + $0x150] sm:$0xf] %vm1865, %v6102
        %6170 = vst.msk [vmem:[#allocation4 + $0x15c] sm:$0xf] %vm1865, %v6104
        %6171 = vst.msk [vmem:[#allocation4 + $0x168] sm:$0xf] %vm1865, %v6106
        %6172 = vst.msk [vmem:[#allocation4 + $0x174] sm:$0xf] %vm1865, %v6108
        %v6173 = vld [vmem:[%s5100] sm:$0xf]
        %v6174 = vld [vmem:[%s5100 + $0x4] sm:$0xf]
        %v6175 = vld [vmem:[%s5100 + $0xc] sm:$0xf]
        %v6176 = vld [vmem:[%s5100 + $0x10] sm:$0xf]
        %v6177 = vld [vmem:[%s5100 + $0x18] sm:$0xf]
        %v6178 = vld [vmem:[%s5100 + $0x1c] sm:$0xf]
        %v6179 = vld [vmem:[%s5100 + $0x24] sm:$0xf]
        %v6180 = vld [vmem:[%s5100 + $0x28] sm:$0xf]
        %v6181 = vld [vmem:[%s5100 + $0x30] sm:$0xf]
        %v6182 = vld [vmem:[%s5100 + $0x34] sm:$0xf]
        %v6183 = vld [vmem:[%s5100 + $0x3c] sm:$0xf]
        %v6184 = vld [vmem:[%s5100 + $0x40] sm:$0xf]
        %v6185 = vld [vmem:[%s5100 + $0x48] sm:$0xf]
        %v6186 = vld [vmem:[%s5100 + $0x4c] sm:$0xf]
        %v6187 = vld [vmem:[%s5100 + $0x54] sm:$0xf]
        %v6188 = vld [vmem:[%s5100 + $0x58] sm:$0xf]
        %v6189 = vld [vmem:[%s5100 + $0x60] sm:$0xf]
        %v6190 = vld [vmem:[%s5100 + $0x64] sm:$0xf]
        %v6191 = vld [vmem:[%s5100 + $0x6c] sm:$0xf]
        %v6192 = vld [vmem:[%s5100 + $0x70] sm:$0xf]
        %v6193 = vld [vmem:[%s5100 + $0x78] sm:$0xf]
        %v6194 = vld [vmem:[%s5100 + $0x7c] sm:$0xf]
        %v6195 = vld [vmem:[%s5100 + $0x84] sm:$0xf]
        %v6196 = vld [vmem:[%s5100 + $0x88] sm:$0xf]
        %v6197 = vld [vmem:[%s5100 + $0x90] sm:$0xf]
        %v6198 = vld [vmem:[%s5100 + $0x94] sm:$0xf]
        %v6199 = vld [vmem:[%s5100 + $0x9c] sm:$0xf]
        %v6200 = vld [vmem:[%s5100 + $0xa0] sm:$0xf]
        %v6201 = vld [vmem:[%s5100 + $0xa8] sm:$0xf]
        %v6202 = vld [vmem:[%s5100 + $0xac] sm:$0xf]
        %v6203 = vld [vmem:[%s5100 + $0xb4] sm:$0xf]
        %v6204 = vld [vmem:[%s5100 + $0xb8] sm:$0xf]
        %6237 = vrot.lane.b32.xlu0 %v6173, 96
        %v6238 = vpop.permute.xlu0 %6237
        %6239 = vrot.lane.b32.xlu0 %v6174, 96
        %v6240 = vpop.permute.xlu0 %6239
        %6241 = vrot.lane.b32.xlu0 %v6175, 96
        %v6242 = vpop.permute.xlu0 %6241
        %6243 = vrot.lane.b32.xlu0 %v6176, 96
        %v6244 = vpop.permute.xlu0 %6243
        %6245 = vrot.lane.b32.xlu0 %v6177, 96
        %v6246 = vpop.permute.xlu0 %6245
        %6247 = vrot.lane.b32.xlu0 %v6178, 96
        %v6248 = vpop.permute.xlu0 %6247
        %6249 = vrot.lane.b32.xlu0 %v6179, 96
        %v6250 = vpop.permute.xlu0 %6249
        %6251 = vrot.lane.b32.xlu0 %v6180, 96
        %v6252 = vpop.permute.xlu0 %6251
        %6253 = vrot.lane.b32.xlu0 %v6181, 96
        %v6254 = vpop.permute.xlu0 %6253
        %6255 = vrot.lane.b32.xlu0 %v6182, 96
        %v6256 = vpop.permute.xlu0 %6255
        %6257 = vrot.lane.b32.xlu0 %v6183, 96
        %v6258 = vpop.permute.xlu0 %6257
        %6259 = vrot.lane.b32.xlu0 %v6184, 96
        %v6260 = vpop.permute.xlu0 %6259
        %6261 = vrot.lane.b32.xlu0 %v6185, 96
        %v6262 = vpop.permute.xlu0 %6261
        %6263 = vrot.lane.b32.xlu0 %v6186, 96
        %v6264 = vpop.permute.xlu0 %6263
        %6265 = vrot.lane.b32.xlu0 %v6187, 96
        %v6266 = vpop.permute.xlu0 %6265
        %6267 = vrot.lane.b32.xlu0 %v6188, 96
        %v6268 = vpop.permute.xlu0 %6267
        %6269 = vrot.lane.b32.xlu0 %v6189, 96
        %v6270 = vpop.permute.xlu0 %6269
        %6271 = vrot.lane.b32.xlu0 %v6190, 96
        %v6272 = vpop.permute.xlu0 %6271
        %6273 = vrot.lane.b32.xlu0 %v6191, 96
        %v6274 = vpop.permute.xlu0 %6273
        %6275 = vrot.lane.b32.xlu0 %v6192, 96
        %v6276 = vpop.permute.xlu0 %6275
        %6277 = vrot.lane.b32.xlu0 %v6193, 96
        %v6278 = vpop.permute.xlu0 %6277
        %6279 = vrot.lane.b32.xlu0 %v6194, 96
        %v6280 = vpop.permute.xlu0 %6279
        %6281 = vrot.lane.b32.xlu0 %v6195, 96
        %v6282 = vpop.permute.xlu0 %6281
        %6283 = vrot.lane.b32.xlu0 %v6196, 96
        %v6284 = vpop.permute.xlu0 %6283
        %6285 = vrot.lane.b32.xlu0 %v6197, 96
        %v6286 = vpop.permute.xlu0 %6285
        %6287 = vrot.lane.b32.xlu0 %v6198, 96
        %v6288 = vpop.permute.xlu0 %6287
        %6289 = vrot.lane.b32.xlu0 %v6199, 96
        %v6290 = vpop.permute.xlu0 %6289
        %6291 = vrot.lane.b32.xlu0 %v6200, 96
        %v6292 = vpop.permute.xlu0 %6291
        %6293 = vrot.lane.b32.xlu0 %v6201, 96
        %v6294 = vpop.permute.xlu0 %6293
        %6295 = vrot.lane.b32.xlu0 %v6202, 96
        %v6296 = vpop.permute.xlu0 %6295
        %6297 = vrot.lane.b32.xlu0 %v6203, 96
        %v6298 = vpop.permute.xlu0 %6297
        %6299 = vrot.lane.b32.xlu0 %v6204, 96
        %v6300 = vpop.permute.xlu0 %6299
        %6333 = vst.msk [vmem:[#allocation4] sm:$0xf] %vm2058, %v6238
        %6334 = vst.msk [vmem:[#allocation4 + $0xc] sm:$0xf] %vm2058, %v6240
        %6335 = vst.msk [vmem:[#allocation4 + $0x18] sm:$0xf] %vm2058, %v6242
        %6336 = vst.msk [vmem:[#allocation4 + $0x24] sm:$0xf] %vm2058, %v6244
        %6337 = vst.msk [vmem:[#allocation4 + $0x30] sm:$0xf] %vm2058, %v6246
        %6338 = vst.msk [vmem:[#allocation4 + $0x3c] sm:$0xf] %vm2058, %v6248
        %6339 = vst.msk [vmem:[#allocation4 + $0x48] sm:$0xf] %vm2058, %v6250
        %6340 = vst.msk [vmem:[#allocation4 + $0x54] sm:$0xf] %vm2058, %v6252
        %6341 = vst.msk [vmem:[#allocation4 + $0x60] sm:$0xf] %vm2058, %v6254
        %6342 = vst.msk [vmem:[#allocation4 + $0x6c] sm:$0xf] %vm2058, %v6256
        %6343 = vst.msk [vmem:[#allocation4 + $0x78] sm:$0xf] %vm2058, %v6258
        %6344 = vst.msk [vmem:[#allocation4 + $0x84] sm:$0xf] %vm2058, %v6260
        %6345 = vst.msk [vmem:[#allocation4 + $0x90] sm:$0xf] %vm2058, %v6262
        %6346 = vst.msk [vmem:[#allocation4 + $0x9c] sm:$0xf] %vm2058, %v6264
        %6347 = vst.msk [vmem:[#allocation4 + $0xa8] sm:$0xf] %vm2058, %v6266
        %6348 = vst.msk [vmem:[#allocation4 + $0xb4] sm:$0xf] %vm2058, %v6268
        %6349 = vst.msk [vmem:[#allocation4 + $0xc0] sm:$0xf] %vm2058, %v6270
        %6350 = vst.msk [vmem:[#allocation4 + $0xcc] sm:$0xf] %vm2058, %v6272
        %6351 = vst.msk [vmem:[#allocation4 + $0xd8] sm:$0xf] %vm2058, %v6274
        %6352 = vst.msk [vmem:[#allocation4 + $0xe4] sm:$0xf] %vm2058, %v6276
        %6353 = vst.msk [vmem:[#allocation4 + $0xf0] sm:$0xf] %vm2058, %v6278
        %6354 = vst.msk [vmem:[#allocation4 + $0xfc] sm:$0xf] %vm2058, %v6280
        %6355 = vst.msk [vmem:[#allocation4 + $0x108] sm:$0xf] %vm2058, %v6282
        %6356 = vst.msk [vmem:[#allocation4 + $0x114] sm:$0xf] %vm2058, %v6284
        %6357 = vst.msk [vmem:[#allocation4 + $0x120] sm:$0xf] %vm2058, %v6286
        %6358 = vst.msk [vmem:[#allocation4 + $0x12c] sm:$0xf] %vm2058, %v6288
        %6359 = vst.msk [vmem:[#allocation4 + $0x138] sm:$0xf] %vm2058, %v6290
        %6360 = vst.msk [vmem:[#allocation4 + $0x144] sm:$0xf] %vm2058, %v6292
        %6361 = vst.msk [vmem:[#allocation4 + $0x150] sm:$0xf] %vm2058, %v6294
        %6362 = vst.msk [vmem:[#allocation4 + $0x15c] sm:$0xf] %vm2058, %v6296
        %6363 = vst.msk [vmem:[#allocation4 + $0x168] sm:$0xf] %vm2058, %v6298
        %6364 = vst.msk [vmem:[#allocation4 + $0x174] sm:$0xf] %vm2058, %v6300
        %v6365 = vld [vmem:[%s5100] sm:$0xf]
        %v6366 = vld [vmem:[%s5100 + $0x4] sm:$0xf]
        %v6367 = vld [vmem:[%s5100 + $0x8] sm:$0x1]
        %v6368 = vld [vmem:[%s5100 + $0xc] sm:$0xf]
        %v6369 = vld [vmem:[%s5100 + $0x10] sm:$0xf]
        %v6370 = vld [vmem:[%s5100 + $0x14] sm:$0x1]
        %v6371 = vld [vmem:[%s5100 + $0x18] sm:$0xf]
        %v6372 = vld [vmem:[%s5100 + $0x1c] sm:$0xf]
        %v6373 = vld [vmem:[%s5100 + $0x20] sm:$0x1]
        %v6374 = vld [vmem:[%s5100 + $0x24] sm:$0xf]
        %v6375 = vld [vmem:[%s5100 + $0x28] sm:$0xf]
        %v6376 = vld [vmem:[%s5100 + $0x2c] sm:$0x1]
        %v6377 = vld [vmem:[%s5100 + $0x30] sm:$0xf]
        %v6378 = vld [vmem:[%s5100 + $0x34] sm:$0xf]
        %v6379 = vld [vmem:[%s5100 + $0x38] sm:$0x1]
        %v6380 = vld [vmem:[%s5100 + $0x3c] sm:$0xf]
        %v6381 = vld [vmem:[%s5100 + $0x40] sm:$0xf]
        %v6382 = vld [vmem:[%s5100 + $0x44] sm:$0x1]
        %v6383 = vld [vmem:[%s5100 + $0x48] sm:$0xf]
        %v6384 = vld [vmem:[%s5100 + $0x4c] sm:$0xf]
        %v6385 = vld [vmem:[%s5100 + $0x50] sm:$0x1]
        %v6386 = vld [vmem:[%s5100 + $0x54] sm:$0xf]
        %v6387 = vld [vmem:[%s5100 + $0x58] sm:$0xf]
        %v6388 = vld [vmem:[%s5100 + $0x5c] sm:$0x1]
        %v6389 = vld [vmem:[%s5100 + $0x60] sm:$0xf]
        %v6390 = vld [vmem:[%s5100 + $0x64] sm:$0xf]
        %v6391 = vld [vmem:[%s5100 + $0x68] sm:$0x1]
        %v6392 = vld [vmem:[%s5100 + $0x6c] sm:$0xf]
        %v6393 = vld [vmem:[%s5100 + $0x70] sm:$0xf]
        %v6394 = vld [vmem:[%s5100 + $0x74] sm:$0x1]
        %v6395 = vld [vmem:[%s5100 + $0x78] sm:$0xf]
        %v6396 = vld [vmem:[%s5100 + $0x7c] sm:$0xf]
        %v6397 = vld [vmem:[%s5100 + $0x80] sm:$0x1]
        %v6398 = vld [vmem:[%s5100 + $0x84] sm:$0xf]
        %v6399 = vld [vmem:[%s5100 + $0x88] sm:$0xf]
        %v6400 = vld [vmem:[%s5100 + $0x8c] sm:$0x1]
        %v6401 = vld [vmem:[%s5100 + $0x90] sm:$0xf]
        %v6402 = vld [vmem:[%s5100 + $0x94] sm:$0xf]
        %v6403 = vld [vmem:[%s5100 + $0x98] sm:$0x1]
        %v6404 = vld [vmem:[%s5100 + $0x9c] sm:$0xf]
        %v6405 = vld [vmem:[%s5100 + $0xa0] sm:$0xf]
        %v6406 = vld [vmem:[%s5100 + $0xa4] sm:$0x1]
        %v6407 = vld [vmem:[%s5100 + $0xa8] sm:$0xf]
        %v6408 = vld [vmem:[%s5100 + $0xac] sm:$0xf]
        %v6409 = vld [vmem:[%s5100 + $0xb0] sm:$0x1]
        %v6410 = vld [vmem:[%s5100 + $0xb4] sm:$0xf]
        %v6411 = vld [vmem:[%s5100 + $0xb8] sm:$0xf]
        %v6412 = vld [vmem:[%s5100 + $0xbc] sm:$0x1]
        %v6414 = vshrl.u32 %v6365, 16
        %v6416 = vrot.slane %v6414, 4
        %v6417 = vshll.u32 %v6365, 16
        %v6419 = vrot.slane %v6417, 5
        %v6420 = vor.u32 %v6416, %v6419
        %v6421 = vrot.slane %v6420, 4
        %v6423 = vshll.u32 %v6366, 16
        %v6425 = vrot.slane %v6423, 5
        %v6426 = vsel %vm1044, %v6421, %v6425
        %v6427 = vshrl.u32 %v6366, 16
        %v6429 = vrot.slane %v6427, 4
        %v6430 = vor.u32 %v6429, %v6425
        %v6431 = vrot.slane %v6430, 4
        %v6433 = vshll.u32 %v6367, 16
        %v6435 = vrot.slane %v6433, 5
        %v6436 = vsel %vm1044, %v6431, %v6435
        %v6438 = vshrl.u32 %v6368, 16
        %v6440 = vrot.slane %v6438, 4
        %v6441 = vshll.u32 %v6368, 16
        %v6443 = vrot.slane %v6441, 5
        %v6444 = vor.u32 %v6440, %v6443
        %v6445 = vrot.slane %v6444, 4
        %v6447 = vshll.u32 %v6369, 16
        %v6449 = vrot.slane %v6447, 5
        %v6450 = vsel %vm1044, %v6445, %v6449
        %v6451 = vshrl.u32 %v6369, 16
        %v6453 = vrot.slane %v6451, 4
        %v6454 = vor.u32 %v6453, %v6449
        %v6455 = vrot.slane %v6454, 4
        %v6457 = vshll.u32 %v6370, 16
        %v6459 = vrot.slane %v6457, 5
        %v6460 = vsel %vm1044, %v6455, %v6459
        %v6462 = vshrl.u32 %v6371, 16
        %v6464 = vrot.slane %v6462, 4
        %v6465 = vshll.u32 %v6371, 16
        %v6467 = vrot.slane %v6465, 5
        %v6468 = vor.u32 %v6464, %v6467
        %v6469 = vrot.slane %v6468, 4
        %v6471 = vshll.u32 %v6372, 16
        %v6473 = vrot.slane %v6471, 5
        %v6474 = vsel %vm1044, %v6469, %v6473
        %v6475 = vshrl.u32 %v6372, 16
        %v6477 = vrot.slane %v6475, 4
        %v6478 = vor.u32 %v6477, %v6473
        %v6479 = vrot.slane %v6478, 4
        %v6481 = vshll.u32 %v6373, 16
        %v6483 = vrot.slane %v6481, 5
        %v6484 = vsel %vm1044, %v6479, %v6483
        %v6486 = vshrl.u32 %v6374, 16
        %v6488 = vrot.slane %v6486, 4
        %v6489 = vshll.u32 %v6374, 16
        %v6491 = vrot.slane %v6489, 5
        %v6492 = vor.u32 %v6488, %v6491
        %v6493 = vrot.slane %v6492, 4
        %v6495 = vshll.u32 %v6375, 16
        %v6497 = vrot.slane %v6495, 5
        %v6498 = vsel %vm1044, %v6493, %v6497
        %v6499 = vshrl.u32 %v6375, 16
        %v6501 = vrot.slane %v6499, 4
        %v6502 = vor.u32 %v6501, %v6497
        %v6503 = vrot.slane %v6502, 4
        %v6505 = vshll.u32 %v6376, 16
        %v6507 = vrot.slane %v6505, 5
        %v6508 = vsel %vm1044, %v6503, %v6507
        %v6510 = vshrl.u32 %v6377, 16
        %v6512 = vrot.slane %v6510, 4
        %v6513 = vshll.u32 %v6377, 16
        %v6515 = vrot.slane %v6513, 5
        %v6516 = vor.u32 %v6512, %v6515
        %v6517 = vrot.slane %v6516, 4
        %v6519 = vshll.u32 %v6378, 16
        %v6521 = vrot.slane %v6519, 5
        %v6522 = vsel %vm1044, %v6517, %v6521
        %v6523 = vshrl.u32 %v6378, 16
        %v6525 = vrot.slane %v6523, 4
        %v6526 = vor.u32 %v6525, %v6521
        %v6527 = vrot.slane %v6526, 4
        %v6529 = vshll.u32 %v6379, 16
        %v6531 = vrot.slane %v6529, 5
        %v6532 = vsel %vm1044, %v6527, %v6531
        %v6534 = vshrl.u32 %v6380, 16
        %v6536 = vrot.slane %v6534, 4
        %v6537 = vshll.u32 %v6380, 16
        %v6539 = vrot.slane %v6537, 5
        %v6540 = vor.u32 %v6536, %v6539
        %v6541 = vrot.slane %v6540, 4
        %v6543 = vshll.u32 %v6381, 16
        %v6545 = vrot.slane %v6543, 5
        %v6546 = vsel %vm1044, %v6541, %v6545
        %v6547 = vshrl.u32 %v6381, 16
        %v6549 = vrot.slane %v6547, 4
        %v6550 = vor.u32 %v6549, %v6545
        %v6551 = vrot.slane %v6550, 4
        %v6553 = vshll.u32 %v6382, 16
        %v6555 = vrot.slane %v6553, 5
        %v6556 = vsel %vm1044, %v6551, %v6555
        %v6558 = vshrl.u32 %v6383, 16
        %v6560 = vrot.slane %v6558, 4
        %v6561 = vshll.u32 %v6383, 16
        %v6563 = vrot.slane %v6561, 5
        %v6564 = vor.u32 %v6560, %v6563
        %v6565 = vrot.slane %v6564, 4
        %v6567 = vshll.u32 %v6384, 16
        %v6569 = vrot.slane %v6567, 5
        %v6570 = vsel %vm1044, %v6565, %v6569
        %v6571 = vshrl.u32 %v6384, 16
        %v6573 = vrot.slane %v6571, 4
        %v6574 = vor.u32 %v6573, %v6569
        %v6575 = vrot.slane %v6574, 4
        %v6577 = vshll.u32 %v6385, 16
        %v6579 = vrot.slane %v6577, 5
        %v6580 = vsel %vm1044, %v6575, %v6579
        %v6582 = vshrl.u32 %v6386, 16
        %v6584 = vrot.slane %v6582, 4
        %v6585 = vshll.u32 %v6386, 16
        %v6587 = vrot.slane %v6585, 5
        %v6588 = vor.u32 %v6584, %v6587
        %v6589 = vrot.slane %v6588, 4
        %v6591 = vshll.u32 %v6387, 16
        %v6593 = vrot.slane %v6591, 5
        %v6594 = vsel %vm1044, %v6589, %v6593
        %v6595 = vshrl.u32 %v6387, 16
        %v6597 = vrot.slane %v6595, 4
        %v6598 = vor.u32 %v6597, %v6593
        %v6599 = vrot.slane %v6598, 4
        %v6601 = vshll.u32 %v6388, 16
        %v6603 = vrot.slane %v6601, 5
        %v6604 = vsel %vm1044, %v6599, %v6603
        %v6606 = vshrl.u32 %v6389, 16
        %v6608 = vrot.slane %v6606, 4
        %v6609 = vshll.u32 %v6389, 16
        %v6611 = vrot.slane %v6609, 5
        %v6612 = vor.u32 %v6608, %v6611
        %v6613 = vrot.slane %v6612, 4
        %v6615 = vshll.u32 %v6390, 16
        %v6617 = vrot.slane %v6615, 5
        %v6618 = vsel %vm1044, %v6613, %v6617
        %v6619 = vshrl.u32 %v6390, 16
        %v6621 = vrot.slane %v6619, 4
        %v6622 = vor.u32 %v6621, %v6617
        %v6623 = vrot.slane %v6622, 4
        %v6625 = vshll.u32 %v6391, 16
        %v6627 = vrot.slane %v6625, 5
        %v6628 = vsel %vm1044, %v6623, %v6627
        %v6630 = vshrl.u32 %v6392, 16
        %v6632 = vrot.slane %v6630, 4
        %v6633 = vshll.u32 %v6392, 16
        %v6635 = vrot.slane %v6633, 5
        %v6636 = vor.u32 %v6632, %v6635
        %v6637 = vrot.slane %v6636, 4
        %v6639 = vshll.u32 %v6393, 16
        %v6641 = vrot.slane %v6639, 5
        %v6642 = vsel %vm1044, %v6637, %v6641
        %v6643 = vshrl.u32 %v6393, 16
        %v6645 = vrot.slane %v6643, 4
        %v6646 = vor.u32 %v6645, %v6641
        %v6647 = vrot.slane %v6646, 4
        %v6649 = vshll.u32 %v6394, 16
        %v6651 = vrot.slane %v6649, 5
        %v6652 = vsel %vm1044, %v6647, %v6651
        %v6654 = vshrl.u32 %v6395, 16
        %v6656 = vrot.slane %v6654, 4
        %v6657 = vshll.u32 %v6395, 16
        %v6659 = vrot.slane %v6657, 5
        %v6660 = vor.u32 %v6656, %v6659
        %v6661 = vrot.slane %v6660, 4
        %v6663 = vshll.u32 %v6396, 16
        %v6665 = vrot.slane %v6663, 5
        %v6666 = vsel %vm1044, %v6661, %v6665
        %v6667 = vshrl.u32 %v6396, 16
        %v6669 = vrot.slane %v6667, 4
        %v6670 = vor.u32 %v6669, %v6665
        %v6671 = vrot.slane %v6670, 4
        %v6673 = vshll.u32 %v6397, 16
        %v6675 = vrot.slane %v6673, 5
        %v6676 = vsel %vm1044, %v6671, %v6675
        %v6678 = vshrl.u32 %v6398, 16
        %v6680 = vrot.slane %v6678, 4
        %v6681 = vshll.u32 %v6398, 16
        %v6683 = vrot.slane %v6681, 5
        %v6684 = vor.u32 %v6680, %v6683
        %v6685 = vrot.slane %v6684, 4
        %v6687 = vshll.u32 %v6399, 16
        %v6689 = vrot.slane %v6687, 5
        %v6690 = vsel %vm1044, %v6685, %v6689
        %v6691 = vshrl.u32 %v6399, 16
        %v6693 = vrot.slane %v6691, 4
        %v6694 = vor.u32 %v6693, %v6689
        %v6695 = vrot.slane %v6694, 4
        %v6697 = vshll.u32 %v6400, 16
        %v6699 = vrot.slane %v6697, 5
        %v6700 = vsel %vm1044, %v6695, %v6699
        %v6702 = vshrl.u32 %v6401, 16
        %v6704 = vrot.slane %v6702, 4
        %v6705 = vshll.u32 %v6401, 16
        %v6707 = vrot.slane %v6705, 5
        %v6708 = vor.u32 %v6704, %v6707
        %v6709 = vrot.slane %v6708, 4
        %v6711 = vshll.u32 %v6402, 16
        %v6713 = vrot.slane %v6711, 5
        %v6714 = vsel %vm1044, %v6709, %v6713
        %v6715 = vshrl.u32 %v6402, 16
        %v6717 = vrot.slane %v6715, 4
        %v6718 = vor.u32 %v6717, %v6713
        %v6719 = vrot.slane %v6718, 4
        %v6721 = vshll.u32 %v6403, 16
        %v6723 = vrot.slane %v6721, 5
        %v6724 = vsel %vm1044, %v6719, %v6723
        %v6726 = vshrl.u32 %v6404, 16
        %v6728 = vrot.slane %v6726, 4
        %v6729 = vshll.u32 %v6404, 16
        %v6731 = vrot.slane %v6729, 5
        %v6732 = vor.u32 %v6728, %v6731
        %v6733 = vrot.slane %v6732, 4
        %v6735 = vshll.u32 %v6405, 16
        %v6737 = vrot.slane %v6735, 5
        %v6738 = vsel %vm1044, %v6733, %v6737
        %v6739 = vshrl.u32 %v6405, 16
        %v6741 = vrot.slane %v6739, 4
        %v6742 = vor.u32 %v6741, %v6737
        %v6743 = vrot.slane %v6742, 4
        %v6745 = vshll.u32 %v6406, 16
        %v6747 = vrot.slane %v6745, 5
        %v6748 = vsel %vm1044, %v6743, %v6747
        %v6750 = vshrl.u32 %v6407, 16
        %v6752 = vrot.slane %v6750, 4
        %v6753 = vshll.u32 %v6407, 16
        %v6755 = vrot.slane %v6753, 5
        %v6756 = vor.u32 %v6752, %v6755
        %v6757 = vrot.slane %v6756, 4
        %v6759 = vshll.u32 %v6408, 16
        %v6761 = vrot.slane %v6759, 5
        %v6762 = vsel %vm1044, %v6757, %v6761
        %v6763 = vshrl.u32 %v6408, 16
        %v6765 = vrot.slane %v6763, 4
        %v6766 = vor.u32 %v6765, %v6761
        %v6767 = vrot.slane %v6766, 4
        %v6769 = vshll.u32 %v6409, 16
        %v6771 = vrot.slane %v6769, 5
        %v6772 = vsel %vm1044, %v6767, %v6771
        %v6774 = vshrl.u32 %v6410, 16
        %v6776 = vrot.slane %v6774, 4
        %v6777 = vshll.u32 %v6410, 16
        %v6779 = vrot.slane %v6777, 5
        %v6780 = vor.u32 %v6776, %v6779
        %v6781 = vrot.slane %v6780, 4
        %v6783 = vshll.u32 %v6411, 16
        %v6785 = vrot.slane %v6783, 5
        %v6786 = vsel %vm1044, %v6781, %v6785
        %v6787 = vshrl.u32 %v6411, 16
        %v6789 = vrot.slane %v6787, 4
        %v6790 = vor.u32 %v6789, %v6785
        %v6791 = vrot.slane %v6790, 4
        %v6793 = vshll.u32 %v6412, 16
        %v6795 = vrot.slane %v6793, 5
        %v6796 = vsel %vm1044, %v6791, %v6795
        %6829 = vst.msk [vmem:[#allocation4 + $0x4] sm:$0xf] %vm224, %v6426
        %6830 = vst.msk [vmem:[#allocation4 + $0x10] sm:$0xf] %vm224, %v6436
        %6831 = vst.msk [vmem:[#allocation4 + $0x1c] sm:$0xf] %vm224, %v6450
        %6832 = vst.msk [vmem:[#allocation4 + $0x28] sm:$0xf] %vm224, %v6460
        %6833 = vst.msk [vmem:[#allocation4 + $0x34] sm:$0xf] %vm224, %v6474
        %6834 = vst.msk [vmem:[#allocation4 + $0x40] sm:$0xf] %vm224, %v6484
        %6835 = vst.msk [vmem:[#allocation4 + $0x4c] sm:$0xf] %vm224, %v6498
        %6836 = vst.msk [vmem:[#allocation4 + $0x58] sm:$0xf] %vm224, %v6508
        %6837 = vst.msk [vmem:[#allocation4 + $0x64] sm:$0xf] %vm224, %v6522
        %6838 = vst.msk [vmem:[#allocation4 + $0x70] sm:$0xf] %vm224, %v6532
        %6839 = vst.msk [vmem:[#allocation4 + $0x7c] sm:$0xf] %vm224, %v6546
        %6840 = vst.msk [vmem:[#allocation4 + $0x88] sm:$0xf] %vm224, %v6556
        %6841 = vst.msk [vmem:[#allocation4 + $0x94] sm:$0xf] %vm224, %v6570
        %6842 = vst.msk [vmem:[#allocation4 + $0xa0] sm:$0xf] %vm224, %v6580
        %6843 = vst.msk [vmem:[#allocation4 + $0xac] sm:$0xf] %vm224, %v6594
        %6844 = vst.msk [vmem:[#allocation4 + $0xb8] sm:$0xf] %vm224, %v6604
        %6845 = vst.msk [vmem:[#allocation4 + $0xc4] sm:$0xf] %vm224, %v6618
        %6846 = vst.msk [vmem:[#allocation4 + $0xd0] sm:$0xf] %vm224, %v6628
        %6847 = vst.msk [vmem:[#allocation4 + $0xdc] sm:$0xf] %vm224, %v6642
        %6848 = vst.msk [vmem:[#allocation4 + $0xe8] sm:$0xf] %vm224, %v6652
        %6849 = vst.msk [vmem:[#allocation4 + $0xf4] sm:$0xf] %vm224, %v6666
        %6850 = vst.msk [vmem:[#allocation4 + $0x100] sm:$0xf] %vm224, %v6676
        %6851 = vst.msk [vmem:[#allocation4 + $0x10c] sm:$0xf] %vm224, %v6690
        %6852 = vst.msk [vmem:[#allocation4 + $0x118] sm:$0xf] %vm224, %v6700
        %6853 = vst.msk [vmem:[#allocation4 + $0x124] sm:$0xf] %vm224, %v6714
        %6854 = vst.msk [vmem:[#allocation4 + $0x130] sm:$0xf] %vm224, %v6724
        %6855 = vst.msk [vmem:[#allocation4 + $0x13c] sm:$0xf] %vm224, %v6738
        %6856 = vst.msk [vmem:[#allocation4 + $0x148] sm:$0xf] %vm224, %v6748
        %6857 = vst.msk [vmem:[#allocation4 + $0x154] sm:$0xf] %vm224, %v6762
        %6858 = vst.msk [vmem:[#allocation4 + $0x160] sm:$0xf] %vm224, %v6772
        %6859 = vst.msk [vmem:[#allocation4 + $0x16c] sm:$0xf] %vm224, %v6786
        %6860 = vst.msk [vmem:[#allocation4 + $0x178] sm:$0xf] %vm224, %v6796
        %v6861 = vld [vmem:[%s5100] sm:$0xe]
        %v6862 = vld [vmem:[%s5100 + $0x4] sm:$0xf]
        %v6863 = vld [vmem:[%s5100 + $0x8] sm:$0x1]
        %v6864 = vld [vmem:[%s5100 + $0xc] sm:$0xe]
        %v6865 = vld [vmem:[%s5100 + $0x10] sm:$0xf]
        %v6866 = vld [vmem:[%s5100 + $0x14] sm:$0x1]
        %v6867 = vld [vmem:[%s5100 + $0x18] sm:$0xe]
        %v6868 = vld [vmem:[%s5100 + $0x1c] sm:$0xf]
        %v6869 = vld [vmem:[%s5100 + $0x20] sm:$0x1]
        %v6870 = vld [vmem:[%s5100 + $0x24] sm:$0xe]
        %v6871 = vld [vmem:[%s5100 + $0x28] sm:$0xf]
        %v6872 = vld [vmem:[%s5100 + $0x2c] sm:$0x1]
        %v6873 = vld [vmem:[%s5100 + $0x30] sm:$0xe]
        %v6874 = vld [vmem:[%s5100 + $0x34] sm:$0xf]
        %v6875 = vld [vmem:[%s5100 + $0x38] sm:$0x1]
        %v6876 = vld [vmem:[%s5100 + $0x3c] sm:$0xe]
        %v6877 = vld [vmem:[%s5100 + $0x40] sm:$0xf]
        %v6878 = vld [vmem:[%s5100 + $0x44] sm:$0x1]
        %v6879 = vld [vmem:[%s5100 + $0x48] sm:$0xe]
        %v6880 = vld [vmem:[%s5100 + $0x4c] sm:$0xf]
        %v6881 = vld [vmem:[%s5100 + $0x50] sm:$0x1]
        %v6882 = vld [vmem:[%s5100 + $0x54] sm:$0xe]
        %v6883 = vld [vmem:[%s5100 + $0x58] sm:$0xf]
        %v6884 = vld [vmem:[%s5100 + $0x5c] sm:$0x1]
        %v6885 = vld [vmem:[%s5100 + $0x60] sm:$0xe]
        %v6886 = vld [vmem:[%s5100 + $0x64] sm:$0xf]
        %v6887 = vld [vmem:[%s5100 + $0x68] sm:$0x1]
        %v6888 = vld [vmem:[%s5100 + $0x6c] sm:$0xe]
        %v6889 = vld [vmem:[%s5100 + $0x70] sm:$0xf]
        %v6890 = vld [vmem:[%s5100 + $0x74] sm:$0x1]
        %v6891 = vld [vmem:[%s5100 + $0x78] sm:$0xe]
        %v6892 = vld [vmem:[%s5100 + $0x7c] sm:$0xf]
        %v6893 = vld [vmem:[%s5100 + $0x80] sm:$0x1]
        %v6894 = vld [vmem:[%s5100 + $0x84] sm:$0xe]
        %v6895 = vld [vmem:[%s5100 + $0x88] sm:$0xf]
        %v6896 = vld [vmem:[%s5100 + $0x8c] sm:$0x1]
        %v6897 = vld [vmem:[%s5100 + $0x90] sm:$0xe]
        %v6898 = vld [vmem:[%s5100 + $0x94] sm:$0xf]
        %v6899 = vld [vmem:[%s5100 + $0x98] sm:$0x1]
        %v6900 = vld [vmem:[%s5100 + $0x9c] sm:$0xe]
        %v6901 = vld [vmem:[%s5100 + $0xa0] sm:$0xf]
        %v6902 = vld [vmem:[%s5100 + $0xa4] sm:$0x1]
        %v6903 = vld [vmem:[%s5100 + $0xa8] sm:$0xe]
        %v6904 = vld [vmem:[%s5100 + $0xac] sm:$0xf]
        %v6905 = vld [vmem:[%s5100 + $0xb0] sm:$0x1]
        %v6906 = vld [vmem:[%s5100 + $0xb4] sm:$0xe]
        %v6907 = vld [vmem:[%s5100 + $0xb8] sm:$0xf]
        %v6908 = vld [vmem:[%s5100 + $0xbc] sm:$0x1]
        %v6957 = vrot.slane %v6861, 5
        %v6958 = vrot.slane %v6957, 4
        %v6959 = vrot.slane %v6862, 5
        %v6960 = vsel %vm1656, %v6958, %v6959
        %v6961 = vrot.slane %v6959, 4
        %v6962 = vrot.slane %v6863, 5
        %v6963 = vsel %vm1656, %v6961, %v6962
        %v6964 = vrot.slane %v6864, 5
        %v6965 = vrot.slane %v6964, 4
        %v6966 = vrot.slane %v6865, 5
        %v6967 = vsel %vm1656, %v6965, %v6966
        %v6968 = vrot.slane %v6966, 4
        %v6969 = vrot.slane %v6866, 5
        %v6970 = vsel %vm1656, %v6968, %v6969
        %v6971 = vrot.slane %v6867, 5
        %v6972 = vrot.slane %v6971, 4
        %v6973 = vrot.slane %v6868, 5
        %v6974 = vsel %vm1656, %v6972, %v6973
        %v6975 = vrot.slane %v6973, 4
        %v6976 = vrot.slane %v6869, 5
        %v6977 = vsel %vm1656, %v6975, %v6976
        %v6978 = vrot.slane %v6870, 5
        %v6979 = vrot.slane %v6978, 4
        %v6980 = vrot.slane %v6871, 5
        %v6981 = vsel %vm1656, %v6979, %v6980
        %v6982 = vrot.slane %v6980, 4
        %v6983 = vrot.slane %v6872, 5
        %v6984 = vsel %vm1656, %v6982, %v6983
        %v6985 = vrot.slane %v6873, 5
        %v6986 = vrot.slane %v6985, 4
        %v6987 = vrot.slane %v6874, 5
        %v6988 = vsel %vm1656, %v6986, %v6987
        %v6989 = vrot.slane %v6987, 4
        %v6990 = vrot.slane %v6875, 5
        %v6991 = vsel %vm1656, %v6989, %v6990
        %v6992 = vrot.slane %v6876, 5
        %v6993 = vrot.slane %v6992, 4
        %v6994 = vrot.slane %v6877, 5
        %v6995 = vsel %vm1656, %v6993, %v6994
        %v6996 = vrot.slane %v6994, 4
        %v6997 = vrot.slane %v6878, 5
        %v6998 = vsel %vm1656, %v6996, %v6997
        %v6999 = vrot.slane %v6879, 5
        %v7000 = vrot.slane %v6999, 4
        %v7001 = vrot.slane %v6880, 5
        %v7002 = vsel %vm1656, %v7000, %v7001
        %v7003 = vrot.slane %v7001, 4
        %v7004 = vrot.slane %v6881, 5
        %v7005 = vsel %vm1656, %v7003, %v7004
        %v7006 = vrot.slane %v6882, 5
        %v7007 = vrot.slane %v7006, 4
        %v7008 = vrot.slane %v6883, 5
        %v7009 = vsel %vm1656, %v7007, %v7008
        %v7010 = vrot.slane %v7008, 4
        %v7011 = vrot.slane %v6884, 5
        %v7012 = vsel %vm1656, %v7010, %v7011
        %v7013 = vrot.slane %v6885, 5
        %v7014 = vrot.slane %v7013, 4
        %v7015 = vrot.slane %v6886, 5
        %v7016 = vsel %vm1656, %v7014, %v7015
        %v7017 = vrot.slane %v7015, 4
        %v7018 = vrot.slane %v6887, 5
        %v7019 = vsel %vm1656, %v7017, %v7018
        %v7020 = vrot.slane %v6888, 5
        %v7021 = vrot.slane %v7020, 4
        %v7022 = vrot.slane %v6889, 5
        %v7023 = vsel %vm1656, %v7021, %v7022
        %v7024 = vrot.slane %v7022, 4
        %v7025 = vrot.slane %v6890, 5
        %v7026 = vsel %vm1656, %v7024, %v7025
        %v7027 = vrot.slane %v6891, 5
        %v7028 = vrot.slane %v7027, 4
        %v7029 = vrot.slane %v6892, 5
        %v7030 = vsel %vm1656, %v7028, %v7029
        %v7031 = vrot.slane %v7029, 4
        %v7032 = vrot.slane %v6893, 5
        %v7033 = vsel %vm1656, %v7031, %v7032
        %v7034 = vrot.slane %v6894, 5
        %v7035 = vrot.slane %v7034, 4
        %v7036 = vrot.slane %v6895, 5
        %v7037 = vsel %vm1656, %v7035, %v7036
        %v7038 = vrot.slane %v7036, 4
        %v7039 = vrot.slane %v6896, 5
        %v7040 = vsel %vm1656, %v7038, %v7039
        %v7041 = vrot.slane %v6897, 5
        %v7042 = vrot.slane %v7041, 4
        %v7043 = vrot.slane %v6898, 5
        %v7044 = vsel %vm1656, %v7042, %v7043
        %v7045 = vrot.slane %v7043, 4
        %v7046 = vrot.slane %v6899, 5
        %v7047 = vsel %vm1656, %v7045, %v7046
        %v7048 = vrot.slane %v6900, 5
        %v7049 = vrot.slane %v7048, 4
        %v7050 = vrot.slane %v6901, 5
        %v7051 = vsel %vm1656, %v7049, %v7050
        %v7052 = vrot.slane %v7050, 4
        %v7053 = vrot.slane %v6902, 5
        %v7054 = vsel %vm1656, %v7052, %v7053
        %v7055 = vrot.slane %v6903, 5
        %v7056 = vrot.slane %v7055, 4
        %v7057 = vrot.slane %v6904, 5
        %v7058 = vsel %vm1656, %v7056, %v7057
        %v7059 = vrot.slane %v7057, 4
        %v7060 = vrot.slane %v6905, 5
        %v7061 = vsel %vm1656, %v7059, %v7060
        %v7062 = vrot.slane %v6906, 5
        %v7063 = vrot.slane %v7062, 4
        %v7064 = vrot.slane %v6907, 5
        %v7065 = vsel %vm1656, %v7063, %v7064
        %v7066 = vrot.slane %v7064, 4
        %v7067 = vrot.slane %v6908, 5
        %v7068 = vsel %vm1656, %v7066, %v7067
        %7069 = vrot.lane.b32.xlu0 %v6960, 32
        %v7070 = vpop.permute.xlu0 %7069
        %7071 = vrot.lane.b32.xlu0 %v6963, 32
        %v7072 = vpop.permute.xlu0 %7071
        %7073 = vrot.lane.b32.xlu0 %v6967, 32
        %v7074 = vpop.permute.xlu0 %7073
        %7075 = vrot.lane.b32.xlu0 %v6970, 32
        %v7076 = vpop.permute.xlu0 %7075
        %7077 = vrot.lane.b32.xlu0 %v6974, 32
        %v7078 = vpop.permute.xlu0 %7077
        %7079 = vrot.lane.b32.xlu0 %v6977, 32
        %v7080 = vpop.permute.xlu0 %7079
        %7081 = vrot.lane.b32.xlu0 %v6981, 32
        %v7082 = vpop.permute.xlu0 %7081
        %7083 = vrot.lane.b32.xlu0 %v6984, 32
        %v7084 = vpop.permute.xlu0 %7083
        %7085 = vrot.lane.b32.xlu0 %v6988, 32
        %v7086 = vpop.permute.xlu0 %7085
        %7087 = vrot.lane.b32.xlu0 %v6991, 32
        %v7088 = vpop.permute.xlu0 %7087
        %7089 = vrot.lane.b32.xlu0 %v6995, 32
        %v7090 = vpop.permute.xlu0 %7089
        %7091 = vrot.lane.b32.xlu0 %v6998, 32
        %v7092 = vpop.permute.xlu0 %7091
        %7093 = vrot.lane.b32.xlu0 %v7002, 32
        %v7094 = vpop.permute.xlu0 %7093
        %7095 = vrot.lane.b32.xlu0 %v7005, 32
        %v7096 = vpop.permute.xlu0 %7095
        %7097 = vrot.lane.b32.xlu0 %v7009, 32
        %v7098 = vpop.permute.xlu0 %7097
        %7099 = vrot.lane.b32.xlu0 %v7012, 32
        %v7100 = vpop.permute.xlu0 %7099
        %7101 = vrot.lane.b32.xlu0 %v7016, 32
        %v7102 = vpop.permute.xlu0 %7101
        %7103 = vrot.lane.b32.xlu0 %v7019, 32
        %v7104 = vpop.permute.xlu0 %7103
        %7105 = vrot.lane.b32.xlu0 %v7023, 32
        %v7106 = vpop.permute.xlu0 %7105
        %7107 = vrot.lane.b32.xlu0 %v7026, 32
        %v7108 = vpop.permute.xlu0 %7107
        %7109 = vrot.lane.b32.xlu0 %v7030, 32
        %v7110 = vpop.permute.xlu0 %7109
        %7111 = vrot.lane.b32.xlu0 %v7033, 32
        %v7112 = vpop.permute.xlu0 %7111
        %7113 = vrot.lane.b32.xlu0 %v7037, 32
        %v7114 = vpop.permute.xlu0 %7113
        %7115 = vrot.lane.b32.xlu0 %v7040, 32
        %v7116 = vpop.permute.xlu0 %7115
        %7117 = vrot.lane.b32.xlu0 %v7044, 32
        %v7118 = vpop.permute.xlu0 %7117
        %7119 = vrot.lane.b32.xlu0 %v7047, 32
        %v7120 = vpop.permute.xlu0 %7119
        %7121 = vrot.lane.b32.xlu0 %v7051, 32
        %v7122 = vpop.permute.xlu0 %7121
        %7123 = vrot.lane.b32.xlu0 %v7054, 32
        %v7124 = vpop.permute.xlu0 %7123
        %7125 = vrot.lane.b32.xlu0 %v7058, 32
        %v7126 = vpop.permute.xlu0 %7125
        %7127 = vrot.lane.b32.xlu0 %v7061, 32
        %v7128 = vpop.permute.xlu0 %7127
        %7129 = vrot.lane.b32.xlu0 %v7065, 32
        %v7130 = vpop.permute.xlu0 %7129
        %7131 = vrot.lane.b32.xlu0 %v7068, 32
        %v7132 = vpop.permute.xlu0 %7131
        %7165 = vst.msk [vmem:[#allocation4 + $0x4] sm:$0xf] %vm1525, %v7070
        %7166 = vst.msk [vmem:[#allocation4 + $0x10] sm:$0xf] %vm1525, %v7072
        %7167 = vst.msk [vmem:[#allocation4 + $0x1c] sm:$0xf] %vm1525, %v7074
        %7168 = vst.msk [vmem:[#allocation4 + $0x28] sm:$0xf] %vm1525, %v7076
        %7169 = vst.msk [vmem:[#allocation4 + $0x34] sm:$0xf] %vm1525, %v7078
        %7170 = vst.msk [vmem:[#allocation4 + $0x40] sm:$0xf] %vm1525, %v7080
        %7171 = vst.msk [vmem:[#allocation4 + $0x4c] sm:$0xf] %vm1525, %v7082
        %7172 = vst.msk [vmem:[#allocation4 + $0x58] sm:$0xf] %vm1525, %v7084
        %7173 = vst.msk [vmem:[#allocation4 + $0x64] sm:$0xf] %vm1525, %v7086
        %7174 = vst.msk [vmem:[#allocation4 + $0x70] sm:$0xf] %vm1525, %v7088
        %7175 = vst.msk [vmem:[#allocation4 + $0x7c] sm:$0xf] %vm1525, %v7090
        %7176 = vst.msk [vmem:[#allocation4 + $0x88] sm:$0xf] %vm1525, %v7092
        %7177 = vst.msk [vmem:[#allocation4 + $0x94] sm:$0xf] %vm1525, %v7094
        %7178 = vst.msk [vmem:[#allocation4 + $0xa0] sm:$0xf] %vm1525, %v7096
        %7179 = vst.msk [vmem:[#allocation4 + $0xac] sm:$0xf] %vm1525, %v7098
        %7180 = vst.msk [vmem:[#allocation4 + $0xb8] sm:$0xf] %vm1525, %v7100
        %7181 = vst.msk [vmem:[#allocation4 + $0xc4] sm:$0xf] %vm1525, %v7102
        %7182 = vst.msk [vmem:[#allocation4 + $0xd0] sm:$0xf] %vm1525, %v7104
        %7183 = vst.msk [vmem:[#allocation4 + $0xdc] sm:$0xf] %vm1525, %v7106
        %7184 = vst.msk [vmem:[#allocation4 + $0xe8] sm:$0xf] %vm1525, %v7108
        %7185 = vst.msk [vmem:[#allocation4 + $0xf4] sm:$0xf] %vm1525, %v7110
        %7186 = vst.msk [vmem:[#allocation4 + $0x100] sm:$0xf] %vm1525, %v7112
        %7187 = vst.msk [vmem:[#allocation4 + $0x10c] sm:$0xf] %vm1525, %v7114
        %7188 = vst.msk [vmem:[#allocation4 + $0x118] sm:$0xf] %vm1525, %v7116
        %7189 = vst.msk [vmem:[#allocation4 + $0x124] sm:$0xf] %vm1525, %v7118
        %7190 = vst.msk [vmem:[#allocation4 + $0x130] sm:$0xf] %vm1525, %v7120
        %7191 = vst.msk [vmem:[#allocation4 + $0x13c] sm:$0xf] %vm1525, %v7122
        %7192 = vst.msk [vmem:[#allocation4 + $0x148] sm:$0xf] %vm1525, %v7124
        %7193 = vst.msk [vmem:[#allocation4 + $0x154] sm:$0xf] %vm1525, %v7126
        %7194 = vst.msk [vmem:[#allocation4 + $0x160] sm:$0xf] %vm1525, %v7128
        %7195 = vst.msk [vmem:[#allocation4 + $0x16c] sm:$0xf] %vm1525, %v7130
        %7196 = vst.msk [vmem:[#allocation4 + $0x178] sm:$0xf] %vm1525, %v7132
        %s7197 = scalar_lea.vmem [#allocation3], 24
        %v7198 = vld [vmem:[%s7197] sm:$0xf]
        %v7199 = vld [vmem:[%s7197 + $0x4] sm:$0xf]
        %v7200 = vld [vmem:[%s7197 + $0xc] sm:$0xf]
        %v7201 = vld [vmem:[%s7197 + $0x10] sm:$0xf]
        %v7202 = vld [vmem:[%s7197 + $0x18] sm:$0xf]
        %v7203 = vld [vmem:[%s7197 + $0x1c] sm:$0xf]
        %v7204 = vld [vmem:[%s7197 + $0x24] sm:$0xf]
        %v7205 = vld [vmem:[%s7197 + $0x28] sm:$0xf]
        %v7206 = vld [vmem:[%s7197 + $0x30] sm:$0xf]
        %v7207 = vld [vmem:[%s7197 + $0x34] sm:$0xf]
        %v7208 = vld [vmem:[%s7197 + $0x3c] sm:$0xf]
        %v7209 = vld [vmem:[%s7197 + $0x40] sm:$0xf]
        %v7210 = vld [vmem:[%s7197 + $0x48] sm:$0xf]
        %v7211 = vld [vmem:[%s7197 + $0x4c] sm:$0xf]
        %v7212 = vld [vmem:[%s7197 + $0x54] sm:$0xf]
        %v7213 = vld [vmem:[%s7197 + $0x58] sm:$0xf]
        %v7214 = vld [vmem:[%s7197 + $0x60] sm:$0xf]
        %v7215 = vld [vmem:[%s7197 + $0x64] sm:$0xf]
        %v7216 = vld [vmem:[%s7197 + $0x6c] sm:$0xf]
        %v7217 = vld [vmem:[%s7197 + $0x70] sm:$0xf]
        %v7218 = vld [vmem:[%s7197 + $0x78] sm:$0xf]
        %v7219 = vld [vmem:[%s7197 + $0x7c] sm:$0xf]
        %v7220 = vld [vmem:[%s7197 + $0x84] sm:$0xf]
        %v7221 = vld [vmem:[%s7197 + $0x88] sm:$0xf]
        %v7222 = vld [vmem:[%s7197 + $0x90] sm:$0xf]
        %v7223 = vld [vmem:[%s7197 + $0x94] sm:$0xf]
        %v7224 = vld [vmem:[%s7197 + $0x9c] sm:$0xf]
        %v7225 = vld [vmem:[%s7197 + $0xa0] sm:$0xf]
        %v7226 = vld [vmem:[%s7197 + $0xa8] sm:$0xf]
        %v7227 = vld [vmem:[%s7197 + $0xac] sm:$0xf]
        %v7228 = vld [vmem:[%s7197 + $0xb4] sm:$0xf]
        %v7229 = vld [vmem:[%s7197 + $0xb8] sm:$0xf]
        %7262 = vrot.lane.b32.xlu0 %v7198, 64
        %v7263 = vpop.permute.xlu0 %7262
        %7264 = vrot.lane.b32.xlu0 %v7199, 64
        %v7265 = vpop.permute.xlu0 %7264
        %7266 = vrot.lane.b32.xlu0 %v7200, 64
        %v7267 = vpop.permute.xlu0 %7266
        %7268 = vrot.lane.b32.xlu0 %v7201, 64
        %v7269 = vpop.permute.xlu0 %7268
        %7270 = vrot.lane.b32.xlu0 %v7202, 64
        %v7271 = vpop.permute.xlu0 %7270
        %7272 = vrot.lane.b32.xlu0 %v7203, 64
        %v7273 = vpop.permute.xlu0 %7272
        %7274 = vrot.lane.b32.xlu0 %v7204, 64
        %v7275 = vpop.permute.xlu0 %7274
        %7276 = vrot.lane.b32.xlu0 %v7205, 64
        %v7277 = vpop.permute.xlu0 %7276
        %7278 = vrot.lane.b32.xlu0 %v7206, 64
        %v7279 = vpop.permute.xlu0 %7278
        %7280 = vrot.lane.b32.xlu0 %v7207, 64
        %v7281 = vpop.permute.xlu0 %7280
        %7282 = vrot.lane.b32.xlu0 %v7208, 64
        %v7283 = vpop.permute.xlu0 %7282
        %7284 = vrot.lane.b32.xlu0 %v7209, 64
        %v7285 = vpop.permute.xlu0 %7284
        %7286 = vrot.lane.b32.xlu0 %v7210, 64
        %v7287 = vpop.permute.xlu0 %7286
        %7288 = vrot.lane.b32.xlu0 %v7211, 64
        %v7289 = vpop.permute.xlu0 %7288
        %7290 = vrot.lane.b32.xlu0 %v7212, 64
        %v7291 = vpop.permute.xlu0 %7290
        %7292 = vrot.lane.b32.xlu0 %v7213, 64
        %v7293 = vpop.permute.xlu0 %7292
        %7294 = vrot.lane.b32.xlu0 %v7214, 64
        %v7295 = vpop.permute.xlu0 %7294
        %7296 = vrot.lane.b32.xlu0 %v7215, 64
        %v7297 = vpop.permute.xlu0 %7296
        %7298 = vrot.lane.b32.xlu0 %v7216, 64
        %v7299 = vpop.permute.xlu0 %7298
        %7300 = vrot.lane.b32.xlu0 %v7217, 64
        %v7301 = vpop.permute.xlu0 %7300
        %7302 = vrot.lane.b32.xlu0 %v7218, 64
        %v7303 = vpop.permute.xlu0 %7302
        %7304 = vrot.lane.b32.xlu0 %v7219, 64
        %v7305 = vpop.permute.xlu0 %7304
        %7306 = vrot.lane.b32.xlu0 %v7220, 64
        %v7307 = vpop.permute.xlu0 %7306
        %7308 = vrot.lane.b32.xlu0 %v7221, 64
        %v7309 = vpop.permute.xlu0 %7308
        %7310 = vrot.lane.b32.xlu0 %v7222, 64
        %v7311 = vpop.permute.xlu0 %7310
        %7312 = vrot.lane.b32.xlu0 %v7223, 64
        %v7313 = vpop.permute.xlu0 %7312
        %7314 = vrot.lane.b32.xlu0 %v7224, 64
        %v7315 = vpop.permute.xlu0 %7314
        %7316 = vrot.lane.b32.xlu0 %v7225, 64
        %v7317 = vpop.permute.xlu0 %7316
        %7318 = vrot.lane.b32.xlu0 %v7226, 64
        %v7319 = vpop.permute.xlu0 %7318
        %7320 = vrot.lane.b32.xlu0 %v7227, 64
        %v7321 = vpop.permute.xlu0 %7320
        %7322 = vrot.lane.b32.xlu0 %v7228, 64
        %v7323 = vpop.permute.xlu0 %7322
        %7324 = vrot.lane.b32.xlu0 %v7229, 64
        %v7325 = vpop.permute.xlu0 %7324
        %7358 = vst.msk [vmem:[#allocation4 + $0x4] sm:$0xf] %vm1865, %v7263
        %7359 = vst.msk [vmem:[#allocation4 + $0x10] sm:$0xf] %vm1865, %v7265
        %7360 = vst.msk [vmem:[#allocation4 + $0x1c] sm:$0xf] %vm1865, %v7267
        %7361 = vst.msk [vmem:[#allocation4 + $0x28] sm:$0xf] %vm1865, %v7269
        %7362 = vst.msk [vmem:[#allocation4 + $0x34] sm:$0xf] %vm1865, %v7271
        %7363 = vst.msk [vmem:[#allocation4 + $0x40] sm:$0xf] %vm1865, %v7273
        %7364 = vst.msk [vmem:[#allocation4 + $0x4c] sm:$0xf] %vm1865, %v7275
        %7365 = vst.msk [vmem:[#allocation4 + $0x58] sm:$0xf] %vm1865, %v7277
        %7366 = vst.msk [vmem:[#allocation4 + $0x64] sm:$0xf] %vm1865, %v7279
        %7367 = vst.msk [vmem:[#allocation4 + $0x70] sm:$0xf] %vm1865, %v7281
        %7368 = vst.msk [vmem:[#allocation4 + $0x7c] sm:$0xf] %vm1865, %v7283
        %7369 = vst.msk [vmem:[#allocation4 + $0x88] sm:$0xf] %vm1865, %v7285
        %7370 = vst.msk [vmem:[#allocation4 + $0x94] sm:$0xf] %vm1865, %v7287
        %7371 = vst.msk [vmem:[#allocation4 + $0xa0] sm:$0xf] %vm1865, %v7289
        %7372 = vst.msk [vmem:[#allocation4 + $0xac] sm:$0xf] %vm1865, %v7291
        %7373 = vst.msk [vmem:[#allocation4 + $0xb8] sm:$0xf] %vm1865, %v7293
        %7374 = vst.msk [vmem:[#allocation4 + $0xc4] sm:$0xf] %vm1865, %v7295
        %7375 = vst.msk [vmem:[#allocation4 + $0xd0] sm:$0xf] %vm1865, %v7297
        %7376 = vst.msk [vmem:[#allocation4 + $0xdc] sm:$0xf] %vm1865, %v7299
        %7377 = vst.msk [vmem:[#allocation4 + $0xe8] sm:$0xf] %vm1865, %v7301
        %7378 = vst.msk [vmem:[#allocation4 + $0xf4] sm:$0xf] %vm1865, %v7303
        %7379 = vst.msk [vmem:[#allocation4 + $0x100] sm:$0xf] %vm1865, %v7305
        %7380 = vst.msk [vmem:[#allocation4 + $0x10c] sm:$0xf] %vm1865, %v7307
        %7381 = vst.msk [vmem:[#allocation4 + $0x118] sm:$0xf] %vm1865, %v7309
        %7382 = vst.msk [vmem:[#allocation4 + $0x124] sm:$0xf] %vm1865, %v7311
        %7383 = vst.msk [vmem:[#allocation4 + $0x130] sm:$0xf] %vm1865, %v7313
        %7384 = vst.msk [vmem:[#allocation4 + $0x13c] sm:$0xf] %vm1865, %v7315
        %7385 = vst.msk [vmem:[#allocation4 + $0x148] sm:$0xf] %vm1865, %v7317
        %7386 = vst.msk [vmem:[#allocation4 + $0x154] sm:$0xf] %vm1865, %v7319
        %7387 = vst.msk [vmem:[#allocation4 + $0x160] sm:$0xf] %vm1865, %v7321
        %7388 = vst.msk [vmem:[#allocation4 + $0x16c] sm:$0xf] %vm1865, %v7323
        %7389 = vst.msk [vmem:[#allocation4 + $0x178] sm:$0xf] %vm1865, %v7325
        %v7390 = vld [vmem:[%s7197] sm:$0xf]
        %v7391 = vld [vmem:[%s7197 + $0x4] sm:$0xf]
        %v7392 = vld [vmem:[%s7197 + $0x8] sm:$0x1]
        %v7393 = vld [vmem:[%s7197 + $0xc] sm:$0xf]
        %v7394 = vld [vmem:[%s7197 + $0x10] sm:$0xf]
        %v7395 = vld [vmem:[%s7197 + $0x14] sm:$0x1]
        %v7396 = vld [vmem:[%s7197 + $0x18] sm:$0xf]
        %v7397 = vld [vmem:[%s7197 + $0x1c] sm:$0xf]
        %v7398 = vld [vmem:[%s7197 + $0x20] sm:$0x1]
        %v7399 = vld [vmem:[%s7197 + $0x24] sm:$0xf]
        %v7400 = vld [vmem:[%s7197 + $0x28] sm:$0xf]
        %v7401 = vld [vmem:[%s7197 + $0x2c] sm:$0x1]
        %v7402 = vld [vmem:[%s7197 + $0x30] sm:$0xf]
        %v7403 = vld [vmem:[%s7197 + $0x34] sm:$0xf]
        %v7404 = vld [vmem:[%s7197 + $0x38] sm:$0x1]
        %v7405 = vld [vmem:[%s7197 + $0x3c] sm:$0xf]
        %v7406 = vld [vmem:[%s7197 + $0x40] sm:$0xf]
        %v7407 = vld [vmem:[%s7197 + $0x44] sm:$0x1]
        %v7408 = vld [vmem:[%s7197 + $0x48] sm:$0xf]
        %v7409 = vld [vmem:[%s7197 + $0x4c] sm:$0xf]
        %v7410 = vld [vmem:[%s7197 + $0x50] sm:$0x1]
        %v7411 = vld [vmem:[%s7197 + $0x54] sm:$0xf]
        %v7412 = vld [vmem:[%s7197 + $0x58] sm:$0xf]
        %v7413 = vld [vmem:[%s7197 + $0x5c] sm:$0x1]
        %v7414 = vld [vmem:[%s7197 + $0x60] sm:$0xf]
        %v7415 = vld [vmem:[%s7197 + $0x64] sm:$0xf]
        %v7416 = vld [vmem:[%s7197 + $0x68] sm:$0x1]
        %v7417 = vld [vmem:[%s7197 + $0x6c] sm:$0xf]
        %v7418 = vld [vmem:[%s7197 + $0x70] sm:$0xf]
        %v7419 = vld [vmem:[%s7197 + $0x74] sm:$0x1]
        %v7420 = vld [vmem:[%s7197 + $0x78] sm:$0xf]
        %v7421 = vld [vmem:[%s7197 + $0x7c] sm:$0xf]
        %v7422 = vld [vmem:[%s7197 + $0x80] sm:$0x1]
        %v7423 = vld [vmem:[%s7197 + $0x84] sm:$0xf]
        %v7424 = vld [vmem:[%s7197 + $0x88] sm:$0xf]
        %v7425 = vld [vmem:[%s7197 + $0x8c] sm:$0x1]
        %v7426 = vld [vmem:[%s7197 + $0x90] sm:$0xf]
        %v7427 = vld [vmem:[%s7197 + $0x94] sm:$0xf]
        %v7428 = vld [vmem:[%s7197 + $0x98] sm:$0x1]
        %v7429 = vld [vmem:[%s7197 + $0x9c] sm:$0xf]
        %v7430 = vld [vmem:[%s7197 + $0xa0] sm:$0xf]
        %v7431 = vld [vmem:[%s7197 + $0xa4] sm:$0x1]
        %v7432 = vld [vmem:[%s7197 + $0xa8] sm:$0xf]
        %v7433 = vld [vmem:[%s7197 + $0xac] sm:$0xf]
        %v7434 = vld [vmem:[%s7197 + $0xb0] sm:$0x1]
        %v7435 = vld [vmem:[%s7197 + $0xb4] sm:$0xf]
        %v7436 = vld [vmem:[%s7197 + $0xb8] sm:$0xf]
        %v7437 = vld [vmem:[%s7197 + $0xbc] sm:$0x1]
        %v7439 = vshrl.u32 %v7390, 16
        %v7441 = vrot.slane %v7439, 4
        %v7442 = vshll.u32 %v7390, 16
        %v7444 = vrot.slane %v7442, 5
        %v7445 = vor.u32 %v7441, %v7444
        %v7446 = vrot.slane %v7445, 4
        %v7448 = vshll.u32 %v7391, 16
        %v7450 = vrot.slane %v7448, 5
        %v7451 = vsel %vm1044, %v7446, %v7450
        %v7452 = vshrl.u32 %v7391, 16
        %v7454 = vrot.slane %v7452, 4
        %v7455 = vor.u32 %v7454, %v7450
        %v7456 = vrot.slane %v7455, 4
        %v7458 = vshll.u32 %v7392, 16
        %v7460 = vrot.slane %v7458, 5
        %v7461 = vsel %vm1044, %v7456, %v7460
        %v7463 = vshrl.u32 %v7393, 16
        %v7465 = vrot.slane %v7463, 4
        %v7466 = vshll.u32 %v7393, 16
        %v7468 = vrot.slane %v7466, 5
        %v7469 = vor.u32 %v7465, %v7468
        %v7470 = vrot.slane %v7469, 4
        %v7472 = vshll.u32 %v7394, 16
        %v7474 = vrot.slane %v7472, 5
        %v7475 = vsel %vm1044, %v7470, %v7474
        %v7476 = vshrl.u32 %v7394, 16
        %v7478 = vrot.slane %v7476, 4
        %v7479 = vor.u32 %v7478, %v7474
        %v7480 = vrot.slane %v7479, 4
        %v7482 = vshll.u32 %v7395, 16
        %v7484 = vrot.slane %v7482, 5
        %v7485 = vsel %vm1044, %v7480, %v7484
        %v7487 = vshrl.u32 %v7396, 16
        %v7489 = vrot.slane %v7487, 4
        %v7490 = vshll.u32 %v7396, 16
        %v7492 = vrot.slane %v7490, 5
        %v7493 = vor.u32 %v7489, %v7492
        %v7494 = vrot.slane %v7493, 4
        %v7496 = vshll.u32 %v7397, 16
        %v7498 = vrot.slane %v7496, 5
        %v7499 = vsel %vm1044, %v7494, %v7498
        %v7500 = vshrl.u32 %v7397, 16
        %v7502 = vrot.slane %v7500, 4
        %v7503 = vor.u32 %v7502, %v7498
        %v7504 = vrot.slane %v7503, 4
        %v7506 = vshll.u32 %v7398, 16
        %v7508 = vrot.slane %v7506, 5
        %v7509 = vsel %vm1044, %v7504, %v7508
        %v7511 = vshrl.u32 %v7399, 16
        %v7513 = vrot.slane %v7511, 4
        %v7514 = vshll.u32 %v7399, 16
        %v7516 = vrot.slane %v7514, 5
        %v7517 = vor.u32 %v7513, %v7516
        %v7518 = vrot.slane %v7517, 4
        %v7520 = vshll.u32 %v7400, 16
        %v7522 = vrot.slane %v7520, 5
        %v7523 = vsel %vm1044, %v7518, %v7522
        %v7524 = vshrl.u32 %v7400, 16
        %v7526 = vrot.slane %v7524, 4
        %v7527 = vor.u32 %v7526, %v7522
        %v7528 = vrot.slane %v7527, 4
        %v7530 = vshll.u32 %v7401, 16
        %v7532 = vrot.slane %v7530, 5
        %v7533 = vsel %vm1044, %v7528, %v7532
        %v7535 = vshrl.u32 %v7402, 16
        %v7537 = vrot.slane %v7535, 4
        %v7538 = vshll.u32 %v7402, 16
        %v7540 = vrot.slane %v7538, 5
        %v7541 = vor.u32 %v7537, %v7540
        %v7542 = vrot.slane %v7541, 4
        %v7544 = vshll.u32 %v7403, 16
        %v7546 = vrot.slane %v7544, 5
        %v7547 = vsel %vm1044, %v7542, %v7546
        %v7548 = vshrl.u32 %v7403, 16
        %v7550 = vrot.slane %v7548, 4
        %v7551 = vor.u32 %v7550, %v7546
        %v7552 = vrot.slane %v7551, 4
        %v7554 = vshll.u32 %v7404, 16
        %v7556 = vrot.slane %v7554, 5
        %v7557 = vsel %vm1044, %v7552, %v7556
        %v7559 = vshrl.u32 %v7405, 16
        %v7561 = vrot.slane %v7559, 4
        %v7562 = vshll.u32 %v7405, 16
        %v7564 = vrot.slane %v7562, 5
        %v7565 = vor.u32 %v7561, %v7564
        %v7566 = vrot.slane %v7565, 4
        %v7568 = vshll.u32 %v7406, 16
        %v7570 = vrot.slane %v7568, 5
        %v7571 = vsel %vm1044, %v7566, %v7570
        %v7572 = vshrl.u32 %v7406, 16
        %v7574 = vrot.slane %v7572, 4
        %v7575 = vor.u32 %v7574, %v7570
        %v7576 = vrot.slane %v7575, 4
        %v7578 = vshll.u32 %v7407, 16
        %v7580 = vrot.slane %v7578, 5
        %v7581 = vsel %vm1044, %v7576, %v7580
        %v7583 = vshrl.u32 %v7408, 16
        %v7585 = vrot.slane %v7583, 4
        %v7586 = vshll.u32 %v7408, 16
        %v7588 = vrot.slane %v7586, 5
        %v7589 = vor.u32 %v7585, %v7588
        %v7590 = vrot.slane %v7589, 4
        %v7592 = vshll.u32 %v7409, 16
        %v7594 = vrot.slane %v7592, 5
        %v7595 = vsel %vm1044, %v7590, %v7594
        %v7596 = vshrl.u32 %v7409, 16
        %v7598 = vrot.slane %v7596, 4
        %v7599 = vor.u32 %v7598, %v7594
        %v7600 = vrot.slane %v7599, 4
        %v7602 = vshll.u32 %v7410, 16
        %v7604 = vrot.slane %v7602, 5
        %v7605 = vsel %vm1044, %v7600, %v7604
        %v7607 = vshrl.u32 %v7411, 16
        %v7609 = vrot.slane %v7607, 4
        %v7610 = vshll.u32 %v7411, 16
        %v7612 = vrot.slane %v7610, 5
        %v7613 = vor.u32 %v7609, %v7612
        %v7614 = vrot.slane %v7613, 4
        %v7616 = vshll.u32 %v7412, 16
        %v7618 = vrot.slane %v7616, 5
        %v7619 = vsel %vm1044, %v7614, %v7618
        %v7620 = vshrl.u32 %v7412, 16
        %v7622 = vrot.slane %v7620, 4
        %v7623 = vor.u32 %v7622, %v7618
        %v7624 = vrot.slane %v7623, 4
        %v7626 = vshll.u32 %v7413, 16
        %v7628 = vrot.slane %v7626, 5
        %v7629 = vsel %vm1044, %v7624, %v7628
        %v7631 = vshrl.u32 %v7414, 16
        %v7633 = vrot.slane %v7631, 4
        %v7634 = vshll.u32 %v7414, 16
        %v7636 = vrot.slane %v7634, 5
        %v7637 = vor.u32 %v7633, %v7636
        %v7638 = vrot.slane %v7637, 4
        %v7640 = vshll.u32 %v7415, 16
        %v7642 = vrot.slane %v7640, 5
        %v7643 = vsel %vm1044, %v7638, %v7642
        %v7644 = vshrl.u32 %v7415, 16
        %v7646 = vrot.slane %v7644, 4
        %v7647 = vor.u32 %v7646, %v7642
        %v7648 = vrot.slane %v7647, 4
        %v7650 = vshll.u32 %v7416, 16
        %v7652 = vrot.slane %v7650, 5
        %v7653 = vsel %vm1044, %v7648, %v7652
        %v7655 = vshrl.u32 %v7417, 16
        %v7657 = vrot.slane %v7655, 4
        %v7658 = vshll.u32 %v7417, 16
        %v7660 = vrot.slane %v7658, 5
        %v7661 = vor.u32 %v7657, %v7660
        %v7662 = vrot.slane %v7661, 4
        %v7664 = vshll.u32 %v7418, 16
        %v7666 = vrot.slane %v7664, 5
        %v7667 = vsel %vm1044, %v7662, %v7666
        %v7668 = vshrl.u32 %v7418, 16
        %v7670 = vrot.slane %v7668, 4
        %v7671 = vor.u32 %v7670, %v7666
        %v7672 = vrot.slane %v7671, 4
        %v7674 = vshll.u32 %v7419, 16
        %v7676 = vrot.slane %v7674, 5
        %v7677 = vsel %vm1044, %v7672, %v7676
        %v7679 = vshrl.u32 %v7420, 16
        %v7681 = vrot.slane %v7679, 4
        %v7682 = vshll.u32 %v7420, 16
        %v7684 = vrot.slane %v7682, 5
        %v7685 = vor.u32 %v7681, %v7684
        %v7686 = vrot.slane %v7685, 4
        %v7688 = vshll.u32 %v7421, 16
        %v7690 = vrot.slane %v7688, 5
        %v7691 = vsel %vm1044, %v7686, %v7690
        %v7692 = vshrl.u32 %v7421, 16
        %v7694 = vrot.slane %v7692, 4
        %v7695 = vor.u32 %v7694, %v7690
        %v7696 = vrot.slane %v7695, 4
        %v7698 = vshll.u32 %v7422, 16
        %v7700 = vrot.slane %v7698, 5
        %v7701 = vsel %vm1044, %v7696, %v7700
        %v7703 = vshrl.u32 %v7423, 16
        %v7705 = vrot.slane %v7703, 4
        %v7706 = vshll.u32 %v7423, 16
        %v7708 = vrot.slane %v7706, 5
        %v7709 = vor.u32 %v7705, %v7708
        %v7710 = vrot.slane %v7709, 4
        %v7712 = vshll.u32 %v7424, 16
        %v7714 = vrot.slane %v7712, 5
        %v7715 = vsel %vm1044, %v7710, %v7714
        %v7716 = vshrl.u32 %v7424, 16
        %v7718 = vrot.slane %v7716, 4
        %v7719 = vor.u32 %v7718, %v7714
        %v7720 = vrot.slane %v7719, 4
        %v7722 = vshll.u32 %v7425, 16
        %v7724 = vrot.slane %v7722, 5
        %v7725 = vsel %vm1044, %v7720, %v7724
        %v7727 = vshrl.u32 %v7426, 16
        %v7729 = vrot.slane %v7727, 4
        %v7730 = vshll.u32 %v7426, 16
        %v7732 = vrot.slane %v7730, 5
        %v7733 = vor.u32 %v7729, %v7732
        %v7734 = vrot.slane %v7733, 4
        %v7736 = vshll.u32 %v7427, 16
        %v7738 = vrot.slane %v7736, 5
        %v7739 = vsel %vm1044, %v7734, %v7738
        %v7740 = vshrl.u32 %v7427, 16
        %v7742 = vrot.slane %v7740, 4
        %v7743 = vor.u32 %v7742, %v7738
        %v7744 = vrot.slane %v7743, 4
        %v7746 = vshll.u32 %v7428, 16
        %v7748 = vrot.slane %v7746, 5
        %v7749 = vsel %vm1044, %v7744, %v7748
        %v7751 = vshrl.u32 %v7429, 16
        %v7753 = vrot.slane %v7751, 4
        %v7754 = vshll.u32 %v7429, 16
        %v7756 = vrot.slane %v7754, 5
        %v7757 = vor.u32 %v7753, %v7756
        %v7758 = vrot.slane %v7757, 4
        %v7760 = vshll.u32 %v7430, 16
        %v7762 = vrot.slane %v7760, 5
        %v7763 = vsel %vm1044, %v7758, %v7762
        %v7764 = vshrl.u32 %v7430, 16
        %v7766 = vrot.slane %v7764, 4
        %v7767 = vor.u32 %v7766, %v7762
        %v7768 = vrot.slane %v7767, 4
        %v7770 = vshll.u32 %v7431, 16
        %v7772 = vrot.slane %v7770, 5
        %v7773 = vsel %vm1044, %v7768, %v7772
        %v7775 = vshrl.u32 %v7432, 16
        %v7777 = vrot.slane %v7775, 4
        %v7778 = vshll.u32 %v7432, 16
        %v7780 = vrot.slane %v7778, 5
        %v7781 = vor.u32 %v7777, %v7780
        %v7782 = vrot.slane %v7781, 4
        %v7784 = vshll.u32 %v7433, 16
        %v7786 = vrot.slane %v7784, 5
        %v7787 = vsel %vm1044, %v7782, %v7786
        %v7788 = vshrl.u32 %v7433, 16
        %v7790 = vrot.slane %v7788, 4
        %v7791 = vor.u32 %v7790, %v7786
        %v7792 = vrot.slane %v7791, 4
        %v7794 = vshll.u32 %v7434, 16
        %v7796 = vrot.slane %v7794, 5
        %v7797 = vsel %vm1044, %v7792, %v7796
        %v7799 = vshrl.u32 %v7435, 16
        %v7801 = vrot.slane %v7799, 4
        %v7802 = vshll.u32 %v7435, 16
        %v7804 = vrot.slane %v7802, 5
        %v7805 = vor.u32 %v7801, %v7804
        %v7806 = vrot.slane %v7805, 4
        %v7808 = vshll.u32 %v7436, 16
        %v7810 = vrot.slane %v7808, 5
        %v7811 = vsel %vm1044, %v7806, %v7810
        %v7812 = vshrl.u32 %v7436, 16
        %v7814 = vrot.slane %v7812, 4
        %v7815 = vor.u32 %v7814, %v7810
        %v7816 = vrot.slane %v7815, 4
        %v7818 = vshll.u32 %v7437, 16
        %v7820 = vrot.slane %v7818, 5
        %v7821 = vsel %vm1044, %v7816, %v7820
        %7822 = vrot.lane.b32.xlu0 %v7451, 96
        %v7823 = vpop.permute.xlu0 %7822
        %7824 = vrot.lane.b32.xlu0 %v7461, 96
        %v7825 = vpop.permute.xlu0 %7824
        %7826 = vrot.lane.b32.xlu0 %v7475, 96
        %v7827 = vpop.permute.xlu0 %7826
        %7828 = vrot.lane.b32.xlu0 %v7485, 96
        %v7829 = vpop.permute.xlu0 %7828
        %7830 = vrot.lane.b32.xlu0 %v7499, 96
        %v7831 = vpop.permute.xlu0 %7830
        %7832 = vrot.lane.b32.xlu0 %v7509, 96
        %v7833 = vpop.permute.xlu0 %7832
        %7834 = vrot.lane.b32.xlu0 %v7523, 96
        %v7835 = vpop.permute.xlu0 %7834
        %7836 = vrot.lane.b32.xlu0 %v7533, 96
        %v7837 = vpop.permute.xlu0 %7836
        %7838 = vrot.lane.b32.xlu0 %v7547, 96
        %v7839 = vpop.permute.xlu0 %7838
        %7840 = vrot.lane.b32.xlu0 %v7557, 96
        %v7841 = vpop.permute.xlu0 %7840
        %7842 = vrot.lane.b32.xlu0 %v7571, 96
        %v7843 = vpop.permute.xlu0 %7842
        %7844 = vrot.lane.b32.xlu0 %v7581, 96
        %v7845 = vpop.permute.xlu0 %7844
        %7846 = vrot.lane.b32.xlu0 %v7595, 96
        %v7847 = vpop.permute.xlu0 %7846
        %7848 = vrot.lane.b32.xlu0 %v7605, 96
        %v7849 = vpop.permute.xlu0 %7848
        %7850 = vrot.lane.b32.xlu0 %v7619, 96
        %v7851 = vpop.permute.xlu0 %7850
        %7852 = vrot.lane.b32.xlu0 %v7629, 96
        %v7853 = vpop.permute.xlu0 %7852
        %7854 = vrot.lane.b32.xlu0 %v7643, 96
        %v7855 = vpop.permute.xlu0 %7854
        %7856 = vrot.lane.b32.xlu0 %v7653, 96
        %v7857 = vpop.permute.xlu0 %7856
        %7858 = vrot.lane.b32.xlu0 %v7667, 96
        %v7859 = vpop.permute.xlu0 %7858
        %7860 = vrot.lane.b32.xlu0 %v7677, 96
        %v7861 = vpop.permute.xlu0 %7860
        %7862 = vrot.lane.b32.xlu0 %v7691, 96
        %v7863 = vpop.permute.xlu0 %7862
        %7864 = vrot.lane.b32.xlu0 %v7701, 96
        %v7865 = vpop.permute.xlu0 %7864
        %7866 = vrot.lane.b32.xlu0 %v7715, 96
        %v7867 = vpop.permute.xlu0 %7866
        %7868 = vrot.lane.b32.xlu0 %v7725, 96
        %v7869 = vpop.permute.xlu0 %7868
        %7870 = vrot.lane.b32.xlu0 %v7739, 96
        %v7871 = vpop.permute.xlu0 %7870
        %7872 = vrot.lane.b32.xlu0 %v7749, 96
        %v7873 = vpop.permute.xlu0 %7872
        %7874 = vrot.lane.b32.xlu0 %v7763, 96
        %v7875 = vpop.permute.xlu0 %7874
        %7876 = vrot.lane.b32.xlu0 %v7773, 96
        %v7877 = vpop.permute.xlu0 %7876
        %7878 = vrot.lane.b32.xlu0 %v7787, 96
        %v7879 = vpop.permute.xlu0 %7878
        %7880 = vrot.lane.b32.xlu0 %v7797, 96
        %v7881 = vpop.permute.xlu0 %7880
        %7882 = vrot.lane.b32.xlu0 %v7811, 96
        %v7883 = vpop.permute.xlu0 %7882
        %7884 = vrot.lane.b32.xlu0 %v7821, 96
        %v7885 = vpop.permute.xlu0 %7884
        %7918 = vst.msk [vmem:[#allocation4 + $0x4] sm:$0xf] %vm2058, %v7823
        %7919 = vst.msk [vmem:[#allocation4 + $0x10] sm:$0xf] %vm2058, %v7825
        %7920 = vst.msk [vmem:[#allocation4 + $0x1c] sm:$0xf] %vm2058, %v7827
        %7921 = vst.msk [vmem:[#allocation4 + $0x28] sm:$0xf] %vm2058, %v7829
        %7922 = vst.msk [vmem:[#allocation4 + $0x34] sm:$0xf] %vm2058, %v7831
        %7923 = vst.msk [vmem:[#allocation4 + $0x40] sm:$0xf] %vm2058, %v7833
        %7924 = vst.msk [vmem:[#allocation4 + $0x4c] sm:$0xf] %vm2058, %v7835
        %7925 = vst.msk [vmem:[#allocation4 + $0x58] sm:$0xf] %vm2058, %v7837
        %7926 = vst.msk [vmem:[#allocation4 + $0x64] sm:$0xf] %vm2058, %v7839
        %7927 = vst.msk [vmem:[#allocation4 + $0x70] sm:$0xf] %vm2058, %v7841
        %7928 = vst.msk [vmem:[#allocation4 + $0x7c] sm:$0xf] %vm2058, %v7843
        %7929 = vst.msk [vmem:[#allocation4 + $0x88] sm:$0xf] %vm2058, %v7845
        %7930 = vst.msk [vmem:[#allocation4 + $0x94] sm:$0xf] %vm2058, %v7847
        %7931 = vst.msk [vmem:[#allocation4 + $0xa0] sm:$0xf] %vm2058, %v7849
        %7932 = vst.msk [vmem:[#allocation4 + $0xac] sm:$0xf] %vm2058, %v7851
        %7933 = vst.msk [vmem:[#allocation4 + $0xb8] sm:$0xf] %vm2058, %v7853
        %7934 = vst.msk [vmem:[#allocation4 + $0xc4] sm:$0xf] %vm2058, %v7855
        %7935 = vst.msk [vmem:[#allocation4 + $0xd0] sm:$0xf] %vm2058, %v7857
        %7936 = vst.msk [vmem:[#allocation4 + $0xdc] sm:$0xf] %vm2058, %v7859
        %7937 = vst.msk [vmem:[#allocation4 + $0xe8] sm:$0xf] %vm2058, %v7861
        %7938 = vst.msk [vmem:[#allocation4 + $0xf4] sm:$0xf] %vm2058, %v7863
        %7939 = vst.msk [vmem:[#allocation4 + $0x100] sm:$0xf] %vm2058, %v7865
        %7940 = vst.msk [vmem:[#allocation4 + $0x10c] sm:$0xf] %vm2058, %v7867
        %7941 = vst.msk [vmem:[#allocation4 + $0x118] sm:$0xf] %vm2058, %v7869
        %7942 = vst.msk [vmem:[#allocation4 + $0x124] sm:$0xf] %vm2058, %v7871
        %7943 = vst.msk [vmem:[#allocation4 + $0x130] sm:$0xf] %vm2058, %v7873
        %7944 = vst.msk [vmem:[#allocation4 + $0x13c] sm:$0xf] %vm2058, %v7875
        %7945 = vst.msk [vmem:[#allocation4 + $0x148] sm:$0xf] %vm2058, %v7877
        %7946 = vst.msk [vmem:[#allocation4 + $0x154] sm:$0xf] %vm2058, %v7879
        %7947 = vst.msk [vmem:[#allocation4 + $0x160] sm:$0xf] %vm2058, %v7881
        %7948 = vst.msk [vmem:[#allocation4 + $0x16c] sm:$0xf] %vm2058, %v7883
        %7949 = vst.msk [vmem:[#allocation4 + $0x178] sm:$0xf] %vm2058, %v7885
        %v7950 = vld [vmem:[%s7197] sm:$0xe]
        %v7951 = vld [vmem:[%s7197 + $0x4] sm:$0xf]
        %v7952 = vld [vmem:[%s7197 + $0x8] sm:$0x1]
        %v7953 = vld [vmem:[%s7197 + $0xc] sm:$0xe]
        %v7954 = vld [vmem:[%s7197 + $0x10] sm:$0xf]
        %v7955 = vld [vmem:[%s7197 + $0x14] sm:$0x1]
        %v7956 = vld [vmem:[%s7197 + $0x18] sm:$0xe]
        %v7957 = vld [vmem:[%s7197 + $0x1c] sm:$0xf]
        %v7958 = vld [vmem:[%s7197 + $0x20] sm:$0x1]
        %v7959 = vld [vmem:[%s7197 + $0x24] sm:$0xe]
        %v7960 = vld [vmem:[%s7197 + $0x28] sm:$0xf]
        %v7961 = vld [vmem:[%s7197 + $0x2c] sm:$0x1]
        %v7962 = vld [vmem:[%s7197 + $0x30] sm:$0xe]
        %v7963 = vld [vmem:[%s7197 + $0x34] sm:$0xf]
        %v7964 = vld [vmem:[%s7197 + $0x38] sm:$0x1]
        %v7965 = vld [vmem:[%s7197 + $0x3c] sm:$0xe]
        %v7966 = vld [vmem:[%s7197 + $0x40] sm:$0xf]
        %v7967 = vld [vmem:[%s7197 + $0x44] sm:$0x1]
        %v7968 = vld [vmem:[%s7197 + $0x48] sm:$0xe]
        %v7969 = vld [vmem:[%s7197 + $0x4c] sm:$0xf]
        %v7970 = vld [vmem:[%s7197 + $0x50] sm:$0x1]
        %v7971 = vld [vmem:[%s7197 + $0x54] sm:$0xe]
        %v7972 = vld [vmem:[%s7197 + $0x58] sm:$0xf]
        %v7973 = vld [vmem:[%s7197 + $0x5c] sm:$0x1]
        %v7974 = vld [vmem:[%s7197 + $0x60] sm:$0xe]
        %v7975 = vld [vmem:[%s7197 + $0x64] sm:$0xf]
        %v7976 = vld [vmem:[%s7197 + $0x68] sm:$0x1]
        %v7977 = vld [vmem:[%s7197 + $0x6c] sm:$0xe]
        %v7978 = vld [vmem:[%s7197 + $0x70] sm:$0xf]
        %v7979 = vld [vmem:[%s7197 + $0x74] sm:$0x1]
        %v7980 = vld [vmem:[%s7197 + $0x78] sm:$0xe]
        %v7981 = vld [vmem:[%s7197 + $0x7c] sm:$0xf]
        %v7982 = vld [vmem:[%s7197 + $0x80] sm:$0x1]
        %v7983 = vld [vmem:[%s7197 + $0x84] sm:$0xe]
        %v7984 = vld [vmem:[%s7197 + $0x88] sm:$0xf]
        %v7985 = vld [vmem:[%s7197 + $0x8c] sm:$0x1]
        %v7986 = vld [vmem:[%s7197 + $0x90] sm:$0xe]
        %v7987 = vld [vmem:[%s7197 + $0x94] sm:$0xf]
        %v7988 = vld [vmem:[%s7197 + $0x98] sm:$0x1]
        %v7989 = vld [vmem:[%s7197 + $0x9c] sm:$0xe]
        %v7990 = vld [vmem:[%s7197 + $0xa0] sm:$0xf]
        %v7991 = vld [vmem:[%s7197 + $0xa4] sm:$0x1]
        %v7992 = vld [vmem:[%s7197 + $0xa8] sm:$0xe]
        %v7993 = vld [vmem:[%s7197 + $0xac] sm:$0xf]
        %v7994 = vld [vmem:[%s7197 + $0xb0] sm:$0x1]
        %v7995 = vld [vmem:[%s7197 + $0xb4] sm:$0xe]
        %v7996 = vld [vmem:[%s7197 + $0xb8] sm:$0xf]
        %v7997 = vld [vmem:[%s7197 + $0xbc] sm:$0x1]
        %v8046 = vrot.slane %v7950, 5
        %v8047 = vrot.slane %v8046, 4
        %v8048 = vrot.slane %v7951, 5
        %v8049 = vsel %vm1656, %v8047, %v8048
        %v8050 = vrot.slane %v8048, 4
        %v8051 = vrot.slane %v7952, 5
        %v8052 = vsel %vm1656, %v8050, %v8051
        %v8053 = vrot.slane %v7953, 5
        %v8054 = vrot.slane %v8053, 4
        %v8055 = vrot.slane %v7954, 5
        %v8056 = vsel %vm1656, %v8054, %v8055
        %v8057 = vrot.slane %v8055, 4
        %v8058 = vrot.slane %v7955, 5
        %v8059 = vsel %vm1656, %v8057, %v8058
        %v8060 = vrot.slane %v7956, 5
        %v8061 = vrot.slane %v8060, 4
        %v8062 = vrot.slane %v7957, 5
        %v8063 = vsel %vm1656, %v8061, %v8062
        %v8064 = vrot.slane %v8062, 4
        %v8065 = vrot.slane %v7958, 5
        %v8066 = vsel %vm1656, %v8064, %v8065
        %v8067 = vrot.slane %v7959, 5
        %v8068 = vrot.slane %v8067, 4
        %v8069 = vrot.slane %v7960, 5
        %v8070 = vsel %vm1656, %v8068, %v8069
        %v8071 = vrot.slane %v8069, 4
        %v8072 = vrot.slane %v7961, 5
        %v8073 = vsel %vm1656, %v8071, %v8072
        %v8074 = vrot.slane %v7962, 5
        %v8075 = vrot.slane %v8074, 4
        %v8076 = vrot.slane %v7963, 5
        %v8077 = vsel %vm1656, %v8075, %v8076
        %v8078 = vrot.slane %v8076, 4
        %v8079 = vrot.slane %v7964, 5
        %v8080 = vsel %vm1656, %v8078, %v8079
        %v8081 = vrot.slane %v7965, 5
        %v8082 = vrot.slane %v8081, 4
        %v8083 = vrot.slane %v7966, 5
        %v8084 = vsel %vm1656, %v8082, %v8083
        %v8085 = vrot.slane %v8083, 4
        %v8086 = vrot.slane %v7967, 5
        %v8087 = vsel %vm1656, %v8085, %v8086
        %v8088 = vrot.slane %v7968, 5
        %v8089 = vrot.slane %v8088, 4
        %v8090 = vrot.slane %v7969, 5
        %v8091 = vsel %vm1656, %v8089, %v8090
        %v8092 = vrot.slane %v8090, 4
        %v8093 = vrot.slane %v7970, 5
        %v8094 = vsel %vm1656, %v8092, %v8093
        %v8095 = vrot.slane %v7971, 5
        %v8096 = vrot.slane %v8095, 4
        %v8097 = vrot.slane %v7972, 5
        %v8098 = vsel %vm1656, %v8096, %v8097
        %v8099 = vrot.slane %v8097, 4
        %v8100 = vrot.slane %v7973, 5
        %v8101 = vsel %vm1656, %v8099, %v8100
        %v8102 = vrot.slane %v7974, 5
        %v8103 = vrot.slane %v8102, 4
        %v8104 = vrot.slane %v7975, 5
        %v8105 = vsel %vm1656, %v8103, %v8104
        %v8106 = vrot.slane %v8104, 4
        %v8107 = vrot.slane %v7976, 5
        %v8108 = vsel %vm1656, %v8106, %v8107
        %v8109 = vrot.slane %v7977, 5
        %v8110 = vrot.slane %v8109, 4
        %v8111 = vrot.slane %v7978, 5
        %v8112 = vsel %vm1656, %v8110, %v8111
        %v8113 = vrot.slane %v8111, 4
        %v8114 = vrot.slane %v7979, 5
        %v8115 = vsel %vm1656, %v8113, %v8114
        %v8116 = vrot.slane %v7980, 5
        %v8117 = vrot.slane %v8116, 4
        %v8118 = vrot.slane %v7981, 5
        %v8119 = vsel %vm1656, %v8117, %v8118
        %v8120 = vrot.slane %v8118, 4
        %v8121 = vrot.slane %v7982, 5
        %v8122 = vsel %vm1656, %v8120, %v8121
        %v8123 = vrot.slane %v7983, 5
        %v8124 = vrot.slane %v8123, 4
        %v8125 = vrot.slane %v7984, 5
        %v8126 = vsel %vm1656, %v8124, %v8125
        %v8127 = vrot.slane %v8125, 4
        %v8128 = vrot.slane %v7985, 5
        %v8129 = vsel %vm1656, %v8127, %v8128
        %v8130 = vrot.slane %v7986, 5
        %v8131 = vrot.slane %v8130, 4
        %v8132 = vrot.slane %v7987, 5
        %v8133 = vsel %vm1656, %v8131, %v8132
        %v8134 = vrot.slane %v8132, 4
        %v8135 = vrot.slane %v7988, 5
        %v8136 = vsel %vm1656, %v8134, %v8135
        %v8137 = vrot.slane %v7989, 5
        %v8138 = vrot.slane %v8137, 4
        %v8139 = vrot.slane %v7990, 5
        %v8140 = vsel %vm1656, %v8138, %v8139
        %v8141 = vrot.slane %v8139, 4
        %v8142 = vrot.slane %v7991, 5
        %v8143 = vsel %vm1656, %v8141, %v8142
        %v8144 = vrot.slane %v7992, 5
        %v8145 = vrot.slane %v8144, 4
        %v8146 = vrot.slane %v7993, 5
        %v8147 = vsel %vm1656, %v8145, %v8146
        %v8148 = vrot.slane %v8146, 4
        %v8149 = vrot.slane %v7994, 5
        %v8150 = vsel %vm1656, %v8148, %v8149
        %v8151 = vrot.slane %v7995, 5
        %v8152 = vrot.slane %v8151, 4
        %v8153 = vrot.slane %v7996, 5
        %v8154 = vsel %vm1656, %v8152, %v8153
        %v8155 = vrot.slane %v8153, 4
        %v8156 = vrot.slane %v7997, 5
        %v8157 = vsel %vm1656, %v8155, %v8156
        %8190 = vst.msk [vmem:[#allocation4 + $0x8] sm:$0xf] %vm224, %v8049
        %8191 = vst.msk [vmem:[#allocation4 + $0x14] sm:$0xf] %vm224, %v8052
        %8192 = vst.msk [vmem:[#allocation4 + $0x20] sm:$0xf] %vm224, %v8056
        %8193 = vst.msk [vmem:[#allocation4 + $0x2c] sm:$0xf] %vm224, %v8059
        %8194 = vst.msk [vmem:[#allocation4 + $0x38] sm:$0xf] %vm224, %v8063
        %8195 = vst.msk [vmem:[#allocation4 + $0x44] sm:$0xf] %vm224, %v8066
        %8196 = vst.msk [vmem:[#allocation4 + $0x50] sm:$0xf] %vm224, %v8070
        %8197 = vst.msk [vmem:[#allocation4 + $0x5c] sm:$0xf] %vm224, %v8073
        %8198 = vst.msk [vmem:[#allocation4 + $0x68] sm:$0xf] %vm224, %v8077
        %8199 = vst.msk [vmem:[#allocation4 + $0x74] sm:$0xf] %vm224, %v8080
        %8200 = vst.msk [vmem:[#allocation4 + $0x80] sm:$0xf] %vm224, %v8084
        %8201 = vst.msk [vmem:[#allocation4 + $0x8c] sm:$0xf] %vm224, %v8087
        %8202 = vst.msk [vmem:[#allocation4 + $0x98] sm:$0xf] %vm224, %v8091
        %8203 = vst.msk [vmem:[#allocation4 + $0xa4] sm:$0xf] %vm224, %v8094
        %8204 = vst.msk [vmem:[#allocation4 + $0xb0] sm:$0xf] %vm224, %v8098
        %8205 = vst.msk [vmem:[#allocation4 + $0xbc] sm:$0xf] %vm224, %v8101
        %8206 = vst.msk [vmem:[#allocation4 + $0xc8] sm:$0xf] %vm224, %v8105
        %8207 = vst.msk [vmem:[#allocation4 + $0xd4] sm:$0xf] %vm224, %v8108
        %8208 = vst.msk [vmem:[#allocation4 + $0xe0] sm:$0xf] %vm224, %v8112
        %8209 = vst.msk [vmem:[#allocation4 + $0xec] sm:$0xf] %vm224, %v8115
        %8210 = vst.msk [vmem:[#allocation4 + $0xf8] sm:$0xf] %vm224, %v8119
        %8211 = vst.msk [vmem:[#allocation4 + $0x104] sm:$0xf] %vm224, %v8122
        %8212 = vst.msk [vmem:[#allocation4 + $0x110] sm:$0xf] %vm224, %v8126
        %8213 = vst.msk [vmem:[#allocation4 + $0x11c] sm:$0xf] %vm224, %v8129
        %8214 = vst.msk [vmem:[#allocation4 + $0x128] sm:$0xf] %vm224, %v8133
        %8215 = vst.msk [vmem:[#allocation4 + $0x134] sm:$0xf] %vm224, %v8136
        %8216 = vst.msk [vmem:[#allocation4 + $0x140] sm:$0xf] %vm224, %v8140
        %8217 = vst.msk [vmem:[#allocation4 + $0x14c] sm:$0xf] %vm224, %v8143
        %8218 = vst.msk [vmem:[#allocation4 + $0x158] sm:$0xf] %vm224, %v8147
        %8219 = vst.msk [vmem:[#allocation4 + $0x164] sm:$0xf] %vm224, %v8150
        %8220 = vst.msk [vmem:[#allocation4 + $0x170] sm:$0xf] %vm224, %v8154
        %8221 = vst.msk [vmem:[#allocation4 + $0x17c] sm:$0xf] %vm224, %v8157
        %v8222 = vld [vmem:[#allocation4] sm:$0xff]
        %v8223 = vld [vmem:[#allocation4 + $0x8] sm:$0xf]
        %v8224 = vld [vmem:[#allocation4 + $0xc] sm:$0xff]
        %v8225 = vld [vmem:[#allocation4 + $0x14] sm:$0xf]
        %v8226 = vld [vmem:[#allocation4 + $0x18] sm:$0xff]
        %v8227 = vld [vmem:[#allocation4 + $0x20] sm:$0xf]
        %v8228 = vld [vmem:[#allocation4 + $0x24] sm:$0xff]
        %v8229 = vld [vmem:[#allocation4 + $0x2c] sm:$0xf]
        %v8230 = vld [vmem:[#allocation4 + $0x30] sm:$0xff]
        %v8231 = vld [vmem:[#allocation4 + $0x38] sm:$0xf]
        %v8232 = vld [vmem:[#allocation4 + $0x3c] sm:$0xff]
        %v8233 = vld [vmem:[#allocation4 + $0x44] sm:$0xf]
        %v8234 = vld [vmem:[#allocation4 + $0x48] sm:$0xff]
        %v8235 = vld [vmem:[#allocation4 + $0x50] sm:$0xf]
        %v8236 = vld [vmem:[#allocation4 + $0x54] sm:$0xff]
        %v8237 = vld [vmem:[#allocation4 + $0x5c] sm:$0xf]
        %v8238 = vld [vmem:[#allocation4 + $0x60] sm:$0xff]
        %v8239 = vld [vmem:[#allocation4 + $0x68] sm:$0xf]
        %v8240 = vld [vmem:[#allocation4 + $0x6c] sm:$0xff]
        %v8241 = vld [vmem:[#allocation4 + $0x74] sm:$0xf]
        %v8242 = vld [vmem:[#allocation4 + $0x78] sm:$0xff]
        %v8243 = vld [vmem:[#allocation4 + $0x80] sm:$0xf]
        %v8244 = vld [vmem:[#allocation4 + $0x84] sm:$0xff]
        %v8245 = vld [vmem:[#allocation4 + $0x8c] sm:$0xf]
        %v8246 = vld [vmem:[#allocation4 + $0x90] sm:$0xff]
        %v8247 = vld [vmem:[#allocation4 + $0x98] sm:$0xf]
        %v8248 = vld [vmem:[#allocation4 + $0x9c] sm:$0xff]
        %v8249 = vld [vmem:[#allocation4 + $0xa4] sm:$0xf]
        %v8250 = vld [vmem:[#allocation4 + $0xa8] sm:$0xff]
        %v8251 = vld [vmem:[#allocation4 + $0xb0] sm:$0xf]
        %v8252 = vld [vmem:[#allocation4 + $0xb4] sm:$0xff]
        %v8253 = vld [vmem:[#allocation4 + $0xbc] sm:$0xf]
        %v8254 = vld [vmem:[#allocation4 + $0xc0] sm:$0xff]
        %v8255 = vld [vmem:[#allocation4 + $0xc8] sm:$0xf]
        %v8256 = vld [vmem:[#allocation4 + $0xcc] sm:$0xff]
        %v8257 = vld [vmem:[#allocation4 + $0xd4] sm:$0xf]
        %v8258 = vld [vmem:[#allocation4 + $0xd8] sm:$0xff]
        %v8259 = vld [vmem:[#allocation4 + $0xe0] sm:$0xf]
        %v8260 = vld [vmem:[#allocation4 + $0xe4] sm:$0xff]
        %v8261 = vld [vmem:[#allocation4 + $0xec] sm:$0xf]
        %v8262 = vld [vmem:[#allocation4 + $0xf0] sm:$0xff]
        %v8263 = vld [vmem:[#allocation4 + $0xf8] sm:$0xf]
        %v8264 = vld [vmem:[#allocation4 + $0xfc] sm:$0xff]
        %v8265 = vld [vmem:[#allocation4 + $0x104] sm:$0xf]
        %v8266 = vld [vmem:[#allocation4 + $0x108] sm:$0xff]
        %v8267 = vld [vmem:[#allocation4 + $0x110] sm:$0xf]
        %v8268 = vld [vmem:[#allocation4 + $0x114] sm:$0xff]
        %v8269 = vld [vmem:[#allocation4 + $0x11c] sm:$0xf]
        %v8270 = vld [vmem:[#allocation4 + $0x120] sm:$0xff]
        %v8271 = vld [vmem:[#allocation4 + $0x128] sm:$0xf]
        %v8272 = vld [vmem:[#allocation4 + $0x12c] sm:$0xff]
        %v8273 = vld [vmem:[#allocation4 + $0x134] sm:$0xf]
        %v8274 = vld [vmem:[#allocation4 + $0x138] sm:$0xff]
        %v8275 = vld [vmem:[#allocation4 + $0x140] sm:$0xf]
        %v8276 = vld [vmem:[#allocation4 + $0x144] sm:$0xff]
        %v8277 = vld [vmem:[#allocation4 + $0x14c] sm:$0xf]
        %v8278 = vld [vmem:[#allocation4 + $0x150] sm:$0xff]
        %v8279 = vld [vmem:[#allocation4 + $0x158] sm:$0xf]
        %v8280 = vld [vmem:[#allocation4 + $0x15c] sm:$0xff]
        %v8281 = vld [vmem:[#allocation4 + $0x164] sm:$0xf]
        %v8282 = vld [vmem:[#allocation4 + $0x168] sm:$0xff]
        %v8283 = vld [vmem:[#allocation4 + $0x170] sm:$0xf]
        %v8284 = vld [vmem:[#allocation4 + $0x174] sm:$0xff]
        %v8285 = vld [vmem:[#allocation4 + $0x17c] sm:$0xf]
        %v8286 = vld [vmem:[%s3] sm:$0xf]
        %v8287 = vld [vmem:[%s3 + $0x4] sm:$0xf]
        %v8288 = vld [vmem:[%s3 + $0x8] sm:$0xf]
        %v8289 = vld [vmem:[%s3 + $0xc] sm:$0xf]
        %v8290 = vld [vmem:[%s3 + $0x10] sm:$0xf]
        %v8291 = vld [vmem:[%s3 + $0x14] sm:$0xf]
        %v8292 = vld [vmem:[%s3 + $0x18] sm:$0xf]
        %v8293 = vld [vmem:[%s3 + $0x1c] sm:$0xf]
        %v8294 = vld [vmem:[%s3 + $0x20] sm:$0xf]
        %v8295 = vld [vmem:[%s3 + $0x24] sm:$0xf]
        %v8296 = vld [vmem:[%s3 + $0x28] sm:$0xf]
        %v8297 = vld [vmem:[%s3 + $0x2c] sm:$0xf]
        %v8298 = vld [vmem:[%s3 + $0x30] sm:$0xf]
        %v8299 = vld [vmem:[%s3 + $0x34] sm:$0xf]
        %v8300 = vld [vmem:[%s3 + $0x38] sm:$0xf]
        %v8301 = vld [vmem:[%s3 + $0x3c] sm:$0xf]
        %v8302 = vld [vmem:[%s3 + $0x40] sm:$0xf]
        %v8303 = vld [vmem:[%s3 + $0x44] sm:$0xf]
        %v8304 = vld [vmem:[%s3 + $0x48] sm:$0xf]
        %v8305 = vld [vmem:[%s3 + $0x4c] sm:$0xf]
        %v8306 = vld [vmem:[%s3 + $0x50] sm:$0xf]
        %v8307 = vld [vmem:[%s3 + $0x54] sm:$0xf]
        %v8308 = vld [vmem:[%s3 + $0x58] sm:$0xf]
        %v8309 = vld [vmem:[%s3 + $0x5c] sm:$0xf]
        %v8310 = vld [vmem:[%s3 + $0x60] sm:$0xf]
        %v8311 = vld [vmem:[%s3 + $0x64] sm:$0xf]
        %v8312 = vld [vmem:[%s3 + $0x68] sm:$0xf]
        %v8313 = vld [vmem:[%s3 + $0x6c] sm:$0xf]
        %v8314 = vld [vmem:[%s3 + $0x70] sm:$0xf]
        %v8315 = vld [vmem:[%s3 + $0x74] sm:$0xf]
        %v8316 = vld [vmem:[%s3 + $0x78] sm:$0xf]
        %v8317 = vld [vmem:[%s3 + $0x7c] sm:$0xf]
        %v8318 = vld [vmem:[%s3 + $0x80] sm:$0xf]
        %v8319 = vld [vmem:[%s3 + $0x84] sm:$0xf]
        %v8320 = vld [vmem:[%s3 + $0x88] sm:$0xf]
        %v8321 = vld [vmem:[%s3 + $0x8c] sm:$0xf]
        %v8322 = vld [vmem:[%s4] sm:$0x1]
        %v8324 = vperm.slane %v8322, 0
        %v8390 = vunpack.c.l.b16 %v8222
        %v8391 = vunpack.c.h.b16 %v8222
        %v8392 = vunpack.c.l.b16 %v8223
        %v8393 = vunpack.c.l.b16 %v8224
        %v8394 = vunpack.c.h.b16 %v8224
        %v8395 = vunpack.c.l.b16 %v8225
        %v8396 = vunpack.c.l.b16 %v8226
        %v8397 = vunpack.c.h.b16 %v8226
        %v8398 = vunpack.c.l.b16 %v8227
        %v8399 = vunpack.c.l.b16 %v8228
        %v8400 = vunpack.c.h.b16 %v8228
        %v8401 = vunpack.c.l.b16 %v8229
        %v8402 = vunpack.c.l.b16 %v8230
        %v8403 = vunpack.c.h.b16 %v8230
        %v8404 = vunpack.c.l.b16 %v8231
        %v8405 = vunpack.c.l.b16 %v8232
        %v8406 = vunpack.c.h.b16 %v8232
        %v8407 = vunpack.c.l.b16 %v8233
        %v8408 = vunpack.c.l.b16 %v8234
        %v8409 = vunpack.c.h.b16 %v8234
        %v8410 = vunpack.c.l.b16 %v8235
        %v8411 = vunpack.c.l.b16 %v8236
        %v8412 = vunpack.c.h.b16 %v8236
        %v8413 = vunpack.c.l.b16 %v8237
        %v8414 = vunpack.c.l.b16 %v8238
        %v8415 = vunpack.c.h.b16 %v8238
        %v8416 = vunpack.c.l.b16 %v8239
        %v8417 = vunpack.c.l.b16 %v8240
        %v8418 = vunpack.c.h.b16 %v8240
        %v8419 = vunpack.c.l.b16 %v8241
        %v8420 = vunpack.c.l.b16 %v8242
        %v8421 = vunpack.c.h.b16 %v8242
        %v8422 = vunpack.c.l.b16 %v8243
        %v8423 = vunpack.c.l.b16 %v8244
        %v8424 = vunpack.c.h.b16 %v8244
        %v8425 = vunpack.c.l.b16 %v8245
        %v8426 = vunpack.c.l.b16 %v8246
        %v8427 = vunpack.c.h.b16 %v8246
        %v8428 = vunpack.c.l.b16 %v8247
        %v8429 = vunpack.c.l.b16 %v8248
        %v8430 = vunpack.c.h.b16 %v8248
        %v8431 = vunpack.c.l.b16 %v8249
        %v8432 = vunpack.c.l.b16 %v8250
        %v8433 = vunpack.c.h.b16 %v8250
        %v8434 = vunpack.c.l.b16 %v8251
        %v8435 = vunpack.c.l.b16 %v8252
        %v8436 = vunpack.c.h.b16 %v8252
        %v8437 = vunpack.c.l.b16 %v8253
        %v8438 = vunpack.c.l.b16 %v8254
        %v8439 = vunpack.c.h.b16 %v8254
        %v8440 = vunpack.c.l.b16 %v8255
        %v8441 = vunpack.c.l.b16 %v8256
        %v8442 = vunpack.c.h.b16 %v8256
        %v8443 = vunpack.c.l.b16 %v8257
        %v8444 = vunpack.c.l.b16 %v8258
        %v8445 = vunpack.c.h.b16 %v8258
        %v8446 = vunpack.c.l.b16 %v8259
        %v8447 = vunpack.c.l.b16 %v8260
        %v8448 = vunpack.c.h.b16 %v8260
        %v8449 = vunpack.c.l.b16 %v8261
        %v8450 = vunpack.c.l.b16 %v8262
        %v8451 = vunpack.c.h.b16 %v8262
        %v8452 = vunpack.c.l.b16 %v8263
        %v8453 = vunpack.c.l.b16 %v8264
        %v8454 = vunpack.c.h.b16 %v8264
        %v8455 = vunpack.c.l.b16 %v8265
        %v8456 = vunpack.c.l.b16 %v8266
        %v8457 = vunpack.c.h.b16 %v8266
        %v8458 = vunpack.c.l.b16 %v8267
        %v8459 = vunpack.c.l.b16 %v8268
        %v8460 = vunpack.c.h.b16 %v8268
        %v8461 = vunpack.c.l.b16 %v8269
        %v8462 = vunpack.c.l.b16 %v8270
        %v8463 = vunpack.c.h.b16 %v8270
        %v8464 = vunpack.c.l.b16 %v8271
        %v8465 = vunpack.c.l.b16 %v8272
        %v8466 = vunpack.c.h.b16 %v8272
        %v8467 = vunpack.c.l.b16 %v8273
        %v8468 = vunpack.c.l.b16 %v8274
        %v8469 = vunpack.c.h.b16 %v8274
        %v8470 = vunpack.c.l.b16 %v8275
        %v8471 = vunpack.c.l.b16 %v8276
        %v8472 = vunpack.c.h.b16 %v8276
        %v8473 = vunpack.c.l.b16 %v8277
        %v8474 = vunpack.c.l.b16 %v8278
        %v8475 = vunpack.c.h.b16 %v8278
        %v8476 = vunpack.c.l.b16 %v8279
        %v8477 = vunpack.c.l.b16 %v8280
        %v8478 = vunpack.c.h.b16 %v8280
        %v8479 = vunpack.c.l.b16 %v8281
        %v8480 = vunpack.c.l.b16 %v8282
        %v8481 = vunpack.c.h.b16 %v8282
        %v8482 = vunpack.c.l.b16 %v8283
        %v8483 = vunpack.c.l.b16 %v8284
        %v8484 = vunpack.c.h.b16 %v8284
        %v8485 = vunpack.c.l.b16 %v8285
        %v8486 = vpack.c.b16 %v8393, %v8390
        %v8487 = vpack.c.b16 %v8394, %v8391
        %v8488 = vpack.c.b16 %v8395, %v8392
        %v8489 = vpack.c.b16 %v8399, %v8396
        %v8490 = vpack.c.b16 %v8400, %v8397
        %v8491 = vpack.c.b16 %v8401, %v8398
        %v8492 = vpack.c.b16 %v8405, %v8402
        %v8493 = vpack.c.b16 %v8406, %v8403
        %v8494 = vpack.c.b16 %v8407, %v8404
        %v8495 = vpack.c.b16 %v8411, %v8408
        %v8496 = vpack.c.b16 %v8412, %v8409
        %v8497 = vpack.c.b16 %v8413, %v8410
        %v8498 = vpack.c.b16 %v8417, %v8414
        %v8499 = vpack.c.b16 %v8418, %v8415
        %v8500 = vpack.c.b16 %v8419, %v8416
        %v8501 = vpack.c.b16 %v8423, %v8420
        %v8502 = vpack.c.b16 %v8424, %v8421
        %v8503 = vpack.c.b16 %v8425, %v8422
        %v8504 = vpack.c.b16 %v8429, %v8426
        %v8505 = vpack.c.b16 %v8430, %v8427
        %v8506 = vpack.c.b16 %v8431, %v8428
        %v8507 = vpack.c.b16 %v8435, %v8432
        %v8508 = vpack.c.b16 %v8436, %v8433
        %v8509 = vpack.c.b16 %v8437, %v8434
        %v8510 = vpack.c.b16 %v8441, %v8438
        %v8511 = vpack.c.b16 %v8442, %v8439
        %v8512 = vpack.c.b16 %v8443, %v8440
        %v8513 = vpack.c.b16 %v8447, %v8444
        %v8514 = vpack.c.b16 %v8448, %v8445
        %v8515 = vpack.c.b16 %v8449, %v8446
        %v8516 = vpack.c.b16 %v8453, %v8450
        %v8517 = vpack.c.b16 %v8454, %v8451
        %v8518 = vpack.c.b16 %v8455, %v8452
        %v8519 = vpack.c.b16 %v8459, %v8456
        %v8520 = vpack.c.b16 %v8460, %v8457
        %v8521 = vpack.c.b16 %v8461, %v8458
        %v8522 = vpack.c.b16 %v8465, %v8462
        %v8523 = vpack.c.b16 %v8466, %v8463
        %v8524 = vpack.c.b16 %v8467, %v8464
        %v8525 = vpack.c.b16 %v8471, %v8468
        %v8526 = vpack.c.b16 %v8472, %v8469
        %v8527 = vpack.c.b16 %v8473, %v8470
        %v8528 = vpack.c.b16 %v8477, %v8474
        %v8529 = vpack.c.b16 %v8478, %v8475
        %v8530 = vpack.c.b16 %v8479, %v8476
        %v8531 = vpack.c.b16 %v8483, %v8480
        %v8532 = vpack.c.b16 %v8484, %v8481
        %v8533 = vpack.c.b16 %v8485, %v8482
        %v8602 = vunpack.c.l.b16 %v8286
        %v8603 = vunpack.c.l.b16 %v8287
        %v8604 = vunpack.c.l.b16 %v8288
        %v8605 = vunpack.c.l.b16 %v8289
        %v8606 = vunpack.c.l.b16 %v8290
        %v8607 = vunpack.c.l.b16 %v8291
        %v8608 = vunpack.c.l.b16 %v8292
        %v8609 = vunpack.c.l.b16 %v8293
        %v8610 = vunpack.c.l.b16 %v8294
        %v8611 = vunpack.c.l.b16 %v8295
        %v8612 = vunpack.c.l.b16 %v8296
        %v8613 = vunpack.c.l.b16 %v8297
        %v8614 = vunpack.c.l.b16 %v8298
        %v8615 = vunpack.c.l.b16 %v8299
        %v8616 = vunpack.c.l.b16 %v8300
        %v8617 = vunpack.c.l.b16 %v8301
        %v8618 = vunpack.c.l.b16 %v8302
        %v8619 = vunpack.c.l.b16 %v8303
        %v8620 = vunpack.c.l.b16 %v8304
        %v8621 = vunpack.c.l.b16 %v8305
        %v8622 = vunpack.c.l.b16 %v8306
        %v8623 = vunpack.c.l.b16 %v8307
        %v8624 = vunpack.c.l.b16 %v8308
        %v8625 = vunpack.c.l.b16 %v8309
        %v8626 = vunpack.c.l.b16 %v8310
        %v8627 = vunpack.c.l.b16 %v8311
        %v8628 = vunpack.c.l.b16 %v8312
        %v8629 = vunpack.c.l.b16 %v8313
        %v8630 = vunpack.c.l.b16 %v8314
        %v8631 = vunpack.c.l.b16 %v8315
        %v8632 = vunpack.c.l.b16 %v8316
        %v8633 = vunpack.c.l.b16 %v8317
        %v8634 = vunpack.c.l.b16 %v8318
        %v8635 = vunpack.c.l.b16 %v8319
        %v8636 = vunpack.c.l.b16 %v8320
        %v8637 = vunpack.c.l.b16 %v8321
        %v8638 = vpack.c.b16 %v8603, %v8602
        %v8639 = vpack.c.b16 %v8605, %v8604
        %v8640 = vpack.c.b16 %v8607, %v8606
        %v8641 = vpack.c.b16 %v8609, %v8608
        %v8642 = vpack.c.b16 %v8611, %v8610
        %v8643 = vpack.c.b16 %v8613, %v8612
        %v8644 = vpack.c.b16 %v8615, %v8614
        %v8645 = vpack.c.b16 %v8617, %v8616
        %v8646 = vpack.c.b16 %v8619, %v8618
        %v8647 = vpack.c.b16 %v8621, %v8620
        %v8648 = vpack.c.b16 %v8623, %v8622
        %v8649 = vpack.c.b16 %v8625, %v8624
        %v8650 = vpack.c.b16 %v8627, %v8626
        %v8651 = vpack.c.b16 %v8629, %v8628
        %v8652 = vpack.c.b16 %v8631, %v8630
        %v8653 = vpack.c.b16 %v8633, %v8632
        %v8654 = vpack.c.b16 %v8635, %v8634
        %v8655 = vpack.c.b16 %v8637, %v8636
        %v8675 = vsel %vm4400, %v8488, 0
        %v8678 = vsel %vm4400, %v8491, 0
        %v8681 = vsel %vm4400, %v8494, 0
        %v8684 = vsel %vm4400, %v8497, 0
        %v8687 = vsel %vm4400, %v8500, 0
        %v8690 = vsel %vm4400, %v8503, 0
        %v8693 = vsel %vm4400, %v8506, 0
        %v8696 = vsel %vm4400, %v8509, 0
        %v8699 = vsel %vm4400, %v8512, 0
        %v8702 = vsel %vm4400, %v8515, 0
        %v8705 = vsel %vm4400, %v8518, 0
        %v8708 = vsel %vm4400, %v8521, 0
        %v8711 = vsel %vm4400, %v8524, 0
        %v8714 = vsel %vm4400, %v8527, 0
        %v8717 = vsel %vm4400, %v8530, 0
        %v8720 = vsel %vm4400, %v8533, 0
        %8722 = vmatpush.bf16.msra.mxu0 %v8645
        %8723 = vmatpush.bf16.msra.mxu0 %v8644
        %8724 = vmatpush.bf16.msra.mxu0 %v8643
        %8725 = vmatpush.bf16.msra.mxu0 %v8642
        %8726 = vmatpush.bf16.msra.mxu0 %v8641
        %8727 = vmatpush.bf16.msra.mxu0 %v8640
        %8728 = vmatpush.bf16.msra.mxu0 %v8639
        %8729 = vmatpush.bf16.msra.mxu0 %v8638
        %8730 = vmatmul.bf16.gmra.mxu0 %v8486
        %v8731 = vpop.f32.mrf.mxu0
        %v8732 = vadd.f32 %v8324, %v8731
        %v8733 = vpop.f32.mrf.mxu0
        %v8734 = vadd.f32 %v8324, %v8733
        %8735 = vmatmul.bf16.gmra.mxu0 %v8489
        %v8736 = vpop.f32.mrf.mxu0
        %v8737 = vadd.f32 %v8324, %v8736
        %v8738 = vpop.f32.mrf.mxu0
        %v8739 = vadd.f32 %v8324, %v8738
        %8740 = vmatmul.bf16.gmra.mxu0 %v8492
        %v8741 = vpop.f32.mrf.mxu0
        %v8742 = vadd.f32 %v8324, %v8741
        %v8743 = vpop.f32.mrf.mxu0
        %v8744 = vadd.f32 %v8324, %v8743
        %8745 = vmatmul.bf16.gmra.mxu0 %v8495
        %v8746 = vpop.f32.mrf.mxu0
        %v8747 = vadd.f32 %v8324, %v8746
        %v8748 = vpop.f32.mrf.mxu0
        %v8749 = vadd.f32 %v8324, %v8748
        %8750 = vmatmul.bf16.gmra.mxu0 %v8498
        %v8751 = vpop.f32.mrf.mxu0
        %v8752 = vadd.f32 %v8324, %v8751
        %v8753 = vpop.f32.mrf.mxu0
        %v8754 = vadd.f32 %v8324, %v8753
        %8755 = vmatmul.bf16.gmra.mxu0 %v8501
        %v8756 = vpop.f32.mrf.mxu0
        %v8757 = vadd.f32 %v8324, %v8756
        %v8758 = vpop.f32.mrf.mxu0
        %v8759 = vadd.f32 %v8324, %v8758
        %8760 = vmatmul.bf16.gmra.mxu0 %v8504
        %v8761 = vpop.f32.mrf.mxu0
        %v8762 = vadd.f32 %v8324, %v8761
        %v8763 = vpop.f32.mrf.mxu0
        %v8764 = vadd.f32 %v8324, %v8763
        %8765 = vmatmul.bf16.gmra.mxu0 %v8507
        %v8766 = vpop.f32.mrf.mxu0
        %v8767 = vadd.f32 %v8324, %v8766
        %v8768 = vpop.f32.mrf.mxu0
        %v8769 = vadd.f32 %v8324, %v8768
        %8770 = vmatmul.bf16.gmra.mxu0 %v8510
        %v8771 = vpop.f32.mrf.mxu0
        %v8772 = vadd.f32 %v8324, %v8771
        %v8773 = vpop.f32.mrf.mxu0
        %v8774 = vadd.f32 %v8324, %v8773
        %8775 = vmatmul.bf16.gmra.mxu0 %v8513
        %v8776 = vpop.f32.mrf.mxu0
        %v8777 = vadd.f32 %v8324, %v8776
        %v8778 = vpop.f32.mrf.mxu0
        %v8779 = vadd.f32 %v8324, %v8778
        %8780 = vmatmul.bf16.gmra.mxu0 %v8516
        %v8781 = vpop.f32.mrf.mxu0
        %v8782 = vadd.f32 %v8324, %v8781
        %v8783 = vpop.f32.mrf.mxu0
        %v8784 = vadd.f32 %v8324, %v8783
        %8785 = vmatmul.bf16.gmra.mxu0 %v8519
        %v8786 = vpop.f32.mrf.mxu0
        %v8787 = vadd.f32 %v8324, %v8786
        %v8788 = vpop.f32.mrf.mxu0
        %v8789 = vadd.f32 %v8324, %v8788
        %8790 = vmatmul.bf16.gmra.mxu0 %v8522
        %v8791 = vpop.f32.mrf.mxu0
        %v8792 = vadd.f32 %v8324, %v8791
        %v8793 = vpop.f32.mrf.mxu0
        %v8794 = vadd.f32 %v8324, %v8793
        %8795 = vmatmul.bf16.gmra.mxu0 %v8525
        %v8796 = vpop.f32.mrf.mxu0
        %v8797 = vadd.f32 %v8324, %v8796
        %v8798 = vpop.f32.mrf.mxu0
        %v8799 = vadd.f32 %v8324, %v8798
        %8800 = vmatmul.bf16.gmra.mxu0 %v8528
        %v8801 = vpop.f32.mrf.mxu0
        %v8802 = vadd.f32 %v8324, %v8801
        %v8803 = vpop.f32.mrf.mxu0
        %v8804 = vadd.f32 %v8324, %v8803
        %8805 = vmatmul.bf16.gmra.mxu0 %v8531
        %v8806 = vpop.f32.mrf.mxu0
        %v8807 = vadd.f32 %v8324, %v8806
        %v8808 = vpop.f32.mrf.mxu0
        %v8809 = vadd.f32 %v8324, %v8808
        %8810 = vdwg.mxu0
        %8811 = vmatpush.bf16.msra.mxu0 %v8653
        %8812 = vmatpush.bf16.msra.mxu0 %v8652
        %8813 = vmatpush.bf16.msra.mxu0 %v8651
        %8814 = vmatpush.bf16.msra.mxu0 %v8650
        %8815 = vmatpush.bf16.msra.mxu0 %v8649
        %8816 = vmatpush.bf16.msra.mxu0 %v8648
        %8817 = vmatpush.bf16.msra.mxu0 %v8647
        %8818 = vmatpush.bf16.msra.mxu0 %v8646
        %8819 = vmatmul.bf16.gmra.mxu0 %v8487
        %v8820 = vpop.f32.mrf.mxu0
        %v8821 = vadd.f32 %v8732, %v8820
        %v8822 = vpop.f32.mrf.mxu0
        %v8823 = vadd.f32 %v8734, %v8822
        %8824 = vmatmul.bf16.gmra.mxu0 %v8490
        %v8825 = vpop.f32.mrf.mxu0
        %v8826 = vadd.f32 %v8737, %v8825
        %v8827 = vpop.f32.mrf.mxu0
        %v8828 = vadd.f32 %v8739, %v8827
        %8829 = vmatmul.bf16.gmra.mxu0 %v8493
        %v8830 = vpop.f32.mrf.mxu0
        %v8831 = vadd.f32 %v8742, %v8830
        %v8832 = vpop.f32.mrf.mxu0
        %v8833 = vadd.f32 %v8744, %v8832
        %8834 = vmatmul.bf16.gmra.mxu0 %v8496
        %v8835 = vpop.f32.mrf.mxu0
        %v8836 = vadd.f32 %v8747, %v8835
        %v8837 = vpop.f32.mrf.mxu0
        %v8838 = vadd.f32 %v8749, %v8837
        %8839 = vmatmul.bf16.gmra.mxu0 %v8499
        %v8840 = vpop.f32.mrf.mxu0
        %v8841 = vadd.f32 %v8752, %v8840
        %v8842 = vpop.f32.mrf.mxu0
        %v8843 = vadd.f32 %v8754, %v8842
        %8844 = vmatmul.bf16.gmra.mxu0 %v8502
        %v8845 = vpop.f32.mrf.mxu0
        %v8846 = vadd.f32 %v8757, %v8845
        %v8847 = vpop.f32.mrf.mxu0
        %v8848 = vadd.f32 %v8759, %v8847
        %8849 = vmatmul.bf16.gmra.mxu0 %v8505
        %v8850 = vpop.f32.mrf.mxu0
        %v8851 = vadd.f32 %v8762, %v8850
        %v8852 = vpop.f32.mrf.mxu0
        %v8853 = vadd.f32 %v8764, %v8852
        %8854 = vmatmul.bf16.gmra.mxu0 %v8508
        %v8855 = vpop.f32.mrf.mxu0
        %v8856 = vadd.f32 %v8767, %v8855
        %v8857 = vpop.f32.mrf.mxu0
        %v8858 = vadd.f32 %v8769, %v8857
        %8859 = vmatmul.bf16.gmra.mxu0 %v8511
        %v8860 = vpop.f32.mrf.mxu0
        %v8861 = vadd.f32 %v8772, %v8860
        %v8862 = vpop.f32.mrf.mxu0
        %v8863 = vadd.f32 %v8774, %v8862
        %8864 = vmatmul.bf16.gmra.mxu0 %v8514
        %v8865 = vpop.f32.mrf.mxu0
        %v8866 = vadd.f32 %v8777, %v8865
        %v8867 = vpop.f32.mrf.mxu0
        %v8868 = vadd.f32 %v8779, %v8867
        %8869 = vmatmul.bf16.gmra.mxu0 %v8517
        %v8870 = vpop.f32.mrf.mxu0
        %v8871 = vadd.f32 %v8782, %v8870
        %v8872 = vpop.f32.mrf.mxu0
        %v8873 = vadd.f32 %v8784, %v8872
        %8874 = vmatmul.bf16.gmra.mxu0 %v8520
        %v8875 = vpop.f32.mrf.mxu0
        %v8876 = vadd.f32 %v8787, %v8875
        %v8877 = vpop.f32.mrf.mxu0
        %v8878 = vadd.f32 %v8789, %v8877
        %8879 = vmatmul.bf16.gmra.mxu0 %v8523
        %v8880 = vpop.f32.mrf.mxu0
        %v8881 = vadd.f32 %v8792, %v8880
        %v8882 = vpop.f32.mrf.mxu0
        %v8883 = vadd.f32 %v8794, %v8882
        %8884 = vmatmul.bf16.gmra.mxu0 %v8526
        %v8885 = vpop.f32.mrf.mxu0
        %v8886 = vadd.f32 %v8797, %v8885
        %v8887 = vpop.f32.mrf.mxu0
        %v8888 = vadd.f32 %v8799, %v8887
        %8889 = vmatmul.bf16.gmra.mxu0 %v8529
        %v8890 = vpop.f32.mrf.mxu0
        %v8891 = vadd.f32 %v8802, %v8890
        %v8892 = vpop.f32.mrf.mxu0
        %v8893 = vadd.f32 %v8804, %v8892
        %8894 = vmatmul.bf16.gmra.mxu0 %v8532
        %v8895 = vpop.f32.mrf.mxu0
        %v8896 = vadd.f32 %v8807, %v8895
        %v8897 = vpop.f32.mrf.mxu0
        %v8898 = vadd.f32 %v8809, %v8897
        %8899 = vdwg.mxu0
        %8900 = vmatpush.bf16.msra.mxu0 0
        %8901 = vmatpush.bf16.msra.mxu0 0
        %8902 = vmatpush.bf16.msra.mxu0 0
        %8903 = vmatpush.bf16.msra.mxu0 0
        %8904 = vmatpush.bf16.msra.mxu0 0
        %8905 = vmatpush.bf16.msra.mxu0 0
        %8906 = vmatpush.bf16.msra.mxu0 %v8655
        %8907 = vmatpush.bf16.msra.mxu0 %v8654
        %8908 = vmatmul.bf16.gmra.mxu0 %v8675
        %v8909 = vpop.f32.mrf.mxu0
        %v8910 = vadd.f32 %v8821, %v8909
        %v8911 = vpop.f32.mrf.mxu0
        %v8912 = vadd.f32 %v8823, %v8911
        %8913 = vmatmul.bf16.gmra.mxu0 %v8678
        %v8914 = vpop.f32.mrf.mxu0
        %v8915 = vadd.f32 %v8826, %v8914
        %v8916 = vpop.f32.mrf.mxu0
        %v8917 = vadd.f32 %v8828, %v8916
        %8918 = vmatmul.bf16.gmra.mxu0 %v8681
        %v8919 = vpop.f32.mrf.mxu0
        %v8920 = vadd.f32 %v8831, %v8919
        %v8921 = vpop.f32.mrf.mxu0
        %v8922 = vadd.f32 %v8833, %v8921
        %8923 = vmatmul.bf16.gmra.mxu0 %v8684
        %v8924 = vpop.f32.mrf.mxu0
        %v8925 = vadd.f32 %v8836, %v8924
        %v8926 = vpop.f32.mrf.mxu0
        %v8927 = vadd.f32 %v8838, %v8926
        %8928 = vmatmul.bf16.gmra.mxu0 %v8687
        %v8929 = vpop.f32.mrf.mxu0
        %v8930 = vadd.f32 %v8841, %v8929
        %v8931 = vpop.f32.mrf.mxu0
        %v8932 = vadd.f32 %v8843, %v8931
        %8933 = vmatmul.bf16.gmra.mxu0 %v8690
        %v8934 = vpop.f32.mrf.mxu0
        %v8935 = vadd.f32 %v8846, %v8934
        %v8936 = vpop.f32.mrf.mxu0
        %v8937 = vadd.f32 %v8848, %v8936
        %8938 = vmatmul.bf16.gmra.mxu0 %v8693
        %v8939 = vpop.f32.mrf.mxu0
        %v8940 = vadd.f32 %v8851, %v8939
        %v8941 = vpop.f32.mrf.mxu0
        %v8942 = vadd.f32 %v8853, %v8941
        %8943 = vmatmul.bf16.gmra.mxu0 %v8696
        %v8944 = vpop.f32.mrf.mxu0
        %v8945 = vadd.f32 %v8856, %v8944
        %v8946 = vpop.f32.mrf.mxu0
        %v8947 = vadd.f32 %v8858, %v8946
        %8948 = vmatmul.bf16.gmra.mxu0 %v8699
        %v8949 = vpop.f32.mrf.mxu0
        %v8950 = vadd.f32 %v8861, %v8949
        %v8951 = vpop.f32.mrf.mxu0
        %v8952 = vadd.f32 %v8863, %v8951
        %8953 = vmatmul.bf16.gmra.mxu0 %v8702
        %v8954 = vpop.f32.mrf.mxu0
        %v8955 = vadd.f32 %v8866, %v8954
        %v8956 = vpop.f32.mrf.mxu0
        %v8957 = vadd.f32 %v8868, %v8956
        %8958 = vmatmul.bf16.gmra.mxu0 %v8705
        %v8959 = vpop.f32.mrf.mxu0
        %v8960 = vadd.f32 %v8871, %v8959
        %v8961 = vpop.f32.mrf.mxu0
        %v8962 = vadd.f32 %v8873, %v8961
        %8963 = vmatmul.bf16.gmra.mxu0 %v8708
        %v8964 = vpop.f32.mrf.mxu0
        %v8965 = vadd.f32 %v8876, %v8964
        %v8966 = vpop.f32.mrf.mxu0
        %v8967 = vadd.f32 %v8878, %v8966
        %8968 = vmatmul.bf16.gmra.mxu0 %v8711
        %v8969 = vpop.f32.mrf.mxu0
        %v8970 = vadd.f32 %v8881, %v8969
        %v8971 = vpop.f32.mrf.mxu0
        %v8972 = vadd.f32 %v8883, %v8971
        %8973 = vmatmul.bf16.gmra.mxu0 %v8714
        %v8974 = vpop.f32.mrf.mxu0
        %v8975 = vadd.f32 %v8886, %v8974
        %v8976 = vpop.f32.mrf.mxu0
        %v8977 = vadd.f32 %v8888, %v8976
        %8978 = vmatmul.bf16.gmra.mxu0 %v8717
        %v8979 = vpop.f32.mrf.mxu0
        %v8980 = vadd.f32 %v8891, %v8979
        %v8981 = vpop.f32.mrf.mxu0
        %v8982 = vadd.f32 %v8893, %v8981
        %8983 = vmatmul.bf16.gmra.mxu0 %v8720
        %v8984 = vpop.f32.mrf.mxu0
        %v8985 = vadd.f32 %v8896, %v8984
        %v8986 = vpop.f32.mrf.mxu0
        %v8987 = vadd.f32 %v8898, %v8986
        %8988 = vdwg.mxu0
        %v8989 = vld [vmem:[%s222] sm:$0xf]
        %v8990 = vld [vmem:[%s222 + $0x4] sm:$0xf]
        %v8991 = vld [vmem:[%s222 + $0x8] sm:$0xf]
        %v8992 = vld [vmem:[%s222 + $0xc] sm:$0xf]
        %v8993 = vld [vmem:[%s222 + $0x10] sm:$0xf]
        %v8994 = vld [vmem:[%s222 + $0x14] sm:$0xf]
        %v8995 = vld [vmem:[%s222 + $0x18] sm:$0xf]
        %v8996 = vld [vmem:[%s222 + $0x1c] sm:$0xf]
        %v8997 = vld [vmem:[%s222 + $0x20] sm:$0xf]
        %v8998 = vld [vmem:[%s222 + $0x24] sm:$0xf]
        %v8999 = vld [vmem:[%s222 + $0x28] sm:$0xf]
        %v9000 = vld [vmem:[%s222 + $0x2c] sm:$0xf]
        %v9001 = vld [vmem:[%s222 + $0x30] sm:$0xf]
        %v9002 = vld [vmem:[%s222 + $0x34] sm:$0xf]
        %v9003 = vld [vmem:[%s222 + $0x38] sm:$0xf]
        %v9004 = vld [vmem:[%s222 + $0x3c] sm:$0xf]
        %v9005 = vld [vmem:[%s222 + $0x40] sm:$0xf]
        %v9006 = vld [vmem:[%s222 + $0x44] sm:$0xf]
        %v9007 = vld [vmem:[%s222 + $0x48] sm:$0xf]
        %v9008 = vld [vmem:[%s222 + $0x4c] sm:$0xf]
        %v9009 = vld [vmem:[%s222 + $0x50] sm:$0xf]
        %v9010 = vld [vmem:[%s222 + $0x54] sm:$0xf]
        %v9011 = vld [vmem:[%s222 + $0x58] sm:$0xf]
        %v9012 = vld [vmem:[%s222 + $0x5c] sm:$0xf]
        %v9013 = vld [vmem:[%s222 + $0x60] sm:$0xf]
        %v9014 = vld [vmem:[%s222 + $0x64] sm:$0xf]
        %v9015 = vld [vmem:[%s222 + $0x68] sm:$0xf]
        %v9016 = vld [vmem:[%s222 + $0x6c] sm:$0xf]
        %v9017 = vld [vmem:[%s222 + $0x70] sm:$0xf]
        %v9018 = vld [vmem:[%s222 + $0x74] sm:$0xf]
        %v9019 = vld [vmem:[%s222 + $0x78] sm:$0xf]
        %v9020 = vld [vmem:[%s222 + $0x7c] sm:$0xf]
        %v9021 = vunpack.c.l.bf16 %v8989
        %v9022 = vunpack.c.l.bf16 %v8990
        %v9023 = vunpack.c.l.bf16 %v8991
        %v9024 = vunpack.c.l.bf16 %v8992
        %v9025 = vunpack.c.l.bf16 %v8993
        %v9026 = vunpack.c.l.bf16 %v8994
        %v9027 = vunpack.c.l.bf16 %v8995
        %v9028 = vunpack.c.l.bf16 %v8996
        %v9029 = vunpack.c.l.bf16 %v8997
        %v9030 = vunpack.c.l.bf16 %v8998
        %v9031 = vunpack.c.l.bf16 %v8999
        %v9032 = vunpack.c.l.bf16 %v9000
        %v9033 = vunpack.c.l.bf16 %v9001
        %v9034 = vunpack.c.l.bf16 %v9002
        %v9035 = vunpack.c.l.bf16 %v9003
        %v9036 = vunpack.c.l.bf16 %v9004
        %v9037 = vunpack.c.l.bf16 %v9005
        %v9038 = vunpack.c.l.bf16 %v9006
        %v9039 = vunpack.c.l.bf16 %v9007
        %v9040 = vunpack.c.l.bf16 %v9008
        %v9041 = vunpack.c.l.bf16 %v9009
        %v9042 = vunpack.c.l.bf16 %v9010
        %v9043 = vunpack.c.l.bf16 %v9011
        %v9044 = vunpack.c.l.bf16 %v9012
        %v9045 = vunpack.c.l.bf16 %v9013
        %v9046 = vunpack.c.l.bf16 %v9014
        %v9047 = vunpack.c.l.bf16 %v9015
        %v9048 = vunpack.c.l.bf16 %v9016
        %v9049 = vunpack.c.l.bf16 %v9017
        %v9050 = vunpack.c.l.bf16 %v9018
        %v9051 = vunpack.c.l.bf16 %v9019
        %v9052 = vunpack.c.l.bf16 %v9020
        %v9053 = vadd.f32 %v8910, %v9021
        %v9054 = vadd.f32 %v8912, %v9022
        %v9055 = vadd.f32 %v8915, %v9023
        %v9056 = vadd.f32 %v8917, %v9024
        %v9057 = vadd.f32 %v8920, %v9025
        %v9058 = vadd.f32 %v8922, %v9026
        %v9059 = vadd.f32 %v8925, %v9027
        %v9060 = vadd.f32 %v8927, %v9028
        %v9061 = vadd.f32 %v8930, %v9029
        %v9062 = vadd.f32 %v8932, %v9030
        %v9063 = vadd.f32 %v8935, %v9031
        %v9064 = vadd.f32 %v8937, %v9032
        %v9065 = vadd.f32 %v8940, %v9033
        %v9066 = vadd.f32 %v8942, %v9034
        %v9067 = vadd.f32 %v8945, %v9035
        %v9068 = vadd.f32 %v8947, %v9036
        %v9069 = vadd.f32 %v8950, %v9037
        %v9070 = vadd.f32 %v8952, %v9038
        %v9071 = vadd.f32 %v8955, %v9039
        %v9072 = vadd.f32 %v8957, %v9040
        %v9073 = vadd.f32 %v8960, %v9041
        %v9074 = vadd.f32 %v8962, %v9042
        %v9075 = vadd.f32 %v8965, %v9043
        %v9076 = vadd.f32 %v8967, %v9044
        %v9077 = vadd.f32 %v8970, %v9045
        %v9078 = vadd.f32 %v8972, %v9046
        %v9079 = vadd.f32 %v8975, %v9047
        %v9080 = vadd.f32 %v8977, %v9048
        %v9081 = vadd.f32 %v8980, %v9049
        %v9082 = vadd.f32 %v8982, %v9050
        %v9083 = vadd.f32 %v8985, %v9051
        %v9084 = vadd.f32 %v8987, %v9052
        %v9085 = vmax.f32 %v9053, 0.0
        %v9086 = vmax.f32 %v9054, 0.0
        %v9087 = vmax.f32 %v9055, 0.0
        %v9088 = vmax.f32 %v9056, 0.0
        %v9089 = vmax.f32 %v9057, 0.0
        %v9090 = vmax.f32 %v9058, 0.0
        %v9091 = vmax.f32 %v9059, 0.0
        %v9092 = vmax.f32 %v9060, 0.0
        %v9093 = vmax.f32 %v9061, 0.0
        %v9094 = vmax.f32 %v9062, 0.0
        %v9095 = vmax.f32 %v9063, 0.0
        %v9096 = vmax.f32 %v9064, 0.0
        %v9097 = vmax.f32 %v9065, 0.0
        %v9098 = vmax.f32 %v9066, 0.0
        %v9099 = vmax.f32 %v9067, 0.0
        %v9100 = vmax.f32 %v9068, 0.0
        %v9101 = vmax.f32 %v9069, 0.0
        %v9102 = vmax.f32 %v9070, 0.0
        %v9103 = vmax.f32 %v9071, 0.0
        %v9104 = vmax.f32 %v9072, 0.0
        %v9105 = vmax.f32 %v9073, 0.0
        %v9106 = vmax.f32 %v9074, 0.0
        %v9107 = vmax.f32 %v9075, 0.0
        %v9108 = vmax.f32 %v9076, 0.0
        %v9109 = vmax.f32 %v9077, 0.0
        %v9110 = vmax.f32 %v9078, 0.0
        %v9111 = vmax.f32 %v9079, 0.0
        %v9112 = vmax.f32 %v9080, 0.0
        %v9113 = vmax.f32 %v9081, 0.0
        %v9114 = vmax.f32 %v9082, 0.0
        %v9115 = vmax.f32 %v9083, 0.0
        %v9116 = vmax.f32 %v9084, 0.0
        %9117 = vst.msk [vmem:[%s217] sm:$0xff] %vm4400, %v9085
        %9118 = vst.msk [vmem:[%s217 + $0x8] sm:$0xff] %vm4400, %v9086
        %9119 = vst.msk [vmem:[%s217 + $0x10] sm:$0xff] %vm4400, %v9087
        %9120 = vst.msk [vmem:[%s217 + $0x18] sm:$0xff] %vm4400, %v9088
        %9121 = vst.msk [vmem:[%s217 + $0x20] sm:$0xff] %vm4400, %v9089
        %9122 = vst.msk [vmem:[%s217 + $0x28] sm:$0xff] %vm4400, %v9090
        %9123 = vst.msk [vmem:[%s217 + $0x30] sm:$0xff] %vm4400, %v9091
        %9124 = vst.msk [vmem:[%s217 + $0x38] sm:$0xff] %vm4400, %v9092
        %9125 = vst.msk [vmem:[%s217 + $0x40] sm:$0xff] %vm4400, %v9093
        %9126 = vst.msk [vmem:[%s217 + $0x48] sm:$0xff] %vm4400, %v9094
        %9127 = vst.msk [vmem:[%s217 + $0x50] sm:$0xff] %vm4400, %v9095
        %9128 = vst.msk [vmem:[%s217 + $0x58] sm:$0xff] %vm4400, %v9096
        %9129 = vst.msk [vmem:[%s217 + $0x60] sm:$0xff] %vm4400, %v9097
        %9130 = vst.msk [vmem:[%s217 + $0x68] sm:$0xff] %vm4400, %v9098
        %9131 = vst.msk [vmem:[%s217 + $0x70] sm:$0xff] %vm4400, %v9099
        %9132 = vst.msk [vmem:[%s217 + $0x78] sm:$0xff] %vm4400, %v9100
        %9133 = vst.msk [vmem:[%s217 + $0x80] sm:$0xff] %vm4400, %v9101
        %9134 = vst.msk [vmem:[%s217 + $0x88] sm:$0xff] %vm4400, %v9102
        %9135 = vst.msk [vmem:[%s217 + $0x90] sm:$0xff] %vm4400, %v9103
        %9136 = vst.msk [vmem:[%s217 + $0x98] sm:$0xff] %vm4400, %v9104
        %9137 = vst.msk [vmem:[%s217 + $0xa0] sm:$0xff] %vm4400, %v9105
        %9138 = vst.msk [vmem:[%s217 + $0xa8] sm:$0xff] %vm4400, %v9106
        %9139 = vst.msk [vmem:[%s217 + $0xb0] sm:$0xff] %vm4400, %v9107
        %9140 = vst.msk [vmem:[%s217 + $0xb8] sm:$0xff] %vm4400, %v9108
        %9141 = vst.msk [vmem:[%s217 + $0xc0] sm:$0xff] %vm4400, %v9109
        %9142 = vst.msk [vmem:[%s217 + $0xc8] sm:$0xff] %vm4400, %v9110
        %9143 = vst.msk [vmem:[%s217 + $0xd0] sm:$0xff] %vm4400, %v9111
        %9144 = vst.msk [vmem:[%s217 + $0xd8] sm:$0xff] %vm4400, %v9112
        %9145 = vst.msk [vmem:[%s217 + $0xe0] sm:$0xff] %vm4400, %v9113
        %9146 = vst.msk [vmem:[%s217 + $0xe8] sm:$0xff] %vm4400, %v9114
        %9147 = vst.msk [vmem:[%s217 + $0xf0] sm:$0xff] %vm4400, %v9115
        %9148 = vst.msk [vmem:[%s217 + $0xf8] sm:$0xff] %vm4400, %v9116
        %s9149 = sand.u32 %s137, 1
        %s9150 = scalar_lea.sflag [#allocation6], %s9149
        %s9151 = sand.u32 %s137, 1
        %s9152 = smul.addr %s9151, 256
        %s9153 = scalar_lea.vmem [#allocation5], %s9152
        // Predicated region
        $region41: #{basic_block_enc.1} parent=39 // pred_check
          %p9154 = pneg %p147
        $region42: #{basic_block_enc.1} parent=39 // pred_check_branch
          %9156 = sbr.rel (%p9154) target = $region44
        $region43: #{basic_block_enc.1} parent=39 // pred_region
          %9158 = vsyncadd %s9150, 0
          %s9159 = smul.addr %s19, 32
          %s9160 = smul.addr %s9159, 8
          %s9161 = scalar_lea.hbm %s5, %s9160
          %s9162 = sshll.u32 %s9153, 4
          %s9163 = int_to_ptr.vmem [resolvable:$true] %s9162
          %s9164 = sshll.u32 %s9161, 4
          %s9165 = int_to_ptr.hbm [resolvable:$true] %s9164
          %9170 = dma.vmem_to_hbm [thread:$0]  %s9163, 4096, %s9165, %s9150, 128, 128, 8
        $region44: #{basic_block_enc.1} parent=39 // pred_fallthru
          _
      $region40: #{basic_block_enc.1} parent=5 // pred_fallthru
        _
      %p9171 = scmp.le.s32.totalorder 2, %s14
      // Predicated region
      $region45: #{basic_block_enc.1} parent=5 // pred_check
        %p9172 = pneg %p9171
      $region46: #{basic_block_enc.1} parent=5 // pred_check_branch
        %9174 = sbr.rel (%p9172) target = $region48
      $region47: #{basic_block_enc.1} parent=5 // pred_region
        %s9175 = ssub.s32 %s14, 2
        // Predicated region
        $region49: #{basic_block_enc.1} parent=47 // pred_check
          %p9176 = pneg %p153
        $region50: #{basic_block_enc.1} parent=47 // pred_check_branch
          %9178 = sbr.rel (%p9176) target = $region52
        $region51: #{basic_block_enc.1} parent=47 // pred_region
          %s9179 = sand.u32 %s138, 1
          %s9180 = scalar_lea.sflag [#allocation6], %s9179
          %s9181 = sand.u32 %s138, 1
          %s9182 = smul.addr %s9181, 256
          %s9183 = scalar_lea.vmem [#allocation5], %s9182
          %9185 = dma.done %s9180, 4096
        $region52: #{basic_block_enc.1} parent=47 // pred_fallthru
          _
      $region48: #{basic_block_enc.1} parent=5 // pred_fallthru
        _
    $region6: #{basic_block_enc.1} parent=1 // loop_footer
      %s18 = sadd.s32 1, %s14
    $region7: #{basic_block_enc.1} parent=1 // loop_footer_branch
      %13 = sbr.rel target = $region3
    $region8: #{basic_block_enc.1} parent=1 // loop_exit
      _
    %9186 = vsyncpa [#allocation6], 1
    %s9187 = scalar_lea.sflag [#allocation6], 1
    %9188 = vsyncpa %s9187, 1

</llo_original>
